<compile_context>
chip_gen: v5e
topology: v5e:2x2
jax: 0.10.0
libtpu: 0.0.40
codegen_flags: <defaults>
</compile_context>

<pallas_src>
import functools

import jax
import jax.numpy as jnp
from jax import lax
from jax.experimental import pallas as pl
from jax.experimental.pallas import tpu as pltpu

NEG_SLOPE = 0.2                  # LeakyReLU(0.2)
BN_EPS = 1e-5                    # PyTorch BatchNorm2d default eps
PAD = 2                          # Conv2d(..., padding=2) as in the reference module
KH = KW = 4                      # Conv2d kernel_size=4
VMEM_LIMIT = 32 * 1024 * 1024    # scoped-VMEM limit, safe on v5e/v6e/v7x


def _round_up(x, m):
    return (x + m - 1) // m * m


# ---------------------------------------------------------------------------
# Pallas kernel: one grid step = one (sample, Cout-tile), 16 streamed taps
# ---------------------------------------------------------------------------
def _conv_tap_kernel(*refs, taps, rows_out, fuse_in, collect_stats,
                     apply_lrelu, inv_count):
    """Conv2d(k=4) for one sample / Cout tile, taps streamed from VMEM.

    refs, in order:
      x      (1, P, Rin, Cin)   phase-split, row-flattened, zero-padded input
      w      (16, Cin, TCo)     per-tap weight slices (VMEM-resident)
      b      (1, 1, TCo)
      [scale, shift (1,1,Cin), vmask (1,P,Rin,1)]   when fuse_in
      [omask (1, rows_out, 1)]                      when collect_stats
      out    (1, rows_out, TCo)
      [sum, m2 (1, 1, TCo)]                         when collect_stats
      [xs    (P, Rin, Cin) VMEM scratch]            when fuse_in
    """
    it = iter(refs)
    x_ref, w_ref, b_ref = next(it), next(it), next(it)
    if fuse_in:
        scale_ref, shift_ref, vmask_ref = next(it), next(it), next(it)
    if collect_stats:
        omask_ref = next(it)
    out_ref = next(it)
    if collect_stats:
        sum_ref, m2_ref = next(it), next(it)
    if fuse_in:
        xs_ref = next(it)

    if fuse_in:
        # Producer layer's BatchNorm affine + LeakyReLU fused into this conv's
        # input (no standalone BN pass over HBM).  vmask re-zeroes the conv
        # padding, which must stay zero *after* the affine.
        xin = x_ref[0].astype(jnp.float32)
        xin = xin * scale_ref[0] + shift_ref[0]
        xin = jnp.where(xin > 0, xin, NEG_SLOPE * xin)
        xs_ref[...] = (xin * vmask_ref[0]).astype(xs_ref.dtype)

        def tap_lhs(ph, st):
            return xs_ref[ph, st:st + rows_out, :]
    else:
        def tap_lhs(ph, st):
            return x_ref[0, ph, st:st + rows_out, :]

    # 16 taps, statically unrolled: each tap is a contiguous row window of one
    # stride phase -> bf16 MXU matmul with f32 accumulation (no im2col).
    tco = w_ref.shape[-1]
    acc = jnp.zeros((rows_out, tco), jnp.float32)
    for t, (ph, st) in enumerate(taps):
        acc = acc + jnp.dot(tap_lhs(ph, st), w_ref[t],
                            preferred_element_type=jnp.float32)

    y = acc + b_ref[0]
    if apply_lrelu:
        y = jnp.where(y > 0, y, NEG_SLOPE * y)
    out_ref[0] = y.astype(out_ref.dtype)

    if collect_stats:
        # Per-(sample, Cout-tile) BatchNorm partial statistics written to their
        # own output block (no grid-resident accumulator -> all axes parallel).
        # Centered second moment avoids E[x^2]-E[x]^2 cancellation.
        m = omask_ref[0]                                   # (rows_out, 1), 0/1
        s = jnp.sum(y * m, axis=0, keepdims=True)          # (1, TCo)
        mean = s * inv_count
        d = (y - mean) * m
        sum_ref[0] = s
        m2_ref[0] = jnp.sum(d * d, axis=0, keepdims=True)


# ---------------------------------------------------------------------------
# Wrappers: layout prep in XLA (cheap ~1x passes), hot path in Pallas
# ---------------------------------------------------------------------------
def _prep_phase_input(x_nhwc, stride):
    """Zero-pad, split into stride phases, flatten (H, W) -> rows.

    Returns (xflat (N, s*s, Rpad, C), taps [(phase, row_start)]*16, geom).
    Every kernel tap reads the contiguous rows [start, start + OH*Wc) of one
    phase; output row r = oh*Wc + ow is valid for ow < OW (junk columns are
    masked for the BN stats and cropped by the consumer).
    """
    N, H, W, C = x_nhwc.shape
    s = stride
    OH = (H + 2 * PAD - KH) // s + 1
    OW = (W + 2 * PAD - KW) // s + 1
    maxd = (KH - 1) // s
    Hc, Wc = OH + maxd, OW + maxd
    xpad = jnp.pad(x_nhwc, ((0, 0), (PAD, PAD), (PAD, PAD), (0, 0)))
    phases = []
    for py in range(s):
        for px in range(s):
            ph = xpad[:, py::s, px::s, :][:, :Hc, :Wc, :]
            if ph.shape[1] < Hc or ph.shape[2] < Wc:
                ph = jnp.pad(ph, ((0, 0), (0, Hc - ph.shape[1]),
                                  (0, Wc - ph.shape[2]), (0, 0)))
            phases.append(ph)
    xph = jnp.stack(phases, axis=1)                       # (N, s*s, Hc, Wc, C)
    xflat = xph.reshape(N, s * s, Hc * Wc, C)

    taps = [((ky % s) * s + (kx % s), (ky // s) * Wc + (kx // s))
            for ky in range(KH) for kx in range(KW)]
    rows_out = OH * Wc
    rows_need = max(st for _, st in taps) + rows_out
    rpad = _round_up(max(rows_need, Hc * Wc), 8)
    xflat = jnp.pad(xflat, ((0, 0), (0, 0), (0, rpad - Hc * Wc), (0, 0)))
    geom = dict(OH=OH, OW=OW, Wc=Wc, rows_out=rows_out, rpad=rpad)
    return xflat, taps, geom


def _out_col_mask(ow, wc, rows_out):
    valid = (jnp.arange(rows_out) % wc) < ow
    return valid.astype(jnp.float32).reshape(1, rows_out, 1)


def conv2d_taps_pallas(xflat, taps, geom, w_oihw, b, *, apply_lrelu,
                       collect_stats, in_affine=None, out_dtype=jnp.bfloat16):
    """Conv2d(kernel=4, stride, padding=2) with 16 in-kernel taps."""
    N, P, Rin, Cin = xflat.shape
    Cout = w_oihw.shape[0]
    rows_out = geom["rows_out"]
    T = KH * KW

    # (Cout, Cin, KH, KW) -> (KH*KW, Cin, Cout); taps index the leading axis.
    wt = jnp.transpose(w_oihw, (2, 3, 1, 0)).reshape(T, Cin, Cout)
    wt = wt.astype(jnp.bfloat16)
    b3 = b.reshape(1, 1, Cout).astype(jnp.float32)

    # Tile Cout only when it splits into lane-dense 256-wide blocks; otherwise
    # one full-dim block (full blocks waive the 128 rule, and not padding Cout
    # avoids write amplification for narrow layers).
    tco = 256 if (Cout > 256 and Cout % 256 == 0) else Cout
    nj = Cout // tco

    fuse_in = in_affine is not None
    args = [xflat, wt, b3]
    in_specs = [
        pl.BlockSpec((1, P, Rin, Cin), lambda n, j: (n, 0, 0, 0)),
        pl.BlockSpec((T, Cin, tco), lambda n, j: (0, 0, j)),    # VMEM-resident
        pl.BlockSpec((1, 1, tco), lambda n, j: (0, 0, j)),
    ]
    if fuse_in:
        scale, shift, vmask = in_affine
        args += [scale, shift, vmask]
        in_specs += [
            pl.BlockSpec((1, 1, Cin), lambda n, j: (0, 0, 0)),
            pl.BlockSpec((1, 1, Cin), lambda n, j: (0, 0, 0)),
            pl.BlockSpec((1, P, Rin, 1), lambda n, j: (0, 0, 0, 0)),
        ]
    if collect_stats:
        args.append(_out_col_mask(geom["OW"], geom["Wc"], rows_out))
        in_specs.append(pl.BlockSpec((1, rows_out, 1), lambda n, j: (0, 0, 0)))

    out_shape = [jax.ShapeDtypeStruct((N, rows_out, Cout), out_dtype)]
    out_specs = [pl.BlockSpec((1, rows_out, tco), lambda n, j: (n, 0, j))]
    if collect_stats:
        out_shape.append(jax.ShapeDtypeStruct((N, 1, Cout), jnp.float32))
        out_shape.append(jax.ShapeDtypeStruct((N, 1, Cout), jnp.float32))
        out_specs.append(pl.BlockSpec((1, 1, tco), lambda n, j: (n, 0, j)))
        out_specs.append(pl.BlockSpec((1, 1, tco), lambda n, j: (n, 0, j)))

    scratch = [pltpu.VMEM((P, Rin, Cin), xflat.dtype)] if fuse_in else []

    kernel = functools.partial(
        _conv_tap_kernel, taps=tuple(taps), rows_out=rows_out,
        fuse_in=fuse_in, collect_stats=collect_stats, apply_lrelu=apply_lrelu,
        inv_count=1.0 / float(geom["OH"] * geom["OW"]))

    # TODO(synk): for very large spatial inputs the per-sample block should be
    # row-tiled with a manual halo DMA (pl.ANY + make_async_copy) to bound
    # VMEM; unnecessary at these sizes.
    res = pl.pallas_call(
        kernel,
        out_shape=tuple(out_shape),
        grid=(N, nj),
        in_specs=in_specs,
        out_specs=tuple(out_specs),
        scratch_shapes=scratch,
        compiler_params=pltpu.CompilerParams(
            dimension_semantics=("parallel", "parallel"),
            vmem_limit_bytes=VMEM_LIMIT),
    )(*args)
    out = res[0]
    stats = (res[1], res[2]) if collect_stats else None
    return out, stats


def _bn_scale_shift(stats, gamma, beta, count_per_sample):
    """Combine per-sample partial stats (sum, centered M2) -> (scale, shift)."""
    sum_s, m2_s = stats                                  # each (N, 1, C)
    n = sum_s.shape[0]
    total = float(n) * count_per_sample
    mean_s = sum_s / count_per_sample
    mean = jnp.sum(sum_s, axis=0) / total                # (1, C)
    m2 = jnp.sum(m2_s, axis=0) + count_per_sample * jnp.sum(
        jnp.square(mean_s - mean), axis=0)
    var = m2 / total                                     # biased, PyTorch train BN
    scale = gamma.reshape(1, -1) * lax.rsqrt(var + BN_EPS)
    shift = beta.reshape(1, -1) - mean * scale
    c = gamma.shape[0]
    return (scale.reshape(1, 1, c).astype(jnp.float32),
            shift.reshape(1, 1, c).astype(jnp.float32))


# ---------------------------------------------------------------------------
# Discriminator: parameter init + forward
# ---------------------------------------------------------------------------
def init_discriminator_params(key, channels_in=3, base_mult=64, n_layers=3):
    """Mirrors the nn.Sequential built in Discriminator.__init__."""
    cfgs = [(channels_in, base_mult, 2, False)]          # conv + LeakyReLU
    stride = 2
    n_channels = base_mult
    for idx in range(n_layers):
        if idx == n_layers - 1:
            stride = 1
        n_channels = base_mult * 2 ** idx
        cfgs.append((n_channels, n_channels * 2, stride, True))   # conv+BN+LReLU
    cfgs.append((n_channels * 2, 1, 1, False))           # final conv

    params = []
    for (cin, cout, s, bn) in cfgs:
        key, kw, kb, kg, kbt = jax.random.split(key, 5)
        p = {"w": 0.05 * jax.random.normal(kw, (cout, cin, 4, 4), jnp.float32),
             "b": 0.01 * jax.random.normal(kb, (cout,), jnp.float32),
             "stride": s, "bn": bn}
        if bn:
            p["gamma"] = 1.0 + 0.1 * jax.random.normal(kg, (cout,), jnp.float32)
            p["beta"] = 0.1 * jax.random.normal(kbt, (cout,), jnp.float32)
        params.append(p)
    return params


def discriminator_forward(params, img_nchw):
    # TODO(synk): PyTorch BatchNorm2d also updates running_mean/var buffers in
    # training mode; that stateful side effect is not part of the forward value.
    x = jnp.transpose(img_nchw, (0, 2, 3, 1)).astype(jnp.bfloat16)   # NCHW->NHWC
    n_layers = len(params)
    pending_affine = None   # (scale, shift) of a BN layer, fused into the next conv
    for idx, p in enumerate(params):
        is_last = idx == n_layers - 1
        has_bn = p["bn"]
        _, h, w_sp, _ = x.shape
        xflat, taps, geom = _prep_phase_input(x, p["stride"])
        in_affine = None
        if pending_affine is not None:
            scale, shift = pending_affine
            # Validity mask built by pushing a ones-image through the identical
            # pad/phase/flatten pipeline, so conv zero-padding stays zero after
            # the fused BN affine + LeakyReLU.
            vmask, _, _ = _prep_phase_input(
                jnp.ones((1, h, w_sp, 1), jnp.float32), p["stride"])
            in_affine = (scale, shift, vmask)
        out_slab, stats = conv2d_taps_pallas(
            xflat, taps, geom, p["w"], p["b"],
            apply_lrelu=(not is_last) and (not has_bn),
            collect_stats=has_bn,
            in_affine=in_affine,
            out_dtype=jnp.float32 if is_last else jnp.bfloat16)
        if has_bn:
            pending_affine = _bn_scale_shift(
                stats, p["gamma"], p["beta"], float(geom["OH"] * geom["OW"]))
        else:
            pending_affine = None
        # Slab (N, OH*Wc, Cout) -> NHWC; the tiny junk-column crop fuses with
        # the next layer's pad/phase-split pass (no standalone round trip).
        oh, ow, wc = geom["OH"], geom["OW"], geom["Wc"]
        x = out_slab.reshape(out_slab.shape[0], oh, wc, -1)[:, :, :ow, :]
    return jnp.transpose(x, (0, 3, 1, 2)).astype(jnp.float32)        # NHWC->NCHW


# ---------------------------------------------------------------------------
# Pure-XLA reference (mirrors the kernel's bf16 storage points) for validation
# ---------------------------------------------------------------------------
def _reference_forward(params, img_nchw):
    x = jnp.transpose(img_nchw, (0, 2, 3, 1)).astype(jnp.bfloat16)
    n_layers = len(params)
    for idx, p in enumerate(params):
        w = jnp.transpose(p["w"], (2, 3, 1, 0)).astype(jnp.bfloat16)   # HWIO
        y = lax.conv_general_dilated(
            x.astype(jnp.bfloat16), w, window_strides=(p["stride"],) * 2,
            padding=((PAD, PAD), (PAD, PAD)),
            dimension_numbers=("NHWC", "HWIO", "NHWC"),
            preferred_element_type=jnp.float32)
        y = y + p["b"].reshape(1, 1, 1, -1)
        if p["bn"]:
            mean = jnp.mean(y, axis=(0, 1, 2), keepdims=True)
            var = jnp.mean(jnp.square(y - mean), axis=(0, 1, 2), keepdims=True)
            yq = y.astype(jnp.bfloat16).astype(jnp.float32)   # stored activation
            y = (yq - mean) * lax.rsqrt(var + BN_EPS)
            y = y * p["gamma"].reshape(1, 1, 1, -1) + p["beta"].reshape(1, 1, 1, -1)
        if idx < n_layers - 1:
            y = jnp.where(y > 0, y, NEG_SLOPE * y)
            x = y.astype(jnp.bfloat16)
        else:
            x = y.astype(jnp.float32)
    return jnp.transpose(x, (0, 3, 1, 2))


if __name__ == "__main__":
    import numpy as np

    key = jax.random.PRNGKey(0)
    k_img, k_par = jax.random.split(key)

    # Small config consistent with the module: channels_in=3, base_mult=8, n_layers=3.
    img = jax.random.normal(k_img, (2, 3, 16, 16), jnp.float32)        # NCHW
    params = init_discriminator_params(k_par, channels_in=3, base_mult=8, n_layers=3)

    fwd = jax.jit(functools.partial(discriminator_forward, params))
    out = jax.block_until_ready(fwd(img))

    # Conv(k=4, pad=2) chain: 16 -> 9 -> 5 -> 3 -> 4 -> 5  => output (2, 1, 5, 5)
    assert out.shape == (2, 1, 5, 5), out.shape
    assert bool(jnp.all(jnp.isfinite(out)))

    ref = jax.block_until_ready(_reference_forward(params, img))
    np.testing.assert_allclose(np.asarray(out), np.asarray(ref, dtype=np.float32),
                               rtol=3e-2, atol=3e-2)
    print("KERNEL_OK")
</pallas_src>

<mosaic_0001>
module attributes {stable_mosaic.version = 11 : i64} {
  func.func @_conv_tap_kernel(%arg0: i32, %arg1: i32, %arg2: memref<1x4x104x3xbf16, #tpu.memory_space<vmem>>, %arg3: memref<16x3x8xbf16, #tpu.memory_space<vmem>>, %arg4: memref<1x1x8xf32, #tpu.memory_space<vmem>>, %arg5: memref<1x90x8xbf16, #tpu.memory_space<vmem>>) attributes {dimension_semantics = [#tpu.dimension_semantics<parallel>, #tpu.dimension_semantics<parallel>], iteration_bounds = array<i64: 2, 1>, scalar_prefetch = 0 : i64, scratch_operands = 0 : i64, tpu.core_type = #tpu.core_type<tc>, window_params = [{transform_indices = @transform_0, window_bounds = array<i64: 1, 4, 104, 3>}, {transform_indices = @transform_1, window_bounds = array<i64: 16, 3, 8>}, {transform_indices = @transform_2, window_bounds = array<i64: 1, 1, 8>}, {transform_indices = @transform_3, window_bounds = array<i64: 1, 90, 8>}]} {
    %cst = arith.constant 0.000000e+00 : f32
    %0 = vector.broadcast %cst : f32 to vector<90x8xf32>
    %c0 = arith.constant 0 : index
    %c0_0 = arith.constant 0 : index
    %c0_1 = arith.constant 0 : index
    %c0_2 = arith.constant 0 : index
    %1 = vector.load %arg2[%c0, %c0_0, %c0_1, %c0_2] : memref<1x4x104x3xbf16, #tpu.memory_space<vmem>>, vector<1x1x90x3xbf16>
    %2 = vector.shape_cast %1 : vector<1x1x90x3xbf16> to vector<90x3xbf16>
    %c0_3 = arith.constant 0 : index
    %c0_4 = arith.constant 0 : index
    %c0_5 = arith.constant 0 : index
    %3 = vector.load %arg3[%c0_3, %c0_4, %c0_5] : memref<16x3x8xbf16, #tpu.memory_space<vmem>>, vector<1x3x8xbf16>
    %4 = vector.shape_cast %3 : vector<1x3x8xbf16> to vector<3x8xbf16>
    %cst_6 = arith.constant dense<0.000000e+00> : vector<90x8xf32>
    %5 = tpu.matmul %2, %4, %cst_6 {dimension_numbers = #tpu.dot_dimension_numbers<[1], [0], [0], [1], [0, 0, 1, 1], [], []>} : vector<90x3xbf16>, vector<3x8xbf16>, vector<90x8xf32> -> vector<90x8xf32>
    %6 = arith.addf %0, %5 : vector<90x8xf32>
    %c0_7 = arith.constant 0 : index
    %c1 = arith.constant 1 : index
    %c0_8 = arith.constant 0 : index
    %c0_9 = arith.constant 0 : index
    %7 = vector.load %arg2[%c0_7, %c1, %c0_8, %c0_9] : memref<1x4x104x3xbf16, #tpu.memory_space<vmem>>, vector<1x1x90x3xbf16>
    %8 = vector.shape_cast %7 : vector<1x1x90x3xbf16> to vector<90x3xbf16>
    %c1_10 = arith.constant 1 : index
    %c0_11 = arith.constant 0 : index
    %c0_12 = arith.constant 0 : index
    %9 = vector.load %arg3[%c1_10, %c0_11, %c0_12] : memref<16x3x8xbf16, #tpu.memory_space<vmem>>, vector<1x3x8xbf16>
    %10 = vector.shape_cast %9 : vector<1x3x8xbf16> to vector<3x8xbf16>
    %cst_13 = arith.constant dense<0.000000e+00> : vector<90x8xf32>
    %11 = tpu.matmul %8, %10, %cst_13 {dimension_numbers = #tpu.dot_dimension_numbers<[1], [0], [0], [1], [0, 0, 1, 1], [], []>} : vector<90x3xbf16>, vector<3x8xbf16>, vector<90x8xf32> -> vector<90x8xf32>
    %12 = arith.addf %6, %11 : vector<90x8xf32>
    %c0_14 = arith.constant 0 : index
    %c0_15 = arith.constant 0 : index
    %c1_16 = arith.constant 1 : index
    %c0_17 = arith.constant 0 : index
    %13 = vector.load %arg2[%c0_14, %c0_15, %c1_16, %c0_17] : memref<1x4x104x3xbf16, #tpu.memory_space<vmem>>, vector<1x1x90x3xbf16>
    %14 = vector.shape_cast %13 : vector<1x1x90x3xbf16> to vector<90x3xbf16>
    %c2 = arith.constant 2 : index
    %c0_18 = arith.constant 0 : index
    %c0_19 = arith.constant 0 : index
    %15 = vector.load %arg3[%c2, %c0_18, %c0_19] : memref<16x3x8xbf16, #tpu.memory_space<vmem>>, vector<1x3x8xbf16>
    %16 = vector.shape_cast %15 : vector<1x3x8xbf16> to vector<3x8xbf16>
    %cst_20 = arith.constant dense<0.000000e+00> : vector<90x8xf32>
    %17 = tpu.matmul %14, %16, %cst_20 {dimension_numbers = #tpu.dot_dimension_numbers<[1], [0], [0], [1], [0, 0, 1, 1], [], []>} : vector<90x3xbf16>, vector<3x8xbf16>, vector<90x8xf32> -> vector<90x8xf32>
    %18 = arith.addf %12, %17 : vector<90x8xf32>
    %c0_21 = arith.constant 0 : index
    %c1_22 = arith.constant 1 : index
    %c1_23 = arith.constant 1 : index
    %c0_24 = arith.constant 0 : index
    %19 = vector.load %arg2[%c0_21, %c1_22, %c1_23, %c0_24] : memref<1x4x104x3xbf16, #tpu.memory_space<vmem>>, vector<1x1x90x3xbf16>
    %20 = vector.shape_cast %19 : vector<1x1x90x3xbf16> to vector<90x3xbf16>
    %c3 = arith.constant 3 : index
    %c0_25 = arith.constant 0 : index
    %c0_26 = arith.constant 0 : index
    %21 = vector.load %arg3[%c3, %c0_25, %c0_26] : memref<16x3x8xbf16, #tpu.memory_space<vmem>>, vector<1x3x8xbf16>
    %22 = vector.shape_cast %21 : vector<1x3x8xbf16> to vector<3x8xbf16>
    %cst_27 = arith.constant dense<0.000000e+00> : vector<90x8xf32>
    %23 = tpu.matmul %20, %22, %cst_27 {dimension_numbers = #tpu.dot_dimension_numbers<[1], [0], [0], [1], [0, 0, 1, 1], [], []>} : vector<90x3xbf16>, vector<3x8xbf16>, vector<90x8xf32> -> vector<90x8xf32>
    %24 = arith.addf %18, %23 : vector<90x8xf32>
    %c0_28 = arith.constant 0 : index
    %c2_29 = arith.constant 2 : index
    %c0_30 = arith.constant 0 : index
    %c0_31 = arith.constant 0 : index
    %25 = vector.load %arg2[%c0_28, %c2_29, %c0_30, %c0_31] : memref<1x4x104x3xbf16, #tpu.memory_space<vmem>>, vector<1x1x90x3xbf16>
    %26 = vector.shape_cast %25 : vector<1x1x90x3xbf16> to vector<90x3xbf16>
    %c4 = arith.constant 4 : index
    %c0_32 = arith.constant 0 : index
    %c0_33 = arith.constant 0 : index
    %27 = vector.load %arg3[%c4, %c0_32, %c0_33] : memref<16x3x8xbf16, #tpu.memory_space<vmem>>, vector<1x3x8xbf16>
    %28 = vector.shape_cast %27 : vector<1x3x8xbf16> to vector<3x8xbf16>
    %cst_34 = arith.constant dense<0.000000e+00> : vector<90x8xf32>
    %29 = tpu.matmul %26, %28, %cst_34 {dimension_numbers = #tpu.dot_dimension_numbers<[1], [0], [0], [1], [0, 0, 1, 1], [], []>} : vector<90x3xbf16>, vector<3x8xbf16>, vector<90x8xf32> -> vector<90x8xf32>
    %30 = arith.addf %24, %29 : vector<90x8xf32>
    %c0_35 = arith.constant 0 : index
    %c3_36 = arith.constant 3 : index
    %c0_37 = arith.constant 0 : index
    %c0_38 = arith.constant 0 : index
    %31 = vector.load %arg2[%c0_35, %c3_36, %c0_37, %c0_38] : memref<1x4x104x3xbf16, #tpu.memory_space<vmem>>, vector<1x1x90x3xbf16>
    %32 = vector.shape_cast %31 : vector<1x1x90x3xbf16> to vector<90x3xbf16>
    %c5 = arith.constant 5 : index
    %c0_39 = arith.constant 0 : index
    %c0_40 = arith.constant 0 : index
    %33 = vector.load %arg3[%c5, %c0_39, %c0_40] : memref<16x3x8xbf16, #tpu.memory_space<vmem>>, vector<1x3x8xbf16>
    %34 = vector.shape_cast %33 : vector<1x3x8xbf16> to vector<3x8xbf16>
    %cst_41 = arith.constant dense<0.000000e+00> : vector<90x8xf32>
    %35 = tpu.matmul %32, %34, %cst_41 {dimension_numbers = #tpu.dot_dimension_numbers<[1], [0], [0], [1], [0, 0, 1, 1], [], []>} : vector<90x3xbf16>, vector<3x8xbf16>, vector<90x8xf32> -> vector<90x8xf32>
    %36 = arith.addf %30, %35 : vector<90x8xf32>
    %c0_42 = arith.constant 0 : index
    %c2_43 = arith.constant 2 : index
    %c1_44 = arith.constant 1 : index
    %c0_45 = arith.constant 0 : index
    %37 = vector.load %arg2[%c0_42, %c2_43, %c1_44, %c0_45] : memref<1x4x104x3xbf16, #tpu.memory_space<vmem>>, vector<1x1x90x3xbf16>
    %38 = vector.shape_cast %37 : vector<1x1x90x3xbf16> to vector<90x3xbf16>
    %c6 = arith.constant 6 : index
    %c0_46 = arith.constant 0 : index
    %c0_47 = arith.constant 0 : index
    %39 = vector.load %arg3[%c6, %c0_46, %c0_47] : memref<16x3x8xbf16, #tpu.memory_space<vmem>>, vector<1x3x8xbf16>
    %40 = vector.shape_cast %39 : vector<1x3x8xbf16> to vector<3x8xbf16>
    %cst_48 = arith.constant dense<0.000000e+00> : vector<90x8xf32>
    %41 = tpu.matmul %38, %40, %cst_48 {dimension_numbers = #tpu.dot_dimension_numbers<[1], [0], [0], [1], [0, 0, 1, 1], [], []>} : vector<90x3xbf16>, vector<3x8xbf16>, vector<90x8xf32> -> vector<90x8xf32>
    %42 = arith.addf %36, %41 : vector<90x8xf32>
    %c0_49 = arith.constant 0 : index
    %c3_50 = arith.constant 3 : index
    %c1_51 = arith.constant 1 : index
    %c0_52 = arith.constant 0 : index
    %43 = vector.load %arg2[%c0_49, %c3_50, %c1_51, %c0_52] : memref<1x4x104x3xbf16, #tpu.memory_space<vmem>>, vector<1x1x90x3xbf16>
    %44 = vector.shape_cast %43 : vector<1x1x90x3xbf16> to vector<90x3xbf16>
    %c7 = arith.constant 7 : index
    %c0_53 = arith.constant 0 : index
    %c0_54 = arith.constant 0 : index
    %45 = vector.load %arg3[%c7, %c0_53, %c0_54] : memref<16x3x8xbf16, #tpu.memory_space<vmem>>, vector<1x3x8xbf16>
    %46 = vector.shape_cast %45 : vector<1x3x8xbf16> to vector<3x8xbf16>
    %cst_55 = arith.constant dense<0.000000e+00> : vector<90x8xf32>
    %47 = tpu.matmul %44, %46, %cst_55 {dimension_numbers = #tpu.dot_dimension_numbers<[1], [0], [0], [1], [0, 0, 1, 1], [], []>} : vector<90x3xbf16>, vector<3x8xbf16>, vector<90x8xf32> -> vector<90x8xf32>
    %48 = arith.addf %42, %47 : vector<90x8xf32>
    %c0_56 = arith.constant 0 : index
    %c0_57 = arith.constant 0 : index
    %c10 = arith.constant 10 : index
    %c0_58 = arith.constant 0 : index
    %49 = vector.load %arg2[%c0_56, %c0_57, %c10, %c0_58] : memref<1x4x104x3xbf16, #tpu.memory_space<vmem>>, vector<1x1x90x3xbf16>
    %50 = vector.shape_cast %49 : vector<1x1x90x3xbf16> to vector<90x3xbf16>
    %c8 = arith.constant 8 : index
    %c0_59 = arith.constant 0 : index
    %c0_60 = arith.constant 0 : index
    %51 = vector.load %arg3[%c8, %c0_59, %c0_60] : memref<16x3x8xbf16, #tpu.memory_space<vmem>>, vector<1x3x8xbf16>
    %52 = vector.shape_cast %51 : vector<1x3x8xbf16> to vector<3x8xbf16>
    %cst_61 = arith.constant dense<0.000000e+00> : vector<90x8xf32>
    %53 = tpu.matmul %50, %52, %cst_61 {dimension_numbers = #tpu.dot_dimension_numbers<[1], [0], [0], [1], [0, 0, 1, 1], [], []>} : vector<90x3xbf16>, vector<3x8xbf16>, vector<90x8xf32> -> vector<90x8xf32>
    %54 = arith.addf %48, %53 : vector<90x8xf32>
    %c0_62 = arith.constant 0 : index
    %c1_63 = arith.constant 1 : index
    %c10_64 = arith.constant 10 : index
    %c0_65 = arith.constant 0 : index
    %55 = vector.load %arg2[%c0_62, %c1_63, %c10_64, %c0_65] : memref<1x4x104x3xbf16, #tpu.memory_space<vmem>>, vector<1x1x90x3xbf16>
    %56 = vector.shape_cast %55 : vector<1x1x90x3xbf16> to vector<90x3xbf16>
    %c9 = arith.constant 9 : index
    %c0_66 = arith.constant 0 : index
    %c0_67 = arith.constant 0 : index
    %57 = vector.load %arg3[%c9, %c0_66, %c0_67] : memref<16x3x8xbf16, #tpu.memory_space<vmem>>, vector<1x3x8xbf16>
    %58 = vector.shape_cast %57 : vector<1x3x8xbf16> to vector<3x8xbf16>
    %cst_68 = arith.constant dense<0.000000e+00> : vector<90x8xf32>
    %59 = tpu.matmul %56, %58, %cst_68 {dimension_numbers = #tpu.dot_dimension_numbers<[1], [0], [0], [1], [0, 0, 1, 1], [], []>} : vector<90x3xbf16>, vector<3x8xbf16>, vector<90x8xf32> -> vector<90x8xf32>
    %60 = arith.addf %54, %59 : vector<90x8xf32>
    %c0_69 = arith.constant 0 : index
    %c0_70 = arith.constant 0 : index
    %c11 = arith.constant 11 : index
    %c0_71 = arith.constant 0 : index
    %61 = vector.load %arg2[%c0_69, %c0_70, %c11, %c0_71] : memref<1x4x104x3xbf16, #tpu.memory_space<vmem>>, vector<1x1x90x3xbf16>
    %62 = vector.shape_cast %61 : vector<1x1x90x3xbf16> to vector<90x3xbf16>
    %c10_72 = arith.constant 10 : index
    %c0_73 = arith.constant 0 : index
    %c0_74 = arith.constant 0 : index
    %63 = vector.load %arg3[%c10_72, %c0_73, %c0_74] : memref<16x3x8xbf16, #tpu.memory_space<vmem>>, vector<1x3x8xbf16>
    %64 = vector.shape_cast %63 : vector<1x3x8xbf16> to vector<3x8xbf16>
    %cst_75 = arith.constant dense<0.000000e+00> : vector<90x8xf32>
    %65 = tpu.matmul %62, %64, %cst_75 {dimension_numbers = #tpu.dot_dimension_numbers<[1], [0], [0], [1], [0, 0, 1, 1], [], []>} : vector<90x3xbf16>, vector<3x8xbf16>, vector<90x8xf32> -> vector<90x8xf32>
    %66 = arith.addf %60, %65 : vector<90x8xf32>
    %c0_76 = arith.constant 0 : index
    %c1_77 = arith.constant 1 : index
    %c11_78 = arith.constant 11 : index
    %c0_79 = arith.constant 0 : index
    %67 = vector.load %arg2[%c0_76, %c1_77, %c11_78, %c0_79] : memref<1x4x104x3xbf16, #tpu.memory_space<vmem>>, vector<1x1x90x3xbf16>
    %68 = vector.shape_cast %67 : vector<1x1x90x3xbf16> to vector<90x3xbf16>
    %c11_80 = arith.constant 11 : index
    %c0_81 = arith.constant 0 : index
    %c0_82 = arith.constant 0 : index
    %69 = vector.load %arg3[%c11_80, %c0_81, %c0_82] : memref<16x3x8xbf16, #tpu.memory_space<vmem>>, vector<1x3x8xbf16>
    %70 = vector.shape_cast %69 : vector<1x3x8xbf16> to vector<3x8xbf16>
    %cst_83 = arith.constant dense<0.000000e+00> : vector<90x8xf32>
    %71 = tpu.matmul %68, %70, %cst_83 {dimension_numbers = #tpu.dot_dimension_numbers<[1], [0], [0], [1], [0, 0, 1, 1], [], []>} : vector<90x3xbf16>, vector<3x8xbf16>, vector<90x8xf32> -> vector<90x8xf32>
    %72 = arith.addf %66, %71 : vector<90x8xf32>
    %c0_84 = arith.constant 0 : index
    %c2_85 = arith.constant 2 : index
    %c10_86 = arith.constant 10 : index
    %c0_87 = arith.constant 0 : index
    %73 = vector.load %arg2[%c0_84, %c2_85, %c10_86, %c0_87] : memref<1x4x104x3xbf16, #tpu.memory_space<vmem>>, vector<1x1x90x3xbf16>
    %74 = vector.shape_cast %73 : vector<1x1x90x3xbf16> to vector<90x3xbf16>
    %c12 = arith.constant 12 : index
    %c0_88 = arith.constant 0 : index
    %c0_89 = arith.constant 0 : index
    %75 = vector.load %arg3[%c12, %c0_88, %c0_89] : memref<16x3x8xbf16, #tpu.memory_space<vmem>>, vector<1x3x8xbf16>
    %76 = vector.shape_cast %75 : vector<1x3x8xbf16> to vector<3x8xbf16>
    %cst_90 = arith.constant dense<0.000000e+00> : vector<90x8xf32>
    %77 = tpu.matmul %74, %76, %cst_90 {dimension_numbers = #tpu.dot_dimension_numbers<[1], [0], [0], [1], [0, 0, 1, 1], [], []>} : vector<90x3xbf16>, vector<3x8xbf16>, vector<90x8xf32> -> vector<90x8xf32>
    %78 = arith.addf %72, %77 : vector<90x8xf32>
    %c0_91 = arith.constant 0 : index
    %c3_92 = arith.constant 3 : index
    %c10_93 = arith.constant 10 : index
    %c0_94 = arith.constant 0 : index
    %79 = vector.load %arg2[%c0_91, %c3_92, %c10_93, %c0_94] : memref<1x4x104x3xbf16, #tpu.memory_space<vmem>>, vector<1x1x90x3xbf16>
    %80 = vector.shape_cast %79 : vector<1x1x90x3xbf16> to vector<90x3xbf16>
    %c13 = arith.constant 13 : index
    %c0_95 = arith.constant 0 : index
    %c0_96 = arith.constant 0 : index
    %81 = vector.load %arg3[%c13, %c0_95, %c0_96] : memref<16x3x8xbf16, #tpu.memory_space<vmem>>, vector<1x3x8xbf16>
    %82 = vector.shape_cast %81 : vector<1x3x8xbf16> to vector<3x8xbf16>
    %cst_97 = arith.constant dense<0.000000e+00> : vector<90x8xf32>
    %83 = tpu.matmul %80, %82, %cst_97 {dimension_numbers = #tpu.dot_dimension_numbers<[1], [0], [0], [1], [0, 0, 1, 1], [], []>} : vector<90x3xbf16>, vector<3x8xbf16>, vector<90x8xf32> -> vector<90x8xf32>
    %84 = arith.addf %78, %83 : vector<90x8xf32>
    %c0_98 = arith.constant 0 : index
    %c2_99 = arith.constant 2 : index
    %c11_100 = arith.constant 11 : index
    %c0_101 = arith.constant 0 : index
    %85 = vector.load %arg2[%c0_98, %c2_99, %c11_100, %c0_101] : memref<1x4x104x3xbf16, #tpu.memory_space<vmem>>, vector<1x1x90x3xbf16>
    %86 = vector.shape_cast %85 : vector<1x1x90x3xbf16> to vector<90x3xbf16>
    %c14 = arith.constant 14 : index
    %c0_102 = arith.constant 0 : index
    %c0_103 = arith.constant 0 : index
    %87 = vector.load %arg3[%c14, %c0_102, %c0_103] : memref<16x3x8xbf16, #tpu.memory_space<vmem>>, vector<1x3x8xbf16>
    %88 = vector.shape_cast %87 : vector<1x3x8xbf16> to vector<3x8xbf16>
    %cst_104 = arith.constant dense<0.000000e+00> : vector<90x8xf32>
    %89 = tpu.matmul %86, %88, %cst_104 {dimension_numbers = #tpu.dot_dimension_numbers<[1], [0], [0], [1], [0, 0, 1, 1], [], []>} : vector<90x3xbf16>, vector<3x8xbf16>, vector<90x8xf32> -> vector<90x8xf32>
    %90 = arith.addf %84, %89 : vector<90x8xf32>
    %c0_105 = arith.constant 0 : index
    %c3_106 = arith.constant 3 : index
    %c11_107 = arith.constant 11 : index
    %c0_108 = arith.constant 0 : index
    %91 = vector.load %arg2[%c0_105, %c3_106, %c11_107, %c0_108] : memref<1x4x104x3xbf16, #tpu.memory_space<vmem>>, vector<1x1x90x3xbf16>
    %92 = vector.shape_cast %91 : vector<1x1x90x3xbf16> to vector<90x3xbf16>
    %c15 = arith.constant 15 : index
    %c0_109 = arith.constant 0 : index
    %c0_110 = arith.constant 0 : index
    %93 = vector.load %arg3[%c15, %c0_109, %c0_110] : memref<16x3x8xbf16, #tpu.memory_space<vmem>>, vector<1x3x8xbf16>
    %94 = vector.shape_cast %93 : vector<1x3x8xbf16> to vector<3x8xbf16>
    %cst_111 = arith.constant dense<0.000000e+00> : vector<90x8xf32>
    %95 = tpu.matmul %92, %94, %cst_111 {dimension_numbers = #tpu.dot_dimension_numbers<[1], [0], [0], [1], [0, 0, 1, 1], [], []>} : vector<90x3xbf16>, vector<3x8xbf16>, vector<90x8xf32> -> vector<90x8xf32>
    %96 = arith.addf %90, %95 : vector<90x8xf32>
    %c0_112 = arith.constant 0 : index
    %c0_113 = arith.constant 0 : index
    %c0_114 = arith.constant 0 : index
    %97 = vector.load %arg4[%c0_112, %c0_113, %c0_114] : memref<1x1x8xf32, #tpu.memory_space<vmem>>, vector<1x1x8xf32>
    %98 = vector.shape_cast %97 : vector<1x1x8xf32> to vector<1x8xf32>
    %99 = vector.broadcast %98 : vector<1x8xf32> to vector<90x8xf32>
    %100 = arith.addf %96, %99 : vector<90x8xf32>
    %cst_115 = arith.constant 0.000000e+00 : f32
    %101 = vector.broadcast %cst_115 : f32 to vector<90x8xf32>
    %102 = arith.cmpf ogt, %100, %101 : vector<90x8xf32>
    %cst_116 = arith.constant 2.000000e-01 : f32
    %103 = vector.broadcast %cst_116 : f32 to vector<90x8xf32>
    %104 = arith.mulf %103, %100 : vector<90x8xf32>
    %105 = arith.select %102, %100, %104 : vector<90x8xi1>, vector<90x8xf32>
    %106 = arith.truncf %105 : vector<90x8xf32> to vector<90x8xbf16>
    %c0_117 = arith.constant 0 : index
    %c0_118 = arith.constant 0 : index
    %c0_119 = arith.constant 0 : index
    %107 = vector.load %arg5[%c0_117, %c0_118, %c0_119] : memref<1x90x8xbf16, #tpu.memory_space<vmem>>, vector<1x90x8xbf16>
    %108 = vector.shape_cast %107 : vector<1x90x8xbf16> to vector<90x8xbf16>
    %109 = vector.shape_cast %106 : vector<90x8xbf16> to vector<1x90x8xbf16>
    tpu.vector_store %arg5[%c0_117, %c0_118, %c0_119], %109 {strides = array<i32>} : memref<1x90x8xbf16, #tpu.memory_space<vmem>>, vector<1x90x8xbf16>,
    return
  }
  func.func @transform_0(%arg0: i32, %arg1: i32) -> (i32, i32, i32, i32) {
    %c0_i32 = arith.constant 0 : i32
    %c0_i32_0 = arith.constant 0 : i32
    %c0_i32_1 = arith.constant 0 : i32
    %c0_i32_2 = arith.constant 0 : i32
    return %arg0, %c0_i32, %c0_i32_0, %c0_i32_1 : i32, i32, i32, i32
  }
  func.func @transform_1(%arg0: i32, %arg1: i32) -> (i32, i32, i32) {
    %c0_i32 = arith.constant 0 : i32
    %c0_i32_0 = arith.constant 0 : i32
    %c0_i32_1 = arith.constant 0 : i32
    return %c0_i32, %c0_i32_0, %arg1 : i32, i32, i32
  }
  func.func @transform_2(%arg0: i32, %arg1: i32) -> (i32, i32, i32) {
    %c0_i32 = arith.constant 0 : i32
    %c0_i32_0 = arith.constant 0 : i32
    %c0_i32_1 = arith.constant 0 : i32
    return %c0_i32, %c0_i32_0, %arg1 : i32, i32, i32
  }
  func.func @transform_3(%arg0: i32, %arg1: i32) -> (i32, i32, i32) {
    %c0_i32 = arith.constant 0 : i32
    %c0_i32_0 = arith.constant 0 : i32
    return %arg0, %c0_i32, %arg1 : i32, i32, i32
  }
}

module attributes {stable_mosaic.version = 11 : i64} {
  func.func @_conv_tap_kernel(%arg0: i32, %arg1: i32, %arg2: memref<1x4x40x8xbf16, #tpu.memory_space<vmem>>, %arg3: memref<16x8x16xbf16, #tpu.memory_space<vmem>>, %arg4: memref<1x1x16xf32, #tpu.memory_space<vmem>>, %arg5: memref<1x30x1xf32, #tpu.memory_space<vmem>>, %arg6: memref<1x30x16xbf16, #tpu.memory_space<vmem>>, %arg7: memref<1x1x16xf32, #tpu.memory_space<vmem>>, %arg8: memref<1x1x16xf32, #tpu.memory_space<vmem>>) attributes {dimension_semantics = [#tpu.dimension_semantics<parallel>, #tpu.dimension_semantics<parallel>], iteration_bounds = array<i64: 2, 1>, scalar_prefetch = 0 : i64, scratch_operands = 0 : i64, tpu.core_type = #tpu.core_type<tc>, window_params = [{transform_indices = @transform_0, window_bounds = array<i64: 1, 4, 40, 8>}, {transform_indices = @transform_1, window_bounds = array<i64: 16, 8, 16>}, {transform_indices = @transform_2, window_bounds = array<i64: 1, 1, 16>}, {pipeline_mode = #tpu.pipeline_mode<synchronous>, transform_indices = @transform_3, window_bounds = array<i64: 1, 30, 1>}, {transform_indices = @transform_4, window_bounds = array<i64: 1, 30, 16>}, {transform_indices = @transform_5, window_bounds = array<i64: 1, 1, 16>}, {transform_indices = @transform_6, window_bounds = array<i64: 1, 1, 16>}]} {
    %cst = arith.constant 0.000000e+00 : f32
    %0 = vector.broadcast %cst : f32 to vector<30x16xf32>
    %c0 = arith.constant 0 : index
    %c0_0 = arith.constant 0 : index
    %c0_1 = arith.constant 0 : index
    %c0_2 = arith.constant 0 : index
    %1 = vector.load %arg2[%c0, %c0_0, %c0_1, %c0_2] : memref<1x4x40x8xbf16, #tpu.memory_space<vmem>>, vector<1x1x30x8xbf16>
    %2 = vector.shape_cast %1 : vector<1x1x30x8xbf16> to vector<30x8xbf16>
    %c0_3 = arith.constant 0 : index
    %c0_4 = arith.constant 0 : index
    %c0_5 = arith.constant 0 : index
    %3 = vector.load %arg3[%c0_3, %c0_4, %c0_5] : memref<16x8x16xbf16, #tpu.memory_space<vmem>>, vector<1x8x16xbf16>
    %4 = vector.shape_cast %3 : vector<1x8x16xbf16> to vector<8x16xbf16>
    %cst_6 = arith.constant dense<0.000000e+00> : vector<30x16xf32>
    %5 = tpu.matmul %2, %4, %cst_6 {dimension_numbers = #tpu.dot_dimension_numbers<[1], [0], [0], [1], [0, 0, 1, 1], [], []>} : vector<30x8xbf16>, vector<8x16xbf16>, vector<30x16xf32> -> vector<30x16xf32>
    %6 = arith.addf %0, %5 : vector<30x16xf32>
    %c0_7 = arith.constant 0 : index
    %c1 = arith.constant 1 : index
    %c0_8 = arith.constant 0 : index
    %c0_9 = arith.constant 0 : index
    %7 = vector.load %arg2[%c0_7, %c1, %c0_8, %c0_9] : memref<1x4x40x8xbf16, #tpu.memory_space<vmem>>, vector<1x1x30x8xbf16>
    %8 = vector.shape_cast %7 : vector<1x1x30x8xbf16> to vector<30x8xbf16>
    %c1_10 = arith.constant 1 : index
    %c0_11 = arith.constant 0 : index
    %c0_12 = arith.constant 0 : index
    %9 = vector.load %arg3[%c1_10, %c0_11, %c0_12] : memref<16x8x16xbf16, #tpu.memory_space<vmem>>, vector<1x8x16xbf16>
    %10 = vector.shape_cast %9 : vector<1x8x16xbf16> to vector<8x16xbf16>
    %cst_13 = arith.constant dense<0.000000e+00> : vector<30x16xf32>
    %11 = tpu.matmul %8, %10, %cst_13 {dimension_numbers = #tpu.dot_dimension_numbers<[1], [0], [0], [1], [0, 0, 1, 1], [], []>} : vector<30x8xbf16>, vector<8x16xbf16>, vector<30x16xf32> -> vector<30x16xf32>
    %12 = arith.addf %6, %11 : vector<30x16xf32>
    %c0_14 = arith.constant 0 : index
    %c0_15 = arith.constant 0 : index
    %c1_16 = arith.constant 1 : index
    %c0_17 = arith.constant 0 : index
    %13 = vector.load %arg2[%c0_14, %c0_15, %c1_16, %c0_17] : memref<1x4x40x8xbf16, #tpu.memory_space<vmem>>, vector<1x1x30x8xbf16>
    %14 = vector.shape_cast %13 : vector<1x1x30x8xbf16> to vector<30x8xbf16>
    %c2 = arith.constant 2 : index
    %c0_18 = arith.constant 0 : index
    %c0_19 = arith.constant 0 : index
    %15 = vector.load %arg3[%c2, %c0_18, %c0_19] : memref<16x8x16xbf16, #tpu.memory_space<vmem>>, vector<1x8x16xbf16>
    %16 = vector.shape_cast %15 : vector<1x8x16xbf16> to vector<8x16xbf16>
    %cst_20 = arith.constant dense<0.000000e+00> : vector<30x16xf32>
    %17 = tpu.matmul %14, %16, %cst_20 {dimension_numbers = #tpu.dot_dimension_numbers<[1], [0], [0], [1], [0, 0, 1, 1], [], []>} : vector<30x8xbf16>, vector<8x16xbf16>, vector<30x16xf32> -> vector<30x16xf32>
    %18 = arith.addf %12, %17 : vector<30x16xf32>
    %c0_21 = arith.constant 0 : index
    %c1_22 = arith.constant 1 : index
    %c1_23 = arith.constant 1 : index
    %c0_24 = arith.constant 0 : index
    %19 = vector.load %arg2[%c0_21, %c1_22, %c1_23, %c0_24] : memref<1x4x40x8xbf16, #tpu.memory_space<vmem>>, vector<1x1x30x8xbf16>
    %20 = vector.shape_cast %19 : vector<1x1x30x8xbf16> to vector<30x8xbf16>
    %c3 = arith.constant 3 : index
    %c0_25 = arith.constant 0 : index
    %c0_26 = arith.constant 0 : index
    %21 = vector.load %arg3[%c3, %c0_25, %c0_26] : memref<16x8x16xbf16, #tpu.memory_space<vmem>>, vector<1x8x16xbf16>
    %22 = vector.shape_cast %21 : vector<1x8x16xbf16> to vector<8x16xbf16>
    %cst_27 = arith.constant dense<0.000000e+00> : vector<30x16xf32>
    %23 = tpu.matmul %20, %22, %cst_27 {dimension_numbers = #tpu.dot_dimension_numbers<[1], [0], [0], [1], [0, 0, 1, 1], [], []>} : vector<30x8xbf16>, vector<8x16xbf16>, vector<30x16xf32> -> vector<30x16xf32>
    %24 = arith.addf %18, %23 : vector<30x16xf32>
    %c0_28 = arith.constant 0 : index
    %c2_29 = arith.constant 2 : index
    %c0_30 = arith.constant 0 : index
    %c0_31 = arith.constant 0 : index
    %25 = vector.load %arg2[%c0_28, %c2_29, %c0_30, %c0_31] : memref<1x4x40x8xbf16, #tpu.memory_space<vmem>>, vector<1x1x30x8xbf16>
    %26 = vector.shape_cast %25 : vector<1x1x30x8xbf16> to vector<30x8xbf16>
    %c4 = arith.constant 4 : index
    %c0_32 = arith.constant 0 : index
    %c0_33 = arith.constant 0 : index
    %27 = vector.load %arg3[%c4, %c0_32, %c0_33] : memref<16x8x16xbf16, #tpu.memory_space<vmem>>, vector<1x8x16xbf16>
    %28 = vector.shape_cast %27 : vector<1x8x16xbf16> to vector<8x16xbf16>
    %cst_34 = arith.constant dense<0.000000e+00> : vector<30x16xf32>
    %29 = tpu.matmul %26, %28, %cst_34 {dimension_numbers = #tpu.dot_dimension_numbers<[1], [0], [0], [1], [0, 0, 1, 1], [], []>} : vector<30x8xbf16>, vector<8x16xbf16>, vector<30x16xf32> -> vector<30x16xf32>
    %30 = arith.addf %24, %29 : vector<30x16xf32>
    %c0_35 = arith.constant 0 : index
    %c3_36 = arith.constant 3 : index
    %c0_37 = arith.constant 0 : index
    %c0_38 = arith.constant 0 : index
    %31 = vector.load %arg2[%c0_35, %c3_36, %c0_37, %c0_38] : memref<1x4x40x8xbf16, #tpu.memory_space<vmem>>, vector<1x1x30x8xbf16>
    %32 = vector.shape_cast %31 : vector<1x1x30x8xbf16> to vector<30x8xbf16>
    %c5 = arith.constant 5 : index
    %c0_39 = arith.constant 0 : index
    %c0_40 = arith.constant 0 : index
    %33 = vector.load %arg3[%c5, %c0_39, %c0_40] : memref<16x8x16xbf16, #tpu.memory_space<vmem>>, vector<1x8x16xbf16>
    %34 = vector.shape_cast %33 : vector<1x8x16xbf16> to vector<8x16xbf16>
    %cst_41 = arith.constant dense<0.000000e+00> : vector<30x16xf32>
    %35 = tpu.matmul %32, %34, %cst_41 {dimension_numbers = #tpu.dot_dimension_numbers<[1], [0], [0], [1], [0, 0, 1, 1], [], []>} : vector<30x8xbf16>, vector<8x16xbf16>, vector<30x16xf32> -> vector<30x16xf32>
    %36 = arith.addf %30, %35 : vector<30x16xf32>
    %c0_42 = arith.constant 0 : index
    %c2_43 = arith.constant 2 : index
    %c1_44 = arith.constant 1 : index
    %c0_45 = arith.constant 0 : index
    %37 = vector.load %arg2[%c0_42, %c2_43, %c1_44, %c0_45] : memref<1x4x40x8xbf16, #tpu.memory_space<vmem>>, vector<1x1x30x8xbf16>
    %38 = vector.shape_cast %37 : vector<1x1x30x8xbf16> to vector<30x8xbf16>
    %c6 = arith.constant 6 : index
    %c0_46 = arith.constant 0 : index
    %c0_47 = arith.constant 0 : index
    %39 = vector.load %arg3[%c6, %c0_46, %c0_47] : memref<16x8x16xbf16, #tpu.memory_space<vmem>>, vector<1x8x16xbf16>
    %40 = vector.shape_cast %39 : vector<1x8x16xbf16> to vector<8x16xbf16>
    %cst_48 = arith.constant dense<0.000000e+00> : vector<30x16xf32>
    %41 = tpu.matmul %38, %40, %cst_48 {dimension_numbers = #tpu.dot_dimension_numbers<[1], [0], [0], [1], [0, 0, 1, 1], [], []>} : vector<30x8xbf16>, vector<8x16xbf16>, vector<30x16xf32> -> vector<30x16xf32>
    %42 = arith.addf %36, %41 : vector<30x16xf32>
    %c0_49 = arith.constant 0 : index
    %c3_50 = arith.constant 3 : index
    %c1_51 = arith.constant 1 : index
    %c0_52 = arith.constant 0 : index
    %43 = vector.load %arg2[%c0_49, %c3_50, %c1_51, %c0_52] : memref<1x4x40x8xbf16, #tpu.memory_space<vmem>>, vector<1x1x30x8xbf16>
    %44 = vector.shape_cast %43 : vector<1x1x30x8xbf16> to vector<30x8xbf16>
    %c7 = arith.constant 7 : index
    %c0_53 = arith.constant 0 : index
    %c0_54 = arith.constant 0 : index
    %45 = vector.load %arg3[%c7, %c0_53, %c0_54] : memref<16x8x16xbf16, #tpu.memory_space<vmem>>, vector<1x8x16xbf16>
    %46 = vector.shape_cast %45 : vector<1x8x16xbf16> to vector<8x16xbf16>
    %cst_55 = arith.constant dense<0.000000e+00> : vector<30x16xf32>
    %47 = tpu.matmul %44, %46, %cst_55 {dimension_numbers = #tpu.dot_dimension_numbers<[1], [0], [0], [1], [0, 0, 1, 1], [], []>} : vector<30x8xbf16>, vector<8x16xbf16>, vector<30x16xf32> -> vector<30x16xf32>
    %48 = arith.addf %42, %47 : vector<30x16xf32>
    %c0_56 = arith.constant 0 : index
    %c0_57 = arith.constant 0 : index
    %c6_58 = arith.constant 6 : index
    %c0_59 = arith.constant 0 : index
    %49 = vector.load %arg2[%c0_56, %c0_57, %c6_58, %c0_59] : memref<1x4x40x8xbf16, #tpu.memory_space<vmem>>, vector<1x1x30x8xbf16>
    %50 = vector.shape_cast %49 : vector<1x1x30x8xbf16> to vector<30x8xbf16>
    %c8 = arith.constant 8 : index
    %c0_60 = arith.constant 0 : index
    %c0_61 = arith.constant 0 : index
    %51 = vector.load %arg3[%c8, %c0_60, %c0_61] : memref<16x8x16xbf16, #tpu.memory_space<vmem>>, vector<1x8x16xbf16>
    %52 = vector.shape_cast %51 : vector<1x8x16xbf16> to vector<8x16xbf16>
    %cst_62 = arith.constant dense<0.000000e+00> : vector<30x16xf32>
    %53 = tpu.matmul %50, %52, %cst_62 {dimension_numbers = #tpu.dot_dimension_numbers<[1], [0], [0], [1], [0, 0, 1, 1], [], []>} : vector<30x8xbf16>, vector<8x16xbf16>, vector<30x16xf32> -> vector<30x16xf32>
    %54 = arith.addf %48, %53 : vector<30x16xf32>
    %c0_63 = arith.constant 0 : index
    %c1_64 = arith.constant 1 : index
    %c6_65 = arith.constant 6 : index
    %c0_66 = arith.constant 0 : index
    %55 = vector.load %arg2[%c0_63, %c1_64, %c6_65, %c0_66] : memref<1x4x40x8xbf16, #tpu.memory_space<vmem>>, vector<1x1x30x8xbf16>
    %56 = vector.shape_cast %55 : vector<1x1x30x8xbf16> to vector<30x8xbf16>
    %c9 = arith.constant 9 : index
    %c0_67 = arith.constant 0 : index
    %c0_68 = arith.constant 0 : index
    %57 = vector.load %arg3[%c9, %c0_67, %c0_68] : memref<16x8x16xbf16, #tpu.memory_space<vmem>>, vector<1x8x16xbf16>
    %58 = vector.shape_cast %57 : vector<1x8x16xbf16> to vector<8x16xbf16>
    %cst_69 = arith.constant dense<0.000000e+00> : vector<30x16xf32>
    %59 = tpu.matmul %56, %58, %cst_69 {dimension_numbers = #tpu.dot_dimension_numbers<[1], [0], [0], [1], [0, 0, 1, 1], [], []>} : vector<30x8xbf16>, vector<8x16xbf16>, vector<30x16xf32> -> vector<30x16xf32>
    %60 = arith.addf %54, %59 : vector<30x16xf32>
    %c0_70 = arith.constant 0 : index
    %c0_71 = arith.constant 0 : index
    %c7_72 = arith.constant 7 : index
    %c0_73 = arith.constant 0 : index
    %61 = vector.load %arg2[%c0_70, %c0_71, %c7_72, %c0_73] : memref<1x4x40x8xbf16, #tpu.memory_space<vmem>>, vector<1x1x30x8xbf16>
    %62 = vector.shape_cast %61 : vector<1x1x30x8xbf16> to vector<30x8xbf16>
    %c10 = arith.constant 10 : index
    %c0_74 = arith.constant 0 : index
    %c0_75 = arith.constant 0 : index
    %63 = vector.load %arg3[%c10, %c0_74, %c0_75] : memref<16x8x16xbf16, #tpu.memory_space<vmem>>, vector<1x8x16xbf16>
    %64 = vector.shape_cast %63 : vector<1x8x16xbf16> to vector<8x16xbf16>
    %cst_76 = arith.constant dense<0.000000e+00> : vector<30x16xf32>
    %65 = tpu.matmul %62, %64, %cst_76 {dimension_numbers = #tpu.dot_dimension_numbers<[1], [0], [0], [1], [0, 0, 1, 1], [], []>} : vector<30x8xbf16>, vector<8x16xbf16>, vector<30x16xf32> -> vector<30x16xf32>
    %66 = arith.addf %60, %65 : vector<30x16xf32>
    %c0_77 = arith.constant 0 : index
    %c1_78 = arith.constant 1 : index
    %c7_79 = arith.constant 7 : index
    %c0_80 = arith.constant 0 : index
    %67 = vector.load %arg2[%c0_77, %c1_78, %c7_79, %c0_80] : memref<1x4x40x8xbf16, #tpu.memory_space<vmem>>, vector<1x1x30x8xbf16>
    %68 = vector.shape_cast %67 : vector<1x1x30x8xbf16> to vector<30x8xbf16>
    %c11 = arith.constant 11 : index
    %c0_81 = arith.constant 0 : index
    %c0_82 = arith.constant 0 : index
    %69 = vector.load %arg3[%c11, %c0_81, %c0_82] : memref<16x8x16xbf16, #tpu.memory_space<vmem>>, vector<1x8x16xbf16>
    %70 = vector.shape_cast %69 : vector<1x8x16xbf16> to vector<8x16xbf16>
    %cst_83 = arith.constant dense<0.000000e+00> : vector<30x16xf32>
    %71 = tpu.matmul %68, %70, %cst_83 {dimension_numbers = #tpu.dot_dimension_numbers<[1], [0], [0], [1], [0, 0, 1, 1], [], []>} : vector<30x8xbf16>, vector<8x16xbf16>, vector<30x16xf32> -> vector<30x16xf32>
    %72 = arith.addf %66, %71 : vector<30x16xf32>
    %c0_84 = arith.constant 0 : index
    %c2_85 = arith.constant 2 : index
    %c6_86 = arith.constant 6 : index
    %c0_87 = arith.constant 0 : index
    %73 = vector.load %arg2[%c0_84, %c2_85, %c6_86, %c0_87] : memref<1x4x40x8xbf16, #tpu.memory_space<vmem>>, vector<1x1x30x8xbf16>
    %74 = vector.shape_cast %73 : vector<1x1x30x8xbf16> to vector<30x8xbf16>
    %c12 = arith.constant 12 : index
    %c0_88 = arith.constant 0 : index
    %c0_89 = arith.constant 0 : index
    %75 = vector.load %arg3[%c12, %c0_88, %c0_89] : memref<16x8x16xbf16, #tpu.memory_space<vmem>>, vector<1x8x16xbf16>
    %76 = vector.shape_cast %75 : vector<1x8x16xbf16> to vector<8x16xbf16>
    %cst_90 = arith.constant dense<0.000000e+00> : vector<30x16xf32>
    %77 = tpu.matmul %74, %76, %cst_90 {dimension_numbers = #tpu.dot_dimension_numbers<[1], [0], [0], [1], [0, 0, 1, 1], [], []>} : vector<30x8xbf16>, vector<8x16xbf16>, vector<30x16xf32> -> vector<30x16xf32>
    %78 = arith.addf %72, %77 : vector<30x16xf32>
    %c0_91 = arith.constant 0 : index
    %c3_92 = arith.constant 3 : index
    %c6_93 = arith.constant 6 : index
    %c0_94 = arith.constant 0 : index
    %79 = vector.load %arg2[%c0_91, %c3_92, %c6_93, %c0_94] : memref<1x4x40x8xbf16, #tpu.memory_space<vmem>>, vector<1x1x30x8xbf16>
    %80 = vector.shape_cast %79 : vector<1x1x30x8xbf16> to vector<30x8xbf16>
    %c13 = arith.constant 13 : index
    %c0_95 = arith.constant 0 : index
    %c0_96 = arith.constant 0 : index
    %81 = vector.load %arg3[%c13, %c0_95, %c0_96] : memref<16x8x16xbf16, #tpu.memory_space<vmem>>, vector<1x8x16xbf16>
    %82 = vector.shape_cast %81 : vector<1x8x16xbf16> to vector<8x16xbf16>
    %cst_97 = arith.constant dense<0.000000e+00> : vector<30x16xf32>
    %83 = tpu.matmul %80, %82, %cst_97 {dimension_numbers = #tpu.dot_dimension_numbers<[1], [0], [0], [1], [0, 0, 1, 1], [], []>} : vector<30x8xbf16>, vector<8x16xbf16>, vector<30x16xf32> -> vector<30x16xf32>
    %84 = arith.addf %78, %83 : vector<30x16xf32>
    %c0_98 = arith.constant 0 : index
    %c2_99 = arith.constant 2 : index
    %c7_100 = arith.constant 7 : index
    %c0_101 = arith.constant 0 : index
    %85 = vector.load %arg2[%c0_98, %c2_99, %c7_100, %c0_101] : memref<1x4x40x8xbf16, #tpu.memory_space<vmem>>, vector<1x1x30x8xbf16>
    %86 = vector.shape_cast %85 : vector<1x1x30x8xbf16> to vector<30x8xbf16>
    %c14 = arith.constant 14 : index
    %c0_102 = arith.constant 0 : index
    %c0_103 = arith.constant 0 : index
    %87 = vector.load %arg3[%c14, %c0_102, %c0_103] : memref<16x8x16xbf16, #tpu.memory_space<vmem>>, vector<1x8x16xbf16>
    %88 = vector.shape_cast %87 : vector<1x8x16xbf16> to vector<8x16xbf16>
    %cst_104 = arith.constant dense<0.000000e+00> : vector<30x16xf32>
    %89 = tpu.matmul %86, %88, %cst_104 {dimension_numbers = #tpu.dot_dimension_numbers<[1], [0], [0], [1], [0, 0, 1, 1], [], []>} : vector<30x8xbf16>, vector<8x16xbf16>, vector<30x16xf32> -> vector<30x16xf32>
    %90 = arith.addf %84, %89 : vector<30x16xf32>
    %c0_105 = arith.constant 0 : index
    %c3_106 = arith.constant 3 : index
    %c7_107 = arith.constant 7 : index
    %c0_108 = arith.constant 0 : index
    %91 = vector.load %arg2[%c0_105, %c3_106, %c7_107, %c0_108] : memref<1x4x40x8xbf16, #tpu.memory_space<vmem>>, vector<1x1x30x8xbf16>
    %92 = vector.shape_cast %91 : vector<1x1x30x8xbf16> to vector<30x8xbf16>
    %c15 = arith.constant 15 : index
    %c0_109 = arith.constant 0 : index
    %c0_110 = arith.constant 0 : index
    %93 = vector.load %arg3[%c15, %c0_109, %c0_110] : memref<16x8x16xbf16, #tpu.memory_space<vmem>>, vector<1x8x16xbf16>
    %94 = vector.shape_cast %93 : vector<1x8x16xbf16> to vector<8x16xbf16>
    %cst_111 = arith.constant dense<0.000000e+00> : vector<30x16xf32>
    %95 = tpu.matmul %92, %94, %cst_111 {dimension_numbers = #tpu.dot_dimension_numbers<[1], [0], [0], [1], [0, 0, 1, 1], [], []>} : vector<30x8xbf16>, vector<8x16xbf16>, vector<30x16xf32> -> vector<30x16xf32>
    %96 = arith.addf %90, %95 : vector<30x16xf32>
    %c0_112 = arith.constant 0 : index
    %c0_113 = arith.constant 0 : index
    %c0_114 = arith.constant 0 : index
    %97 = vector.load %arg4[%c0_112, %c0_113, %c0_114] : memref<1x1x16xf32, #tpu.memory_space<vmem>>, vector<1x1x16xf32>
    %98 = vector.shape_cast %97 : vector<1x1x16xf32> to vector<1x16xf32>
    %99 = vector.broadcast %98 : vector<1x16xf32> to vector<30x16xf32>
    %100 = arith.addf %96, %99 : vector<30x16xf32>
    %101 = arith.truncf %100 : vector<30x16xf32> to vector<30x16xbf16>
    %c0_115 = arith.constant 0 : index
    %c0_116 = arith.constant 0 : index
    %c0_117 = arith.constant 0 : index
    %102 = vector.load %arg6[%c0_115, %c0_116, %c0_117] : memref<1x30x16xbf16, #tpu.memory_space<vmem>>, vector<1x30x16xbf16>
    %103 = vector.shape_cast %102 : vector<1x30x16xbf16> to vector<30x16xbf16>
    %104 = vector.shape_cast %101 : vector<30x16xbf16> to vector<1x30x16xbf16>
    tpu.vector_store %arg6[%c0_115, %c0_116, %c0_117], %104 {strides = array<i32>} : memref<1x30x16xbf16, #tpu.memory_space<vmem>>, vector<1x30x16xbf16>,
    %c0_118 = arith.constant 0 : index
    %c0_119 = arith.constant 0 : index
    %c0_120 = arith.constant 0 : index
    %105 = vector.load %arg5[%c0_118, %c0_119, %c0_120] : memref<1x30x1xf32, #tpu.memory_space<vmem>>, vector<1x30x1xf32>
    %106 = vector.shape_cast %105 : vector<1x30x1xf32> to vector<30x1xf32>
    %107 = vector.broadcast %106 : vector<30x1xf32> to vector<30x16xf32>
    %108 = arith.mulf %100, %107 : vector<30x16xf32>
    %cst_121 = arith.constant dense<0.000000e+00> : vector<16xf32>
    %109 = vector.multi_reduction <add>, %108, %cst_121 [0] : vector<30x16xf32> to vector<16xf32>
    %110 = vector.shape_cast %109 : vector<16xf32> to vector<1x16xf32>
    %cst_122 = arith.constant 4.000000e-02 : f32
    %111 = vector.broadcast %cst_122 : f32 to vector<1x16xf32>
    %112 = arith.mulf %110, %111 : vector<1x16xf32>
    %113 = vector.broadcast %112 : vector<1x16xf32> to vector<30x16xf32>
    %114 = arith.subf %100, %113 : vector<30x16xf32>
    %115 = vector.broadcast %106 : vector<30x1xf32> to vector<30x16xf32>
    %116 = arith.mulf %114, %115 : vector<30x16xf32>
    %c0_123 = arith.constant 0 : index
    %c0_124 = arith.constant 0 : index
    %c0_125 = arith.constant 0 : index
    %117 = vector.load %arg7[%c0_123, %c0_124, %c0_125] : memref<1x1x16xf32, #tpu.memory_space<vmem>>, vector<1x1x16xf32>
    %118 = vector.shape_cast %117 : vector<1x1x16xf32> to vector<1x16xf32>
    %119 = vector.shape_cast %110 : vector<1x16xf32> to vector<1x1x16xf32>
    tpu.vector_store %arg7[%c0_123, %c0_124, %c0_125], %119 {strides = array<i32>} : memref<1x1x16xf32, #tpu.memory_space<vmem>>, vector<1x1x16xf32>,
    %120 = arith.mulf %116, %116 : vector<30x16xf32>
    %cst_126 = arith.constant dense<0.000000e+00> : vector<16xf32>
    %121 = vector.multi_reduction <add>, %120, %cst_126 [0] : vector<30x16xf32> to vector<16xf32>
    %122 = vector.shape_cast %121 : vector<16xf32> to vector<1x16xf32>
    %c0_127 = arith.constant 0 : index
    %c0_128 = arith.constant 0 : index
    %c0_129 = arith.constant 0 : index
    %123 = vector.load %arg8[%c0_127, %c0_128, %c0_129] : memref<1x1x16xf32, #tpu.memory_space<vmem>>, vector<1x1x16xf32>
    %124 = vector.shape_cast %123 : vector<1x1x16xf32> to vector<1x16xf32>
    %125 = vector.shape_cast %122 : vector<1x16xf32> to vector<1x1x16xf32>
    tpu.vector_store %arg8[%c0_127, %c0_128, %c0_129], %125 {strides = array<i32>} : memref<1x1x16xf32, #tpu.memory_space<vmem>>, vector<1x1x16xf32>,
    return
  }
  func.func @transform_0(%arg0: i32, %arg1: i32) -> (i32, i32, i32, i32) {
    %c0_i32 = arith.constant 0 : i32
    %c0_i32_0 = arith.constant 0 : i32
    %c0_i32_1 = arith.constant 0 : i32
    %c0_i32_2 = arith.constant 0 : i32
    return %arg0, %c0_i32, %c0_i32_0, %c0_i32_1 : i32, i32, i32, i32
  }
  func.func @transform_1(%arg0: i32, %arg1: i32) -> (i32, i32, i32) {
    %c0_i32 = arith.constant 0 : i32
    %c0_i32_0 = arith.constant 0 : i32
    %c0_i32_1 = arith.constant 0 : i32
    return %c0_i32, %c0_i32_0, %arg1 : i32, i32, i32
  }
  func.func @transform_2(%arg0: i32, %arg1: i32) -> (i32, i32, i32) {
    %c0_i32 = arith.constant 0 : i32
    %c0_i32_0 = arith.constant 0 : i32
    %c0_i32_1 = arith.constant 0 : i32
    return %c0_i32, %c0_i32_0, %arg1 : i32, i32, i32
  }
  func.func @transform_3(%arg0: i32, %arg1: i32) -> (i32, i32, i32) {
    %c0_i32 = arith.constant 0 : i32
    %c0_i32_0 = arith.constant 0 : i32
    %c0_i32_1 = arith.constant 0 : i32
    %c0_i32_2 = arith.constant 0 : i32
    return %c0_i32, %c0_i32_0, %c0_i32_1 : i32, i32, i32
  }
  func.func @transform_4(%arg0: i32, %arg1: i32) -> (i32, i32, i32) {
    %c0_i32 = arith.constant 0 : i32
    %c0_i32_0 = arith.constant 0 : i32
    return %arg0, %c0_i32, %arg1 : i32, i32, i32
  }
  func.func @transform_5(%arg0: i32, %arg1: i32) -> (i32, i32, i32) {
    %c0_i32 = arith.constant 0 : i32
    %c0_i32_0 = arith.constant 0 : i32
    return %arg0, %c0_i32, %arg1 : i32, i32, i32
  }
  func.func @transform_6(%arg0: i32, %arg1: i32) -> (i32, i32, i32) {
    %c0_i32 = arith.constant 0 : i32
    %c0_i32_0 = arith.constant 0 : i32
    return %arg0, %c0_i32, %arg1 : i32, i32, i32
  }
}

module attributes {stable_mosaic.version = 11 : i64} {
  func.func @_conv_tap_kernel(%arg0: i32, %arg1: i32, %arg2: memref<1x4x24x16xbf16, #tpu.memory_space<vmem>>, %arg3: memref<16x16x32xbf16, #tpu.memory_space<vmem>>, %arg4: memref<1x1x32xf32, #tpu.memory_space<vmem>>, %arg5: memref<1x1x16xf32, #tpu.memory_space<vmem>>, %arg6: memref<1x1x16xf32, #tpu.memory_space<vmem>>, %arg7: memref<1x4x24x1xf32, #tpu.memory_space<vmem>>, %arg8: memref<1x12x1xf32, #tpu.memory_space<vmem>>, %arg9: memref<1x12x32xbf16, #tpu.memory_space<vmem>>, %arg10: memref<1x1x32xf32, #tpu.memory_space<vmem>>, %arg11: memref<1x1x32xf32, #tpu.memory_space<vmem>>, %arg12: memref<4x24x16xbf16, #tpu.memory_space<vmem>>) attributes {dimension_semantics = [#tpu.dimension_semantics<parallel>, #tpu.dimension_semantics<parallel>], iteration_bounds = array<i64: 2, 1>, scalar_prefetch = 0 : i64, scratch_operands = 1 : i64, tpu.core_type = #tpu.core_type<tc>, window_params = [{transform_indices = @transform_0, window_bounds = array<i64: 1, 4, 24, 16>}, {transform_indices = @transform_1, window_bounds = array<i64: 16, 16, 32>}, {transform_indices = @transform_2, window_bounds = array<i64: 1, 1, 32>}, {pipeline_mode = #tpu.pipeline_mode<synchronous>, transform_indices = @transform_3, window_bounds = array<i64: 1, 1, 16>}, {pipeline_mode = #tpu.pipeline_mode<synchronous>, transform_indices = @transform_4, window_bounds = array<i64: 1, 1, 16>}, {pipeline_mode = #tpu.pipeline_mode<synchronous>, transform_indices = @transform_5, window_bounds = array<i64: 1, 4, 24, 1>}, {pipeline_mode = #tpu.pipeline_mode<synchronous>, transform_indices = @transform_6, window_bounds = array<i64: 1, 12, 1>}, {transform_indices = @transform_7, window_bounds = array<i64: 1, 12, 32>}, {transform_indices = @transform_8, window_bounds = array<i64: 1, 1, 32>}, {transform_indices = @transform_9, window_bounds = array<i64: 1, 1, 32>}]} {
    %c0 = arith.constant 0 : index
    %c0_0 = arith.constant 0 : index
    %c0_1 = arith.constant 0 : index
    %c0_2 = arith.constant 0 : index
    %0 = vector.load %arg2[%c0, %c0_0, %c0_1, %c0_2] : memref<1x4x24x16xbf16, #tpu.memory_space<vmem>>, vector<1x4x24x16xbf16>
    %1 = vector.shape_cast %0 : vector<1x4x24x16xbf16> to vector<4x24x16xbf16>
    %2 = arith.extf %1 : vector<4x24x16xbf16> to vector<4x24x16xf32>
    %c0_3 = arith.constant 0 : index
    %c0_4 = arith.constant 0 : index
    %c0_5 = arith.constant 0 : index
    %3 = vector.load %arg5[%c0_3, %c0_4, %c0_5] : memref<1x1x16xf32, #tpu.memory_space<vmem>>, vector<1x1x16xf32>
    %4 = vector.shape_cast %3 : vector<1x1x16xf32> to vector<1x16xf32>
    %5 = vector.shape_cast %4 : vector<1x16xf32> to vector<1x1x16xf32>
    %6 = vector.broadcast %5 : vector<1x1x16xf32> to vector<4x24x16xf32>
    %7 = arith.mulf %2, %6 : vector<4x24x16xf32>
    %c0_6 = arith.constant 0 : index
    %c0_7 = arith.constant 0 : index
    %c0_8 = arith.constant 0 : index
    %8 = vector.load %arg6[%c0_6, %c0_7, %c0_8] : memref<1x1x16xf32, #tpu.memory_space<vmem>>, vector<1x1x16xf32>
    %9 = vector.shape_cast %8 : vector<1x1x16xf32> to vector<1x16xf32>
    %10 = vector.shape_cast %9 : vector<1x16xf32> to vector<1x1x16xf32>
    %11 = vector.broadcast %10 : vector<1x1x16xf32> to vector<4x24x16xf32>
    %12 = arith.addf %7, %11 : vector<4x24x16xf32>
    %cst = arith.constant 0.000000e+00 : f32
    %13 = vector.broadcast %cst : f32 to vector<4x24x16xf32>
    %14 = arith.cmpf ogt, %12, %13 : vector<4x24x16xf32>
    %cst_9 = arith.constant 2.000000e-01 : f32
    %15 = vector.broadcast %cst_9 : f32 to vector<4x24x16xf32>
    %16 = arith.mulf %15, %12 : vector<4x24x16xf32>
    %17 = arith.select %14, %12, %16 : vector<4x24x16xi1>, vector<4x24x16xf32>
    %c0_10 = arith.constant 0 : index
    %c0_11 = arith.constant 0 : index
    %c0_12 = arith.constant 0 : index
    %c0_13 = arith.constant 0 : index
    %18 = vector.load %arg7[%c0_10, %c0_11, %c0_12, %c0_13] : memref<1x4x24x1xf32, #tpu.memory_space<vmem>>, vector<1x4x24x1xf32>
    %19 = vector.shape_cast %18 : vector<1x4x24x1xf32> to vector<4x24x1xf32>
    %20 = vector.broadcast %19 : vector<4x24x1xf32> to vector<4x24x16xf32>
    %21 = arith.mulf %17, %20 : vector<4x24x16xf32>
    %22 = arith.truncf %21 : vector<4x24x16xf32> to vector<4x24x16xbf16>
    %c0_14 = arith.constant 0 : index
    %c0_15 = arith.constant 0 : index
    %c0_16 = arith.constant 0 : index
    %23 = vector.load %arg12[%c0_14, %c0_15, %c0_16] : memref<4x24x16xbf16, #tpu.memory_space<vmem>>, vector<4x24x16xbf16>
    tpu.vector_store %arg12[%c0_14, %c0_15, %c0_16], %22 {strides = array<i32>} : memref<4x24x16xbf16, #tpu.memory_space<vmem>>, vector<4x24x16xbf16>,
    %cst_17 = arith.constant 0.000000e+00 : f32
    %24 = vector.broadcast %cst_17 : f32 to vector<12x32xf32>
    %c0_18 = arith.constant 0 : index
    %c0_19 = arith.constant 0 : index
    %c0_20 = arith.constant 0 : index
    %25 = vector.load %arg12[%c0_18, %c0_19, %c0_20] : memref<4x24x16xbf16, #tpu.memory_space<vmem>>, vector<1x12x16xbf16>
    %26 = vector.shape_cast %25 : vector<1x12x16xbf16> to vector<12x16xbf16>
    %c0_21 = arith.constant 0 : index
    %c0_22 = arith.constant 0 : index
    %c0_23 = arith.constant 0 : index
    %27 = vector.load %arg3[%c0_21, %c0_22, %c0_23] : memref<16x16x32xbf16, #tpu.memory_space<vmem>>, vector<1x16x32xbf16>
    %28 = vector.shape_cast %27 : vector<1x16x32xbf16> to vector<16x32xbf16>
    %cst_24 = arith.constant dense<0.000000e+00> : vector<12x32xf32>
    %29 = tpu.matmul %26, %28, %cst_24 {dimension_numbers = #tpu.dot_dimension_numbers<[1], [0], [0], [1], [0, 0, 1, 1], [], []>} : vector<12x16xbf16>, vector<16x32xbf16>, vector<12x32xf32> -> vector<12x32xf32>
    %30 = arith.addf %24, %29 : vector<12x32xf32>
    %c1 = arith.constant 1 : index
    %c0_25 = arith.constant 0 : index
    %c0_26 = arith.constant 0 : index
    %31 = vector.load %arg12[%c1, %c0_25, %c0_26] : memref<4x24x16xbf16, #tpu.memory_space<vmem>>, vector<1x12x16xbf16>
    %32 = vector.shape_cast %31 : vector<1x12x16xbf16> to vector<12x16xbf16>
    %c1_27 = arith.constant 1 : index
    %c0_28 = arith.constant 0 : index
    %c0_29 = arith.constant 0 : index
    %33 = vector.load %arg3[%c1_27, %c0_28, %c0_29] : memref<16x16x32xbf16, #tpu.memory_space<vmem>>, vector<1x16x32xbf16>
    %34 = vector.shape_cast %33 : vector<1x16x32xbf16> to vector<16x32xbf16>
    %cst_30 = arith.constant dense<0.000000e+00> : vector<12x32xf32>
    %35 = tpu.matmul %32, %34, %cst_30 {dimension_numbers = #tpu.dot_dimension_numbers<[1], [0], [0], [1], [0, 0, 1, 1], [], []>} : vector<12x16xbf16>, vector<16x32xbf16>, vector<12x32xf32> -> vector<12x32xf32>
    %36 = arith.addf %30, %35 : vector<12x32xf32>
    %c0_31 = arith.constant 0 : index
    %c1_32 = arith.constant 1 : index
    %c0_33 = arith.constant 0 : index
    %37 = vector.load %arg12[%c0_31, %c1_32, %c0_33] : memref<4x24x16xbf16, #tpu.memory_space<vmem>>, vector<1x12x16xbf16>
    %38 = vector.shape_cast %37 : vector<1x12x16xbf16> to vector<12x16xbf16>
    %c2 = arith.constant 2 : index
    %c0_34 = arith.constant 0 : index
    %c0_35 = arith.constant 0 : index
    %39 = vector.load %arg3[%c2, %c0_34, %c0_35] : memref<16x16x32xbf16, #tpu.memory_space<vmem>>, vector<1x16x32xbf16>
    %40 = vector.shape_cast %39 : vector<1x16x32xbf16> to vector<16x32xbf16>
    %cst_36 = arith.constant dense<0.000000e+00> : vector<12x32xf32>
    %41 = tpu.matmul %38, %40, %cst_36 {dimension_numbers = #tpu.dot_dimension_numbers<[1], [0], [0], [1], [0, 0, 1, 1], [], []>} : vector<12x16xbf16>, vector<16x32xbf16>, vector<12x32xf32> -> vector<12x32xf32>
    %42 = arith.addf %36, %41 : vector<12x32xf32>
    %c1_37 = arith.constant 1 : index
    %c1_38 = arith.constant 1 : index
    %c0_39 = arith.constant 0 : index
    %43 = vector.load %arg12[%c1_37, %c1_38, %c0_39] : memref<4x24x16xbf16, #tpu.memory_space<vmem>>, vector<1x12x16xbf16>
    %44 = vector.shape_cast %43 : vector<1x12x16xbf16> to vector<12x16xbf16>
    %c3 = arith.constant 3 : index
    %c0_40 = arith.constant 0 : index
    %c0_41 = arith.constant 0 : index
    %45 = vector.load %arg3[%c3, %c0_40, %c0_41] : memref<16x16x32xbf16, #tpu.memory_space<vmem>>, vector<1x16x32xbf16>
    %46 = vector.shape_cast %45 : vector<1x16x32xbf16> to vector<16x32xbf16>
    %cst_42 = arith.constant dense<0.000000e+00> : vector<12x32xf32>
    %47 = tpu.matmul %44, %46, %cst_42 {dimension_numbers = #tpu.dot_dimension_numbers<[1], [0], [0], [1], [0, 0, 1, 1], [], []>} : vector<12x16xbf16>, vector<16x32xbf16>, vector<12x32xf32> -> vector<12x32xf32>
    %48 = arith.addf %42, %47 : vector<12x32xf32>
    %c2_43 = arith.constant 2 : index
    %c0_44 = arith.constant 0 : index
    %c0_45 = arith.constant 0 : index
    %49 = vector.load %arg12[%c2_43, %c0_44, %c0_45] : memref<4x24x16xbf16, #tpu.memory_space<vmem>>, vector<1x12x16xbf16>
    %50 = vector.shape_cast %49 : vector<1x12x16xbf16> to vector<12x16xbf16>
    %c4 = arith.constant 4 : index
    %c0_46 = arith.constant 0 : index
    %c0_47 = arith.constant 0 : index
    %51 = vector.load %arg3[%c4, %c0_46, %c0_47] : memref<16x16x32xbf16, #tpu.memory_space<vmem>>, vector<1x16x32xbf16>
    %52 = vector.shape_cast %51 : vector<1x16x32xbf16> to vector<16x32xbf16>
    %cst_48 = arith.constant dense<0.000000e+00> : vector<12x32xf32>
    %53 = tpu.matmul %50, %52, %cst_48 {dimension_numbers = #tpu.dot_dimension_numbers<[1], [0], [0], [1], [0, 0, 1, 1], [], []>} : vector<12x16xbf16>, vector<16x32xbf16>, vector<12x32xf32> -> vector<12x32xf32>
    %54 = arith.addf %48, %53 : vector<12x32xf32>
    %c3_49 = arith.constant 3 : index
    %c0_50 = arith.constant 0 : index
    %c0_51 = arith.constant 0 : index
    %55 = vector.load %arg12[%c3_49, %c0_50, %c0_51] : memref<4x24x16xbf16, #tpu.memory_space<vmem>>, vector<1x12x16xbf16>
    %56 = vector.shape_cast %55 : vector<1x12x16xbf16> to vector<12x16xbf16>
    %c5 = arith.constant 5 : index
    %c0_52 = arith.constant 0 : index
    %c0_53 = arith.constant 0 : index
    %57 = vector.load %arg3[%c5, %c0_52, %c0_53] : memref<16x16x32xbf16, #tpu.memory_space<vmem>>, vector<1x16x32xbf16>
    %58 = vector.shape_cast %57 : vector<1x16x32xbf16> to vector<16x32xbf16>
    %cst_54 = arith.constant dense<0.000000e+00> : vector<12x32xf32>
    %59 = tpu.matmul %56, %58, %cst_54 {dimension_numbers = #tpu.dot_dimension_numbers<[1], [0], [0], [1], [0, 0, 1, 1], [], []>} : vector<12x16xbf16>, vector<16x32xbf16>, vector<12x32xf32> -> vector<12x32xf32>
    %60 = arith.addf %54, %59 : vector<12x32xf32>
    %c2_55 = arith.constant 2 : index
    %c1_56 = arith.constant 1 : index
    %c0_57 = arith.constant 0 : index
    %61 = vector.load %arg12[%c2_55, %c1_56, %c0_57] : memref<4x24x16xbf16, #tpu.memory_space<vmem>>, vector<1x12x16xbf16>
    %62 = vector.shape_cast %61 : vector<1x12x16xbf16> to vector<12x16xbf16>
    %c6 = arith.constant 6 : index
    %c0_58 = arith.constant 0 : index
    %c0_59 = arith.constant 0 : index
    %63 = vector.load %arg3[%c6, %c0_58, %c0_59] : memref<16x16x32xbf16, #tpu.memory_space<vmem>>, vector<1x16x32xbf16>
    %64 = vector.shape_cast %63 : vector<1x16x32xbf16> to vector<16x32xbf16>
    %cst_60 = arith.constant dense<0.000000e+00> : vector<12x32xf32>
    %65 = tpu.matmul %62, %64, %cst_60 {dimension_numbers = #tpu.dot_dimension_numbers<[1], [0], [0], [1], [0, 0, 1, 1], [], []>} : vector<12x16xbf16>, vector<16x32xbf16>, vector<12x32xf32> -> vector<12x32xf32>
    %66 = arith.addf %60, %65 : vector<12x32xf32>
    %c3_61 = arith.constant 3 : index
    %c1_62 = arith.constant 1 : index
    %c0_63 = arith.constant 0 : index
    %67 = vector.load %arg12[%c3_61, %c1_62, %c0_63] : memref<4x24x16xbf16, #tpu.memory_space<vmem>>, vector<1x12x16xbf16>
    %68 = vector.shape_cast %67 : vector<1x12x16xbf16> to vector<12x16xbf16>
    %c7 = arith.constant 7 : index
    %c0_64 = arith.constant 0 : index
    %c0_65 = arith.constant 0 : index
    %69 = vector.load %arg3[%c7, %c0_64, %c0_65] : memref<16x16x32xbf16, #tpu.memory_space<vmem>>, vector<1x16x32xbf16>
    %70 = vector.shape_cast %69 : vector<1x16x32xbf16> to vector<16x32xbf16>
    %cst_66 = arith.constant dense<0.000000e+00> : vector<12x32xf32>
    %71 = tpu.matmul %68, %70, %cst_66 {dimension_numbers = #tpu.dot_dimension_numbers<[1], [0], [0], [1], [0, 0, 1, 1], [], []>} : vector<12x16xbf16>, vector<16x32xbf16>, vector<12x32xf32> -> vector<12x32xf32>
    %72 = arith.addf %66, %71 : vector<12x32xf32>
    %c0_67 = arith.constant 0 : index
    %c4_68 = arith.constant 4 : index
    %c0_69 = arith.constant 0 : index
    %73 = vector.load %arg12[%c0_67, %c4_68, %c0_69] : memref<4x24x16xbf16, #tpu.memory_space<vmem>>, vector<1x12x16xbf16>
    %74 = vector.shape_cast %73 : vector<1x12x16xbf16> to vector<12x16xbf16>
    %c8 = arith.constant 8 : index
    %c0_70 = arith.constant 0 : index
    %c0_71 = arith.constant 0 : index
    %75 = vector.load %arg3[%c8, %c0_70, %c0_71] : memref<16x16x32xbf16, #tpu.memory_space<vmem>>, vector<1x16x32xbf16>
    %76 = vector.shape_cast %75 : vector<1x16x32xbf16> to vector<16x32xbf16>
    %cst_72 = arith.constant dense<0.000000e+00> : vector<12x32xf32>
    %77 = tpu.matmul %74, %76, %cst_72 {dimension_numbers = #tpu.dot_dimension_numbers<[1], [0], [0], [1], [0, 0, 1, 1], [], []>} : vector<12x16xbf16>, vector<16x32xbf16>, vector<12x32xf32> -> vector<12x32xf32>
    %78 = arith.addf %72, %77 : vector<12x32xf32>
    %c1_73 = arith.constant 1 : index
    %c4_74 = arith.constant 4 : index
    %c0_75 = arith.constant 0 : index
    %79 = vector.load %arg12[%c1_73, %c4_74, %c0_75] : memref<4x24x16xbf16, #tpu.memory_space<vmem>>, vector<1x12x16xbf16>
    %80 = vector.shape_cast %79 : vector<1x12x16xbf16> to vector<12x16xbf16>
    %c9 = arith.constant 9 : index
    %c0_76 = arith.constant 0 : index
    %c0_77 = arith.constant 0 : index
    %81 = vector.load %arg3[%c9, %c0_76, %c0_77] : memref<16x16x32xbf16, #tpu.memory_space<vmem>>, vector<1x16x32xbf16>
    %82 = vector.shape_cast %81 : vector<1x16x32xbf16> to vector<16x32xbf16>
    %cst_78 = arith.constant dense<0.000000e+00> : vector<12x32xf32>
    %83 = tpu.matmul %80, %82, %cst_78 {dimension_numbers = #tpu.dot_dimension_numbers<[1], [0], [0], [1], [0, 0, 1, 1], [], []>} : vector<12x16xbf16>, vector<16x32xbf16>, vector<12x32xf32> -> vector<12x32xf32>
    %84 = arith.addf %78, %83 : vector<12x32xf32>
    %c0_79 = arith.constant 0 : index
    %c5_80 = arith.constant 5 : index
    %c0_81 = arith.constant 0 : index
    %85 = vector.load %arg12[%c0_79, %c5_80, %c0_81] : memref<4x24x16xbf16, #tpu.memory_space<vmem>>, vector<1x12x16xbf16>
    %86 = vector.shape_cast %85 : vector<1x12x16xbf16> to vector<12x16xbf16>
    %c10 = arith.constant 10 : index
    %c0_82 = arith.constant 0 : index
    %c0_83 = arith.constant 0 : index
    %87 = vector.load %arg3[%c10, %c0_82, %c0_83] : memref<16x16x32xbf16, #tpu.memory_space<vmem>>, vector<1x16x32xbf16>
    %88 = vector.shape_cast %87 : vector<1x16x32xbf16> to vector<16x32xbf16>
    %cst_84 = arith.constant dense<0.000000e+00> : vector<12x32xf32>
    %89 = tpu.matmul %86, %88, %cst_84 {dimension_numbers = #tpu.dot_dimension_numbers<[1], [0], [0], [1], [0, 0, 1, 1], [], []>} : vector<12x16xbf16>, vector<16x32xbf16>, vector<12x32xf32> -> vector<12x32xf32>
    %90 = arith.addf %84, %89 : vector<12x32xf32>
    %c1_85 = arith.constant 1 : index
    %c5_86 = arith.constant 5 : index
    %c0_87 = arith.constant 0 : index
    %91 = vector.load %arg12[%c1_85, %c5_86, %c0_87] : memref<4x24x16xbf16, #tpu.memory_space<vmem>>, vector<1x12x16xbf16>
    %92 = vector.shape_cast %91 : vector<1x12x16xbf16> to vector<12x16xbf16>
    %c11 = arith.constant 11 : index
    %c0_88 = arith.constant 0 : index
    %c0_89 = arith.constant 0 : index
    %93 = vector.load %arg3[%c11, %c0_88, %c0_89] : memref<16x16x32xbf16, #tpu.memory_space<vmem>>, vector<1x16x32xbf16>
    %94 = vector.shape_cast %93 : vector<1x16x32xbf16> to vector<16x32xbf16>
    %cst_90 = arith.constant dense<0.000000e+00> : vector<12x32xf32>
    %95 = tpu.matmul %92, %94, %cst_90 {dimension_numbers = #tpu.dot_dimension_numbers<[1], [0], [0], [1], [0, 0, 1, 1], [], []>} : vector<12x16xbf16>, vector<16x32xbf16>, vector<12x32xf32> -> vector<12x32xf32>
    %96 = arith.addf %90, %95 : vector<12x32xf32>
    %c2_91 = arith.constant 2 : index
    %c4_92 = arith.constant 4 : index
    %c0_93 = arith.constant 0 : index
    %97 = vector.load %arg12[%c2_91, %c4_92, %c0_93] : memref<4x24x16xbf16, #tpu.memory_space<vmem>>, vector<1x12x16xbf16>
    %98 = vector.shape_cast %97 : vector<1x12x16xbf16> to vector<12x16xbf16>
    %c12 = arith.constant 12 : index
    %c0_94 = arith.constant 0 : index
    %c0_95 = arith.constant 0 : index
    %99 = vector.load %arg3[%c12, %c0_94, %c0_95] : memref<16x16x32xbf16, #tpu.memory_space<vmem>>, vector<1x16x32xbf16>
    %100 = vector.shape_cast %99 : vector<1x16x32xbf16> to vector<16x32xbf16>
    %cst_96 = arith.constant dense<0.000000e+00> : vector<12x32xf32>
    %101 = tpu.matmul %98, %100, %cst_96 {dimension_numbers = #tpu.dot_dimension_numbers<[1], [0], [0], [1], [0, 0, 1, 1], [], []>} : vector<12x16xbf16>, vector<16x32xbf16>, vector<12x32xf32> -> vector<12x32xf32>
    %102 = arith.addf %96, %101 : vector<12x32xf32>
    %c3_97 = arith.constant 3 : index
    %c4_98 = arith.constant 4 : index
    %c0_99 = arith.constant 0 : index
    %103 = vector.load %arg12[%c3_97, %c4_98, %c0_99] : memref<4x24x16xbf16, #tpu.memory_space<vmem>>, vector<1x12x16xbf16>
    %104 = vector.shape_cast %103 : vector<1x12x16xbf16> to vector<12x16xbf16>
    %c13 = arith.constant 13 : index
    %c0_100 = arith.constant 0 : index
    %c0_101 = arith.constant 0 : index
    %105 = vector.load %arg3[%c13, %c0_100, %c0_101] : memref<16x16x32xbf16, #tpu.memory_space<vmem>>, vector<1x16x32xbf16>
    %106 = vector.shape_cast %105 : vector<1x16x32xbf16> to vector<16x32xbf16>
    %cst_102 = arith.constant dense<0.000000e+00> : vector<12x32xf32>
    %107 = tpu.matmul %104, %106, %cst_102 {dimension_numbers = #tpu.dot_dimension_numbers<[1], [0], [0], [1], [0, 0, 1, 1], [], []>} : vector<12x16xbf16>, vector<16x32xbf16>, vector<12x32xf32> -> vector<12x32xf32>
    %108 = arith.addf %102, %107 : vector<12x32xf32>
    %c2_103 = arith.constant 2 : index
    %c5_104 = arith.constant 5 : index
    %c0_105 = arith.constant 0 : index
    %109 = vector.load %arg12[%c2_103, %c5_104, %c0_105] : memref<4x24x16xbf16, #tpu.memory_space<vmem>>, vector<1x12x16xbf16>
    %110 = vector.shape_cast %109 : vector<1x12x16xbf16> to vector<12x16xbf16>
    %c14 = arith.constant 14 : index
    %c0_106 = arith.constant 0 : index
    %c0_107 = arith.constant 0 : index
    %111 = vector.load %arg3[%c14, %c0_106, %c0_107] : memref<16x16x32xbf16, #tpu.memory_space<vmem>>, vector<1x16x32xbf16>
    %112 = vector.shape_cast %111 : vector<1x16x32xbf16> to vector<16x32xbf16>
    %cst_108 = arith.constant dense<0.000000e+00> : vector<12x32xf32>
    %113 = tpu.matmul %110, %112, %cst_108 {dimension_numbers = #tpu.dot_dimension_numbers<[1], [0], [0], [1], [0, 0, 1, 1], [], []>} : vector<12x16xbf16>, vector<16x32xbf16>, vector<12x32xf32> -> vector<12x32xf32>
    %114 = arith.addf %108, %113 : vector<12x32xf32>
    %c3_109 = arith.constant 3 : index
    %c5_110 = arith.constant 5 : index
    %c0_111 = arith.constant 0 : index
    %115 = vector.load %arg12[%c3_109, %c5_110, %c0_111] : memref<4x24x16xbf16, #tpu.memory_space<vmem>>, vector<1x12x16xbf16>
    %116 = vector.shape_cast %115 : vector<1x12x16xbf16> to vector<12x16xbf16>
    %c15 = arith.constant 15 : index
    %c0_112 = arith.constant 0 : index
    %c0_113 = arith.constant 0 : index
    %117 = vector.load %arg3[%c15, %c0_112, %c0_113] : memref<16x16x32xbf16, #tpu.memory_space<vmem>>, vector<1x16x32xbf16>
    %118 = vector.shape_cast %117 : vector<1x16x32xbf16> to vector<16x32xbf16>
    %cst_114 = arith.constant dense<0.000000e+00> : vector<12x32xf32>
    %119 = tpu.matmul %116, %118, %cst_114 {dimension_numbers = #tpu.dot_dimension_numbers<[1], [0], [0], [1], [0, 0, 1, 1], [], []>} : vector<12x16xbf16>, vector<16x32xbf16>, vector<12x32xf32> -> vector<12x32xf32>
    %120 = arith.addf %114, %119 : vector<12x32xf32>
    %c0_115 = arith.constant 0 : index
    %c0_116 = arith.constant 0 : index
    %c0_117 = arith.constant 0 : index
    %121 = vector.load %arg4[%c0_115, %c0_116, %c0_117] : memref<1x1x32xf32, #tpu.memory_space<vmem>>, vector<1x1x32xf32>
    %122 = vector.shape_cast %121 : vector<1x1x32xf32> to vector<1x32xf32>
    %123 = vector.broadcast %122 : vector<1x32xf32> to vector<12x32xf32>
    %124 = arith.addf %120, %123 : vector<12x32xf32>
    %125 = arith.truncf %124 : vector<12x32xf32> to vector<12x32xbf16>
    %c0_118 = arith.constant 0 : index
    %c0_119 = arith.constant 0 : index
    %c0_120 = arith.constant 0 : index
    %126 = vector.load %arg9[%c0_118, %c0_119, %c0_120] : memref<1x12x32xbf16, #tpu.memory_space<vmem>>, vector<1x12x32xbf16>
    %127 = vector.shape_cast %126 : vector<1x12x32xbf16> to vector<12x32xbf16>
    %128 = vector.shape_cast %125 : vector<12x32xbf16> to vector<1x12x32xbf16>
    tpu.vector_store %arg9[%c0_118, %c0_119, %c0_120], %128 {strides = array<i32>} : memref<1x12x32xbf16, #tpu.memory_space<vmem>>, vector<1x12x32xbf16>,
    %c0_121 = arith.constant 0 : index
    %c0_122 = arith.constant 0 : index
    %c0_123 = arith.constant 0 : index
    %129 = vector.load %arg8[%c0_121, %c0_122, %c0_123] : memref<1x12x1xf32, #tpu.memory_space<vmem>>, vector<1x12x1xf32>
    %130 = vector.shape_cast %129 : vector<1x12x1xf32> to vector<12x1xf32>
    %131 = vector.broadcast %130 : vector<12x1xf32> to vector<12x32xf32>
    %132 = arith.mulf %124, %131 : vector<12x32xf32>
    %cst_124 = arith.constant dense<0.000000e+00> : vector<32xf32>
    %133 = vector.multi_reduction <add>, %132, %cst_124 [0] : vector<12x32xf32> to vector<32xf32>
    %134 = vector.shape_cast %133 : vector<32xf32> to vector<1x32xf32>
    %cst_125 = arith.constant 0.111111112 : f32
    %135 = vector.broadcast %cst_125 : f32 to vector<1x32xf32>
    %136 = arith.mulf %134, %135 : vector<1x32xf32>
    %137 = vector.broadcast %136 : vector<1x32xf32> to vector<12x32xf32>
    %138 = arith.subf %124, %137 : vector<12x32xf32>
    %139 = vector.broadcast %130 : vector<12x1xf32> to vector<12x32xf32>
    %140 = arith.mulf %138, %139 : vector<12x32xf32>
    %c0_126 = arith.constant 0 : index
    %c0_127 = arith.constant 0 : index
    %c0_128 = arith.constant 0 : index
    %141 = vector.load %arg10[%c0_126, %c0_127, %c0_128] : memref<1x1x32xf32, #tpu.memory_space<vmem>>, vector<1x1x32xf32>
    %142 = vector.shape_cast %141 : vector<1x1x32xf32> to vector<1x32xf32>
    %143 = vector.shape_cast %134 : vector<1x32xf32> to vector<1x1x32xf32>
    tpu.vector_store %arg10[%c0_126, %c0_127, %c0_128], %143 {strides = array<i32>} : memref<1x1x32xf32, #tpu.memory_space<vmem>>, vector<1x1x32xf32>,
    %144 = arith.mulf %140, %140 : vector<12x32xf32>
    %cst_129 = arith.constant dense<0.000000e+00> : vector<32xf32>
    %145 = vector.multi_reduction <add>, %144, %cst_129 [0] : vector<12x32xf32> to vector<32xf32>
    %146 = vector.shape_cast %145 : vector<32xf32> to vector<1x32xf32>
    %c0_130 = arith.constant 0 : index
    %c0_131 = arith.constant 0 : index
    %c0_132 = arith.constant 0 : index
    %147 = vector.load %arg11[%c0_130, %c0_131, %c0_132] : memref<1x1x32xf32, #tpu.memory_space<vmem>>, vector<1x1x32xf32>
    %148 = vector.shape_cast %147 : vector<1x1x32xf32> to vector<1x32xf32>
    %149 = vector.shape_cast %146 : vector<1x32xf32> to vector<1x1x32xf32>
    tpu.vector_store %arg11[%c0_130, %c0_131, %c0_132], %149 {strides = array<i32>} : memref<1x1x32xf32, #tpu.memory_space<vmem>>, vector<1x1x32xf32>,
    return
  }
  func.func @transform_0(%arg0: i32, %arg1: i32) -> (i32, i32, i32, i32) {
    %c0_i32 = arith.constant 0 : i32
    %c0_i32_0 = arith.constant 0 : i32
    %c0_i32_1 = arith.constant 0 : i32
    %c0_i32_2 = arith.constant 0 : i32
    return %arg0, %c0_i32, %c0_i32_0, %c0_i32_1 : i32, i32, i32, i32
  }
  func.func @transform_1(%arg0: i32, %arg1: i32) -> (i32, i32, i32) {
    %c0_i32 = arith.constant 0 : i32
    %c0_i32_0 = arith.constant 0 : i32
    %c0_i32_1 = arith.constant 0 : i32
    return %c0_i32, %c0_i32_0, %arg1 : i32, i32, i32
  }
  func.func @transform_2(%arg0: i32, %arg1: i32) -> (i32, i32, i32) {
    %c0_i32 = arith.constant 0 : i32
    %c0_i32_0 = arith.constant 0 : i32
    %c0_i32_1 = arith.constant 0 : i32
    return %c0_i32, %c0_i32_0, %arg1 : i32, i32, i32
  }
  func.func @transform_3(%arg0: i32, %arg1: i32) -> (i32, i32, i32) {
    %c0_i32 = arith.constant 0 : i32
    %c0_i32_0 = arith.constant 0 : i32
    %c0_i32_1 = arith.constant 0 : i32
    %c0_i32_2 = arith.constant 0 : i32
    return %c0_i32, %c0_i32_0, %c0_i32_1 : i32, i32, i32
  }
  func.func @transform_4(%arg0: i32, %arg1: i32) -> (i32, i32, i32) {
    %c0_i32 = arith.constant 0 : i32
    %c0_i32_0 = arith.constant 0 : i32
    %c0_i32_1 = arith.constant 0 : i32
    %c0_i32_2 = arith.constant 0 : i32
    return %c0_i32, %c0_i32_0, %c0_i32_1 : i32, i32, i32
  }
  func.func @transform_5(%arg0: i32, %arg1: i32) -> (i32, i32, i32, i32) {
    %c0_i32 = arith.constant 0 : i32
    %c0_i32_0 = arith.constant 0 : i32
    %c0_i32_1 = arith.constant 0 : i32
    %c0_i32_2 = arith.constant 0 : i32
    %c0_i32_3 = arith.constant 0 : i32
    return %c0_i32, %c0_i32_0, %c0_i32_1, %c0_i32_2 : i32, i32, i32, i32
  }
  func.func @transform_6(%arg0: i32, %arg1: i32) -> (i32, i32, i32) {
    %c0_i32 = arith.constant 0 : i32
    %c0_i32_0 = arith.constant 0 : i32
    %c0_i32_1 = arith.constant 0 : i32
    %c0_i32_2 = arith.constant 0 : i32
    return %c0_i32, %c0_i32_0, %c0_i32_1 : i32, i32, i32
  }
  func.func @transform_7(%arg0: i32, %arg1: i32) -> (i32, i32, i32) {
    %c0_i32 = arith.constant 0 : i32
    %c0_i32_0 = arith.constant 0 : i32
    return %arg0, %c0_i32, %arg1 : i32, i32, i32
  }
  func.func @transform_8(%arg0: i32, %arg1: i32) -> (i32, i32, i32) {
    %c0_i32 = arith.constant 0 : i32
    %c0_i32_0 = arith.constant 0 : i32
    return %arg0, %c0_i32, %arg1 : i32, i32, i32
  }
  func.func @transform_9(%arg0: i32, %arg1: i32) -> (i32, i32, i32) {
    %c0_i32 = arith.constant 0 : i32
    %c0_i32_0 = arith.constant 0 : i32
    return %arg0, %c0_i32, %arg1 : i32, i32, i32
  }
}

module attributes {stable_mosaic.version = 11 : i64} {
  func.func @_conv_tap_kernel(%arg0: i32, %arg1: i32, %arg2: memref<1x1x56x32xbf16, #tpu.memory_space<vmem>>, %arg3: memref<16x32x64xbf16, #tpu.memory_space<vmem>>, %arg4: memref<1x1x64xf32, #tpu.memory_space<vmem>>, %arg5: memref<1x1x32xf32, #tpu.memory_space<vmem>>, %arg6: memref<1x1x32xf32, #tpu.memory_space<vmem>>, %arg7: memref<1x1x56x1xf32, #tpu.memory_space<vmem>>, %arg8: memref<1x28x1xf32, #tpu.memory_space<vmem>>, %arg9: memref<1x28x64xbf16, #tpu.memory_space<vmem>>, %arg10: memref<1x1x64xf32, #tpu.memory_space<vmem>>, %arg11: memref<1x1x64xf32, #tpu.memory_space<vmem>>, %arg12: memref<1x56x32xbf16, #tpu.memory_space<vmem>>) attributes {dimension_semantics = [#tpu.dimension_semantics<parallel>, #tpu.dimension_semantics<parallel>], iteration_bounds = array<i64: 2, 1>, scalar_prefetch = 0 : i64, scratch_operands = 1 : i64, tpu.core_type = #tpu.core_type<tc>, window_params = [{transform_indices = @transform_0, window_bounds = array<i64: 1, 1, 56, 32>}, {transform_indices = @transform_1, window_bounds = array<i64: 16, 32, 64>}, {transform_indices = @transform_2, window_bounds = array<i64: 1, 1, 64>}, {pipeline_mode = #tpu.pipeline_mode<synchronous>, transform_indices = @transform_3, window_bounds = array<i64: 1, 1, 32>}, {pipeline_mode = #tpu.pipeline_mode<synchronous>, transform_indices = @transform_4, window_bounds = array<i64: 1, 1, 32>}, {pipeline_mode = #tpu.pipeline_mode<synchronous>, transform_indices = @transform_5, window_bounds = array<i64: 1, 1, 56, 1>}, {pipeline_mode = #tpu.pipeline_mode<synchronous>, transform_indices = @transform_6, window_bounds = array<i64: 1, 28, 1>}, {transform_indices = @transform_7, window_bounds = array<i64: 1, 28, 64>}, {transform_indices = @transform_8, window_bounds = array<i64: 1, 1, 64>}, {transform_indices = @transform_9, window_bounds = array<i64: 1, 1, 64>}]} {
    %c0 = arith.constant 0 : index
    %c0_0 = arith.constant 0 : index
    %c0_1 = arith.constant 0 : index
    %c0_2 = arith.constant 0 : index
    %0 = vector.load %arg2[%c0, %c0_0, %c0_1, %c0_2] : memref<1x1x56x32xbf16, #tpu.memory_space<vmem>>, vector<1x1x56x32xbf16>
    %1 = vector.shape_cast %0 : vector<1x1x56x32xbf16> to vector<1x56x32xbf16>
    %2 = arith.extf %1 : vector<1x56x32xbf16> to vector<1x56x32xf32>
    %c0_3 = arith.constant 0 : index
    %c0_4 = arith.constant 0 : index
    %c0_5 = arith.constant 0 : index
    %3 = vector.load %arg5[%c0_3, %c0_4, %c0_5] : memref<1x1x32xf32, #tpu.memory_space<vmem>>, vector<1x1x32xf32>
    %4 = vector.shape_cast %3 : vector<1x1x32xf32> to vector<1x32xf32>
    %5 = vector.shape_cast %4 : vector<1x32xf32> to vector<1x1x32xf32>
    %6 = vector.broadcast %5 : vector<1x1x32xf32> to vector<1x56x32xf32>
    %7 = arith.mulf %2, %6 : vector<1x56x32xf32>
    %c0_6 = arith.constant 0 : index
    %c0_7 = arith.constant 0 : index
    %c0_8 = arith.constant 0 : index
    %8 = vector.load %arg6[%c0_6, %c0_7, %c0_8] : memref<1x1x32xf32, #tpu.memory_space<vmem>>, vector<1x1x32xf32>
    %9 = vector.shape_cast %8 : vector<1x1x32xf32> to vector<1x32xf32>
    %10 = vector.shape_cast %9 : vector<1x32xf32> to vector<1x1x32xf32>
    %11 = vector.broadcast %10 : vector<1x1x32xf32> to vector<1x56x32xf32>
    %12 = arith.addf %7, %11 : vector<1x56x32xf32>
    %cst = arith.constant 0.000000e+00 : f32
    %13 = vector.broadcast %cst : f32 to vector<1x56x32xf32>
    %14 = arith.cmpf ogt, %12, %13 : vector<1x56x32xf32>
    %cst_9 = arith.constant 2.000000e-01 : f32
    %15 = vector.broadcast %cst_9 : f32 to vector<1x56x32xf32>
    %16 = arith.mulf %15, %12 : vector<1x56x32xf32>
    %17 = arith.select %14, %12, %16 : vector<1x56x32xi1>, vector<1x56x32xf32>
    %c0_10 = arith.constant 0 : index
    %c0_11 = arith.constant 0 : index
    %c0_12 = arith.constant 0 : index
    %c0_13 = arith.constant 0 : index
    %18 = vector.load %arg7[%c0_10, %c0_11, %c0_12, %c0_13] : memref<1x1x56x1xf32, #tpu.memory_space<vmem>>, vector<1x1x56x1xf32>
    %19 = vector.shape_cast %18 : vector<1x1x56x1xf32> to vector<1x56x1xf32>
    %20 = vector.broadcast %19 : vector<1x56x1xf32> to vector<1x56x32xf32>
    %21 = arith.mulf %17, %20 : vector<1x56x32xf32>
    %22 = arith.truncf %21 : vector<1x56x32xf32> to vector<1x56x32xbf16>
    %c0_14 = arith.constant 0 : index
    %c0_15 = arith.constant 0 : index
    %c0_16 = arith.constant 0 : index
    %23 = vector.load %arg12[%c0_14, %c0_15, %c0_16] : memref<1x56x32xbf16, #tpu.memory_space<vmem>>, vector<1x56x32xbf16>
    tpu.vector_store %arg12[%c0_14, %c0_15, %c0_16], %22 {strides = array<i32>} : memref<1x56x32xbf16, #tpu.memory_space<vmem>>, vector<1x56x32xbf16>,
    %cst_17 = arith.constant 0.000000e+00 : f32
    %24 = vector.broadcast %cst_17 : f32 to vector<28x64xf32>
    %c0_18 = arith.constant 0 : index
    %c0_19 = arith.constant 0 : index
    %c0_20 = arith.constant 0 : index
    %25 = vector.load %arg12[%c0_18, %c0_19, %c0_20] : memref<1x56x32xbf16, #tpu.memory_space<vmem>>, vector<1x28x32xbf16>
    %26 = vector.shape_cast %25 : vector<1x28x32xbf16> to vector<28x32xbf16>
    %c0_21 = arith.constant 0 : index
    %c0_22 = arith.constant 0 : index
    %c0_23 = arith.constant 0 : index
    %27 = vector.load %arg3[%c0_21, %c0_22, %c0_23] : memref<16x32x64xbf16, #tpu.memory_space<vmem>>, vector<1x32x64xbf16>
    %28 = vector.shape_cast %27 : vector<1x32x64xbf16> to vector<32x64xbf16>
    %cst_24 = arith.constant dense<0.000000e+00> : vector<28x64xf32>
    %29 = tpu.matmul %26, %28, %cst_24 {dimension_numbers = #tpu.dot_dimension_numbers<[1], [0], [0], [1], [0, 0, 1, 1], [], []>} : vector<28x32xbf16>, vector<32x64xbf16>, vector<28x64xf32> -> vector<28x64xf32>
    %30 = arith.addf %24, %29 : vector<28x64xf32>
    %c0_25 = arith.constant 0 : index
    %c1 = arith.constant 1 : index
    %c0_26 = arith.constant 0 : index
    %31 = vector.load %arg12[%c0_25, %c1, %c0_26] : memref<1x56x32xbf16, #tpu.memory_space<vmem>>, vector<1x28x32xbf16>
    %32 = vector.shape_cast %31 : vector<1x28x32xbf16> to vector<28x32xbf16>
    %c1_27 = arith.constant 1 : index
    %c0_28 = arith.constant 0 : index
    %c0_29 = arith.constant 0 : index
    %33 = vector.load %arg3[%c1_27, %c0_28, %c0_29] : memref<16x32x64xbf16, #tpu.memory_space<vmem>>, vector<1x32x64xbf16>
    %34 = vector.shape_cast %33 : vector<1x32x64xbf16> to vector<32x64xbf16>
    %cst_30 = arith.constant dense<0.000000e+00> : vector<28x64xf32>
    %35 = tpu.matmul %32, %34, %cst_30 {dimension_numbers = #tpu.dot_dimension_numbers<[1], [0], [0], [1], [0, 0, 1, 1], [], []>} : vector<28x32xbf16>, vector<32x64xbf16>, vector<28x64xf32> -> vector<28x64xf32>
    %36 = arith.addf %30, %35 : vector<28x64xf32>
    %c0_31 = arith.constant 0 : index
    %c2 = arith.constant 2 : index
    %c0_32 = arith.constant 0 : index
    %37 = vector.load %arg12[%c0_31, %c2, %c0_32] : memref<1x56x32xbf16, #tpu.memory_space<vmem>>, vector<1x28x32xbf16>
    %38 = vector.shape_cast %37 : vector<1x28x32xbf16> to vector<28x32xbf16>
    %c2_33 = arith.constant 2 : index
    %c0_34 = arith.constant 0 : index
    %c0_35 = arith.constant 0 : index
    %39 = vector.load %arg3[%c2_33, %c0_34, %c0_35] : memref<16x32x64xbf16, #tpu.memory_space<vmem>>, vector<1x32x64xbf16>
    %40 = vector.shape_cast %39 : vector<1x32x64xbf16> to vector<32x64xbf16>
    %cst_36 = arith.constant dense<0.000000e+00> : vector<28x64xf32>
    %41 = tpu.matmul %38, %40, %cst_36 {dimension_numbers = #tpu.dot_dimension_numbers<[1], [0], [0], [1], [0, 0, 1, 1], [], []>} : vector<28x32xbf16>, vector<32x64xbf16>, vector<28x64xf32> -> vector<28x64xf32>
    %42 = arith.addf %36, %41 : vector<28x64xf32>
    %c0_37 = arith.constant 0 : index
    %c3 = arith.constant 3 : index
    %c0_38 = arith.constant 0 : index
    %43 = vector.load %arg12[%c0_37, %c3, %c0_38] : memref<1x56x32xbf16, #tpu.memory_space<vmem>>, vector<1x28x32xbf16>
    %44 = vector.shape_cast %43 : vector<1x28x32xbf16> to vector<28x32xbf16>
    %c3_39 = arith.constant 3 : index
    %c0_40 = arith.constant 0 : index
    %c0_41 = arith.constant 0 : index
    %45 = vector.load %arg3[%c3_39, %c0_40, %c0_41] : memref<16x32x64xbf16, #tpu.memory_space<vmem>>, vector<1x32x64xbf16>
    %46 = vector.shape_cast %45 : vector<1x32x64xbf16> to vector<32x64xbf16>
    %cst_42 = arith.constant dense<0.000000e+00> : vector<28x64xf32>
    %47 = tpu.matmul %44, %46, %cst_42 {dimension_numbers = #tpu.dot_dimension_numbers<[1], [0], [0], [1], [0, 0, 1, 1], [], []>} : vector<28x32xbf16>, vector<32x64xbf16>, vector<28x64xf32> -> vector<28x64xf32>
    %48 = arith.addf %42, %47 : vector<28x64xf32>
    %c0_43 = arith.constant 0 : index
    %c7 = arith.constant 7 : index
    %c0_44 = arith.constant 0 : index
    %49 = vector.load %arg12[%c0_43, %c7, %c0_44] : memref<1x56x32xbf16, #tpu.memory_space<vmem>>, vector<1x28x32xbf16>
    %50 = vector.shape_cast %49 : vector<1x28x32xbf16> to vector<28x32xbf16>
    %c4 = arith.constant 4 : index
    %c0_45 = arith.constant 0 : index
    %c0_46 = arith.constant 0 : index
    %51 = vector.load %arg3[%c4, %c0_45, %c0_46] : memref<16x32x64xbf16, #tpu.memory_space<vmem>>, vector<1x32x64xbf16>
    %52 = vector.shape_cast %51 : vector<1x32x64xbf16> to vector<32x64xbf16>
    %cst_47 = arith.constant dense<0.000000e+00> : vector<28x64xf32>
    %53 = tpu.matmul %50, %52, %cst_47 {dimension_numbers = #tpu.dot_dimension_numbers<[1], [0], [0], [1], [0, 0, 1, 1], [], []>} : vector<28x32xbf16>, vector<32x64xbf16>, vector<28x64xf32> -> vector<28x64xf32>
    %54 = arith.addf %48, %53 : vector<28x64xf32>
    %c0_48 = arith.constant 0 : index
    %c8 = arith.constant 8 : index
    %c0_49 = arith.constant 0 : index
    %55 = vector.load %arg12[%c0_48, %c8, %c0_49] : memref<1x56x32xbf16, #tpu.memory_space<vmem>>, vector<1x28x32xbf16>
    %56 = vector.shape_cast %55 : vector<1x28x32xbf16> to vector<28x32xbf16>
    %c5 = arith.constant 5 : index
    %c0_50 = arith.constant 0 : index
    %c0_51 = arith.constant 0 : index
    %57 = vector.load %arg3[%c5, %c0_50, %c0_51] : memref<16x32x64xbf16, #tpu.memory_space<vmem>>, vector<1x32x64xbf16>
    %58 = vector.shape_cast %57 : vector<1x32x64xbf16> to vector<32x64xbf16>
    %cst_52 = arith.constant dense<0.000000e+00> : vector<28x64xf32>
    %59 = tpu.matmul %56, %58, %cst_52 {dimension_numbers = #tpu.dot_dimension_numbers<[1], [0], [0], [1], [0, 0, 1, 1], [], []>} : vector<28x32xbf16>, vector<32x64xbf16>, vector<28x64xf32> -> vector<28x64xf32>
    %60 = arith.addf %54, %59 : vector<28x64xf32>
    %c0_53 = arith.constant 0 : index
    %c9 = arith.constant 9 : index
    %c0_54 = arith.constant 0 : index
    %61 = vector.load %arg12[%c0_53, %c9, %c0_54] : memref<1x56x32xbf16, #tpu.memory_space<vmem>>, vector<1x28x32xbf16>
    %62 = vector.shape_cast %61 : vector<1x28x32xbf16> to vector<28x32xbf16>
    %c6 = arith.constant 6 : index
    %c0_55 = arith.constant 0 : index
    %c0_56 = arith.constant 0 : index
    %63 = vector.load %arg3[%c6, %c0_55, %c0_56] : memref<16x32x64xbf16, #tpu.memory_space<vmem>>, vector<1x32x64xbf16>
    %64 = vector.shape_cast %63 : vector<1x32x64xbf16> to vector<32x64xbf16>
    %cst_57 = arith.constant dense<0.000000e+00> : vector<28x64xf32>
    %65 = tpu.matmul %62, %64, %cst_57 {dimension_numbers = #tpu.dot_dimension_numbers<[1], [0], [0], [1], [0, 0, 1, 1], [], []>} : vector<28x32xbf16>, vector<32x64xbf16>, vector<28x64xf32> -> vector<28x64xf32>
    %66 = arith.addf %60, %65 : vector<28x64xf32>
    %c0_58 = arith.constant 0 : index
    %c10 = arith.constant 10 : index
    %c0_59 = arith.constant 0 : index
    %67 = vector.load %arg12[%c0_58, %c10, %c0_59] : memref<1x56x32xbf16, #tpu.memory_space<vmem>>, vector<1x28x32xbf16>
    %68 = vector.shape_cast %67 : vector<1x28x32xbf16> to vector<28x32xbf16>
    %c7_60 = arith.constant 7 : index
    %c0_61 = arith.constant 0 : index
    %c0_62 = arith.constant 0 : index
    %69 = vector.load %arg3[%c7_60, %c0_61, %c0_62] : memref<16x32x64xbf16, #tpu.memory_space<vmem>>, vector<1x32x64xbf16>
    %70 = vector.shape_cast %69 : vector<1x32x64xbf16> to vector<32x64xbf16>
    %cst_63 = arith.constant dense<0.000000e+00> : vector<28x64xf32>
    %71 = tpu.matmul %68, %70, %cst_63 {dimension_numbers = #tpu.dot_dimension_numbers<[1], [0], [0], [1], [0, 0, 1, 1], [], []>} : vector<28x32xbf16>, vector<32x64xbf16>, vector<28x64xf32> -> vector<28x64xf32>
    %72 = arith.addf %66, %71 : vector<28x64xf32>
    %c0_64 = arith.constant 0 : index
    %c14 = arith.constant 14 : index
    %c0_65 = arith.constant 0 : index
    %73 = vector.load %arg12[%c0_64, %c14, %c0_65] : memref<1x56x32xbf16, #tpu.memory_space<vmem>>, vector<1x28x32xbf16>
    %74 = vector.shape_cast %73 : vector<1x28x32xbf16> to vector<28x32xbf16>
    %c8_66 = arith.constant 8 : index
    %c0_67 = arith.constant 0 : index
    %c0_68 = arith.constant 0 : index
    %75 = vector.load %arg3[%c8_66, %c0_67, %c0_68] : memref<16x32x64xbf16, #tpu.memory_space<vmem>>, vector<1x32x64xbf16>
    %76 = vector.shape_cast %75 : vector<1x32x64xbf16> to vector<32x64xbf16>
    %cst_69 = arith.constant dense<0.000000e+00> : vector<28x64xf32>
    %77 = tpu.matmul %74, %76, %cst_69 {dimension_numbers = #tpu.dot_dimension_numbers<[1], [0], [0], [1], [0, 0, 1, 1], [], []>} : vector<28x32xbf16>, vector<32x64xbf16>, vector<28x64xf32> -> vector<28x64xf32>
    %78 = arith.addf %72, %77 : vector<28x64xf32>
    %c0_70 = arith.constant 0 : index
    %c15 = arith.constant 15 : index
    %c0_71 = arith.constant 0 : index
    %79 = vector.load %arg12[%c0_70, %c15, %c0_71] : memref<1x56x32xbf16, #tpu.memory_space<vmem>>, vector<1x28x32xbf16>
    %80 = vector.shape_cast %79 : vector<1x28x32xbf16> to vector<28x32xbf16>
    %c9_72 = arith.constant 9 : index
    %c0_73 = arith.constant 0 : index
    %c0_74 = arith.constant 0 : index
    %81 = vector.load %arg3[%c9_72, %c0_73, %c0_74] : memref<16x32x64xbf16, #tpu.memory_space<vmem>>, vector<1x32x64xbf16>
    %82 = vector.shape_cast %81 : vector<1x32x64xbf16> to vector<32x64xbf16>
    %cst_75 = arith.constant dense<0.000000e+00> : vector<28x64xf32>
    %83 = tpu.matmul %80, %82, %cst_75 {dimension_numbers = #tpu.dot_dimension_numbers<[1], [0], [0], [1], [0, 0, 1, 1], [], []>} : vector<28x32xbf16>, vector<32x64xbf16>, vector<28x64xf32> -> vector<28x64xf32>
    %84 = arith.addf %78, %83 : vector<28x64xf32>
    %c0_76 = arith.constant 0 : index
    %c16 = arith.constant 16 : index
    %c0_77 = arith.constant 0 : index
    %85 = vector.load %arg12[%c0_76, %c16, %c0_77] : memref<1x56x32xbf16, #tpu.memory_space<vmem>>, vector<1x28x32xbf16>
    %86 = vector.shape_cast %85 : vector<1x28x32xbf16> to vector<28x32xbf16>
    %c10_78 = arith.constant 10 : index
    %c0_79 = arith.constant 0 : index
    %c0_80 = arith.constant 0 : index
    %87 = vector.load %arg3[%c10_78, %c0_79, %c0_80] : memref<16x32x64xbf16, #tpu.memory_space<vmem>>, vector<1x32x64xbf16>
    %88 = vector.shape_cast %87 : vector<1x32x64xbf16> to vector<32x64xbf16>
    %cst_81 = arith.constant dense<0.000000e+00> : vector<28x64xf32>
    %89 = tpu.matmul %86, %88, %cst_81 {dimension_numbers = #tpu.dot_dimension_numbers<[1], [0], [0], [1], [0, 0, 1, 1], [], []>} : vector<28x32xbf16>, vector<32x64xbf16>, vector<28x64xf32> -> vector<28x64xf32>
    %90 = arith.addf %84, %89 : vector<28x64xf32>
    %c0_82 = arith.constant 0 : index
    %c17 = arith.constant 17 : index
    %c0_83 = arith.constant 0 : index
    %91 = vector.load %arg12[%c0_82, %c17, %c0_83] : memref<1x56x32xbf16, #tpu.memory_space<vmem>>, vector<1x28x32xbf16>
    %92 = vector.shape_cast %91 : vector<1x28x32xbf16> to vector<28x32xbf16>
    %c11 = arith.constant 11 : index
    %c0_84 = arith.constant 0 : index
    %c0_85 = arith.constant 0 : index
    %93 = vector.load %arg3[%c11, %c0_84, %c0_85] : memref<16x32x64xbf16, #tpu.memory_space<vmem>>, vector<1x32x64xbf16>
    %94 = vector.shape_cast %93 : vector<1x32x64xbf16> to vector<32x64xbf16>
    %cst_86 = arith.constant dense<0.000000e+00> : vector<28x64xf32>
    %95 = tpu.matmul %92, %94, %cst_86 {dimension_numbers = #tpu.dot_dimension_numbers<[1], [0], [0], [1], [0, 0, 1, 1], [], []>} : vector<28x32xbf16>, vector<32x64xbf16>, vector<28x64xf32> -> vector<28x64xf32>
    %96 = arith.addf %90, %95 : vector<28x64xf32>
    %c0_87 = arith.constant 0 : index
    %c21 = arith.constant 21 : index
    %c0_88 = arith.constant 0 : index
    %97 = vector.load %arg12[%c0_87, %c21, %c0_88] : memref<1x56x32xbf16, #tpu.memory_space<vmem>>, vector<1x28x32xbf16>
    %98 = vector.shape_cast %97 : vector<1x28x32xbf16> to vector<28x32xbf16>
    %c12 = arith.constant 12 : index
    %c0_89 = arith.constant 0 : index
    %c0_90 = arith.constant 0 : index
    %99 = vector.load %arg3[%c12, %c0_89, %c0_90] : memref<16x32x64xbf16, #tpu.memory_space<vmem>>, vector<1x32x64xbf16>
    %100 = vector.shape_cast %99 : vector<1x32x64xbf16> to vector<32x64xbf16>
    %cst_91 = arith.constant dense<0.000000e+00> : vector<28x64xf32>
    %101 = tpu.matmul %98, %100, %cst_91 {dimension_numbers = #tpu.dot_dimension_numbers<[1], [0], [0], [1], [0, 0, 1, 1], [], []>} : vector<28x32xbf16>, vector<32x64xbf16>, vector<28x64xf32> -> vector<28x64xf32>
    %102 = arith.addf %96, %101 : vector<28x64xf32>
    %c0_92 = arith.constant 0 : index
    %c22 = arith.constant 22 : index
    %c0_93 = arith.constant 0 : index
    %103 = vector.load %arg12[%c0_92, %c22, %c0_93] : memref<1x56x32xbf16, #tpu.memory_space<vmem>>, vector<1x28x32xbf16>
    %104 = vector.shape_cast %103 : vector<1x28x32xbf16> to vector<28x32xbf16>
    %c13 = arith.constant 13 : index
    %c0_94 = arith.constant 0 : index
    %c0_95 = arith.constant 0 : index
    %105 = vector.load %arg3[%c13, %c0_94, %c0_95] : memref<16x32x64xbf16, #tpu.memory_space<vmem>>, vector<1x32x64xbf16>
    %106 = vector.shape_cast %105 : vector<1x32x64xbf16> to vector<32x64xbf16>
    %cst_96 = arith.constant dense<0.000000e+00> : vector<28x64xf32>
    %107 = tpu.matmul %104, %106, %cst_96 {dimension_numbers = #tpu.dot_dimension_numbers<[1], [0], [0], [1], [0, 0, 1, 1], [], []>} : vector<28x32xbf16>, vector<32x64xbf16>, vector<28x64xf32> -> vector<28x64xf32>
    %108 = arith.addf %102, %107 : vector<28x64xf32>
    %c0_97 = arith.constant 0 : index
    %c23 = arith.constant 23 : index
    %c0_98 = arith.constant 0 : index
    %109 = vector.load %arg12[%c0_97, %c23, %c0_98] : memref<1x56x32xbf16, #tpu.memory_space<vmem>>, vector<1x28x32xbf16>
    %110 = vector.shape_cast %109 : vector<1x28x32xbf16> to vector<28x32xbf16>
    %c14_99 = arith.constant 14 : index
    %c0_100 = arith.constant 0 : index
    %c0_101 = arith.constant 0 : index
    %111 = vector.load %arg3[%c14_99, %c0_100, %c0_101] : memref<16x32x64xbf16, #tpu.memory_space<vmem>>, vector<1x32x64xbf16>
    %112 = vector.shape_cast %111 : vector<1x32x64xbf16> to vector<32x64xbf16>
    %cst_102 = arith.constant dense<0.000000e+00> : vector<28x64xf32>
    %113 = tpu.matmul %110, %112, %cst_102 {dimension_numbers = #tpu.dot_dimension_numbers<[1], [0], [0], [1], [0, 0, 1, 1], [], []>} : vector<28x32xbf16>, vector<32x64xbf16>, vector<28x64xf32> -> vector<28x64xf32>
    %114 = arith.addf %108, %113 : vector<28x64xf32>
    %c0_103 = arith.constant 0 : index
    %c24 = arith.constant 24 : index
    %c0_104 = arith.constant 0 : index
    %115 = vector.load %arg12[%c0_103, %c24, %c0_104] : memref<1x56x32xbf16, #tpu.memory_space<vmem>>, vector<1x28x32xbf16>
    %116 = vector.shape_cast %115 : vector<1x28x32xbf16> to vector<28x32xbf16>
    %c15_105 = arith.constant 15 : index
    %c0_106 = arith.constant 0 : index
    %c0_107 = arith.constant 0 : index
    %117 = vector.load %arg3[%c15_105, %c0_106, %c0_107] : memref<16x32x64xbf16, #tpu.memory_space<vmem>>, vector<1x32x64xbf16>
    %118 = vector.shape_cast %117 : vector<1x32x64xbf16> to vector<32x64xbf16>
    %cst_108 = arith.constant dense<0.000000e+00> : vector<28x64xf32>
    %119 = tpu.matmul %116, %118, %cst_108 {dimension_numbers = #tpu.dot_dimension_numbers<[1], [0], [0], [1], [0, 0, 1, 1], [], []>} : vector<28x32xbf16>, vector<32x64xbf16>, vector<28x64xf32> -> vector<28x64xf32>
    %120 = arith.addf %114, %119 : vector<28x64xf32>
    %c0_109 = arith.constant 0 : index
    %c0_110 = arith.constant 0 : index
    %c0_111 = arith.constant 0 : index
    %121 = vector.load %arg4[%c0_109, %c0_110, %c0_111] : memref<1x1x64xf32, #tpu.memory_space<vmem>>, vector<1x1x64xf32>
    %122 = vector.shape_cast %121 : vector<1x1x64xf32> to vector<1x64xf32>
    %123 = vector.broadcast %122 : vector<1x64xf32> to vector<28x64xf32>
    %124 = arith.addf %120, %123 : vector<28x64xf32>
    %125 = arith.truncf %124 : vector<28x64xf32> to vector<28x64xbf16>
    %c0_112 = arith.constant 0 : index
    %c0_113 = arith.constant 0 : index
    %c0_114 = arith.constant 0 : index
    %126 = vector.load %arg9[%c0_112, %c0_113, %c0_114] : memref<1x28x64xbf16, #tpu.memory_space<vmem>>, vector<1x28x64xbf16>
    %127 = vector.shape_cast %126 : vector<1x28x64xbf16> to vector<28x64xbf16>
    %128 = vector.shape_cast %125 : vector<28x64xbf16> to vector<1x28x64xbf16>
    tpu.vector_store %arg9[%c0_112, %c0_113, %c0_114], %128 {strides = array<i32>} : memref<1x28x64xbf16, #tpu.memory_space<vmem>>, vector<1x28x64xbf16>,
    %c0_115 = arith.constant 0 : index
    %c0_116 = arith.constant 0 : index
    %c0_117 = arith.constant 0 : index
    %129 = vector.load %arg8[%c0_115, %c0_116, %c0_117] : memref<1x28x1xf32, #tpu.memory_space<vmem>>, vector<1x28x1xf32>
    %130 = vector.shape_cast %129 : vector<1x28x1xf32> to vector<28x1xf32>
    %131 = vector.broadcast %130 : vector<28x1xf32> to vector<28x64xf32>
    %132 = arith.mulf %124, %131 : vector<28x64xf32>
    %cst_118 = arith.constant dense<0.000000e+00> : vector<64xf32>
    %133 = vector.multi_reduction <add>, %132, %cst_118 [0] : vector<28x64xf32> to vector<64xf32>
    %134 = vector.shape_cast %133 : vector<64xf32> to vector<1x64xf32>
    %cst_119 = arith.constant 6.250000e-02 : f32
    %135 = vector.broadcast %cst_119 : f32 to vector<1x64xf32>
    %136 = arith.mulf %134, %135 : vector<1x64xf32>
    %137 = vector.broadcast %136 : vector<1x64xf32> to vector<28x64xf32>
    %138 = arith.subf %124, %137 : vector<28x64xf32>
    %139 = vector.broadcast %130 : vector<28x1xf32> to vector<28x64xf32>
    %140 = arith.mulf %138, %139 : vector<28x64xf32>
    %c0_120 = arith.constant 0 : index
    %c0_121 = arith.constant 0 : index
    %c0_122 = arith.constant 0 : index
    %141 = vector.load %arg10[%c0_120, %c0_121, %c0_122] : memref<1x1x64xf32, #tpu.memory_space<vmem>>, vector<1x1x64xf32>
    %142 = vector.shape_cast %141 : vector<1x1x64xf32> to vector<1x64xf32>
    %143 = vector.shape_cast %134 : vector<1x64xf32> to vector<1x1x64xf32>
    tpu.vector_store %arg10[%c0_120, %c0_121, %c0_122], %143 {strides = array<i32>} : memref<1x1x64xf32, #tpu.memory_space<vmem>>, vector<1x1x64xf32>,
    %144 = arith.mulf %140, %140 : vector<28x64xf32>
    %cst_123 = arith.constant dense<0.000000e+00> : vector<64xf32>
    %145 = vector.multi_reduction <add>, %144, %cst_123 [0] : vector<28x64xf32> to vector<64xf32>
    %146 = vector.shape_cast %145 : vector<64xf32> to vector<1x64xf32>
    %c0_124 = arith.constant 0 : index
    %c0_125 = arith.constant 0 : index
    %c0_126 = arith.constant 0 : index
    %147 = vector.load %arg11[%c0_124, %c0_125, %c0_126] : memref<1x1x64xf32, #tpu.memory_space<vmem>>, vector<1x1x64xf32>
    %148 = vector.shape_cast %147 : vector<1x1x64xf32> to vector<1x64xf32>
    %149 = vector.shape_cast %146 : vector<1x64xf32> to vector<1x1x64xf32>
    tpu.vector_store %arg11[%c0_124, %c0_125, %c0_126], %149 {strides = array<i32>} : memref<1x1x64xf32, #tpu.memory_space<vmem>>, vector<1x1x64xf32>,
    return
  }
  func.func @transform_0(%arg0: i32, %arg1: i32) -> (i32, i32, i32, i32) {
    %c0_i32 = arith.constant 0 : i32
    %c0_i32_0 = arith.constant 0 : i32
    %c0_i32_1 = arith.constant 0 : i32
    %c0_i32_2 = arith.constant 0 : i32
    return %arg0, %c0_i32, %c0_i32_0, %c0_i32_1 : i32, i32, i32, i32
  }
  func.func @transform_1(%arg0: i32, %arg1: i32) -> (i32, i32, i32) {
    %c0_i32 = arith.constant 0 : i32
    %c0_i32_0 = arith.constant 0 : i32
    %c0_i32_1 = arith.constant 0 : i32
    return %c0_i32, %c0_i32_0, %arg1 : i32, i32, i32
  }
  func.func @transform_2(%arg0: i32, %arg1: i32) -> (i32, i32, i32) {
    %c0_i32 = arith.constant 0 : i32
    %c0_i32_0 = arith.constant 0 : i32
    %c0_i32_1 = arith.constant 0 : i32
    return %c0_i32, %c0_i32_0, %arg1 : i32, i32, i32
  }
  func.func @transform_3(%arg0: i32, %arg1: i32) -> (i32, i32, i32) {
    %c0_i32 = arith.constant 0 : i32
    %c0_i32_0 = arith.constant 0 : i32
    %c0_i32_1 = arith.constant 0 : i32
    %c0_i32_2 = arith.constant 0 : i32
    return %c0_i32, %c0_i32_0, %c0_i32_1 : i32, i32, i32
  }
  func.func @transform_4(%arg0: i32, %arg1: i32) -> (i32, i32, i32) {
    %c0_i32 = arith.constant 0 : i32
    %c0_i32_0 = arith.constant 0 : i32
    %c0_i32_1 = arith.constant 0 : i32
    %c0_i32_2 = arith.constant 0 : i32
    return %c0_i32, %c0_i32_0, %c0_i32_1 : i32, i32, i32
  }
  func.func @transform_5(%arg0: i32, %arg1: i32) -> (i32, i32, i32, i32) {
    %c0_i32 = arith.constant 0 : i32
    %c0_i32_0 = arith.constant 0 : i32
    %c0_i32_1 = arith.constant 0 : i32
    %c0_i32_2 = arith.constant 0 : i32
    %c0_i32_3 = arith.constant 0 : i32
    return %c0_i32, %c0_i32_0, %c0_i32_1, %c0_i32_2 : i32, i32, i32, i32
  }
  func.func @transform_6(%arg0: i32, %arg1: i32) -> (i32, i32, i32) {
    %c0_i32 = arith.constant 0 : i32
    %c0_i32_0 = arith.constant 0 : i32
    %c0_i32_1 = arith.constant 0 : i32
    %c0_i32_2 = arith.constant 0 : i32
    return %c0_i32, %c0_i32_0, %c0_i32_1 : i32, i32, i32
  }
  func.func @transform_7(%arg0: i32, %arg1: i32) -> (i32, i32, i32) {
    %c0_i32 = arith.constant 0 : i32
    %c0_i32_0 = arith.constant 0 : i32
    return %arg0, %c0_i32, %arg1 : i32, i32, i32
  }
  func.func @transform_8(%arg0: i32, %arg1: i32) -> (i32, i32, i32) {
    %c0_i32 = arith.constant 0 : i32
    %c0_i32_0 = arith.constant 0 : i32
    return %arg0, %c0_i32, %arg1 : i32, i32, i32
  }
  func.func @transform_9(%arg0: i32, %arg1: i32) -> (i32, i32, i32) {
    %c0_i32 = arith.constant 0 : i32
    %c0_i32_0 = arith.constant 0 : i32
    return %arg0, %c0_i32, %arg1 : i32, i32, i32
  }
}

module attributes {stable_mosaic.version = 11 : i64} {
  func.func @_conv_tap_kernel(%arg0: i32, %arg1: i32, %arg2: memref<1x1x72x64xbf16, #tpu.memory_space<vmem>>, %arg3: memref<16x64x1xbf16, #tpu.memory_space<vmem>>, %arg4: memref<1x1x1xf32, #tpu.memory_space<vmem>>, %arg5: memref<1x1x64xf32, #tpu.memory_space<vmem>>, %arg6: memref<1x1x64xf32, #tpu.memory_space<vmem>>, %arg7: memref<1x1x72x1xf32, #tpu.memory_space<vmem>>, %arg8: memref<1x40x1xf32, #tpu.memory_space<vmem>>, %arg9: memref<1x72x64xbf16, #tpu.memory_space<vmem>>) attributes {dimension_semantics = [#tpu.dimension_semantics<parallel>, #tpu.dimension_semantics<parallel>], iteration_bounds = array<i64: 2, 1>, scalar_prefetch = 0 : i64, scratch_operands = 1 : i64, tpu.core_type = #tpu.core_type<tc>, window_params = [{transform_indices = @transform_0, window_bounds = array<i64: 1, 1, 72, 64>}, {transform_indices = @transform_1, window_bounds = array<i64: 16, 64, 1>}, {transform_indices = @transform_2, window_bounds = array<i64: 1, 1, 1>}, {pipeline_mode = #tpu.pipeline_mode<synchronous>, transform_indices = @transform_3, window_bounds = array<i64: 1, 1, 64>}, {pipeline_mode = #tpu.pipeline_mode<synchronous>, transform_indices = @transform_4, window_bounds = array<i64: 1, 1, 64>}, {pipeline_mode = #tpu.pipeline_mode<synchronous>, transform_indices = @transform_5, window_bounds = array<i64: 1, 1, 72, 1>}, {transform_indices = @transform_6, window_bounds = array<i64: 1, 40, 1>}]} {
    %c0 = arith.constant 0 : index
    %c0_0 = arith.constant 0 : index
    %c0_1 = arith.constant 0 : index
    %c0_2 = arith.constant 0 : index
    %0 = vector.load %arg2[%c0, %c0_0, %c0_1, %c0_2] : memref<1x1x72x64xbf16, #tpu.memory_space<vmem>>, vector<1x1x72x64xbf16>
    %1 = vector.shape_cast %0 : vector<1x1x72x64xbf16> to vector<1x72x64xbf16>
    %2 = arith.extf %1 : vector<1x72x64xbf16> to vector<1x72x64xf32>
    %c0_3 = arith.constant 0 : index
    %c0_4 = arith.constant 0 : index
    %c0_5 = arith.constant 0 : index
    %3 = vector.load %arg5[%c0_3, %c0_4, %c0_5] : memref<1x1x64xf32, #tpu.memory_space<vmem>>, vector<1x1x64xf32>
    %4 = vector.shape_cast %3 : vector<1x1x64xf32> to vector<1x64xf32>
    %5 = vector.shape_cast %4 : vector<1x64xf32> to vector<1x1x64xf32>
    %6 = vector.broadcast %5 : vector<1x1x64xf32> to vector<1x72x64xf32>
    %7 = arith.mulf %2, %6 : vector<1x72x64xf32>
    %c0_6 = arith.constant 0 : index
    %c0_7 = arith.constant 0 : index
    %c0_8 = arith.constant 0 : index
    %8 = vector.load %arg6[%c0_6, %c0_7, %c0_8] : memref<1x1x64xf32, #tpu.memory_space<vmem>>, vector<1x1x64xf32>
    %9 = vector.shape_cast %8 : vector<1x1x64xf32> to vector<1x64xf32>
    %10 = vector.shape_cast %9 : vector<1x64xf32> to vector<1x1x64xf32>
    %11 = vector.broadcast %10 : vector<1x1x64xf32> to vector<1x72x64xf32>
    %12 = arith.addf %7, %11 : vector<1x72x64xf32>
    %cst = arith.constant 0.000000e+00 : f32
    %13 = vector.broadcast %cst : f32 to vector<1x72x64xf32>
    %14 = arith.cmpf ogt, %12, %13 : vector<1x72x64xf32>
    %cst_9 = arith.constant 2.000000e-01 : f32
    %15 = vector.broadcast %cst_9 : f32 to vector<1x72x64xf32>
    %16 = arith.mulf %15, %12 : vector<1x72x64xf32>
    %17 = arith.select %14, %12, %16 : vector<1x72x64xi1>, vector<1x72x64xf32>
    %c0_10 = arith.constant 0 : index
    %c0_11 = arith.constant 0 : index
    %c0_12 = arith.constant 0 : index
    %c0_13 = arith.constant 0 : index
    %18 = vector.load %arg7[%c0_10, %c0_11, %c0_12, %c0_13] : memref<1x1x72x1xf32, #tpu.memory_space<vmem>>, vector<1x1x72x1xf32>
    %19 = vector.shape_cast %18 : vector<1x1x72x1xf32> to vector<1x72x1xf32>
    %20 = vector.broadcast %19 : vector<1x72x1xf32> to vector<1x72x64xf32>
    %21 = arith.mulf %17, %20 : vector<1x72x64xf32>
    %22 = arith.truncf %21 : vector<1x72x64xf32> to vector<1x72x64xbf16>
    %c0_14 = arith.constant 0 : index
    %c0_15 = arith.constant 0 : index
    %c0_16 = arith.constant 0 : index
    %23 = vector.load %arg9[%c0_14, %c0_15, %c0_16] : memref<1x72x64xbf16, #tpu.memory_space<vmem>>, vector<1x72x64xbf16>
    tpu.vector_store %arg9[%c0_14, %c0_15, %c0_16], %22 {strides = array<i32>} : memref<1x72x64xbf16, #tpu.memory_space<vmem>>, vector<1x72x64xbf16>,
    %cst_17 = arith.constant 0.000000e+00 : f32
    %24 = vector.broadcast %cst_17 : f32 to vector<40x1xf32>
    %c0_18 = arith.constant 0 : index
    %c0_19 = arith.constant 0 : index
    %c0_20 = arith.constant 0 : index
    %25 = vector.load %arg9[%c0_18, %c0_19, %c0_20] : memref<1x72x64xbf16, #tpu.memory_space<vmem>>, vector<1x40x64xbf16>
    %26 = vector.shape_cast %25 : vector<1x40x64xbf16> to vector<40x64xbf16>
    %c0_21 = arith.constant 0 : index
    %c0_22 = arith.constant 0 : index
    %c0_23 = arith.constant 0 : index
    %27 = vector.load %arg3[%c0_21, %c0_22, %c0_23] : memref<16x64x1xbf16, #tpu.memory_space<vmem>>, vector<1x64x1xbf16>
    %28 = vector.shape_cast %27 : vector<1x64x1xbf16> to vector<64x1xbf16>
    %cst_24 = arith.constant dense<0.000000e+00> : vector<40x1xf32>
    %29 = tpu.matmul %26, %28, %cst_24 {dimension_numbers = #tpu.dot_dimension_numbers<[1], [0], [0], [1], [0, 0, 1, 1], [], []>} : vector<40x64xbf16>, vector<64x1xbf16>, vector<40x1xf32> -> vector<40x1xf32>
    %30 = arith.addf %24, %29 : vector<40x1xf32>
    %c0_25 = arith.constant 0 : index
    %c1 = arith.constant 1 : index
    %c0_26 = arith.constant 0 : index
    %31 = vector.load %arg9[%c0_25, %c1, %c0_26] : memref<1x72x64xbf16, #tpu.memory_space<vmem>>, vector<1x40x64xbf16>
    %32 = vector.shape_cast %31 : vector<1x40x64xbf16> to vector<40x64xbf16>
    %c1_27 = arith.constant 1 : index
    %c0_28 = arith.constant 0 : index
    %c0_29 = arith.constant 0 : index
    %33 = vector.load %arg3[%c1_27, %c0_28, %c0_29] : memref<16x64x1xbf16, #tpu.memory_space<vmem>>, vector<1x64x1xbf16>
    %34 = vector.shape_cast %33 : vector<1x64x1xbf16> to vector<64x1xbf16>
    %cst_30 = arith.constant dense<0.000000e+00> : vector<40x1xf32>
    %35 = tpu.matmul %32, %34, %cst_30 {dimension_numbers = #tpu.dot_dimension_numbers<[1], [0], [0], [1], [0, 0, 1, 1], [], []>} : vector<40x64xbf16>, vector<64x1xbf16>, vector<40x1xf32> -> vector<40x1xf32>
    %36 = arith.addf %30, %35 : vector<40x1xf32>
    %c0_31 = arith.constant 0 : index
    %c2 = arith.constant 2 : index
    %c0_32 = arith.constant 0 : index
    %37 = vector.load %arg9[%c0_31, %c2, %c0_32] : memref<1x72x64xbf16, #tpu.memory_space<vmem>>, vector<1x40x64xbf16>
    %38 = vector.shape_cast %37 : vector<1x40x64xbf16> to vector<40x64xbf16>
    %c2_33 = arith.constant 2 : index
    %c0_34 = arith.constant 0 : index
    %c0_35 = arith.constant 0 : index
    %39 = vector.load %arg3[%c2_33, %c0_34, %c0_35] : memref<16x64x1xbf16, #tpu.memory_space<vmem>>, vector<1x64x1xbf16>
    %40 = vector.shape_cast %39 : vector<1x64x1xbf16> to vector<64x1xbf16>
    %cst_36 = arith.constant dense<0.000000e+00> : vector<40x1xf32>
    %41 = tpu.matmul %38, %40, %cst_36 {dimension_numbers = #tpu.dot_dimension_numbers<[1], [0], [0], [1], [0, 0, 1, 1], [], []>} : vector<40x64xbf16>, vector<64x1xbf16>, vector<40x1xf32> -> vector<40x1xf32>
    %42 = arith.addf %36, %41 : vector<40x1xf32>
    %c0_37 = arith.constant 0 : index
    %c3 = arith.constant 3 : index
    %c0_38 = arith.constant 0 : index
    %43 = vector.load %arg9[%c0_37, %c3, %c0_38] : memref<1x72x64xbf16, #tpu.memory_space<vmem>>, vector<1x40x64xbf16>
    %44 = vector.shape_cast %43 : vector<1x40x64xbf16> to vector<40x64xbf16>
    %c3_39 = arith.constant 3 : index
    %c0_40 = arith.constant 0 : index
    %c0_41 = arith.constant 0 : index
    %45 = vector.load %arg3[%c3_39, %c0_40, %c0_41] : memref<16x64x1xbf16, #tpu.memory_space<vmem>>, vector<1x64x1xbf16>
    %46 = vector.shape_cast %45 : vector<1x64x1xbf16> to vector<64x1xbf16>
    %cst_42 = arith.constant dense<0.000000e+00> : vector<40x1xf32>
    %47 = tpu.matmul %44, %46, %cst_42 {dimension_numbers = #tpu.dot_dimension_numbers<[1], [0], [0], [1], [0, 0, 1, 1], [], []>} : vector<40x64xbf16>, vector<64x1xbf16>, vector<40x1xf32> -> vector<40x1xf32>
    %48 = arith.addf %42, %47 : vector<40x1xf32>
    %c0_43 = arith.constant 0 : index
    %c8 = arith.constant 8 : index
    %c0_44 = arith.constant 0 : index
    %49 = vector.load %arg9[%c0_43, %c8, %c0_44] : memref<1x72x64xbf16, #tpu.memory_space<vmem>>, vector<1x40x64xbf16>
    %50 = vector.shape_cast %49 : vector<1x40x64xbf16> to vector<40x64xbf16>
    %c4 = arith.constant 4 : index
    %c0_45 = arith.constant 0 : index
    %c0_46 = arith.constant 0 : index
    %51 = vector.load %arg3[%c4, %c0_45, %c0_46] : memref<16x64x1xbf16, #tpu.memory_space<vmem>>, vector<1x64x1xbf16>
    %52 = vector.shape_cast %51 : vector<1x64x1xbf16> to vector<64x1xbf16>
    %cst_47 = arith.constant dense<0.000000e+00> : vector<40x1xf32>
    %53 = tpu.matmul %50, %52, %cst_47 {dimension_numbers = #tpu.dot_dimension_numbers<[1], [0], [0], [1], [0, 0, 1, 1], [], []>} : vector<40x64xbf16>, vector<64x1xbf16>, vector<40x1xf32> -> vector<40x1xf32>
    %54 = arith.addf %48, %53 : vector<40x1xf32>
    %c0_48 = arith.constant 0 : index
    %c9 = arith.constant 9 : index
    %c0_49 = arith.constant 0 : index
    %55 = vector.load %arg9[%c0_48, %c9, %c0_49] : memref<1x72x64xbf16, #tpu.memory_space<vmem>>, vector<1x40x64xbf16>
    %56 = vector.shape_cast %55 : vector<1x40x64xbf16> to vector<40x64xbf16>
    %c5 = arith.constant 5 : index
    %c0_50 = arith.constant 0 : index
    %c0_51 = arith.constant 0 : index
    %57 = vector.load %arg3[%c5, %c0_50, %c0_51] : memref<16x64x1xbf16, #tpu.memory_space<vmem>>, vector<1x64x1xbf16>
    %58 = vector.shape_cast %57 : vector<1x64x1xbf16> to vector<64x1xbf16>
    %cst_52 = arith.constant dense<0.000000e+00> : vector<40x1xf32>
    %59 = tpu.matmul %56, %58, %cst_52 {dimension_numbers = #tpu.dot_dimension_numbers<[1], [0], [0], [1], [0, 0, 1, 1], [], []>} : vector<40x64xbf16>, vector<64x1xbf16>, vector<40x1xf32> -> vector<40x1xf32>
    %60 = arith.addf %54, %59 : vector<40x1xf32>
    %c0_53 = arith.constant 0 : index
    %c10 = arith.constant 10 : index
    %c0_54 = arith.constant 0 : index
    %61 = vector.load %arg9[%c0_53, %c10, %c0_54] : memref<1x72x64xbf16, #tpu.memory_space<vmem>>, vector<1x40x64xbf16>
    %62 = vector.shape_cast %61 : vector<1x40x64xbf16> to vector<40x64xbf16>
    %c6 = arith.constant 6 : index
    %c0_55 = arith.constant 0 : index
    %c0_56 = arith.constant 0 : index
    %63 = vector.load %arg3[%c6, %c0_55, %c0_56] : memref<16x64x1xbf16, #tpu.memory_space<vmem>>, vector<1x64x1xbf16>
    %64 = vector.shape_cast %63 : vector<1x64x1xbf16> to vector<64x1xbf16>
    %cst_57 = arith.constant dense<0.000000e+00> : vector<40x1xf32>
    %65 = tpu.matmul %62, %64, %cst_57 {dimension_numbers = #tpu.dot_dimension_numbers<[1], [0], [0], [1], [0, 0, 1, 1], [], []>} : vector<40x64xbf16>, vector<64x1xbf16>, vector<40x1xf32> -> vector<40x1xf32>
    %66 = arith.addf %60, %65 : vector<40x1xf32>
    %c0_58 = arith.constant 0 : index
    %c11 = arith.constant 11 : index
    %c0_59 = arith.constant 0 : index
    %67 = vector.load %arg9[%c0_58, %c11, %c0_59] : memref<1x72x64xbf16, #tpu.memory_space<vmem>>, vector<1x40x64xbf16>
    %68 = vector.shape_cast %67 : vector<1x40x64xbf16> to vector<40x64xbf16>
    %c7 = arith.constant 7 : index
    %c0_60 = arith.constant 0 : index
    %c0_61 = arith.constant 0 : index
    %69 = vector.load %arg3[%c7, %c0_60, %c0_61] : memref<16x64x1xbf16, #tpu.memory_space<vmem>>, vector<1x64x1xbf16>
    %70 = vector.shape_cast %69 : vector<1x64x1xbf16> to vector<64x1xbf16>
    %cst_62 = arith.constant dense<0.000000e+00> : vector<40x1xf32>
    %71 = tpu.matmul %68, %70, %cst_62 {dimension_numbers = #tpu.dot_dimension_numbers<[1], [0], [0], [1], [0, 0, 1, 1], [], []>} : vector<40x64xbf16>, vector<64x1xbf16>, vector<40x1xf32> -> vector<40x1xf32>
    %72 = arith.addf %66, %71 : vector<40x1xf32>
    %c0_63 = arith.constant 0 : index
    %c16 = arith.constant 16 : index
    %c0_64 = arith.constant 0 : index
    %73 = vector.load %arg9[%c0_63, %c16, %c0_64] : memref<1x72x64xbf16, #tpu.memory_space<vmem>>, vector<1x40x64xbf16>
    %74 = vector.shape_cast %73 : vector<1x40x64xbf16> to vector<40x64xbf16>
    %c8_65 = arith.constant 8 : index
    %c0_66 = arith.constant 0 : index
    %c0_67 = arith.constant 0 : index
    %75 = vector.load %arg3[%c8_65, %c0_66, %c0_67] : memref<16x64x1xbf16, #tpu.memory_space<vmem>>, vector<1x64x1xbf16>
    %76 = vector.shape_cast %75 : vector<1x64x1xbf16> to vector<64x1xbf16>
    %cst_68 = arith.constant dense<0.000000e+00> : vector<40x1xf32>
    %77 = tpu.matmul %74, %76, %cst_68 {dimension_numbers = #tpu.dot_dimension_numbers<[1], [0], [0], [1], [0, 0, 1, 1], [], []>} : vector<40x64xbf16>, vector<64x1xbf16>, vector<40x1xf32> -> vector<40x1xf32>
    %78 = arith.addf %72, %77 : vector<40x1xf32>
    %c0_69 = arith.constant 0 : index
    %c17 = arith.constant 17 : index
    %c0_70 = arith.constant 0 : index
    %79 = vector.load %arg9[%c0_69, %c17, %c0_70] : memref<1x72x64xbf16, #tpu.memory_space<vmem>>, vector<1x40x64xbf16>
    %80 = vector.shape_cast %79 : vector<1x40x64xbf16> to vector<40x64xbf16>
    %c9_71 = arith.constant 9 : index
    %c0_72 = arith.constant 0 : index
    %c0_73 = arith.constant 0 : index
    %81 = vector.load %arg3[%c9_71, %c0_72, %c0_73] : memref<16x64x1xbf16, #tpu.memory_space<vmem>>, vector<1x64x1xbf16>
    %82 = vector.shape_cast %81 : vector<1x64x1xbf16> to vector<64x1xbf16>
    %cst_74 = arith.constant dense<0.000000e+00> : vector<40x1xf32>
    %83 = tpu.matmul %80, %82, %cst_74 {dimension_numbers = #tpu.dot_dimension_numbers<[1], [0], [0], [1], [0, 0, 1, 1], [], []>} : vector<40x64xbf16>, vector<64x1xbf16>, vector<40x1xf32> -> vector<40x1xf32>
    %84 = arith.addf %78, %83 : vector<40x1xf32>
    %c0_75 = arith.constant 0 : index
    %c18 = arith.constant 18 : index
    %c0_76 = arith.constant 0 : index
    %85 = vector.load %arg9[%c0_75, %c18, %c0_76] : memref<1x72x64xbf16, #tpu.memory_space<vmem>>, vector<1x40x64xbf16>
    %86 = vector.shape_cast %85 : vector<1x40x64xbf16> to vector<40x64xbf16>
    %c10_77 = arith.constant 10 : index
    %c0_78 = arith.constant 0 : index
    %c0_79 = arith.constant 0 : index
    %87 = vector.load %arg3[%c10_77, %c0_78, %c0_79] : memref<16x64x1xbf16, #tpu.memory_space<vmem>>, vector<1x64x1xbf16>
    %88 = vector.shape_cast %87 : vector<1x64x1xbf16> to vector<64x1xbf16>
    %cst_80 = arith.constant dense<0.000000e+00> : vector<40x1xf32>
    %89 = tpu.matmul %86, %88, %cst_80 {dimension_numbers = #tpu.dot_dimension_numbers<[1], [0], [0], [1], [0, 0, 1, 1], [], []>} : vector<40x64xbf16>, vector<64x1xbf16>, vector<40x1xf32> -> vector<40x1xf32>
    %90 = arith.addf %84, %89 : vector<40x1xf32>
    %c0_81 = arith.constant 0 : index
    %c19 = arith.constant 19 : index
    %c0_82 = arith.constant 0 : index
    %91 = vector.load %arg9[%c0_81, %c19, %c0_82] : memref<1x72x64xbf16, #tpu.memory_space<vmem>>, vector<1x40x64xbf16>
    %92 = vector.shape_cast %91 : vector<1x40x64xbf16> to vector<40x64xbf16>
    %c11_83 = arith.constant 11 : index
    %c0_84 = arith.constant 0 : index
    %c0_85 = arith.constant 0 : index
    %93 = vector.load %arg3[%c11_83, %c0_84, %c0_85] : memref<16x64x1xbf16, #tpu.memory_space<vmem>>, vector<1x64x1xbf16>
    %94 = vector.shape_cast %93 : vector<1x64x1xbf16> to vector<64x1xbf16>
    %cst_86 = arith.constant dense<0.000000e+00> : vector<40x1xf32>
    %95 = tpu.matmul %92, %94, %cst_86 {dimension_numbers = #tpu.dot_dimension_numbers<[1], [0], [0], [1], [0, 0, 1, 1], [], []>} : vector<40x64xbf16>, vector<64x1xbf16>, vector<40x1xf32> -> vector<40x1xf32>
    %96 = arith.addf %90, %95 : vector<40x1xf32>
    %c0_87 = arith.constant 0 : index
    %c24 = arith.constant 24 : index
    %c0_88 = arith.constant 0 : index
    %97 = vector.load %arg9[%c0_87, %c24, %c0_88] : memref<1x72x64xbf16, #tpu.memory_space<vmem>>, vector<1x40x64xbf16>
    %98 = vector.shape_cast %97 : vector<1x40x64xbf16> to vector<40x64xbf16>
    %c12 = arith.constant 12 : index
    %c0_89 = arith.constant 0 : index
    %c0_90 = arith.constant 0 : index
    %99 = vector.load %arg3[%c12, %c0_89, %c0_90] : memref<16x64x1xbf16, #tpu.memory_space<vmem>>, vector<1x64x1xbf16>
    %100 = vector.shape_cast %99 : vector<1x64x1xbf16> to vector<64x1xbf16>
    %cst_91 = arith.constant dense<0.000000e+00> : vector<40x1xf32>
    %101 = tpu.matmul %98, %100, %cst_91 {dimension_numbers = #tpu.dot_dimension_numbers<[1], [0], [0], [1], [0, 0, 1, 1], [], []>} : vector<40x64xbf16>, vector<64x1xbf16>, vector<40x1xf32> -> vector<40x1xf32>
    %102 = arith.addf %96, %101 : vector<40x1xf32>
    %c0_92 = arith.constant 0 : index
    %c25 = arith.constant 25 : index
    %c0_93 = arith.constant 0 : index
    %103 = vector.load %arg9[%c0_92, %c25, %c0_93] : memref<1x72x64xbf16, #tpu.memory_space<vmem>>, vector<1x40x64xbf16>
    %104 = vector.shape_cast %103 : vector<1x40x64xbf16> to vector<40x64xbf16>
    %c13 = arith.constant 13 : index
    %c0_94 = arith.constant 0 : index
    %c0_95 = arith.constant 0 : index
    %105 = vector.load %arg3[%c13, %c0_94, %c0_95] : memref<16x64x1xbf16, #tpu.memory_space<vmem>>, vector<1x64x1xbf16>
    %106 = vector.shape_cast %105 : vector<1x64x1xbf16> to vector<64x1xbf16>
    %cst_96 = arith.constant dense<0.000000e+00> : vector<40x1xf32>
    %107 = tpu.matmul %104, %106, %cst_96 {dimension_numbers = #tpu.dot_dimension_numbers<[1], [0], [0], [1], [0, 0, 1, 1], [], []>} : vector<40x64xbf16>, vector<64x1xbf16>, vector<40x1xf32> -> vector<40x1xf32>
    %108 = arith.addf %102, %107 : vector<40x1xf32>
    %c0_97 = arith.constant 0 : index
    %c26 = arith.constant 26 : index
    %c0_98 = arith.constant 0 : index
    %109 = vector.load %arg9[%c0_97, %c26, %c0_98] : memref<1x72x64xbf16, #tpu.memory_space<vmem>>, vector<1x40x64xbf16>
    %110 = vector.shape_cast %109 : vector<1x40x64xbf16> to vector<40x64xbf16>
    %c14 = arith.constant 14 : index
    %c0_99 = arith.constant 0 : index
    %c0_100 = arith.constant 0 : index
    %111 = vector.load %arg3[%c14, %c0_99, %c0_100] : memref<16x64x1xbf16, #tpu.memory_space<vmem>>, vector<1x64x1xbf16>
    %112 = vector.shape_cast %111 : vector<1x64x1xbf16> to vector<64x1xbf16>
    %cst_101 = arith.constant dense<0.000000e+00> : vector<40x1xf32>
    %113 = tpu.matmul %110, %112, %cst_101 {dimension_numbers = #tpu.dot_dimension_numbers<[1], [0], [0], [1], [0, 0, 1, 1], [], []>} : vector<40x64xbf16>, vector<64x1xbf16>, vector<40x1xf32> -> vector<40x1xf32>
    %114 = arith.addf %108, %113 : vector<40x1xf32>
    %c0_102 = arith.constant 0 : index
    %c27 = arith.constant 27 : index
    %c0_103 = arith.constant 0 : index
    %115 = vector.load %arg9[%c0_102, %c27, %c0_103] : memref<1x72x64xbf16, #tpu.memory_space<vmem>>, vector<1x40x64xbf16>
    %116 = vector.shape_cast %115 : vector<1x40x64xbf16> to vector<40x64xbf16>
    %c15 = arith.constant 15 : index
    %c0_104 = arith.constant 0 : index
    %c0_105 = arith.constant 0 : index
    %117 = vector.load %arg3[%c15, %c0_104, %c0_105] : memref<16x64x1xbf16, #tpu.memory_space<vmem>>, vector<1x64x1xbf16>
    %118 = vector.shape_cast %117 : vector<1x64x1xbf16> to vector<64x1xbf16>
    %cst_106 = arith.constant dense<0.000000e+00> : vector<40x1xf32>
    %119 = tpu.matmul %116, %118, %cst_106 {dimension_numbers = #tpu.dot_dimension_numbers<[1], [0], [0], [1], [0, 0, 1, 1], [], []>} : vector<40x64xbf16>, vector<64x1xbf16>, vector<40x1xf32> -> vector<40x1xf32>
    %120 = arith.addf %114, %119 : vector<40x1xf32>
    %c0_107 = arith.constant 0 : index
    %c0_108 = arith.constant 0 : index
    %c0_109 = arith.constant 0 : index
    %121 = vector.load %arg4[%c0_107, %c0_108, %c0_109] : memref<1x1x1xf32, #tpu.memory_space<vmem>>, vector<1x1x1xf32>
    %122 = vector.shape_cast %121 : vector<1x1x1xf32> to vector<1x1xf32>
    %123 = vector.broadcast %122 : vector<1x1xf32> to vector<40x1xf32>
    %124 = arith.addf %120, %123 : vector<40x1xf32>
    %c0_110 = arith.constant 0 : index
    %c0_111 = arith.constant 0 : index
    %c0_112 = arith.constant 0 : index
    %125 = vector.load %arg8[%c0_110, %c0_111, %c0_112] : memref<1x40x1xf32, #tpu.memory_space<vmem>>, vector<1x40x1xf32>
    %126 = vector.shape_cast %125 : vector<1x40x1xf32> to vector<40x1xf32>
    %127 = vector.shape_cast %124 : vector<40x1xf32> to vector<1x40x1xf32>
    tpu.vector_store %arg8[%c0_110, %c0_111, %c0_112], %127 {strides = array<i32>} : memref<1x40x1xf32, #tpu.memory_space<vmem>>, vector<1x40x1xf32>,
    return
  }
  func.func @transform_0(%arg0: i32, %arg1: i32) -> (i32, i32, i32, i32) {
    %c0_i32 = arith.constant 0 : i32
    %c0_i32_0 = arith.constant 0 : i32
    %c0_i32_1 = arith.constant 0 : i32
    %c0_i32_2 = arith.constant 0 : i32
    return %arg0, %c0_i32, %c0_i32_0, %c0_i32_1 : i32, i32, i32, i32
  }
  func.func @transform_1(%arg0: i32, %arg1: i32) -> (i32, i32, i32) {
    %c0_i32 = arith.constant 0 : i32
    %c0_i32_0 = arith.constant 0 : i32
    %c0_i32_1 = arith.constant 0 : i32
    return %c0_i32, %c0_i32_0, %arg1 : i32, i32, i32
  }
  func.func @transform_2(%arg0: i32, %arg1: i32) -> (i32, i32, i32) {
    %c0_i32 = arith.constant 0 : i32
    %c0_i32_0 = arith.constant 0 : i32
    %c0_i32_1 = arith.constant 0 : i32
    return %c0_i32, %c0_i32_0, %arg1 : i32, i32, i32
  }
  func.func @transform_3(%arg0: i32, %arg1: i32) -> (i32, i32, i32) {
    %c0_i32 = arith.constant 0 : i32
    %c0_i32_0 = arith.constant 0 : i32
    %c0_i32_1 = arith.constant 0 : i32
    %c0_i32_2 = arith.constant 0 : i32
    return %c0_i32, %c0_i32_0, %c0_i32_1 : i32, i32, i32
  }
  func.func @transform_4(%arg0: i32, %arg1: i32) -> (i32, i32, i32) {
    %c0_i32 = arith.constant 0 : i32
    %c0_i32_0 = arith.constant 0 : i32
    %c0_i32_1 = arith.constant 0 : i32
    %c0_i32_2 = arith.constant 0 : i32
    return %c0_i32, %c0_i32_0, %c0_i32_1 : i32, i32, i32
  }
  func.func @transform_5(%arg0: i32, %arg1: i32) -> (i32, i32, i32, i32) {
    %c0_i32 = arith.constant 0 : i32
    %c0_i32_0 = arith.constant 0 : i32
    %c0_i32_1 = arith.constant 0 : i32
    %c0_i32_2 = arith.constant 0 : i32
    %c0_i32_3 = arith.constant 0 : i32
    return %c0_i32, %c0_i32_0, %c0_i32_1, %c0_i32_2 : i32, i32, i32, i32
  }
  func.func @transform_6(%arg0: i32, %arg1: i32) -> (i32, i32, i32) {
    %c0_i32 = arith.constant 0 : i32
    %c0_i32_0 = arith.constant 0 : i32
    return %arg0, %c0_i32, %arg1 : i32, i32, i32
  }
}

</mosaic_0001>

<llo_original>
// kernel: discriminator_forward.5
$region0: #{discriminator_forward.5}
  #allocation0 [shape = 'u32[]', space=smem, size = 0x4, offset = 0x4, fixed_abs, tag = 'smem constant byte address 0x4 - core index']
  #allocation1 [shape = 'u32[72,128]{1,0:T(1,128)}', space=vmem, size = 0x9000, scoped, tag = 'internal scratch']
  %s0 = inlined_call_operand.vmem [shape: bf16[2,4,104,3], index: 0, kind: input, shape index: {}]
  %s1 = inlined_call_operand.vmem [shape: bf16[16,3,8], index: 1, kind: input, shape index: {}]
  %s2 = inlined_call_operand.vmem [shape: f32[1,1,8], index: 2, kind: input, shape index: {}]
  %s3 = inlined_call_operand.vmem [shape: bf16[2,90,8], index: 3, kind: output, shape index: {}]
  %s4 = sld [smem:[#allocation0]]
  $region45: #{discriminator_forward.5} parent=0
    _
  %s6 = ssub.s32 1, %s4
  %s7 = scalar_select 0, %s6, %s4
  loop: start=0, step=1, limit=4
  $region2: #{discriminator_forward.5} parent=0 // loop_pre_header
    _
  $region3: #{discriminator_forward.5} parent=0 // loop_header
    %s9 = sphi 0, %s13
    %p10 = scmp.ge.s32.totalorder %s9, 4
    %s16 = sphi 0, %s28
    %s17 = sphi 0, %s24
    %s18 = sphi 0, %s16
    %s19 = sphi 0, %s17
    %s20 = sphi 0, %s18
    %s21 = sphi 0, %s19
    %s31 = sphi 0, %s33
    %s34 = sphi 0, %s31
    %s35 = sphi 0, %s34
    %s51 = sphi 0, %s35
    %s57 = sphi 0, %s59
    %s60 = sphi 0, %s57
    %s61 = sphi 0, %s60
    %s77 = sphi 0, %s61
    %s83 = sphi 0, %s85
    %s86 = sphi 0, %s83
    %s87 = sphi 0, %s86
    %s103 = sphi 0, %s87
    %s111 = sphi 0, %s113
    %s114 = sphi 0, %s111
    %s115 = sphi 0, %s114
    %s131 = sphi 0, %s115
  $region4: #{discriminator_forward.5} parent=0 // loop_header_branch
    %12 = sbr.rel (%p10) target = $region8
  $region5: #{discriminator_forward.5} parent=0 // loop_body
    %s14 = ssub.s32 %s9, 1
    %s15 = ssub.s32 %s9, 2
    %s22 = sadd.s32 1, %s17
    %p23 = scmp.ge.s32.totalorder %s22, 1
    %s24 = scalar_select %p23, 0, %s22
    %s25 = sadd.s32 1, %s16
    %s26 = scalar_select %p23, %s25, %s16
    %p27 = scmp.ge.s32.totalorder %s26, 2
    %s28 = scalar_select %p27, 0, %s26
    %s29 = ssub.s32 %s16, %s28
    %p30 = scmp.eq.s32.totalorder %s29, 0
    %s32 = sadd.s32 %s31, 1
    %s33 = scalar_select %p30, %s31, %s32
    %p36 = pneg %p30
    %p37 = scmp.eq.s32.totalorder %s9, 1
    %p38 = por %p36, %p37
    %p39 = scmp.ne.s32.totalorder %s31, %s34
    %p40 = scmp.eq.s32.totalorder %s9, 0
    %p41 = por %p39, %p40
    %p42 = scmp.ne.s32.totalorder %s31, %s34
    %p43 = scmp.eq.s32.totalorder %s14, 1
    %p44 = por %p42, %p43
    %p45 = scmp.ne.s32.totalorder %s34, %s35
    %p46 = scmp.eq.s32.totalorder %s14, 0
    %p47 = por %p45, %p46
    %p48 = scmp.ne.s32.totalorder %s34, %s35
    %p49 = scmp.eq.s32.totalorder %s15, 1
    %p50 = por %p48, %p49
    %p52 = scmp.ne.s32.totalorder %s35, %s51
    %p53 = scmp.eq.s32.totalorder %s15, 0
    %p54 = por %p52, %p53
    %s55 = ssub.s32 %s17, %s24
    %p56 = scmp.eq.s32.totalorder %s55, 0
    %s58 = sadd.s32 %s57, 1
    %s59 = scalar_select %p56, %s57, %s58
    %p62 = pneg %p56
    %p63 = scmp.eq.s32.totalorder %s9, 1
    %p64 = por %p62, %p63
    %p65 = scmp.ne.s32.totalorder %s57, %s60
    %p66 = scmp.eq.s32.totalorder %s9, 0
    %p67 = por %p65, %p66
    %p68 = scmp.ne.s32.totalorder %s57, %s60
    %p69 = scmp.eq.s32.totalorder %s14, 1
    %p70 = por %p68, %p69
    %p71 = scmp.ne.s32.totalorder %s60, %s61
    %p72 = scmp.eq.s32.totalorder %s14, 0
    %p73 = por %p71, %p72
    %p74 = scmp.ne.s32.totalorder %s60, %s61
    %p75 = scmp.eq.s32.totalorder %s15, 1
    %p76 = por %p74, %p75
    %p78 = scmp.ne.s32.totalorder %s61, %s77
    %p79 = scmp.eq.s32.totalorder %s15, 0
    %p80 = por %p78, %p79
    %s81 = ssub.s32 %s17, %s24
    %p82 = scmp.eq.s32.totalorder %s81, 0
    %s84 = sadd.s32 %s83, 1
    %s85 = scalar_select %p82, %s83, %s84
    %p88 = pneg %p82
    %p89 = scmp.eq.s32.totalorder %s9, 1
    %p90 = por %p88, %p89
    %p91 = scmp.ne.s32.totalorder %s83, %s86
    %p92 = scmp.eq.s32.totalorder %s9, 0
    %p93 = por %p91, %p92
    %p94 = scmp.ne.s32.totalorder %s83, %s86
    %p95 = scmp.eq.s32.totalorder %s14, 1
    %p96 = por %p94, %p95
    %p97 = scmp.ne.s32.totalorder %s86, %s87
    %p98 = scmp.eq.s32.totalorder %s14, 0
    %p99 = por %p97, %p98
    %p100 = scmp.ne.s32.totalorder %s86, %s87
    %p101 = scmp.eq.s32.totalorder %s15, 1
    %p102 = por %p100, %p101
    %p104 = scmp.ne.s32.totalorder %s87, %s103
    %p105 = scmp.eq.s32.totalorder %s15, 0
    %p106 = por %p104, %p105
    %s107 = ssub.s32 %s16, %s28
    %s108 = ssub.s32 %s17, %s24
    %s109 = sor.u32 %s107, %s108
    %p110 = scmp.eq.s32.totalorder %s109, 0
    %s112 = sadd.s32 %s111, 1
    %s113 = scalar_select %p110, %s111, %s112
    %p116 = pneg %p110
    %p117 = scmp.eq.s32.totalorder %s9, 1
    %p118 = por %p116, %p117
    %p119 = scmp.ne.s32.totalorder %s111, %s114
    %p120 = scmp.eq.s32.totalorder %s9, 0
    %p121 = por %p119, %p120
    %p122 = scmp.ne.s32.totalorder %s111, %s114
    %p123 = scmp.eq.s32.totalorder %s14, 1
    %p124 = por %p122, %p123
    %p125 = scmp.ne.s32.totalorder %s114, %s115
    %p126 = scmp.eq.s32.totalorder %s14, 0
    %p127 = por %p125, %p126
    %p128 = scmp.ne.s32.totalorder %s114, %s115
    %p129 = scmp.eq.s32.totalorder %s15, 1
    %p130 = por %p128, %p129
    %p132 = scmp.ne.s32.totalorder %s115, %s131
    %p133 = scmp.eq.s32.totalorder %s15, 0
    %p134 = por %p132, %p133
    %p135 = scmp.le.s32.totalorder 1, %s9
    %p136 = scmp.lt.s32.totalorder %s9, 3
    %p137 = pnand %p135, %p136
    %p138 = pneg %p137
    // Predicated region
    $region9: #{discriminator_forward.5} parent=5 // pred_check
      _
    $region10: #{discriminator_forward.5} parent=5 // pred_check_branch
      %140 = sbr.rel (%p137) target = $region12
    $region11: #{discriminator_forward.5} parent=5 // pred_region
      %s141 = ssub.s32 %s9, 1
      // Predicated region
      $region13: #{discriminator_forward.5} parent=11 // pred_check
        %p142 = pneg %p73
      $region14: #{discriminator_forward.5} parent=11 // pred_check_branch
        %144 = sbr.rel (%p142) target = $region16
      $region15: #{discriminator_forward.5} parent=11 // pred_region
        %p145 = scmp.lt.s32.totalorder %s19, 0
        %s146 = scalar_select %p145, %s19, 0
        %s147 = smul.addr %s146, 2
        %s148 = scalar_lea.vmem %s1, %s147
      $region16: #{discriminator_forward.5} parent=11 // pred_fallthru
        _
      // Predicated region
      $region17: #{discriminator_forward.5} parent=11 // pred_check
        %p149 = pneg %p99
      $region18: #{discriminator_forward.5} parent=11 // pred_check_branch
        %151 = sbr.rel (%p149) target = $region20
      $region19: #{discriminator_forward.5} parent=11 // pred_region
        %p152 = scmp.lt.s32.totalorder %s19, 0
        %s153 = scalar_select %p152, %s19, 0
        %s154 = scalar_lea.vmem %s2, %s153
      $region20: #{discriminator_forward.5} parent=11 // pred_fallthru
        _
    $region12: #{discriminator_forward.5} parent=5 // pred_fallthru
      _
    %p155 = scmp.lt.s32.totalorder %s9, 2
    // Predicated region
    $region21: #{discriminator_forward.5} parent=5 // pred_check
      %p156 = pneg %p155
    $region22: #{discriminator_forward.5} parent=5 // pred_check_branch
      %158 = sbr.rel (%p156) target = $region24
    $region23: #{discriminator_forward.5} parent=5 // pred_region
      // Predicated region
      $region25: #{discriminator_forward.5} parent=23 // pred_check
        %p159 = pneg %p41
      $region26: #{discriminator_forward.5} parent=23 // pred_check_branch
        %161 = sbr.rel (%p159) target = $region28
      $region27: #{discriminator_forward.5} parent=23 // pred_region
        %p162 = scmp.lt.s32.totalorder %s16, 1
        %s163 = scalar_select %p162, %s16, 1
        %s164 = smul.addr %s163, 52
        %s165 = smul.addr %s164, 4
        %s166 = scalar_lea.vmem %s0, %s165
      $region28: #{discriminator_forward.5} parent=23 // pred_fallthru
        _
    $region24: #{discriminator_forward.5} parent=5 // pred_fallthru
      _
    %p167 = scmp.le.s32.totalorder 1, %s9
    %p168 = scmp.lt.s32.totalorder %s9, 3
    %p169 = pnand %p167, %p168
    %p170 = pneg %p169
    // Predicated region
    $region29: #{discriminator_forward.5} parent=5 // pred_check
      _
    $region30: #{discriminator_forward.5} parent=5 // pred_check_branch
      %172 = sbr.rel (%p169) target = $region32
    $region31: #{discriminator_forward.5} parent=5 // pred_region
      %s173 = ssub.s32 %s9, 1
      %p174 = scmp.lt.s32.totalorder %s18, 1
      %s175 = scalar_select %p174, %s18, 1
      %s176 = smul.addr %s175, 52
      %s177 = smul.addr %s176, 4
      %s178 = scalar_lea.vmem %s0, %s177
      %p179 = pneg %p47
      %p180 = pneg %p44
      %p181 = scmp.lt.s32.totalorder %s19, 0
      %s182 = scalar_select %p181, %s19, 0
      %s183 = smul.addr %s182, 2
      %s184 = scalar_lea.vmem %s1, %s183
      %p185 = pneg %p73
      %p186 = pneg %p70
      %p187 = scmp.lt.s32.totalorder %s19, 0
      %s188 = scalar_select %p187, %s19, 0
      %s189 = scalar_lea.vmem %s2, %s188
      %p190 = pneg %p99
      %p191 = pneg %p96
      %p192 = pneg %p127
      %p193 = pneg %p124
      %p194 = scmp.lt.s32.totalorder %s18, 1
      %s195 = scalar_select %p194, %s18, 1
      %p196 = scmp.lt.s32.totalorder %s19, 0
      %s197 = scalar_select %p196, %s19, 0
      %s198 = smul.addr %s195, 12
      %s199 = sadd.s32 %s197, %s198
      %s200 = smul.addr %s199, 4
      %s201 = scalar_lea.vmem %s3, %s200
      %p202 = scmp.lt.s32.totalorder %s18, 1
      %s203 = scalar_select %p202, %s18, 1
      %s204 = smul.addr %s203, 52
      %s205 = smul.addr %s204, 4
      %s206 = scalar_lea.vmem %s0, %s205
      %p207 = scmp.lt.s32.totalorder %s19, 0
      %s208 = scalar_select %p207, %s19, 0
      %s209 = smul.addr %s208, 2
      %s210 = scalar_lea.vmem %s1, %s209
      %p211 = scmp.lt.s32.totalorder %s19, 0
      %s212 = scalar_select %p211, %s19, 0
      %s213 = scalar_lea.vmem %s2, %s212
      %p214 = scmp.lt.s32.totalorder %s18, 1
      %s215 = scalar_select %p214, %s18, 1
      %p216 = scmp.lt.s32.totalorder %s19, 0
      %s217 = scalar_select %p216, %s19, 0
      %s218 = smul.addr %s215, 12
      %s219 = sadd.s32 %s217, %s218
      %s220 = smul.addr %s219, 4
      %s221 = scalar_lea.vmem %s3, %s220
      %v223 = vld [vmem:[%s206] sm:$0xf]
      %v224 = vld [vmem:[%s206 + $0x4] sm:$0xf]
      %v225 = vld [vmem:[%s206 + $0x8] sm:$0xf]
      %v226 = vld [vmem:[%s206 + $0xc] sm:$0xf]
      %v227 = vld [vmem:[%s206 + $0x10] sm:$0xf]
      %v228 = vld [vmem:[%s206 + $0x14] sm:$0xf]
      %v229 = vld [vmem:[%s206 + $0x18] sm:$0xf]
      %v230 = vld [vmem:[%s206 + $0x1c] sm:$0xf]
      %v231 = vld [vmem:[%s206 + $0x20] sm:$0xf]
      %v232 = vld [vmem:[%s206 + $0x24] sm:$0xf]
      %v233 = vld [vmem:[%s206 + $0x28] sm:$0xf]
      %v234 = vld [vmem:[%s206 + $0x2c] sm:$0x1]
      %v235 = vld [vmem:[%s210] sm:$0x3]
      %s236 = scalar_lea.vmem %s206, 52
      %v237 = vld [vmem:[%s236] sm:$0xf]
      %v238 = vld [vmem:[%s236 + $0x4] sm:$0xf]
      %v239 = vld [vmem:[%s236 + $0x8] sm:$0xf]
      %v240 = vld [vmem:[%s236 + $0xc] sm:$0xf]
      %v241 = vld [vmem:[%s236 + $0x10] sm:$0xf]
      %v242 = vld [vmem:[%s236 + $0x14] sm:$0xf]
      %v243 = vld [vmem:[%s236 + $0x18] sm:$0xf]
      %v244 = vld [vmem:[%s236 + $0x1c] sm:$0xf]
      %v245 = vld [vmem:[%s236 + $0x20] sm:$0xf]
      %v246 = vld [vmem:[%s236 + $0x24] sm:$0xf]
      %v247 = vld [vmem:[%s236 + $0x28] sm:$0xf]
      %v248 = vld [vmem:[%s236 + $0x2c] sm:$0x1]
      %s249 = scalar_lea.vmem %s210, 2
      %v250 = vld [vmem:[%s249] sm:$0x3]
      %v263 = vunpack.c.l.b16 %v237
      %v264 = vunpack.c.l.b16 %v238
      %v265 = vunpack.c.l.b16 %v239
      %v266 = vunpack.c.l.b16 %v240
      %v267 = vunpack.c.l.b16 %v241
      %v268 = vunpack.c.l.b16 %v242
      %v269 = vunpack.c.l.b16 %v243
      %v270 = vunpack.c.l.b16 %v244
      %v271 = vunpack.c.l.b16 %v245
      %v272 = vunpack.c.l.b16 %v246
      %v273 = vunpack.c.l.b16 %v247
      %v274 = vunpack.c.l.b16 %v248
      %v275 = vpack.c.b16 %v264, %v263
      %v276 = vpack.c.b16 %v266, %v265
      %v277 = vpack.c.b16 %v268, %v267
      %v278 = vpack.c.b16 %v270, %v269
      %v279 = vpack.c.b16 %v272, %v271
      %v280 = vpack.c.b16 %v274, %v273
      %vm281 = vcmask 23552
      %v283 = vsel %vm281, %v275, 0
      %v286 = vsel %vm281, %v276, 0
      %v289 = vsel %vm281, %v277, 0
      %v292 = vsel %vm281, %v278, 0
      %v295 = vsel %vm281, %v279, 0
      %v298 = vsel %vm281, %v280, 0
      %vm300 = vcmask 1040384
      %vm301 = vcmask 1041408
      %v302 = vsel %vm300, 4294967295, 65535
      %v303 = vsel %vm301, %v302, 0
      %v305 = vand.u32 %v250, %v303
      %307 = vmatpush.bf16.msra.mxu0 0
      %308 = vmatpush.bf16.msra.mxu0 0
      %309 = vmatpush.bf16.msra.mxu0 0
      %310 = vmatpush.bf16.msra.mxu0 0
      %311 = vmatpush.bf16.msra.mxu0 0
      %312 = vmatpush.bf16.msra.mxu0 0
      %313 = vmatpush.bf16.msra.mxu0 0
      %314 = vmatpush.bf16.msra.mxu0 %v305
      %315 = vmatmul.bf16.gmra.mxu0 %v283
      %v316 = vpop.f32.mrf.mxu0
      %v317 = vadd.f32 0.0, %v316
      %v318 = vpop.f32.mrf.mxu0
      %v319 = vadd.f32 0.0, %v318
      %320 = vmatmul.bf16.gmra.mxu0 %v286
      %v321 = vpop.f32.mrf.mxu0
      %v322 = vadd.f32 0.0, %v321
      %v323 = vpop.f32.mrf.mxu0
      %v324 = vadd.f32 0.0, %v323
      %325 = vmatmul.bf16.gmra.mxu0 %v289
      %v326 = vpop.f32.mrf.mxu0
      %v327 = vadd.f32 0.0, %v326
      %v328 = vpop.f32.mrf.mxu0
      %v329 = vadd.f32 0.0, %v328
      %330 = vmatmul.bf16.gmra.mxu0 %v292
      %v331 = vpop.f32.mrf.mxu0
      %v332 = vadd.f32 0.0, %v331
      %v333 = vpop.f32.mrf.mxu0
      %v334 = vadd.f32 0.0, %v333
      %335 = vmatmul.bf16.gmra.mxu0 %v295
      %v336 = vpop.f32.mrf.mxu0
      %v337 = vadd.f32 0.0, %v336
      %v338 = vpop.f32.mrf.mxu0
      %v339 = vadd.f32 0.0, %v338
      %340 = vmatmul.bf16.gmra.mxu0 %v298
      %v341 = vpop.f32.mrf.mxu0
      %v342 = vadd.f32 0.0, %v341
      %v343 = vpop.f32.mrf.mxu0
      %v344 = vadd.f32 0.0, %v343
      %345 = vdwg.mxu0
      %v358 = vunpack.c.l.b16 %v223
      %v359 = vunpack.c.l.b16 %v224
      %v360 = vunpack.c.l.b16 %v225
      %v361 = vunpack.c.l.b16 %v226
      %v362 = vunpack.c.l.b16 %v227
      %v363 = vunpack.c.l.b16 %v228
      %v364 = vunpack.c.l.b16 %v229
      %v365 = vunpack.c.l.b16 %v230
      %v366 = vunpack.c.l.b16 %v231
      %v367 = vunpack.c.l.b16 %v232
      %v368 = vunpack.c.l.b16 %v233
      %v369 = vunpack.c.l.b16 %v234
      %v370 = vpack.c.b16 %v359, %v358
      %v371 = vpack.c.b16 %v361, %v360
      %v372 = vpack.c.b16 %v363, %v362
      %v373 = vpack.c.b16 %v365, %v364
      %v374 = vpack.c.b16 %v367, %v366
      %v375 = vpack.c.b16 %v369, %v368
      %v377 = vsel %vm281, %v370, 0
      %v380 = vsel %vm281, %v371, 0
      %v383 = vsel %vm281, %v372, 0
      %v386 = vsel %vm281, %v373, 0
      %v389 = vsel %vm281, %v374, 0
      %v392 = vsel %vm281, %v375, 0
      %v395 = vand.u32 %v235, %v303
      %397 = vmatpush.bf16.msra.mxu0 0
      %398 = vmatpush.bf16.msra.mxu0 0
      %399 = vmatpush.bf16.msra.mxu0 0
      %400 = vmatpush.bf16.msra.mxu0 0
      %401 = vmatpush.bf16.msra.mxu0 0
      %402 = vmatpush.bf16.msra.mxu0 0
      %403 = vmatpush.bf16.msra.mxu0 0
      %404 = vmatpush.bf16.msra.mxu0 %v395
      %405 = vmatmul.bf16.gmra.mxu0 %v377
      %v406 = vpop.f32.mrf.mxu0
      %v407 = vadd.f32 %v317, %v406
      %v408 = vpop.f32.mrf.mxu0
      %v409 = vadd.f32 %v319, %v408
      %410 = vmatmul.bf16.gmra.mxu0 %v380
      %v411 = vpop.f32.mrf.mxu0
      %v412 = vadd.f32 %v322, %v411
      %v413 = vpop.f32.mrf.mxu0
      %v414 = vadd.f32 %v324, %v413
      %415 = vmatmul.bf16.gmra.mxu0 %v383
      %v416 = vpop.f32.mrf.mxu0
      %v417 = vadd.f32 %v327, %v416
      %v418 = vpop.f32.mrf.mxu0
      %v419 = vadd.f32 %v329, %v418
      %420 = vmatmul.bf16.gmra.mxu0 %v386
      %v421 = vpop.f32.mrf.mxu0
      %v422 = vadd.f32 %v332, %v421
      %v423 = vpop.f32.mrf.mxu0
      %v424 = vadd.f32 %v334, %v423
      %425 = vmatmul.bf16.gmra.mxu0 %v389
      %v426 = vpop.f32.mrf.mxu0
      %v427 = vadd.f32 %v337, %v426
      %v428 = vpop.f32.mrf.mxu0
      %v429 = vadd.f32 %v339, %v428
      %430 = vmatmul.bf16.gmra.mxu0 %v392
      %v431 = vpop.f32.mrf.mxu0
      %v432 = vadd.f32 %v342, %v431
      %v433 = vpop.f32.mrf.mxu0
      %v434 = vadd.f32 %v344, %v433
      %435 = vdwg.mxu0
      %v436 = vld [vmem:[%s206 + $0x2c] sm:$0x3]
      %s437 = scalar_lea.vmem %s210, 4
      %v438 = vld [vmem:[%s437] sm:$0x3]
      %v440 = vunpack.c.l.b16 %v436
      %v441 = vpack.c.b16 %v440, %v368
      %vm442 = vsmask.f32 7424
      %v443 = vshrl.u32 %v370, 16
      %v445 = vshll.u32 %v370, 16
      %v447 = vrot.slane %v445, 1
      %v448 = vor.u32 %v443, %v447
      %v449 = vshll.u32 %v371, 16
      %v451 = vrot.slane %v449, 1
      %v452 = vsel %vm442, %v448, %v451
      %v453 = vshrl.u32 %v371, 16
      %v455 = vor.u32 %v453, %v451
      %v456 = vshll.u32 %v372, 16
      %v458 = vrot.slane %v456, 1
      %v459 = vsel %vm442, %v455, %v458
      %v460 = vshrl.u32 %v372, 16
      %v462 = vor.u32 %v460, %v458
      %v463 = vshll.u32 %v373, 16
      %v465 = vrot.slane %v463, 1
      %v466 = vsel %vm442, %v462, %v465
      %v467 = vshrl.u32 %v373, 16
      %v469 = vor.u32 %v467, %v465
      %v470 = vshll.u32 %v374, 16
      %v472 = vrot.slane %v470, 1
      %v473 = vsel %vm442, %v469, %v472
      %v474 = vshrl.u32 %v374, 16
      %v476 = vor.u32 %v474, %v472
      %v478 = vshll.u32 %v441, 16
      %v480 = vrot.slane %v478, 1
      %v481 = vsel %vm442, %v476, %v480
      %v482 = vshrl.u32 %v441, 16
      %v484 = vor.u32 %v482, %v480
      %v486 = vsel %vm281, %v452, 0
      %v489 = vsel %vm281, %v459, 0
      %v492 = vsel %vm281, %v466, 0
      %v495 = vsel %vm281, %v473, 0
      %v498 = vsel %vm281, %v481, 0
      %v501 = vsel %vm281, %v484, 0
      %v504 = vand.u32 %v438, %v303
      %506 = vmatpush.bf16.msra.mxu0 0
      %507 = vmatpush.bf16.msra.mxu0 0
      %508 = vmatpush.bf16.msra.mxu0 0
      %509 = vmatpush.bf16.msra.mxu0 0
      %510 = vmatpush.bf16.msra.mxu0 0
      %511 = vmatpush.bf16.msra.mxu0 0
      %512 = vmatpush.bf16.msra.mxu0 0
      %513 = vmatpush.bf16.msra.mxu0 %v504
      %514 = vmatmul.bf16.gmra.mxu0 %v486
      %v515 = vpop.f32.mrf.mxu0
      %v516 = vadd.f32 0.0, %v515
      %v517 = vpop.f32.mrf.mxu0
      %v518 = vadd.f32 0.0, %v517
      %519 = vmatmul.bf16.gmra.mxu0 %v489
      %v520 = vpop.f32.mrf.mxu0
      %v521 = vadd.f32 0.0, %v520
      %v522 = vpop.f32.mrf.mxu0
      %v523 = vadd.f32 0.0, %v522
      %524 = vmatmul.bf16.gmra.mxu0 %v492
      %v525 = vpop.f32.mrf.mxu0
      %v526 = vadd.f32 0.0, %v525
      %v527 = vpop.f32.mrf.mxu0
      %v528 = vadd.f32 0.0, %v527
      %529 = vmatmul.bf16.gmra.mxu0 %v495
      %v530 = vpop.f32.mrf.mxu0
      %v531 = vadd.f32 0.0, %v530
      %v532 = vpop.f32.mrf.mxu0
      %v533 = vadd.f32 0.0, %v532
      %534 = vmatmul.bf16.gmra.mxu0 %v498
      %v535 = vpop.f32.mrf.mxu0
      %v536 = vadd.f32 0.0, %v535
      %v537 = vpop.f32.mrf.mxu0
      %v538 = vadd.f32 0.0, %v537
      %539 = vmatmul.bf16.gmra.mxu0 %v501
      %v540 = vpop.f32.mrf.mxu0
      %v541 = vadd.f32 0.0, %v540
      %v542 = vpop.f32.mrf.mxu0
      %v543 = vadd.f32 0.0, %v542
      %544 = vdwg.mxu0
      %v545 = vadd.f32 %v407, %v516
      %v546 = vadd.f32 %v409, %v518
      %v547 = vadd.f32 %v412, %v521
      %v548 = vadd.f32 %v414, %v523
      %v549 = vadd.f32 %v417, %v526
      %v550 = vadd.f32 %v419, %v528
      %v551 = vadd.f32 %v422, %v531
      %v552 = vadd.f32 %v424, %v533
      %v553 = vadd.f32 %v427, %v536
      %v554 = vadd.f32 %v429, %v538
      %v555 = vadd.f32 %v432, %v541
      %v556 = vadd.f32 %v434, %v543
      %v557 = vld [vmem:[%s236 + $0x2c] sm:$0x3]
      %s558 = scalar_lea.vmem %s210, 6
      %v559 = vld [vmem:[%s558] sm:$0x3]
      %v561 = vunpack.c.l.b16 %v557
      %v562 = vpack.c.b16 %v561, %v273
      %v563 = vshrl.u32 %v275, 16
      %v565 = vshll.u32 %v275, 16
      %v567 = vrot.slane %v565, 1
      %v568 = vor.u32 %v563, %v567
      %v569 = vshll.u32 %v276, 16
      %v571 = vrot.slane %v569, 1
      %v572 = vsel %vm442, %v568, %v571
      %v573 = vshrl.u32 %v276, 16
      %v575 = vor.u32 %v573, %v571
      %v576 = vshll.u32 %v277, 16
      %v578 = vrot.slane %v576, 1
      %v579 = vsel %vm442, %v575, %v578
      %v580 = vshrl.u32 %v277, 16
      %v582 = vor.u32 %v580, %v578
      %v583 = vshll.u32 %v278, 16
      %v585 = vrot.slane %v583, 1
      %v586 = vsel %vm442, %v582, %v585
      %v587 = vshrl.u32 %v278, 16
      %v589 = vor.u32 %v587, %v585
      %v590 = vshll.u32 %v279, 16
      %v592 = vrot.slane %v590, 1
      %v593 = vsel %vm442, %v589, %v592
      %v594 = vshrl.u32 %v279, 16
      %v596 = vor.u32 %v594, %v592
      %v598 = vshll.u32 %v562, 16
      %v600 = vrot.slane %v598, 1
      %v601 = vsel %vm442, %v596, %v600
      %v602 = vshrl.u32 %v562, 16
      %v604 = vor.u32 %v602, %v600
      %v606 = vsel %vm281, %v572, 0
      %v609 = vsel %vm281, %v579, 0
      %v612 = vsel %vm281, %v586, 0
      %v615 = vsel %vm281, %v593, 0
      %v618 = vsel %vm281, %v601, 0
      %v621 = vsel %vm281, %v604, 0
      %v624 = vand.u32 %v559, %v303
      %626 = vmatpush.bf16.msra.mxu0 0
      %627 = vmatpush.bf16.msra.mxu0 0
      %628 = vmatpush.bf16.msra.mxu0 0
      %629 = vmatpush.bf16.msra.mxu0 0
      %630 = vmatpush.bf16.msra.mxu0 0
      %631 = vmatpush.bf16.msra.mxu0 0
      %632 = vmatpush.bf16.msra.mxu0 0
      %633 = vmatpush.bf16.msra.mxu0 %v624
      %634 = vmatmul.bf16.gmra.mxu0 %v606
      %v635 = vpop.f32.mrf.mxu0
      %v636 = vadd.f32 0.0, %v635
      %v637 = vpop.f32.mrf.mxu0
      %v638 = vadd.f32 0.0, %v637
      %639 = vmatmul.bf16.gmra.mxu0 %v609
      %v640 = vpop.f32.mrf.mxu0
      %v641 = vadd.f32 0.0, %v640
      %v642 = vpop.f32.mrf.mxu0
      %v643 = vadd.f32 0.0, %v642
      %644 = vmatmul.bf16.gmra.mxu0 %v612
      %v645 = vpop.f32.mrf.mxu0
      %v646 = vadd.f32 0.0, %v645
      %v647 = vpop.f32.mrf.mxu0
      %v648 = vadd.f32 0.0, %v647
      %649 = vmatmul.bf16.gmra.mxu0 %v615
      %v650 = vpop.f32.mrf.mxu0
      %v651 = vadd.f32 0.0, %v650
      %v652 = vpop.f32.mrf.mxu0
      %v653 = vadd.f32 0.0, %v652
      %654 = vmatmul.bf16.gmra.mxu0 %v618
      %v655 = vpop.f32.mrf.mxu0
      %v656 = vadd.f32 0.0, %v655
      %v657 = vpop.f32.mrf.mxu0
      %v658 = vadd.f32 0.0, %v657
      %659 = vmatmul.bf16.gmra.mxu0 %v621
      %v660 = vpop.f32.mrf.mxu0
      %v661 = vadd.f32 0.0, %v660
      %v662 = vpop.f32.mrf.mxu0
      %v663 = vadd.f32 0.0, %v662
      %664 = vdwg.mxu0
      %v665 = vadd.f32 %v545, %v636
      %v666 = vadd.f32 %v546, %v638
      %v667 = vadd.f32 %v547, %v641
      %v668 = vadd.f32 %v548, %v643
      %v669 = vadd.f32 %v549, %v646
      %v670 = vadd.f32 %v550, %v648
      %v671 = vadd.f32 %v551, %v651
      %v672 = vadd.f32 %v552, %v653
      %v673 = vadd.f32 %v553, %v656
      %v674 = vadd.f32 %v554, %v658
      %v675 = vadd.f32 %v555, %v661
      %v676 = vadd.f32 %v556, %v663
      %s677 = scalar_lea.vmem %s206, 104
      %v678 = vld [vmem:[%s677] sm:$0xf]
      %v679 = vld [vmem:[%s677 + $0x4] sm:$0xf]
      %v680 = vld [vmem:[%s677 + $0x8] sm:$0xf]
      %v681 = vld [vmem:[%s677 + $0xc] sm:$0xf]
      %v682 = vld [vmem:[%s677 + $0x10] sm:$0xf]
      %v683 = vld [vmem:[%s677 + $0x14] sm:$0xf]
      %v684 = vld [vmem:[%s677 + $0x18] sm:$0xf]
      %v685 = vld [vmem:[%s677 + $0x1c] sm:$0xf]
      %v686 = vld [vmem:[%s677 + $0x20] sm:$0xf]
      %v687 = vld [vmem:[%s677 + $0x24] sm:$0xf]
      %v688 = vld [vmem:[%s677 + $0x28] sm:$0xf]
      %v689 = vld [vmem:[%s677 + $0x2c] sm:$0x1]
      %s690 = scalar_lea.vmem %s210, 8
      %v691 = vld [vmem:[%s690] sm:$0x3]
      %v704 = vunpack.c.l.b16 %v678
      %v705 = vunpack.c.l.b16 %v679
      %v706 = vunpack.c.l.b16 %v680
      %v707 = vunpack.c.l.b16 %v681
      %v708 = vunpack.c.l.b16 %v682
      %v709 = vunpack.c.l.b16 %v683
      %v710 = vunpack.c.l.b16 %v684
      %v711 = vunpack.c.l.b16 %v685
      %v712 = vunpack.c.l.b16 %v686
      %v713 = vunpack.c.l.b16 %v687
      %v714 = vunpack.c.l.b16 %v688
      %v715 = vunpack.c.l.b16 %v689
      %v716 = vpack.c.b16 %v705, %v704
      %v717 = vpack.c.b16 %v707, %v706
      %v718 = vpack.c.b16 %v709, %v708
      %v719 = vpack.c.b16 %v711, %v710
      %v720 = vpack.c.b16 %v713, %v712
      %v721 = vpack.c.b16 %v715, %v714
      %v723 = vsel %vm281, %v716, 0
      %v726 = vsel %vm281, %v717, 0
      %v729 = vsel %vm281, %v718, 0
      %v732 = vsel %vm281, %v719, 0
      %v735 = vsel %vm281, %v720, 0
      %v738 = vsel %vm281, %v721, 0
      %v741 = vand.u32 %v691, %v303
      %743 = vmatpush.bf16.msra.mxu0 0
      %744 = vmatpush.bf16.msra.mxu0 0
      %745 = vmatpush.bf16.msra.mxu0 0
      %746 = vmatpush.bf16.msra.mxu0 0
      %747 = vmatpush.bf16.msra.mxu0 0
      %748 = vmatpush.bf16.msra.mxu0 0
      %749 = vmatpush.bf16.msra.mxu0 0
      %750 = vmatpush.bf16.msra.mxu0 %v741
      %751 = vmatmul.bf16.gmra.mxu0 %v723
      %v752 = vpop.f32.mrf.mxu0
      %v753 = vadd.f32 0.0, %v752
      %v754 = vpop.f32.mrf.mxu0
      %v755 = vadd.f32 0.0, %v754
      %756 = vmatmul.bf16.gmra.mxu0 %v726
      %v757 = vpop.f32.mrf.mxu0
      %v758 = vadd.f32 0.0, %v757
      %v759 = vpop.f32.mrf.mxu0
      %v760 = vadd.f32 0.0, %v759
      %761 = vmatmul.bf16.gmra.mxu0 %v729
      %v762 = vpop.f32.mrf.mxu0
      %v763 = vadd.f32 0.0, %v762
      %v764 = vpop.f32.mrf.mxu0
      %v765 = vadd.f32 0.0, %v764
      %766 = vmatmul.bf16.gmra.mxu0 %v732
      %v767 = vpop.f32.mrf.mxu0
      %v768 = vadd.f32 0.0, %v767
      %v769 = vpop.f32.mrf.mxu0
      %v770 = vadd.f32 0.0, %v769
      %771 = vmatmul.bf16.gmra.mxu0 %v735
      %v772 = vpop.f32.mrf.mxu0
      %v773 = vadd.f32 0.0, %v772
      %v774 = vpop.f32.mrf.mxu0
      %v775 = vadd.f32 0.0, %v774
      %776 = vmatmul.bf16.gmra.mxu0 %v738
      %v777 = vpop.f32.mrf.mxu0
      %v778 = vadd.f32 0.0, %v777
      %v779 = vpop.f32.mrf.mxu0
      %v780 = vadd.f32 0.0, %v779
      %781 = vdwg.mxu0
      %v782 = vadd.f32 %v665, %v753
      %v783 = vadd.f32 %v666, %v755
      %v784 = vadd.f32 %v667, %v758
      %v785 = vadd.f32 %v668, %v760
      %v786 = vadd.f32 %v669, %v763
      %v787 = vadd.f32 %v670, %v765
      %v788 = vadd.f32 %v671, %v768
      %v789 = vadd.f32 %v672, %v770
      %v790 = vadd.f32 %v673, %v773
      %v791 = vadd.f32 %v674, %v775
      %v792 = vadd.f32 %v675, %v778
      %v793 = vadd.f32 %v676, %v780
      %s794 = scalar_lea.vmem %s206, 156
      %v795 = vld [vmem:[%s794] sm:$0xf]
      %v796 = vld [vmem:[%s794 + $0x4] sm:$0xf]
      %v797 = vld [vmem:[%s794 + $0x8] sm:$0xf]
      %v798 = vld [vmem:[%s794 + $0xc] sm:$0xf]
      %v799 = vld [vmem:[%s794 + $0x10] sm:$0xf]
      %v800 = vld [vmem:[%s794 + $0x14] sm:$0xf]
      %v801 = vld [vmem:[%s794 + $0x18] sm:$0xf]
      %v802 = vld [vmem:[%s794 + $0x1c] sm:$0xf]
      %v803 = vld [vmem:[%s794 + $0x20] sm:$0xf]
      %v804 = vld [vmem:[%s794 + $0x24] sm:$0xf]
      %v805 = vld [vmem:[%s794 + $0x28] sm:$0xf]
      %v806 = vld [vmem:[%s794 + $0x2c] sm:$0x1]
      %s807 = scalar_lea.vmem %s210, 10
      %v808 = vld [vmem:[%s807] sm:$0x3]
      %v821 = vunpack.c.l.b16 %v795
      %v822 = vunpack.c.l.b16 %v796
      %v823 = vunpack.c.l.b16 %v797
      %v824 = vunpack.c.l.b16 %v798
      %v825 = vunpack.c.l.b16 %v799
      %v826 = vunpack.c.l.b16 %v800
      %v827 = vunpack.c.l.b16 %v801
      %v828 = vunpack.c.l.b16 %v802
      %v829 = vunpack.c.l.b16 %v803
      %v830 = vunpack.c.l.b16 %v804
      %v831 = vunpack.c.l.b16 %v805
      %v832 = vunpack.c.l.b16 %v806
      %v833 = vpack.c.b16 %v822, %v821
      %v834 = vpack.c.b16 %v824, %v823
      %v835 = vpack.c.b16 %v826, %v825
      %v836 = vpack.c.b16 %v828, %v827
      %v837 = vpack.c.b16 %v830, %v829
      %v838 = vpack.c.b16 %v832, %v831
      %v840 = vsel %vm281, %v833, 0
      %v843 = vsel %vm281, %v834, 0
      %v846 = vsel %vm281, %v835, 0
      %v849 = vsel %vm281, %v836, 0
      %v852 = vsel %vm281, %v837, 0
      %v855 = vsel %vm281, %v838, 0
      %v858 = vand.u32 %v808, %v303
      %860 = vmatpush.bf16.msra.mxu0 0
      %861 = vmatpush.bf16.msra.mxu0 0
      %862 = vmatpush.bf16.msra.mxu0 0
      %863 = vmatpush.bf16.msra.mxu0 0
      %864 = vmatpush.bf16.msra.mxu0 0
      %865 = vmatpush.bf16.msra.mxu0 0
      %866 = vmatpush.bf16.msra.mxu0 0
      %867 = vmatpush.bf16.msra.mxu0 %v858
      %868 = vmatmul.bf16.gmra.mxu0 %v840
      %v869 = vpop.f32.mrf.mxu0
      %v870 = vadd.f32 0.0, %v869
      %v871 = vpop.f32.mrf.mxu0
      %v872 = vadd.f32 0.0, %v871
      %873 = vmatmul.bf16.gmra.mxu0 %v843
      %v874 = vpop.f32.mrf.mxu0
      %v875 = vadd.f32 0.0, %v874
      %v876 = vpop.f32.mrf.mxu0
      %v877 = vadd.f32 0.0, %v876
      %878 = vmatmul.bf16.gmra.mxu0 %v846
      %v879 = vpop.f32.mrf.mxu0
      %v880 = vadd.f32 0.0, %v879
      %v881 = vpop.f32.mrf.mxu0
      %v882 = vadd.f32 0.0, %v881
      %883 = vmatmul.bf16.gmra.mxu0 %v849
      %v884 = vpop.f32.mrf.mxu0
      %v885 = vadd.f32 0.0, %v884
      %v886 = vpop.f32.mrf.mxu0
      %v887 = vadd.f32 0.0, %v886
      %888 = vmatmul.bf16.gmra.mxu0 %v852
      %v889 = vpop.f32.mrf.mxu0
      %v890 = vadd.f32 0.0, %v889
      %v891 = vpop.f32.mrf.mxu0
      %v892 = vadd.f32 0.0, %v891
      %893 = vmatmul.bf16.gmra.mxu0 %v855
      %v894 = vpop.f32.mrf.mxu0
      %v895 = vadd.f32 0.0, %v894
      %v896 = vpop.f32.mrf.mxu0
      %v897 = vadd.f32 0.0, %v896
      %898 = vdwg.mxu0
      %v899 = vadd.f32 %v782, %v870
      %v900 = vadd.f32 %v783, %v872
      %v901 = vadd.f32 %v784, %v875
      %v902 = vadd.f32 %v785, %v877
      %v903 = vadd.f32 %v786, %v880
      %v904 = vadd.f32 %v787, %v882
      %v905 = vadd.f32 %v788, %v885
      %v906 = vadd.f32 %v789, %v887
      %v907 = vadd.f32 %v790, %v890
      %v908 = vadd.f32 %v791, %v892
      %v909 = vadd.f32 %v792, %v895
      %v910 = vadd.f32 %v793, %v897
      %v911 = vld [vmem:[%s677 + $0x2c] sm:$0x3]
      %s912 = scalar_lea.vmem %s210, 12
      %v913 = vld [vmem:[%s912] sm:$0x3]
      %v915 = vunpack.c.l.b16 %v911
      %v916 = vpack.c.b16 %v915, %v714
      %v917 = vshrl.u32 %v716, 16
      %v919 = vshll.u32 %v716, 16
      %v921 = vrot.slane %v919, 1
      %v922 = vor.u32 %v917, %v921
      %v923 = vshll.u32 %v717, 16
      %v925 = vrot.slane %v923, 1
      %v926 = vsel %vm442, %v922, %v925
      %v927 = vshrl.u32 %v717, 16
      %v929 = vor.u32 %v927, %v925
      %v930 = vshll.u32 %v718, 16
      %v932 = vrot.slane %v930, 1
      %v933 = vsel %vm442, %v929, %v932
      %v934 = vshrl.u32 %v718, 16
      %v936 = vor.u32 %v934, %v932
      %v937 = vshll.u32 %v719, 16
      %v939 = vrot.slane %v937, 1
      %v940 = vsel %vm442, %v936, %v939
      %v941 = vshrl.u32 %v719, 16
      %v943 = vor.u32 %v941, %v939
      %v944 = vshll.u32 %v720, 16
      %v946 = vrot.slane %v944, 1
      %v947 = vsel %vm442, %v943, %v946
      %v948 = vshrl.u32 %v720, 16
      %v950 = vor.u32 %v948, %v946
      %v952 = vshll.u32 %v916, 16
      %v954 = vrot.slane %v952, 1
      %v955 = vsel %vm442, %v950, %v954
      %v956 = vshrl.u32 %v916, 16
      %v958 = vor.u32 %v956, %v954
      %v960 = vsel %vm281, %v926, 0
      %v963 = vsel %vm281, %v933, 0
      %v966 = vsel %vm281, %v940, 0
      %v969 = vsel %vm281, %v947, 0
      %v972 = vsel %vm281, %v955, 0
      %v975 = vsel %vm281, %v958, 0
      %v978 = vand.u32 %v913, %v303
      %980 = vmatpush.bf16.msra.mxu0 0
      %981 = vmatpush.bf16.msra.mxu0 0
      %982 = vmatpush.bf16.msra.mxu0 0
      %983 = vmatpush.bf16.msra.mxu0 0
      %984 = vmatpush.bf16.msra.mxu0 0
      %985 = vmatpush.bf16.msra.mxu0 0
      %986 = vmatpush.bf16.msra.mxu0 0
      %987 = vmatpush.bf16.msra.mxu0 %v978
      %988 = vmatmul.bf16.gmra.mxu0 %v960
      %v989 = vpop.f32.mrf.mxu0
      %v990 = vadd.f32 0.0, %v989
      %v991 = vpop.f32.mrf.mxu0
      %v992 = vadd.f32 0.0, %v991
      %993 = vmatmul.bf16.gmra.mxu0 %v963
      %v994 = vpop.f32.mrf.mxu0
      %v995 = vadd.f32 0.0, %v994
      %v996 = vpop.f32.mrf.mxu0
      %v997 = vadd.f32 0.0, %v996
      %998 = vmatmul.bf16.gmra.mxu0 %v966
      %v999 = vpop.f32.mrf.mxu0
      %v1000 = vadd.f32 0.0, %v999
      %v1001 = vpop.f32.mrf.mxu0
      %v1002 = vadd.f32 0.0, %v1001
      %1003 = vmatmul.bf16.gmra.mxu0 %v969
      %v1004 = vpop.f32.mrf.mxu0
      %v1005 = vadd.f32 0.0, %v1004
      %v1006 = vpop.f32.mrf.mxu0
      %v1007 = vadd.f32 0.0, %v1006
      %1008 = vmatmul.bf16.gmra.mxu0 %v972
      %v1009 = vpop.f32.mrf.mxu0
      %v1010 = vadd.f32 0.0, %v1009
      %v1011 = vpop.f32.mrf.mxu0
      %v1012 = vadd.f32 0.0, %v1011
      %1013 = vmatmul.bf16.gmra.mxu0 %v975
      %v1014 = vpop.f32.mrf.mxu0
      %v1015 = vadd.f32 0.0, %v1014
      %v1016 = vpop.f32.mrf.mxu0
      %v1017 = vadd.f32 0.0, %v1016
      %1018 = vdwg.mxu0
      %v1019 = vadd.f32 %v899, %v990
      %v1020 = vadd.f32 %v900, %v992
      %v1021 = vadd.f32 %v901, %v995
      %v1022 = vadd.f32 %v902, %v997
      %v1023 = vadd.f32 %v903, %v1000
      %v1024 = vadd.f32 %v904, %v1002
      %v1025 = vadd.f32 %v905, %v1005
      %v1026 = vadd.f32 %v906, %v1007
      %v1027 = vadd.f32 %v907, %v1010
      %v1028 = vadd.f32 %v908, %v1012
      %v1029 = vadd.f32 %v909, %v1015
      %v1030 = vadd.f32 %v910, %v1017
      %v1031 = vld [vmem:[%s794 + $0x2c] sm:$0x3]
      %s1032 = scalar_lea.vmem %s210, 14
      %v1033 = vld [vmem:[%s1032] sm:$0x3]
      %v1035 = vunpack.c.l.b16 %v1031
      %v1036 = vpack.c.b16 %v1035, %v831
      %v1037 = vshrl.u32 %v833, 16
      %v1039 = vshll.u32 %v833, 16
      %v1041 = vrot.slane %v1039, 1
      %v1042 = vor.u32 %v1037, %v1041
      %v1043 = vshll.u32 %v834, 16
      %v1045 = vrot.slane %v1043, 1
      %v1046 = vsel %vm442, %v1042, %v1045
      %v1047 = vshrl.u32 %v834, 16
      %v1049 = vor.u32 %v1047, %v1045
      %v1050 = vshll.u32 %v835, 16
      %v1052 = vrot.slane %v1050, 1
      %v1053 = vsel %vm442, %v1049, %v1052
      %v1054 = vshrl.u32 %v835, 16
      %v1056 = vor.u32 %v1054, %v1052
      %v1057 = vshll.u32 %v836, 16
      %v1059 = vrot.slane %v1057, 1
      %v1060 = vsel %vm442, %v1056, %v1059
      %v1061 = vshrl.u32 %v836, 16
      %v1063 = vor.u32 %v1061, %v1059
      %v1064 = vshll.u32 %v837, 16
      %v1066 = vrot.slane %v1064, 1
      %v1067 = vsel %vm442, %v1063, %v1066
      %v1068 = vshrl.u32 %v837, 16
      %v1070 = vor.u32 %v1068, %v1066
      %v1072 = vshll.u32 %v1036, 16
      %v1074 = vrot.slane %v1072, 1
      %v1075 = vsel %vm442, %v1070, %v1074
      %v1076 = vshrl.u32 %v1036, 16
      %v1078 = vor.u32 %v1076, %v1074
      %v1080 = vsel %vm281, %v1046, 0
      %v1083 = vsel %vm281, %v1053, 0
      %v1086 = vsel %vm281, %v1060, 0
      %v1089 = vsel %vm281, %v1067, 0
      %v1092 = vsel %vm281, %v1075, 0
      %v1095 = vsel %vm281, %v1078, 0
      %v1098 = vand.u32 %v1033, %v303
      %1100 = vmatpush.bf16.msra.mxu0 0
      %1101 = vmatpush.bf16.msra.mxu0 0
      %1102 = vmatpush.bf16.msra.mxu0 0
      %1103 = vmatpush.bf16.msra.mxu0 0
      %1104 = vmatpush.bf16.msra.mxu0 0
      %1105 = vmatpush.bf16.msra.mxu0 0
      %1106 = vmatpush.bf16.msra.mxu0 0
      %1107 = vmatpush.bf16.msra.mxu0 %v1098
      %1108 = vmatmul.bf16.gmra.mxu0 %v1080
      %v1109 = vpop.f32.mrf.mxu0
      %v1110 = vadd.f32 0.0, %v1109
      %v1111 = vpop.f32.mrf.mxu0
      %v1112 = vadd.f32 0.0, %v1111
      %1113 = vmatmul.bf16.gmra.mxu0 %v1083
      %v1114 = vpop.f32.mrf.mxu0
      %v1115 = vadd.f32 0.0, %v1114
      %v1116 = vpop.f32.mrf.mxu0
      %v1117 = vadd.f32 0.0, %v1116
      %1118 = vmatmul.bf16.gmra.mxu0 %v1086
      %v1119 = vpop.f32.mrf.mxu0
      %v1120 = vadd.f32 0.0, %v1119
      %v1121 = vpop.f32.mrf.mxu0
      %v1122 = vadd.f32 0.0, %v1121
      %1123 = vmatmul.bf16.gmra.mxu0 %v1089
      %v1124 = vpop.f32.mrf.mxu0
      %v1125 = vadd.f32 0.0, %v1124
      %v1126 = vpop.f32.mrf.mxu0
      %v1127 = vadd.f32 0.0, %v1126
      %1128 = vmatmul.bf16.gmra.mxu0 %v1092
      %v1129 = vpop.f32.mrf.mxu0
      %v1130 = vadd.f32 0.0, %v1129
      %v1131 = vpop.f32.mrf.mxu0
      %v1132 = vadd.f32 0.0, %v1131
      %1133 = vmatmul.bf16.gmra.mxu0 %v1095
      %v1134 = vpop.f32.mrf.mxu0
      %v1135 = vadd.f32 0.0, %v1134
      %v1136 = vpop.f32.mrf.mxu0
      %v1137 = vadd.f32 0.0, %v1136
      %1138 = vdwg.mxu0
      %v1139 = vadd.f32 %v1019, %v1110
      %v1140 = vadd.f32 %v1020, %v1112
      %v1141 = vadd.f32 %v1021, %v1115
      %v1142 = vadd.f32 %v1022, %v1117
      %v1143 = vadd.f32 %v1023, %v1120
      %v1144 = vadd.f32 %v1024, %v1122
      %v1145 = vadd.f32 %v1025, %v1125
      %v1146 = vadd.f32 %v1026, %v1127
      %v1147 = vadd.f32 %v1027, %v1130
      %v1148 = vadd.f32 %v1028, %v1132
      %v1149 = vadd.f32 %v1029, %v1135
      %v1150 = vadd.f32 %v1030, %v1137
      %v1151 = vld [vmem:[%s206 + $0x4] sm:$0xe]
      %v1152 = vld [vmem:[%s206 + $0x8] sm:$0xf]
      %v1153 = vld [vmem:[%s206 + $0xc] sm:$0xf]
      %v1154 = vld [vmem:[%s206 + $0x10] sm:$0xf]
      %v1155 = vld [vmem:[%s206 + $0x14] sm:$0xf]
      %v1156 = vld [vmem:[%s206 + $0x18] sm:$0xf]
      %v1157 = vld [vmem:[%s206 + $0x1c] sm:$0xf]
      %v1158 = vld [vmem:[%s206 + $0x20] sm:$0xf]
      %v1159 = vld [vmem:[%s206 + $0x24] sm:$0xf]
      %v1160 = vld [vmem:[%s206 + $0x28] sm:$0xf]
      %v1161 = vld [vmem:[%s206 + $0x2c] sm:$0xf]
      %v1162 = vld [vmem:[%s206 + $0x30] sm:$0x3]
      %s1163 = scalar_lea.vmem %s210, 16
      %v1164 = vld [vmem:[%s1163] sm:$0x3]
      %v1177 = vunpack.c.l.b16 %v1151
      %v1178 = vunpack.c.l.b16 %v1152
      %v1179 = vunpack.c.l.b16 %v1153
      %v1180 = vunpack.c.l.b16 %v1154
      %v1181 = vunpack.c.l.b16 %v1155
      %v1182 = vunpack.c.l.b16 %v1156
      %v1183 = vunpack.c.l.b16 %v1157
      %v1184 = vunpack.c.l.b16 %v1158
      %v1185 = vunpack.c.l.b16 %v1159
      %v1186 = vunpack.c.l.b16 %v1160
      %v1187 = vunpack.c.l.b16 %v1161
      %v1188 = vunpack.c.l.b16 %v1162
      %v1189 = vpack.c.b16 %v1178, %v1177
      %v1190 = vpack.c.b16 %v1180, %v1179
      %v1191 = vpack.c.b16 %v1182, %v1181
      %v1192 = vpack.c.b16 %v1184, %v1183
      %v1193 = vpack.c.b16 %v1186, %v1185
      %v1194 = vpack.c.b16 %v1188, %v1187
      %vm1195 = vcmask 1046528
      %v1196 = vrot.slane %v1189, 1
      %v1197 = vrot.slane %v1190, 1
      %v1198 = vsel %vm1195, %v1196, %v1197
      %v1199 = vrot.slane %v1191, 1
      %v1200 = vsel %vm1195, %v1197, %v1199
      %v1201 = vrot.slane %v1192, 1
      %v1202 = vsel %vm1195, %v1199, %v1201
      %v1203 = vrot.slane %v1193, 1
      %v1204 = vsel %vm1195, %v1201, %v1203
      %v1205 = vrot.slane %v1194, 1
      %v1206 = vsel %vm1195, %v1203, %v1205
      %v1208 = vsel %vm281, %v1198, 0
      %v1211 = vsel %vm281, %v1200, 0
      %v1214 = vsel %vm281, %v1202, 0
      %v1217 = vsel %vm281, %v1204, 0
      %v1220 = vsel %vm281, %v1206, 0
      %v1223 = vsel %vm281, %v1205, 0
      %v1226 = vand.u32 %v1164, %v303
      %1228 = vmatpush.bf16.msra.mxu0 0
      %1229 = vmatpush.bf16.msra.mxu0 0
      %1230 = vmatpush.bf16.msra.mxu0 0
      %1231 = vmatpush.bf16.msra.mxu0 0
      %1232 = vmatpush.bf16.msra.mxu0 0
      %1233 = vmatpush.bf16.msra.mxu0 0
      %1234 = vmatpush.bf16.msra.mxu0 0
      %1235 = vmatpush.bf16.msra.mxu0 %v1226
      %1236 = vmatmul.bf16.gmra.mxu0 %v1208
      %v1237 = vpop.f32.mrf.mxu0
      %v1238 = vadd.f32 0.0, %v1237
      %v1239 = vpop.f32.mrf.mxu0
      %v1240 = vadd.f32 0.0, %v1239
      %1241 = vmatmul.bf16.gmra.mxu0 %v1211
      %v1242 = vpop.f32.mrf.mxu0
      %v1243 = vadd.f32 0.0, %v1242
      %v1244 = vpop.f32.mrf.mxu0
      %v1245 = vadd.f32 0.0, %v1244
      %1246 = vmatmul.bf16.gmra.mxu0 %v1214
      %v1247 = vpop.f32.mrf.mxu0
      %v1248 = vadd.f32 0.0, %v1247
      %v1249 = vpop.f32.mrf.mxu0
      %v1250 = vadd.f32 0.0, %v1249
      %1251 = vmatmul.bf16.gmra.mxu0 %v1217
      %v1252 = vpop.f32.mrf.mxu0
      %v1253 = vadd.f32 0.0, %v1252
      %v1254 = vpop.f32.mrf.mxu0
      %v1255 = vadd.f32 0.0, %v1254
      %1256 = vmatmul.bf16.gmra.mxu0 %v1220
      %v1257 = vpop.f32.mrf.mxu0
      %v1258 = vadd.f32 0.0, %v1257
      %v1259 = vpop.f32.mrf.mxu0
      %v1260 = vadd.f32 0.0, %v1259
      %1261 = vmatmul.bf16.gmra.mxu0 %v1223
      %v1262 = vpop.f32.mrf.mxu0
      %v1263 = vadd.f32 0.0, %v1262
      %v1264 = vpop.f32.mrf.mxu0
      %v1265 = vadd.f32 0.0, %v1264
      %1266 = vdwg.mxu0
      %v1267 = vadd.f32 %v1139, %v1238
      %v1268 = vadd.f32 %v1140, %v1240
      %v1269 = vadd.f32 %v1141, %v1243
      %v1270 = vadd.f32 %v1142, %v1245
      %v1271 = vadd.f32 %v1143, %v1248
      %v1272 = vadd.f32 %v1144, %v1250
      %v1273 = vadd.f32 %v1145, %v1253
      %v1274 = vadd.f32 %v1146, %v1255
      %v1275 = vadd.f32 %v1147, %v1258
      %v1276 = vadd.f32 %v1148, %v1260
      %v1277 = vadd.f32 %v1149, %v1263
      %v1278 = vadd.f32 %v1150, %v1265
      %v1279 = vld [vmem:[%s236 + $0x4] sm:$0xe]
      %v1280 = vld [vmem:[%s236 + $0x8] sm:$0xf]
      %v1281 = vld [vmem:[%s236 + $0xc] sm:$0xf]
      %v1282 = vld [vmem:[%s236 + $0x10] sm:$0xf]
      %v1283 = vld [vmem:[%s236 + $0x14] sm:$0xf]
      %v1284 = vld [vmem:[%s236 + $0x18] sm:$0xf]
      %v1285 = vld [vmem:[%s236 + $0x1c] sm:$0xf]
      %v1286 = vld [vmem:[%s236 + $0x20] sm:$0xf]
      %v1287 = vld [vmem:[%s236 + $0x24] sm:$0xf]
      %v1288 = vld [vmem:[%s236 + $0x28] sm:$0xf]
      %v1289 = vld [vmem:[%s236 + $0x2c] sm:$0xf]
      %v1290 = vld [vmem:[%s236 + $0x30] sm:$0x3]
      %s1291 = scalar_lea.vmem %s210, 18
      %v1292 = vld [vmem:[%s1291] sm:$0x3]
      %v1305 = vunpack.c.l.b16 %v1279
      %v1306 = vunpack.c.l.b16 %v1280
      %v1307 = vunpack.c.l.b16 %v1281
      %v1308 = vunpack.c.l.b16 %v1282
      %v1309 = vunpack.c.l.b16 %v1283
      %v1310 = vunpack.c.l.b16 %v1284
      %v1311 = vunpack.c.l.b16 %v1285
      %v1312 = vunpack.c.l.b16 %v1286
      %v1313 = vunpack.c.l.b16 %v1287
      %v1314 = vunpack.c.l.b16 %v1288
      %v1315 = vunpack.c.l.b16 %v1289
      %v1316 = vunpack.c.l.b16 %v1290
      %v1317 = vpack.c.b16 %v1306, %v1305
      %v1318 = vpack.c.b16 %v1308, %v1307
      %v1319 = vpack.c.b16 %v1310, %v1309
      %v1320 = vpack.c.b16 %v1312, %v1311
      %v1321 = vpack.c.b16 %v1314, %v1313
      %v1322 = vpack.c.b16 %v1316, %v1315
      %v1323 = vrot.slane %v1317, 1
      %v1324 = vrot.slane %v1318, 1
      %v1325 = vsel %vm1195, %v1323, %v1324
      %v1326 = vrot.slane %v1319, 1
      %v1327 = vsel %vm1195, %v1324, %v1326
      %v1328 = vrot.slane %v1320, 1
      %v1329 = vsel %vm1195, %v1326, %v1328
      %v1330 = vrot.slane %v1321, 1
      %v1331 = vsel %vm1195, %v1328, %v1330
      %v1332 = vrot.slane %v1322, 1
      %v1333 = vsel %vm1195, %v1330, %v1332
      %v1335 = vsel %vm281, %v1325, 0
      %v1338 = vsel %vm281, %v1327, 0
      %v1341 = vsel %vm281, %v1329, 0
      %v1344 = vsel %vm281, %v1331, 0
      %v1347 = vsel %vm281, %v1333, 0
      %v1350 = vsel %vm281, %v1332, 0
      %v1353 = vand.u32 %v1292, %v303
      %1355 = vmatpush.bf16.msra.mxu0 0
      %1356 = vmatpush.bf16.msra.mxu0 0
      %1357 = vmatpush.bf16.msra.mxu0 0
      %1358 = vmatpush.bf16.msra.mxu0 0
      %1359 = vmatpush.bf16.msra.mxu0 0
      %1360 = vmatpush.bf16.msra.mxu0 0
      %1361 = vmatpush.bf16.msra.mxu0 0
      %1362 = vmatpush.bf16.msra.mxu0 %v1353
      %1363 = vmatmul.bf16.gmra.mxu0 %v1335
      %v1364 = vpop.f32.mrf.mxu0
      %v1365 = vadd.f32 0.0, %v1364
      %v1366 = vpop.f32.mrf.mxu0
      %v1367 = vadd.f32 0.0, %v1366
      %1368 = vmatmul.bf16.gmra.mxu0 %v1338
      %v1369 = vpop.f32.mrf.mxu0
      %v1370 = vadd.f32 0.0, %v1369
      %v1371 = vpop.f32.mrf.mxu0
      %v1372 = vadd.f32 0.0, %v1371
      %1373 = vmatmul.bf16.gmra.mxu0 %v1341
      %v1374 = vpop.f32.mrf.mxu0
      %v1375 = vadd.f32 0.0, %v1374
      %v1376 = vpop.f32.mrf.mxu0
      %v1377 = vadd.f32 0.0, %v1376
      %1378 = vmatmul.bf16.gmra.mxu0 %v1344
      %v1379 = vpop.f32.mrf.mxu0
      %v1380 = vadd.f32 0.0, %v1379
      %v1381 = vpop.f32.mrf.mxu0
      %v1382 = vadd.f32 0.0, %v1381
      %1383 = vmatmul.bf16.gmra.mxu0 %v1347
      %v1384 = vpop.f32.mrf.mxu0
      %v1385 = vadd.f32 0.0, %v1384
      %v1386 = vpop.f32.mrf.mxu0
      %v1387 = vadd.f32 0.0, %v1386
      %1388 = vmatmul.bf16.gmra.mxu0 %v1350
      %v1389 = vpop.f32.mrf.mxu0
      %v1390 = vadd.f32 0.0, %v1389
      %v1391 = vpop.f32.mrf.mxu0
      %v1392 = vadd.f32 0.0, %v1391
      %1393 = vdwg.mxu0
      %v1394 = vadd.f32 %v1267, %v1365
      %v1395 = vadd.f32 %v1268, %v1367
      %v1396 = vadd.f32 %v1269, %v1370
      %v1397 = vadd.f32 %v1270, %v1372
      %v1398 = vadd.f32 %v1271, %v1375
      %v1399 = vadd.f32 %v1272, %v1377
      %v1400 = vadd.f32 %v1273, %v1380
      %v1401 = vadd.f32 %v1274, %v1382
      %v1402 = vadd.f32 %v1275, %v1385
      %v1403 = vadd.f32 %v1276, %v1387
      %v1404 = vadd.f32 %v1277, %v1390
      %v1405 = vadd.f32 %v1278, %v1392
      %v1406 = vld [vmem:[%s206 + $0x30] sm:$0x7]
      %s1407 = scalar_lea.vmem %s210, 20
      %v1408 = vld [vmem:[%s1407] sm:$0x3]
      %v1410 = vunpack.c.l.b16 %v1406
      %v1411 = vpack.c.b16 %v1410, %v1187
      %vm1412 = vsmask.f32 6400
      %v1414 = vshrl.u32 %v1189, 16
      %v1416 = vrot.slane %v1414, 1
      %v1417 = vshll.u32 %v1189, 16
      %v1419 = vrot.slane %v1417, 2
      %v1420 = vor.u32 %v1416, %v1419
      %v1422 = vshrl.u32 %v1190, 16
      %v1424 = vrot.slane %v1422, 1
      %v1425 = vshll.u32 %v1190, 16
      %v1427 = vrot.slane %v1425, 2
      %v1428 = vor.u32 %v1424, %v1427
      %v1429 = vsel %vm1412, %v1420, %v1428
      %v1431 = vshrl.u32 %v1191, 16
      %v1433 = vrot.slane %v1431, 1
      %v1434 = vshll.u32 %v1191, 16
      %v1436 = vrot.slane %v1434, 2
      %v1437 = vor.u32 %v1433, %v1436
      %v1438 = vsel %vm1412, %v1428, %v1437
      %v1440 = vshrl.u32 %v1192, 16
      %v1442 = vrot.slane %v1440, 1
      %v1443 = vshll.u32 %v1192, 16
      %v1445 = vrot.slane %v1443, 2
      %v1446 = vor.u32 %v1442, %v1445
      %v1447 = vsel %vm1412, %v1437, %v1446
      %v1449 = vshrl.u32 %v1193, 16
      %v1451 = vrot.slane %v1449, 1
      %v1452 = vshll.u32 %v1193, 16
      %v1454 = vrot.slane %v1452, 2
      %v1455 = vor.u32 %v1451, %v1454
      %v1456 = vsel %vm1412, %v1446, %v1455
      %v1458 = vshrl.u32 %v1411, 16
      %v1460 = vrot.slane %v1458, 1
      %v1461 = vshll.u32 %v1411, 16
      %v1463 = vrot.slane %v1461, 2
      %v1464 = vor.u32 %v1460, %v1463
      %v1465 = vsel %vm1412, %v1455, %v1464
      %v1467 = vsel %vm281, %v1429, 0
      %v1470 = vsel %vm281, %v1438, 0
      %v1473 = vsel %vm281, %v1447, 0
      %v1476 = vsel %vm281, %v1456, 0
      %v1479 = vsel %vm281, %v1465, 0
      %v1482 = vsel %vm281, %v1464, 0
      %v1485 = vand.u32 %v1408, %v303
      %1487 = vmatpush.bf16.msra.mxu0 0
      %1488 = vmatpush.bf16.msra.mxu0 0
      %1489 = vmatpush.bf16.msra.mxu0 0
      %1490 = vmatpush.bf16.msra.mxu0 0
      %1491 = vmatpush.bf16.msra.mxu0 0
      %1492 = vmatpush.bf16.msra.mxu0 0
      %1493 = vmatpush.bf16.msra.mxu0 0
      %1494 = vmatpush.bf16.msra.mxu0 %v1485
      %1495 = vmatmul.bf16.gmra.mxu0 %v1467
      %v1496 = vpop.f32.mrf.mxu0
      %v1497 = vadd.f32 0.0, %v1496
      %v1498 = vpop.f32.mrf.mxu0
      %v1499 = vadd.f32 0.0, %v1498
      %1500 = vmatmul.bf16.gmra.mxu0 %v1470
      %v1501 = vpop.f32.mrf.mxu0
      %v1502 = vadd.f32 0.0, %v1501
      %v1503 = vpop.f32.mrf.mxu0
      %v1504 = vadd.f32 0.0, %v1503
      %1505 = vmatmul.bf16.gmra.mxu0 %v1473
      %v1506 = vpop.f32.mrf.mxu0
      %v1507 = vadd.f32 0.0, %v1506
      %v1508 = vpop.f32.mrf.mxu0
      %v1509 = vadd.f32 0.0, %v1508
      %1510 = vmatmul.bf16.gmra.mxu0 %v1476
      %v1511 = vpop.f32.mrf.mxu0
      %v1512 = vadd.f32 0.0, %v1511
      %v1513 = vpop.f32.mrf.mxu0
      %v1514 = vadd.f32 0.0, %v1513
      %1515 = vmatmul.bf16.gmra.mxu0 %v1479
      %v1516 = vpop.f32.mrf.mxu0
      %v1517 = vadd.f32 0.0, %v1516
      %v1518 = vpop.f32.mrf.mxu0
      %v1519 = vadd.f32 0.0, %v1518
      %1520 = vmatmul.bf16.gmra.mxu0 %v1482
      %v1521 = vpop.f32.mrf.mxu0
      %v1522 = vadd.f32 0.0, %v1521
      %v1523 = vpop.f32.mrf.mxu0
      %v1524 = vadd.f32 0.0, %v1523
      %1525 = vdwg.mxu0
      %v1526 = vadd.f32 %v1394, %v1497
      %v1527 = vadd.f32 %v1395, %v1499
      %v1528 = vadd.f32 %v1396, %v1502
      %v1529 = vadd.f32 %v1397, %v1504
      %v1530 = vadd.f32 %v1398, %v1507
      %v1531 = vadd.f32 %v1399, %v1509
      %v1532 = vadd.f32 %v1400, %v1512
      %v1533 = vadd.f32 %v1401, %v1514
      %v1534 = vadd.f32 %v1402, %v1517
      %v1535 = vadd.f32 %v1403, %v1519
      %v1536 = vadd.f32 %v1404, %v1522
      %v1537 = vadd.f32 %v1405, %v1524
      %v1538 = vld [vmem:[%s236 + $0x30] sm:$0x7]
      %s1539 = scalar_lea.vmem %s210, 22
      %v1540 = vld [vmem:[%s1539] sm:$0x3]
      %v1542 = vunpack.c.l.b16 %v1538
      %v1543 = vpack.c.b16 %v1542, %v1315
      %v1545 = vshrl.u32 %v1317, 16
      %v1547 = vrot.slane %v1545, 1
      %v1548 = vshll.u32 %v1317, 16
      %v1550 = vrot.slane %v1548, 2
      %v1551 = vor.u32 %v1547, %v1550
      %v1553 = vshrl.u32 %v1318, 16
      %v1555 = vrot.slane %v1553, 1
      %v1556 = vshll.u32 %v1318, 16
      %v1558 = vrot.slane %v1556, 2
      %v1559 = vor.u32 %v1555, %v1558
      %v1560 = vsel %vm1412, %v1551, %v1559
      %v1562 = vshrl.u32 %v1319, 16
      %v1564 = vrot.slane %v1562, 1
      %v1565 = vshll.u32 %v1319, 16
      %v1567 = vrot.slane %v1565, 2
      %v1568 = vor.u32 %v1564, %v1567
      %v1569 = vsel %vm1412, %v1559, %v1568
      %v1571 = vshrl.u32 %v1320, 16
      %v1573 = vrot.slane %v1571, 1
      %v1574 = vshll.u32 %v1320, 16
      %v1576 = vrot.slane %v1574, 2
      %v1577 = vor.u32 %v1573, %v1576
      %v1578 = vsel %vm1412, %v1568, %v1577
      %v1580 = vshrl.u32 %v1321, 16
      %v1582 = vrot.slane %v1580, 1
      %v1583 = vshll.u32 %v1321, 16
      %v1585 = vrot.slane %v1583, 2
      %v1586 = vor.u32 %v1582, %v1585
      %v1587 = vsel %vm1412, %v1577, %v1586
      %v1589 = vshrl.u32 %v1543, 16
      %v1591 = vrot.slane %v1589, 1
      %v1592 = vshll.u32 %v1543, 16
      %v1594 = vrot.slane %v1592, 2
      %v1595 = vor.u32 %v1591, %v1594
      %v1596 = vsel %vm1412, %v1586, %v1595
      %v1598 = vsel %vm281, %v1560, 0
      %v1601 = vsel %vm281, %v1569, 0
      %v1604 = vsel %vm281, %v1578, 0
      %v1607 = vsel %vm281, %v1587, 0
      %v1610 = vsel %vm281, %v1596, 0
      %v1613 = vsel %vm281, %v1595, 0
      %v1616 = vand.u32 %v1540, %v303
      %1618 = vmatpush.bf16.msra.mxu0 0
      %1619 = vmatpush.bf16.msra.mxu0 0
      %1620 = vmatpush.bf16.msra.mxu0 0
      %1621 = vmatpush.bf16.msra.mxu0 0
      %1622 = vmatpush.bf16.msra.mxu0 0
      %1623 = vmatpush.bf16.msra.mxu0 0
      %1624 = vmatpush.bf16.msra.mxu0 0
      %1625 = vmatpush.bf16.msra.mxu0 %v1616
      %1626 = vmatmul.bf16.gmra.mxu0 %v1598
      %v1627 = vpop.f32.mrf.mxu0
      %v1628 = vadd.f32 0.0, %v1627
      %v1629 = vpop.f32.mrf.mxu0
      %v1630 = vadd.f32 0.0, %v1629
      %1631 = vmatmul.bf16.gmra.mxu0 %v1601
      %v1632 = vpop.f32.mrf.mxu0
      %v1633 = vadd.f32 0.0, %v1632
      %v1634 = vpop.f32.mrf.mxu0
      %v1635 = vadd.f32 0.0, %v1634
      %1636 = vmatmul.bf16.gmra.mxu0 %v1604
      %v1637 = vpop.f32.mrf.mxu0
      %v1638 = vadd.f32 0.0, %v1637
      %v1639 = vpop.f32.mrf.mxu0
      %v1640 = vadd.f32 0.0, %v1639
      %1641 = vmatmul.bf16.gmra.mxu0 %v1607
      %v1642 = vpop.f32.mrf.mxu0
      %v1643 = vadd.f32 0.0, %v1642
      %v1644 = vpop.f32.mrf.mxu0
      %v1645 = vadd.f32 0.0, %v1644
      %1646 = vmatmul.bf16.gmra.mxu0 %v1610
      %v1647 = vpop.f32.mrf.mxu0
      %v1648 = vadd.f32 0.0, %v1647
      %v1649 = vpop.f32.mrf.mxu0
      %v1650 = vadd.f32 0.0, %v1649
      %1651 = vmatmul.bf16.gmra.mxu0 %v1613
      %v1652 = vpop.f32.mrf.mxu0
      %v1653 = vadd.f32 0.0, %v1652
      %v1654 = vpop.f32.mrf.mxu0
      %v1655 = vadd.f32 0.0, %v1654
      %1656 = vdwg.mxu0
      %v1657 = vadd.f32 %v1526, %v1628
      %v1658 = vadd.f32 %v1527, %v1630
      %v1659 = vadd.f32 %v1528, %v1633
      %v1660 = vadd.f32 %v1529, %v1635
      %v1661 = vadd.f32 %v1530, %v1638
      %v1662 = vadd.f32 %v1531, %v1640
      %v1663 = vadd.f32 %v1532, %v1643
      %v1664 = vadd.f32 %v1533, %v1645
      %v1665 = vadd.f32 %v1534, %v1648
      %v1666 = vadd.f32 %v1535, %v1650
      %v1667 = vadd.f32 %v1536, %v1653
      %v1668 = vadd.f32 %v1537, %v1655
      %v1669 = vld [vmem:[%s677 + $0x4] sm:$0xe]
      %v1670 = vld [vmem:[%s677 + $0x8] sm:$0xf]
      %v1671 = vld [vmem:[%s677 + $0xc] sm:$0xf]
      %v1672 = vld [vmem:[%s677 + $0x10] sm:$0xf]
      %v1673 = vld [vmem:[%s677 + $0x14] sm:$0xf]
      %v1674 = vld [vmem:[%s677 + $0x18] sm:$0xf]
      %v1675 = vld [vmem:[%s677 + $0x1c] sm:$0xf]
      %v1676 = vld [vmem:[%s677 + $0x20] sm:$0xf]
      %v1677 = vld [vmem:[%s677 + $0x24] sm:$0xf]
      %v1678 = vld [vmem:[%s677 + $0x28] sm:$0xf]
      %v1679 = vld [vmem:[%s677 + $0x2c] sm:$0xf]
      %v1680 = vld [vmem:[%s677 + $0x30] sm:$0x3]
      %s1681 = scalar_lea.vmem %s210, 24
      %v1682 = vld [vmem:[%s1681] sm:$0x3]
      %v1695 = vunpack.c.l.b16 %v1669
      %v1696 = vunpack.c.l.b16 %v1670
      %v1697 = vunpack.c.l.b16 %v1671
      %v1698 = vunpack.c.l.b16 %v1672
      %v1699 = vunpack.c.l.b16 %v1673
      %v1700 = vunpack.c.l.b16 %v1674
      %v1701 = vunpack.c.l.b16 %v1675
      %v1702 = vunpack.c.l.b16 %v1676
      %v1703 = vunpack.c.l.b16 %v1677
      %v1704 = vunpack.c.l.b16 %v1678
      %v1705 = vunpack.c.l.b16 %v1679
      %v1706 = vunpack.c.l.b16 %v1680
      %v1707 = vpack.c.b16 %v1696, %v1695
      %v1708 = vpack.c.b16 %v1698, %v1697
      %v1709 = vpack.c.b16 %v1700, %v1699
      %v1710 = vpack.c.b16 %v1702, %v1701
      %v1711 = vpack.c.b16 %v1704, %v1703
      %v1712 = vpack.c.b16 %v1706, %v1705
      %v1713 = vrot.slane %v1707, 1
      %v1714 = vrot.slane %v1708, 1
      %v1715 = vsel %vm1195, %v1713, %v1714
      %v1716 = vrot.slane %v1709, 1
      %v1717 = vsel %vm1195, %v1714, %v1716
      %v1718 = vrot.slane %v1710, 1
      %v1719 = vsel %vm1195, %v1716, %v1718
      %v1720 = vrot.slane %v1711, 1
      %v1721 = vsel %vm1195, %v1718, %v1720
      %v1722 = vrot.slane %v1712, 1
      %v1723 = vsel %vm1195, %v1720, %v1722
      %v1725 = vsel %vm281, %v1715, 0
      %v1728 = vsel %vm281, %v1717, 0
      %v1731 = vsel %vm281, %v1719, 0
      %v1734 = vsel %vm281, %v1721, 0
      %v1737 = vsel %vm281, %v1723, 0
      %v1740 = vsel %vm281, %v1722, 0
      %v1743 = vand.u32 %v1682, %v303
      %1745 = vmatpush.bf16.msra.mxu0 0
      %1746 = vmatpush.bf16.msra.mxu0 0
      %1747 = vmatpush.bf16.msra.mxu0 0
      %1748 = vmatpush.bf16.msra.mxu0 0
      %1749 = vmatpush.bf16.msra.mxu0 0
      %1750 = vmatpush.bf16.msra.mxu0 0
      %1751 = vmatpush.bf16.msra.mxu0 0
      %1752 = vmatpush.bf16.msra.mxu0 %v1743
      %1753 = vmatmul.bf16.gmra.mxu0 %v1725
      %v1754 = vpop.f32.mrf.mxu0
      %v1755 = vadd.f32 0.0, %v1754
      %v1756 = vpop.f32.mrf.mxu0
      %v1757 = vadd.f32 0.0, %v1756
      %1758 = vmatmul.bf16.gmra.mxu0 %v1728
      %v1759 = vpop.f32.mrf.mxu0
      %v1760 = vadd.f32 0.0, %v1759
      %v1761 = vpop.f32.mrf.mxu0
      %v1762 = vadd.f32 0.0, %v1761
      %1763 = vmatmul.bf16.gmra.mxu0 %v1731
      %v1764 = vpop.f32.mrf.mxu0
      %v1765 = vadd.f32 0.0, %v1764
      %v1766 = vpop.f32.mrf.mxu0
      %v1767 = vadd.f32 0.0, %v1766
      %1768 = vmatmul.bf16.gmra.mxu0 %v1734
      %v1769 = vpop.f32.mrf.mxu0
      %v1770 = vadd.f32 0.0, %v1769
      %v1771 = vpop.f32.mrf.mxu0
      %v1772 = vadd.f32 0.0, %v1771
      %1773 = vmatmul.bf16.gmra.mxu0 %v1737
      %v1774 = vpop.f32.mrf.mxu0
      %v1775 = vadd.f32 0.0, %v1774
      %v1776 = vpop.f32.mrf.mxu0
      %v1777 = vadd.f32 0.0, %v1776
      %1778 = vmatmul.bf16.gmra.mxu0 %v1740
      %v1779 = vpop.f32.mrf.mxu0
      %v1780 = vadd.f32 0.0, %v1779
      %v1781 = vpop.f32.mrf.mxu0
      %v1782 = vadd.f32 0.0, %v1781
      %1783 = vdwg.mxu0
      %v1784 = vadd.f32 %v1657, %v1755
      %v1785 = vadd.f32 %v1658, %v1757
      %v1786 = vadd.f32 %v1659, %v1760
      %v1787 = vadd.f32 %v1660, %v1762
      %v1788 = vadd.f32 %v1661, %v1765
      %v1789 = vadd.f32 %v1662, %v1767
      %v1790 = vadd.f32 %v1663, %v1770
      %v1791 = vadd.f32 %v1664, %v1772
      %v1792 = vadd.f32 %v1665, %v1775
      %v1793 = vadd.f32 %v1666, %v1777
      %v1794 = vadd.f32 %v1667, %v1780
      %v1795 = vadd.f32 %v1668, %v1782
      %v1796 = vld [vmem:[%s794 + $0x4] sm:$0xe]
      %v1797 = vld [vmem:[%s794 + $0x8] sm:$0xf]
      %v1798 = vld [vmem:[%s794 + $0xc] sm:$0xf]
      %v1799 = vld [vmem:[%s794 + $0x10] sm:$0xf]
      %v1800 = vld [vmem:[%s794 + $0x14] sm:$0xf]
      %v1801 = vld [vmem:[%s794 + $0x18] sm:$0xf]
      %v1802 = vld [vmem:[%s794 + $0x1c] sm:$0xf]
      %v1803 = vld [vmem:[%s794 + $0x20] sm:$0xf]
      %v1804 = vld [vmem:[%s794 + $0x24] sm:$0xf]
      %v1805 = vld [vmem:[%s794 + $0x28] sm:$0xf]
      %v1806 = vld [vmem:[%s794 + $0x2c] sm:$0xf]
      %v1807 = vld [vmem:[%s794 + $0x30] sm:$0x3]
      %s1808 = scalar_lea.vmem %s210, 26
      %v1809 = vld [vmem:[%s1808] sm:$0x3]
      %v1822 = vunpack.c.l.b16 %v1796
      %v1823 = vunpack.c.l.b16 %v1797
      %v1824 = vunpack.c.l.b16 %v1798
      %v1825 = vunpack.c.l.b16 %v1799
      %v1826 = vunpack.c.l.b16 %v1800
      %v1827 = vunpack.c.l.b16 %v1801
      %v1828 = vunpack.c.l.b16 %v1802
      %v1829 = vunpack.c.l.b16 %v1803
      %v1830 = vunpack.c.l.b16 %v1804
      %v1831 = vunpack.c.l.b16 %v1805
      %v1832 = vunpack.c.l.b16 %v1806
      %v1833 = vunpack.c.l.b16 %v1807
      %v1834 = vpack.c.b16 %v1823, %v1822
      %v1835 = vpack.c.b16 %v1825, %v1824
      %v1836 = vpack.c.b16 %v1827, %v1826
      %v1837 = vpack.c.b16 %v1829, %v1828
      %v1838 = vpack.c.b16 %v1831, %v1830
      %v1839 = vpack.c.b16 %v1833, %v1832
      %v1840 = vrot.slane %v1834, 1
      %v1841 = vrot.slane %v1835, 1
      %v1842 = vsel %vm1195, %v1840, %v1841
      %v1843 = vrot.slane %v1836, 1
      %v1844 = vsel %vm1195, %v1841, %v1843
      %v1845 = vrot.slane %v1837, 1
      %v1846 = vsel %vm1195, %v1843, %v1845
      %v1847 = vrot.slane %v1838, 1
      %v1848 = vsel %vm1195, %v1845, %v1847
      %v1849 = vrot.slane %v1839, 1
      %v1850 = vsel %vm1195, %v1847, %v1849
      %v1852 = vsel %vm281, %v1842, 0
      %v1855 = vsel %vm281, %v1844, 0
      %v1858 = vsel %vm281, %v1846, 0
      %v1861 = vsel %vm281, %v1848, 0
      %v1864 = vsel %vm281, %v1850, 0
      %v1867 = vsel %vm281, %v1849, 0
      %v1870 = vand.u32 %v1809, %v303
      %1872 = vmatpush.bf16.msra.mxu0 0
      %1873 = vmatpush.bf16.msra.mxu0 0
      %1874 = vmatpush.bf16.msra.mxu0 0
      %1875 = vmatpush.bf16.msra.mxu0 0
      %1876 = vmatpush.bf16.msra.mxu0 0
      %1877 = vmatpush.bf16.msra.mxu0 0
      %1878 = vmatpush.bf16.msra.mxu0 0
      %1879 = vmatpush.bf16.msra.mxu0 %v1870
      %1880 = vmatmul.bf16.gmra.mxu0 %v1852
      %v1881 = vpop.f32.mrf.mxu0
      %v1882 = vadd.f32 0.0, %v1881
      %v1883 = vpop.f32.mrf.mxu0
      %v1884 = vadd.f32 0.0, %v1883
      %1885 = vmatmul.bf16.gmra.mxu0 %v1855
      %v1886 = vpop.f32.mrf.mxu0
      %v1887 = vadd.f32 0.0, %v1886
      %v1888 = vpop.f32.mrf.mxu0
      %v1889 = vadd.f32 0.0, %v1888
      %1890 = vmatmul.bf16.gmra.mxu0 %v1858
      %v1891 = vpop.f32.mrf.mxu0
      %v1892 = vadd.f32 0.0, %v1891
      %v1893 = vpop.f32.mrf.mxu0
      %v1894 = vadd.f32 0.0, %v1893
      %1895 = vmatmul.bf16.gmra.mxu0 %v1861
      %v1896 = vpop.f32.mrf.mxu0
      %v1897 = vadd.f32 0.0, %v1896
      %v1898 = vpop.f32.mrf.mxu0
      %v1899 = vadd.f32 0.0, %v1898
      %1900 = vmatmul.bf16.gmra.mxu0 %v1864
      %v1901 = vpop.f32.mrf.mxu0
      %v1902 = vadd.f32 0.0, %v1901
      %v1903 = vpop.f32.mrf.mxu0
      %v1904 = vadd.f32 0.0, %v1903
      %1905 = vmatmul.bf16.gmra.mxu0 %v1867
      %v1906 = vpop.f32.mrf.mxu0
      %v1907 = vadd.f32 0.0, %v1906
      %v1908 = vpop.f32.mrf.mxu0
      %v1909 = vadd.f32 0.0, %v1908
      %1910 = vdwg.mxu0
      %v1911 = vadd.f32 %v1784, %v1882
      %v1912 = vadd.f32 %v1785, %v1884
      %v1913 = vadd.f32 %v1786, %v1887
      %v1914 = vadd.f32 %v1787, %v1889
      %v1915 = vadd.f32 %v1788, %v1892
      %v1916 = vadd.f32 %v1789, %v1894
      %v1917 = vadd.f32 %v1790, %v1897
      %v1918 = vadd.f32 %v1791, %v1899
      %v1919 = vadd.f32 %v1792, %v1902
      %v1920 = vadd.f32 %v1793, %v1904
      %v1921 = vadd.f32 %v1794, %v1907
      %v1922 = vadd.f32 %v1795, %v1909
      %v1923 = vld [vmem:[%s677 + $0x30] sm:$0x7]
      %s1924 = scalar_lea.vmem %s210, 28
      %v1925 = vld [vmem:[%s1924] sm:$0x3]
      %v1927 = vunpack.c.l.b16 %v1923
      %v1928 = vpack.c.b16 %v1927, %v1705
      %v1930 = vshrl.u32 %v1707, 16
      %v1932 = vrot.slane %v1930, 1
      %v1933 = vshll.u32 %v1707, 16
      %v1935 = vrot.slane %v1933, 2
      %v1936 = vor.u32 %v1932, %v1935
      %v1938 = vshrl.u32 %v1708, 16
      %v1940 = vrot.slane %v1938, 1
      %v1941 = vshll.u32 %v1708, 16
      %v1943 = vrot.slane %v1941, 2
      %v1944 = vor.u32 %v1940, %v1943
      %v1945 = vsel %vm1412, %v1936, %v1944
      %v1947 = vshrl.u32 %v1709, 16
      %v1949 = vrot.slane %v1947, 1
      %v1950 = vshll.u32 %v1709, 16
      %v1952 = vrot.slane %v1950, 2
      %v1953 = vor.u32 %v1949, %v1952
      %v1954 = vsel %vm1412, %v1944, %v1953
      %v1956 = vshrl.u32 %v1710, 16
      %v1958 = vrot.slane %v1956, 1
      %v1959 = vshll.u32 %v1710, 16
      %v1961 = vrot.slane %v1959, 2
      %v1962 = vor.u32 %v1958, %v1961
      %v1963 = vsel %vm1412, %v1953, %v1962
      %v1965 = vshrl.u32 %v1711, 16
      %v1967 = vrot.slane %v1965, 1
      %v1968 = vshll.u32 %v1711, 16
      %v1970 = vrot.slane %v1968, 2
      %v1971 = vor.u32 %v1967, %v1970
      %v1972 = vsel %vm1412, %v1962, %v1971
      %v1974 = vshrl.u32 %v1928, 16
      %v1976 = vrot.slane %v1974, 1
      %v1977 = vshll.u32 %v1928, 16
      %v1979 = vrot.slane %v1977, 2
      %v1980 = vor.u32 %v1976, %v1979
      %v1981 = vsel %vm1412, %v1971, %v1980
      %v1983 = vsel %vm281, %v1945, 0
      %v1986 = vsel %vm281, %v1954, 0
      %v1989 = vsel %vm281, %v1963, 0
      %v1992 = vsel %vm281, %v1972, 0
      %v1995 = vsel %vm281, %v1981, 0
      %v1998 = vsel %vm281, %v1980, 0
      %v2001 = vand.u32 %v1925, %v303
      %2003 = vmatpush.bf16.msra.mxu0 0
      %2004 = vmatpush.bf16.msra.mxu0 0
      %2005 = vmatpush.bf16.msra.mxu0 0
      %2006 = vmatpush.bf16.msra.mxu0 0
      %2007 = vmatpush.bf16.msra.mxu0 0
      %2008 = vmatpush.bf16.msra.mxu0 0
      %2009 = vmatpush.bf16.msra.mxu0 0
      %2010 = vmatpush.bf16.msra.mxu0 %v2001
      %2011 = vmatmul.bf16.gmra.mxu0 %v1983
      %v2012 = vpop.f32.mrf.mxu0
      %v2013 = vadd.f32 0.0, %v2012
      %v2014 = vpop.f32.mrf.mxu0
      %v2015 = vadd.f32 0.0, %v2014
      %2016 = vmatmul.bf16.gmra.mxu0 %v1986
      %v2017 = vpop.f32.mrf.mxu0
      %v2018 = vadd.f32 0.0, %v2017
      %v2019 = vpop.f32.mrf.mxu0
      %v2020 = vadd.f32 0.0, %v2019
      %2021 = vmatmul.bf16.gmra.mxu0 %v1989
      %v2022 = vpop.f32.mrf.mxu0
      %v2023 = vadd.f32 0.0, %v2022
      %v2024 = vpop.f32.mrf.mxu0
      %v2025 = vadd.f32 0.0, %v2024
      %2026 = vmatmul.bf16.gmra.mxu0 %v1992
      %v2027 = vpop.f32.mrf.mxu0
      %v2028 = vadd.f32 0.0, %v2027
      %v2029 = vpop.f32.mrf.mxu0
      %v2030 = vadd.f32 0.0, %v2029
      %2031 = vmatmul.bf16.gmra.mxu0 %v1995
      %v2032 = vpop.f32.mrf.mxu0
      %v2033 = vadd.f32 0.0, %v2032
      %v2034 = vpop.f32.mrf.mxu0
      %v2035 = vadd.f32 0.0, %v2034
      %2036 = vmatmul.bf16.gmra.mxu0 %v1998
      %v2037 = vpop.f32.mrf.mxu0
      %v2038 = vadd.f32 0.0, %v2037
      %v2039 = vpop.f32.mrf.mxu0
      %v2040 = vadd.f32 0.0, %v2039
      %2041 = vdwg.mxu0
      %v2042 = vadd.f32 %v1911, %v2013
      %v2043 = vadd.f32 %v1912, %v2015
      %v2044 = vadd.f32 %v1913, %v2018
      %v2045 = vadd.f32 %v1914, %v2020
      %v2046 = vadd.f32 %v1915, %v2023
      %v2047 = vadd.f32 %v1916, %v2025
      %v2048 = vadd.f32 %v1917, %v2028
      %v2049 = vadd.f32 %v1918, %v2030
      %v2050 = vadd.f32 %v1919, %v2033
      %v2051 = vadd.f32 %v1920, %v2035
      %v2052 = vadd.f32 %v1921, %v2038
      %v2053 = vadd.f32 %v1922, %v2040
      %v2054 = vld [vmem:[%s794 + $0x30] sm:$0x7]
      %s2055 = scalar_lea.vmem %s210, 30
      %v2056 = vld [vmem:[%s2055] sm:$0x3]
      %v2058 = vunpack.c.l.b16 %v2054
      %v2059 = vpack.c.b16 %v2058, %v1832
      %v2061 = vshrl.u32 %v1834, 16
      %v2063 = vrot.slane %v2061, 1
      %v2064 = vshll.u32 %v1834, 16
      %v2066 = vrot.slane %v2064, 2
      %v2067 = vor.u32 %v2063, %v2066
      %v2069 = vshrl.u32 %v1835, 16
      %v2071 = vrot.slane %v2069, 1
      %v2072 = vshll.u32 %v1835, 16
      %v2074 = vrot.slane %v2072, 2
      %v2075 = vor.u32 %v2071, %v2074
      %v2076 = vsel %vm1412, %v2067, %v2075
      %v2078 = vshrl.u32 %v1836, 16
      %v2080 = vrot.slane %v2078, 1
      %v2081 = vshll.u32 %v1836, 16
      %v2083 = vrot.slane %v2081, 2
      %v2084 = vor.u32 %v2080, %v2083
      %v2085 = vsel %vm1412, %v2075, %v2084
      %v2087 = vshrl.u32 %v1837, 16
      %v2089 = vrot.slane %v2087, 1
      %v2090 = vshll.u32 %v1837, 16
      %v2092 = vrot.slane %v2090, 2
      %v2093 = vor.u32 %v2089, %v2092
      %v2094 = vsel %vm1412, %v2084, %v2093
      %v2096 = vshrl.u32 %v1838, 16
      %v2098 = vrot.slane %v2096, 1
      %v2099 = vshll.u32 %v1838, 16
      %v2101 = vrot.slane %v2099, 2
      %v2102 = vor.u32 %v2098, %v2101
      %v2103 = vsel %vm1412, %v2093, %v2102
      %v2105 = vshrl.u32 %v2059, 16
      %v2107 = vrot.slane %v2105, 1
      %v2108 = vshll.u32 %v2059, 16
      %v2110 = vrot.slane %v2108, 2
      %v2111 = vor.u32 %v2107, %v2110
      %v2112 = vsel %vm1412, %v2102, %v2111
      %v2114 = vsel %vm281, %v2076, 0
      %v2117 = vsel %vm281, %v2085, 0
      %v2120 = vsel %vm281, %v2094, 0
      %v2123 = vsel %vm281, %v2103, 0
      %v2126 = vsel %vm281, %v2112, 0
      %v2129 = vsel %vm281, %v2111, 0
      %v2132 = vand.u32 %v2056, %v303
      %2134 = vmatpush.bf16.msra.mxu0 0
      %2135 = vmatpush.bf16.msra.mxu0 0
      %2136 = vmatpush.bf16.msra.mxu0 0
      %2137 = vmatpush.bf16.msra.mxu0 0
      %2138 = vmatpush.bf16.msra.mxu0 0
      %2139 = vmatpush.bf16.msra.mxu0 0
      %2140 = vmatpush.bf16.msra.mxu0 0
      %2141 = vmatpush.bf16.msra.mxu0 %v2132
      %2142 = vmatmul.bf16.gmra.mxu0 %v2114
      %v2143 = vpop.f32.mrf.mxu0
      %v2144 = vadd.f32 0.0, %v2143
      %v2145 = vpop.f32.mrf.mxu0
      %v2146 = vadd.f32 0.0, %v2145
      %2147 = vmatmul.bf16.gmra.mxu0 %v2117
      %v2148 = vpop.f32.mrf.mxu0
      %v2149 = vadd.f32 0.0, %v2148
      %v2150 = vpop.f32.mrf.mxu0
      %v2151 = vadd.f32 0.0, %v2150
      %2152 = vmatmul.bf16.gmra.mxu0 %v2120
      %v2153 = vpop.f32.mrf.mxu0
      %v2154 = vadd.f32 0.0, %v2153
      %v2155 = vpop.f32.mrf.mxu0
      %v2156 = vadd.f32 0.0, %v2155
      %2157 = vmatmul.bf16.gmra.mxu0 %v2123
      %v2158 = vpop.f32.mrf.mxu0
      %v2159 = vadd.f32 0.0, %v2158
      %v2160 = vpop.f32.mrf.mxu0
      %v2161 = vadd.f32 0.0, %v2160
      %2162 = vmatmul.bf16.gmra.mxu0 %v2126
      %v2163 = vpop.f32.mrf.mxu0
      %v2164 = vadd.f32 0.0, %v2163
      %v2165 = vpop.f32.mrf.mxu0
      %v2166 = vadd.f32 0.0, %v2165
      %2167 = vmatmul.bf16.gmra.mxu0 %v2129
      %v2168 = vpop.f32.mrf.mxu0
      %v2169 = vadd.f32 0.0, %v2168
      %v2170 = vpop.f32.mrf.mxu0
      %v2171 = vadd.f32 0.0, %v2170
      %2172 = vdwg.mxu0
      %v2173 = vadd.f32 %v2042, %v2144
      %v2174 = vadd.f32 %v2043, %v2146
      %v2175 = vadd.f32 %v2044, %v2149
      %v2176 = vadd.f32 %v2045, %v2151
      %v2177 = vadd.f32 %v2046, %v2154
      %v2178 = vadd.f32 %v2047, %v2156
      %v2179 = vadd.f32 %v2048, %v2159
      %v2180 = vadd.f32 %v2049, %v2161
      %v2181 = vadd.f32 %v2050, %v2164
      %v2182 = vadd.f32 %v2051, %v2166
      %v2183 = vadd.f32 %v2052, %v2169
      %v2184 = vadd.f32 %v2053, %v2171
      %v2185 = vld [vmem:[%s213] sm:$0x1]
      %v2187 = vperm.slane %v2185, 0
      %v2189 = vadd.f32 %v2173, %v2187
      %v2190 = vadd.f32 %v2174, %v2187
      %v2191 = vadd.f32 %v2175, %v2187
      %v2192 = vadd.f32 %v2176, %v2187
      %v2193 = vadd.f32 %v2177, %v2187
      %v2194 = vadd.f32 %v2178, %v2187
      %v2195 = vadd.f32 %v2179, %v2187
      %v2196 = vadd.f32 %v2180, %v2187
      %v2197 = vadd.f32 %v2181, %v2187
      %v2198 = vadd.f32 %v2182, %v2187
      %v2199 = vadd.f32 %v2183, %v2187
      %v2200 = vadd.f32 %v2184, %v2187
      %vm2201 = vcmp.gt.f32.partialorder %v2189, 0.0
      %vm2202 = vcmp.gt.f32.partialorder %v2190, 0.0
      %vm2203 = vcmp.gt.f32.partialorder %v2191, 0.0
      %vm2204 = vcmp.gt.f32.partialorder %v2192, 0.0
      %vm2205 = vcmp.gt.f32.partialorder %v2193, 0.0
      %vm2206 = vcmp.gt.f32.partialorder %v2194, 0.0
      %vm2207 = vcmp.gt.f32.partialorder %v2195, 0.0
      %vm2208 = vcmp.gt.f32.partialorder %v2196, 0.0
      %vm2209 = vcmp.gt.f32.partialorder %v2197, 0.0
      %vm2210 = vcmp.gt.f32.partialorder %v2198, 0.0
      %vm2211 = vcmp.gt.f32.partialorder %v2199, 0.0
      %vm2212 = vcmp.gt.f32.partialorder %v2200, 0.0
      %v2213 = vmul.f32 %v2189, 0.2
      %v2214 = vmul.f32 %v2190, 0.2
      %v2215 = vmul.f32 %v2191, 0.2
      %v2216 = vmul.f32 %v2192, 0.2
      %v2217 = vmul.f32 %v2193, 0.2
      %v2218 = vmul.f32 %v2194, 0.2
      %v2219 = vmul.f32 %v2195, 0.2
      %v2220 = vmul.f32 %v2196, 0.2
      %v2221 = vmul.f32 %v2197, 0.2
      %v2222 = vmul.f32 %v2198, 0.2
      %v2223 = vmul.f32 %v2199, 0.2
      %v2224 = vmul.f32 %v2200, 0.2
      %v2225 = vsel %vm2201, %v2189, %v2213
      %v2226 = vsel %vm2202, %v2190, %v2214
      %v2227 = vsel %vm2203, %v2191, %v2215
      %v2228 = vsel %vm2204, %v2192, %v2216
      %v2229 = vsel %vm2205, %v2193, %v2217
      %v2230 = vsel %vm2206, %v2194, %v2218
      %v2231 = vsel %vm2207, %v2195, %v2219
      %v2232 = vsel %vm2208, %v2196, %v2220
      %v2233 = vsel %vm2209, %v2197, %v2221
      %v2234 = vsel %vm2210, %v2198, %v2222
      %v2235 = vsel %vm2211, %v2199, %v2223
      %v2236 = vsel %vm2212, %v2200, %v2224
      %v2237 = vpack.c.bf16 %v2225, %v2225
      %v2238 = vpack.c.bf16 %v2226, %v2226
      %v2239 = vpack.c.bf16 %v2227, %v2227
      %v2240 = vpack.c.bf16 %v2228, %v2228
      %v2241 = vpack.c.bf16 %v2229, %v2229
      %v2242 = vpack.c.bf16 %v2230, %v2230
      %v2243 = vpack.c.bf16 %v2231, %v2231
      %v2244 = vpack.c.bf16 %v2232, %v2232
      %v2245 = vpack.c.bf16 %v2233, %v2233
      %v2246 = vpack.c.bf16 %v2234, %v2234
      %v2247 = vpack.c.bf16 %v2235, %v2235
      %v2248 = vpack.c.bf16 %v2236, %v2236
      %vm2249 = vcmask 60416
      %2250 = vst.msk [vmem:[%s221] sm:$0xf] %vm2249, %v2237
      %2251 = vst.msk [vmem:[%s221 + $0x4] sm:$0xf] %vm2249, %v2238
      %2252 = vst.msk [vmem:[%s221 + $0x8] sm:$0xf] %vm2249, %v2239
      %2253 = vst.msk [vmem:[%s221 + $0xc] sm:$0xf] %vm2249, %v2240
      %2254 = vst.msk [vmem:[%s221 + $0x10] sm:$0xf] %vm2249, %v2241
      %2255 = vst.msk [vmem:[%s221 + $0x14] sm:$0xf] %vm2249, %v2242
      %2256 = vst.msk [vmem:[%s221 + $0x18] sm:$0xf] %vm2249, %v2243
      %2257 = vst.msk [vmem:[%s221 + $0x1c] sm:$0xf] %vm2249, %v2244
      %2258 = vst.msk [vmem:[%s221 + $0x20] sm:$0xf] %vm2249, %v2245
      %2259 = vst.msk [vmem:[%s221 + $0x24] sm:$0xf] %vm2249, %v2246
      %2260 = vst.msk [vmem:[%s221 + $0x28] sm:$0xf] %vm2249, %v2247
      %vm2261 = vcmask 57344
      %2262 = vst.msk [vmem:[%s221 + $0x2c] sm:$0x1] %vm2261, %v2248
      %p2263 = scmp.lt.s32.totalorder %s18, 1
      %s2264 = scalar_select %p2263, %s18, 1
      %p2265 = scmp.lt.s32.totalorder %s19, 0
      %s2266 = scalar_select %p2265, %s19, 0
      %s2267 = smul.addr %s2264, 12
      %s2268 = sadd.s32 %s2266, %s2267
      %s2269 = smul.addr %s2268, 4
      %s2270 = scalar_lea.vmem %s3, %s2269
      // Predicated region
      $region33: #{discriminator_forward.5} parent=31 // pred_check
        %p2271 = pneg %p124
      $region34: #{discriminator_forward.5} parent=31 // pred_check_branch
        %2273 = sbr.rel (%p2271) target = $region36
      $region35: #{discriminator_forward.5} parent=31 // pred_region
        _
      $region36: #{discriminator_forward.5} parent=31 // pred_fallthru
        _
    $region32: #{discriminator_forward.5} parent=5 // pred_fallthru
      _
    %p2274 = scmp.le.s32.totalorder 2, %s9
    // Predicated region
    $region37: #{discriminator_forward.5} parent=5 // pred_check
      %p2275 = pneg %p2274
    $region38: #{discriminator_forward.5} parent=5 // pred_check_branch
      %2277 = sbr.rel (%p2275) target = $region40
    $region39: #{discriminator_forward.5} parent=5 // pred_region
      %s2278 = ssub.s32 %s9, 2
      // Predicated region
      $region41: #{discriminator_forward.5} parent=39 // pred_check
        %p2279 = pneg %p130
      $region42: #{discriminator_forward.5} parent=39 // pred_check_branch
        %2281 = sbr.rel (%p2279) target = $region44
      $region43: #{discriminator_forward.5} parent=39 // pred_region
        %p2282 = scmp.lt.s32.totalorder %s20, 1
        %s2283 = scalar_select %p2282, %s20, 1
        %p2284 = scmp.lt.s32.totalorder %s21, 0
        %s2285 = scalar_select %p2284, %s21, 0
        %s2286 = smul.addr %s2283, 12
        %s2287 = sadd.s32 %s2285, %s2286
        %s2288 = smul.addr %s2287, 4
        %s2289 = scalar_lea.vmem %s3, %s2288
      $region44: #{discriminator_forward.5} parent=39 // pred_fallthru
        _
    $region40: #{discriminator_forward.5} parent=5 // pred_fallthru
      _
  $region6: #{discriminator_forward.5} parent=0 // loop_footer
    %s13 = sadd.s32 1, %s9
  $region7: #{discriminator_forward.5} parent=0 // loop_footer_branch
    %8 = sbr.rel target = $region3
  $region8: #{discriminator_forward.5} parent=0 // loop_exit
    _

// kernel: discriminator_forward.6
$region0: #{discriminator_forward.6}
  #allocation0 [shape = 'u32[]', space=smem, size = 0x4, offset = 0x4, fixed_abs, tag = 'smem constant byte address 0x4 - core index']
  #allocation1 [shape = 'u32[72,128]{1,0:T(1,128)}', space=vmem, size = 0x9000, scoped, tag = 'internal scratch']
  %s0 = inlined_call_operand.vmem [shape: bf16[2,4,40,8], index: 0, kind: input, shape index: {}]
  %s1 = inlined_call_operand.vmem [shape: bf16[16,8,16], index: 1, kind: input, shape index: {}]
  %s2 = inlined_call_operand.vmem [shape: f32[1,1,16], index: 2, kind: input, shape index: {}]
  %s3 = inlined_call_operand.vmem [shape: f32[1,30,1], index: 3, kind: input, shape index: {}]
  %s4 = inlined_call_operand.vmem [shape: bf16[2,30,16], index: 4, kind: output, shape index: {0}]
  %s5 = inlined_call_operand.vmem [shape: f32[2,1,16], index: 5, kind: output, shape index: {1}]
  %s6 = inlined_call_operand.vmem [shape: f32[2,1,16], index: 6, kind: output, shape index: {2}]
  %7 = xla_tuple %s4, %s5, %s6
  %s8 = sld [smem:[#allocation0]]
  $region65: #{discriminator_forward.6} parent=0
    _
  %s10 = ssub.s32 1, %s8
  %s11 = scalar_select 0, %s10, %s8
  loop: start=0, step=1, limit=4
  $region2: #{discriminator_forward.6} parent=0 // loop_pre_header
    _
  $region3: #{discriminator_forward.6} parent=0 // loop_header
    %s13 = sphi 0, %s17
    %p14 = scmp.ge.s32.totalorder %s13, 4
    %s20 = sphi 0, %s32
    %s21 = sphi 0, %s28
    %s22 = sphi 0, %s20
    %s23 = sphi 0, %s21
    %s24 = sphi 0, %s22
    %s25 = sphi 0, %s23
    %s35 = sphi 0, %s37
    %s38 = sphi 0, %s35
    %s39 = sphi 0, %s38
    %s55 = sphi 0, %s39
    %s61 = sphi 0, %s63
    %s64 = sphi 0, %s61
    %s65 = sphi 0, %s64
    %s81 = sphi 0, %s65
    %s87 = sphi 0, %s89
    %s90 = sphi 0, %s87
    %s91 = sphi 0, %s90
    %s107 = sphi 0, %s91
    %s111 = sphi 0, %s111
    %s113 = sphi 0, %s111
    %s114 = sphi 0, %s113
    %s128 = sphi 0, %s114
    %s136 = sphi 0, %s138
    %s139 = sphi 0, %s136
    %s140 = sphi 0, %s139
    %s156 = sphi 0, %s140
    %s164 = sphi 0, %s166
    %s167 = sphi 0, %s164
    %s168 = sphi 0, %s167
    %s184 = sphi 0, %s168
    %s192 = sphi 0, %s194
    %s195 = sphi 0, %s192
    %s196 = sphi 0, %s195
    %s212 = sphi 0, %s196
  $region4: #{discriminator_forward.6} parent=0 // loop_header_branch
    %16 = sbr.rel (%p14) target = $region8
  $region5: #{discriminator_forward.6} parent=0 // loop_body
    %s18 = ssub.s32 %s13, 1
    %s19 = ssub.s32 %s13, 2
    %s26 = sadd.s32 1, %s21
    %p27 = scmp.ge.s32.totalorder %s26, 1
    %s28 = scalar_select %p27, 0, %s26
    %s29 = sadd.s32 1, %s20
    %s30 = scalar_select %p27, %s29, %s20
    %p31 = scmp.ge.s32.totalorder %s30, 2
    %s32 = scalar_select %p31, 0, %s30
    %s33 = ssub.s32 %s20, %s32
    %p34 = scmp.eq.s32.totalorder %s33, 0
    %s36 = sadd.s32 %s35, 1
    %s37 = scalar_select %p34, %s35, %s36
    %p40 = pneg %p34
    %p41 = scmp.eq.s32.totalorder %s13, 1
    %p42 = por %p40, %p41
    %p43 = scmp.ne.s32.totalorder %s35, %s38
    %p44 = scmp.eq.s32.totalorder %s13, 0
    %p45 = por %p43, %p44
    %p46 = scmp.ne.s32.totalorder %s35, %s38
    %p47 = scmp.eq.s32.totalorder %s18, 1
    %p48 = por %p46, %p47
    %p49 = scmp.ne.s32.totalorder %s38, %s39
    %p50 = scmp.eq.s32.totalorder %s18, 0
    %p51 = por %p49, %p50
    %p52 = scmp.ne.s32.totalorder %s38, %s39
    %p53 = scmp.eq.s32.totalorder %s19, 1
    %p54 = por %p52, %p53
    %p56 = scmp.ne.s32.totalorder %s39, %s55
    %p57 = scmp.eq.s32.totalorder %s19, 0
    %p58 = por %p56, %p57
    %s59 = ssub.s32 %s21, %s28
    %p60 = scmp.eq.s32.totalorder %s59, 0
    %s62 = sadd.s32 %s61, 1
    %s63 = scalar_select %p60, %s61, %s62
    %p66 = pneg %p60
    %p67 = scmp.eq.s32.totalorder %s13, 1
    %p68 = por %p66, %p67
    %p69 = scmp.ne.s32.totalorder %s61, %s64
    %p70 = scmp.eq.s32.totalorder %s13, 0
    %p71 = por %p69, %p70
    %p72 = scmp.ne.s32.totalorder %s61, %s64
    %p73 = scmp.eq.s32.totalorder %s18, 1
    %p74 = por %p72, %p73
    %p75 = scmp.ne.s32.totalorder %s64, %s65
    %p76 = scmp.eq.s32.totalorder %s18, 0
    %p77 = por %p75, %p76
    %p78 = scmp.ne.s32.totalorder %s64, %s65
    %p79 = scmp.eq.s32.totalorder %s19, 1
    %p80 = por %p78, %p79
    %p82 = scmp.ne.s32.totalorder %s65, %s81
    %p83 = scmp.eq.s32.totalorder %s19, 0
    %p84 = por %p82, %p83
    %s85 = ssub.s32 %s21, %s28
    %p86 = scmp.eq.s32.totalorder %s85, 0
    %s88 = sadd.s32 %s87, 1
    %s89 = scalar_select %p86, %s87, %s88
    %p92 = pneg %p86
    %p93 = scmp.eq.s32.totalorder %s13, 1
    %p94 = por %p92, %p93
    %p95 = scmp.ne.s32.totalorder %s87, %s90
    %p96 = scmp.eq.s32.totalorder %s13, 0
    %p97 = por %p95, %p96
    %p98 = scmp.ne.s32.totalorder %s87, %s90
    %p99 = scmp.eq.s32.totalorder %s18, 1
    %p100 = por %p98, %p99
    %p101 = scmp.ne.s32.totalorder %s90, %s91
    %p102 = scmp.eq.s32.totalorder %s18, 0
    %p103 = por %p101, %p102
    %p104 = scmp.ne.s32.totalorder %s90, %s91
    %p105 = scmp.eq.s32.totalorder %s19, 1
    %p106 = por %p104, %p105
    %p108 = scmp.ne.s32.totalorder %s91, %s107
    %p109 = scmp.eq.s32.totalorder %s19, 0
    %p110 = por %p108, %p109
    %s112 = sadd.s32 %s111, 1
    %p115 = scmp.eq.s32.totalorder %s13, 1
    %p116 = scmp.ne.s32.totalorder %s111, %s113
    %p117 = scmp.eq.s32.totalorder %s13, 0
    %p118 = por %p116, %p117
    %p119 = scmp.ne.s32.totalorder %s111, %s113
    %p120 = scmp.eq.s32.totalorder %s18, 1
    %p121 = por %p119, %p120
    %p122 = scmp.ne.s32.totalorder %s113, %s114
    %p123 = scmp.eq.s32.totalorder %s18, 0
    %p124 = por %p122, %p123
    %p125 = scmp.ne.s32.totalorder %s113, %s114
    %p126 = scmp.eq.s32.totalorder %s19, 1
    %p127 = por %p125, %p126
    %p129 = scmp.ne.s32.totalorder %s114, %s128
    %p130 = scmp.eq.s32.totalorder %s19, 0
    %p131 = por %p129, %p130
    %s132 = ssub.s32 %s20, %s32
    %s133 = ssub.s32 %s21, %s28
    %s134 = sor.u32 %s132, %s133
    %p135 = scmp.eq.s32.totalorder %s134, 0
    %s137 = sadd.s32 %s136, 1
    %s138 = scalar_select %p135, %s136, %s137
    %p141 = pneg %p135
    %p142 = scmp.eq.s32.totalorder %s13, 1
    %p143 = por %p141, %p142
    %p144 = scmp.ne.s32.totalorder %s136, %s139
    %p145 = scmp.eq.s32.totalorder %s13, 0
    %p146 = por %p144, %p145
    %p147 = scmp.ne.s32.totalorder %s136, %s139
    %p148 = scmp.eq.s32.totalorder %s18, 1
    %p149 = por %p147, %p148
    %p150 = scmp.ne.s32.totalorder %s139, %s140
    %p151 = scmp.eq.s32.totalorder %s18, 0
    %p152 = por %p150, %p151
    %p153 = scmp.ne.s32.totalorder %s139, %s140
    %p154 = scmp.eq.s32.totalorder %s19, 1
    %p155 = por %p153, %p154
    %p157 = scmp.ne.s32.totalorder %s140, %s156
    %p158 = scmp.eq.s32.totalorder %s19, 0
    %p159 = por %p157, %p158
    %s160 = ssub.s32 %s20, %s32
    %s161 = ssub.s32 %s21, %s28
    %s162 = sor.u32 %s160, %s161
    %p163 = scmp.eq.s32.totalorder %s162, 0
    %s165 = sadd.s32 %s164, 1
    %s166 = scalar_select %p163, %s164, %s165
    %p169 = pneg %p163
    %p170 = scmp.eq.s32.totalorder %s13, 1
    %p171 = por %p169, %p170
    %p172 = scmp.ne.s32.totalorder %s164, %s167
    %p173 = scmp.eq.s32.totalorder %s13, 0
    %p174 = por %p172, %p173
    %p175 = scmp.ne.s32.totalorder %s164, %s167
    %p176 = scmp.eq.s32.totalorder %s18, 1
    %p177 = por %p175, %p176
    %p178 = scmp.ne.s32.totalorder %s167, %s168
    %p179 = scmp.eq.s32.totalorder %s18, 0
    %p180 = por %p178, %p179
    %p181 = scmp.ne.s32.totalorder %s167, %s168
    %p182 = scmp.eq.s32.totalorder %s19, 1
    %p183 = por %p181, %p182
    %p185 = scmp.ne.s32.totalorder %s168, %s184
    %p186 = scmp.eq.s32.totalorder %s19, 0
    %p187 = por %p185, %p186
    %s188 = ssub.s32 %s20, %s32
    %s189 = ssub.s32 %s21, %s28
    %s190 = sor.u32 %s188, %s189
    %p191 = scmp.eq.s32.totalorder %s190, 0
    %s193 = sadd.s32 %s192, 1
    %s194 = scalar_select %p191, %s192, %s193
    %p197 = pneg %p191
    %p198 = scmp.eq.s32.totalorder %s13, 1
    %p199 = por %p197, %p198
    %p200 = scmp.ne.s32.totalorder %s192, %s195
    %p201 = scmp.eq.s32.totalorder %s13, 0
    %p202 = por %p200, %p201
    %p203 = scmp.ne.s32.totalorder %s192, %s195
    %p204 = scmp.eq.s32.totalorder %s18, 1
    %p205 = por %p203, %p204
    %p206 = scmp.ne.s32.totalorder %s195, %s196
    %p207 = scmp.eq.s32.totalorder %s18, 0
    %p208 = por %p206, %p207
    %p209 = scmp.ne.s32.totalorder %s195, %s196
    %p210 = scmp.eq.s32.totalorder %s19, 1
    %p211 = por %p209, %p210
    %p213 = scmp.ne.s32.totalorder %s196, %s212
    %p214 = scmp.eq.s32.totalorder %s19, 0
    %p215 = por %p213, %p214
    %p216 = scmp.le.s32.totalorder 1, %s13
    %p217 = scmp.lt.s32.totalorder %s13, 3
    %p218 = pnand %p216, %p217
    %p219 = pneg %p218
    // Predicated region
    $region9: #{discriminator_forward.6} parent=5 // pred_check
      _
    $region10: #{discriminator_forward.6} parent=5 // pred_check_branch
      %221 = sbr.rel (%p218) target = $region12
    $region11: #{discriminator_forward.6} parent=5 // pred_region
      %s222 = ssub.s32 %s13, 1
      // Predicated region
      $region13: #{discriminator_forward.6} parent=11 // pred_check
        %p223 = pneg %p77
      $region14: #{discriminator_forward.6} parent=11 // pred_check_branch
        %225 = sbr.rel (%p223) target = $region16
      $region15: #{discriminator_forward.6} parent=11 // pred_region
        %p226 = scmp.lt.s32.totalorder %s23, 0
        %s227 = scalar_select %p226, %s23, 0
        %s228 = smul.addr %s227, 4
        %s229 = scalar_lea.vmem %s1, %s228
      $region16: #{discriminator_forward.6} parent=11 // pred_fallthru
        _
      // Predicated region
      $region17: #{discriminator_forward.6} parent=11 // pred_check
        %p230 = pneg %p103
      $region18: #{discriminator_forward.6} parent=11 // pred_check_branch
        %232 = sbr.rel (%p230) target = $region20
      $region19: #{discriminator_forward.6} parent=11 // pred_region
        %p233 = scmp.lt.s32.totalorder %s23, 0
        %s234 = scalar_select %p233, %s23, 0
        %s235 = scalar_lea.vmem %s2, %s234
      $region20: #{discriminator_forward.6} parent=11 // pred_fallthru
        _
      // Predicated region
      $region21: #{discriminator_forward.6} parent=11 // pred_check
        %p236 = pneg %p124
      $region22: #{discriminator_forward.6} parent=11 // pred_check_branch
        %238 = sbr.rel (%p236) target = $region24
      $region23: #{discriminator_forward.6} parent=11 // pred_region
        _
      $region24: #{discriminator_forward.6} parent=11 // pred_fallthru
        _
    $region12: #{discriminator_forward.6} parent=5 // pred_fallthru
      _
    %p239 = scmp.lt.s32.totalorder %s13, 2
    // Predicated region
    $region25: #{discriminator_forward.6} parent=5 // pred_check
      %p240 = pneg %p239
    $region26: #{discriminator_forward.6} parent=5 // pred_check_branch
      %242 = sbr.rel (%p240) target = $region28
    $region27: #{discriminator_forward.6} parent=5 // pred_region
      // Predicated region
      $region29: #{discriminator_forward.6} parent=27 // pred_check
        %p243 = pneg %p45
      $region30: #{discriminator_forward.6} parent=27 // pred_check_branch
        %245 = sbr.rel (%p243) target = $region32
      $region31: #{discriminator_forward.6} parent=27 // pred_region
        %p246 = scmp.lt.s32.totalorder %s20, 1
        %s247 = scalar_select %p246, %s20, 1
        %s248 = smul.addr %s247, 20
        %s249 = smul.addr %s248, 4
        %s250 = scalar_lea.vmem %s0, %s249
      $region32: #{discriminator_forward.6} parent=27 // pred_fallthru
        _
    $region28: #{discriminator_forward.6} parent=5 // pred_fallthru
      _
    %p251 = scmp.le.s32.totalorder 1, %s13
    %p252 = scmp.lt.s32.totalorder %s13, 3
    %p253 = pnand %p251, %p252
    %p254 = pneg %p253
    // Predicated region
    $region33: #{discriminator_forward.6} parent=5 // pred_check
      _
    $region34: #{discriminator_forward.6} parent=5 // pred_check_branch
      %256 = sbr.rel (%p253) target = $region36
    $region35: #{discriminator_forward.6} parent=5 // pred_region
      %s257 = ssub.s32 %s13, 1
      %p258 = scmp.lt.s32.totalorder %s22, 1
      %s259 = scalar_select %p258, %s22, 1
      %s260 = smul.addr %s259, 20
      %s261 = smul.addr %s260, 4
      %s262 = scalar_lea.vmem %s0, %s261
      %p263 = pneg %p51
      %p264 = pneg %p48
      %p265 = scmp.lt.s32.totalorder %s23, 0
      %s266 = scalar_select %p265, %s23, 0
      %s267 = smul.addr %s266, 4
      %s268 = scalar_lea.vmem %s1, %s267
      %p269 = pneg %p77
      %p270 = pneg %p74
      %p271 = scmp.lt.s32.totalorder %s23, 0
      %s272 = scalar_select %p271, %s23, 0
      %s273 = scalar_lea.vmem %s2, %s272
      %p274 = pneg %p103
      %p275 = pneg %p100
      %p276 = pneg %p124
      %p277 = pneg %p121
      %p278 = pneg %p152
      %p279 = pneg %p149
      %p280 = scmp.lt.s32.totalorder %s22, 1
      %s281 = scalar_select %p280, %s22, 1
      %p282 = scmp.lt.s32.totalorder %s23, 0
      %s283 = scalar_select %p282, %s23, 0
      %s284 = smul.addr %s281, 4
      %s285 = sadd.s32 %s283, %s284
      %s286 = smul.addr %s285, 4
      %s287 = scalar_lea.vmem %s4, %s286
      %p288 = pneg %p180
      %p289 = pneg %p177
      %p290 = scmp.lt.s32.totalorder %s22, 1
      %s291 = scalar_select %p290, %s22, 1
      %p292 = scmp.lt.s32.totalorder %s23, 0
      %s293 = scalar_select %p292, %s23, 0
      %s294 = sadd.s32 %s293, %s291
      %s295 = scalar_lea.vmem %s5, %s294
      %p296 = pneg %p208
      %p297 = pneg %p205
      %p298 = scmp.lt.s32.totalorder %s22, 1
      %s299 = scalar_select %p298, %s22, 1
      %p300 = scmp.lt.s32.totalorder %s23, 0
      %s301 = scalar_select %p300, %s23, 0
      %s302 = sadd.s32 %s301, %s299
      %s303 = scalar_lea.vmem %s6, %s302
      %p304 = scmp.lt.s32.totalorder %s22, 1
      %s305 = scalar_select %p304, %s22, 1
      %s306 = smul.addr %s305, 20
      %s307 = smul.addr %s306, 4
      %s308 = scalar_lea.vmem %s0, %s307
      %p309 = scmp.lt.s32.totalorder %s23, 0
      %s310 = scalar_select %p309, %s23, 0
      %s311 = smul.addr %s310, 4
      %s312 = scalar_lea.vmem %s1, %s311
      %p313 = scmp.lt.s32.totalorder %s23, 0
      %s314 = scalar_select %p313, %s23, 0
      %s315 = scalar_lea.vmem %s2, %s314
      %p316 = scmp.lt.s32.totalorder %s22, 1
      %s317 = scalar_select %p316, %s22, 1
      %p318 = scmp.lt.s32.totalorder %s23, 0
      %s319 = scalar_select %p318, %s23, 0
      %s320 = smul.addr %s317, 4
      %s321 = sadd.s32 %s319, %s320
      %s322 = smul.addr %s321, 4
      %s323 = scalar_lea.vmem %s4, %s322
      %p324 = scmp.lt.s32.totalorder %s22, 1
      %s325 = scalar_select %p324, %s22, 1
      %p326 = scmp.lt.s32.totalorder %s23, 0
      %s327 = scalar_select %p326, %s23, 0
      %s328 = sadd.s32 %s327, %s325
      %s329 = scalar_lea.vmem %s5, %s328
      %p330 = scmp.lt.s32.totalorder %s22, 1
      %s331 = scalar_select %p330, %s22, 1
      %p332 = scmp.lt.s32.totalorder %s23, 0
      %s333 = scalar_select %p332, %s23, 0
      %s334 = sadd.s32 %s333, %s331
      %s335 = scalar_lea.vmem %s6, %s334
      %v337 = vld [vmem:[%s308] sm:$0xf]
      %v338 = vld [vmem:[%s308 + $0x4] sm:$0xf]
      %v339 = vld [vmem:[%s308 + $0x8] sm:$0xf]
      %v340 = vld [vmem:[%s308 + $0xc] sm:$0x7]
      %v341 = vld [vmem:[%s312] sm:$0xf]
      %s342 = scalar_lea.vmem %s308, 20
      %v343 = vld [vmem:[%s342] sm:$0xf]
      %v344 = vld [vmem:[%s342 + $0x4] sm:$0xf]
      %v345 = vld [vmem:[%s342 + $0x8] sm:$0xf]
      %v346 = vld [vmem:[%s342 + $0xc] sm:$0x7]
      %s347 = scalar_lea.vmem %s312, 4
      %v348 = vld [vmem:[%s347] sm:$0xf]
      %v353 = vunpack.c.l.b16 %v343
      %v354 = vunpack.c.l.b16 %v344
      %v355 = vunpack.c.l.b16 %v345
      %v356 = vunpack.c.l.b16 %v346
      %v357 = vpack.c.b16 %v354, %v353
      %v358 = vpack.c.b16 %v356, %v355
      %vm359 = vcmask 64512
      %v361 = vsel %vm359, %v357, 0
      %v364 = vsel %vm359, %v358, 0
      %vm366 = vcmask 1043456
      %v368 = vsel %vm366, %v348, 0
      %370 = vmatpush.bf16.msra.mxu0 0
      %371 = vmatpush.bf16.msra.mxu0 0
      %372 = vmatpush.bf16.msra.mxu0 0
      %373 = vmatpush.bf16.msra.mxu0 0
      %374 = vmatpush.bf16.msra.mxu0 0
      %375 = vmatpush.bf16.msra.mxu0 0
      %376 = vmatpush.bf16.msra.mxu0 0
      %377 = vmatpush.bf16.msra.mxu0 %v368
      %378 = vmatmul.bf16.gmra.mxu0 %v361
      %v379 = vpop.f32.mrf.mxu0
      %v380 = vadd.f32 0.0, %v379
      %v381 = vpop.f32.mrf.mxu0
      %v382 = vadd.f32 0.0, %v381
      %383 = vmatmul.bf16.gmra.mxu0 %v364
      %v384 = vpop.f32.mrf.mxu0
      %v385 = vadd.f32 0.0, %v384
      %v386 = vpop.f32.mrf.mxu0
      %v387 = vadd.f32 0.0, %v386
      %388 = vdwg.mxu0
      %v393 = vunpack.c.l.b16 %v337
      %v394 = vunpack.c.l.b16 %v338
      %v395 = vunpack.c.l.b16 %v339
      %v396 = vunpack.c.l.b16 %v340
      %v397 = vpack.c.b16 %v394, %v393
      %v398 = vpack.c.b16 %v396, %v395
      %v400 = vsel %vm359, %v397, 0
      %v403 = vsel %vm359, %v398, 0
      %v406 = vsel %vm366, %v341, 0
      %408 = vmatpush.bf16.msra.mxu0 0
      %409 = vmatpush.bf16.msra.mxu0 0
      %410 = vmatpush.bf16.msra.mxu0 0
      %411 = vmatpush.bf16.msra.mxu0 0
      %412 = vmatpush.bf16.msra.mxu0 0
      %413 = vmatpush.bf16.msra.mxu0 0
      %414 = vmatpush.bf16.msra.mxu0 0
      %415 = vmatpush.bf16.msra.mxu0 %v406
      %416 = vmatmul.bf16.gmra.mxu0 %v400
      %v417 = vpop.f32.mrf.mxu0
      %v418 = vadd.f32 %v380, %v417
      %v419 = vpop.f32.mrf.mxu0
      %v420 = vadd.f32 %v382, %v419
      %421 = vmatmul.bf16.gmra.mxu0 %v403
      %v422 = vpop.f32.mrf.mxu0
      %v423 = vadd.f32 %v385, %v422
      %v424 = vpop.f32.mrf.mxu0
      %v425 = vadd.f32 %v387, %v424
      %426 = vdwg.mxu0
      %v427 = vld [vmem:[%s308 + $0xc] sm:$0xf]
      %s428 = scalar_lea.vmem %s312, 8
      %v429 = vld [vmem:[%s428] sm:$0xf]
      %v431 = vunpack.c.l.b16 %v427
      %v432 = vpack.c.b16 %v431, %v395
      %vm433 = vsmask.f32 7424
      %v434 = vshrl.u32 %v397, 16
      %v436 = vshll.u32 %v397, 16
      %v438 = vrot.slane %v436, 1
      %v439 = vor.u32 %v434, %v438
      %v441 = vshll.u32 %v432, 16
      %v443 = vrot.slane %v441, 1
      %v444 = vsel %vm433, %v439, %v443
      %v445 = vshrl.u32 %v432, 16
      %v447 = vor.u32 %v445, %v443
      %v449 = vsel %vm359, %v444, 0
      %v452 = vsel %vm359, %v447, 0
      %v455 = vsel %vm366, %v429, 0
      %457 = vmatpush.bf16.msra.mxu0 0
      %458 = vmatpush.bf16.msra.mxu0 0
      %459 = vmatpush.bf16.msra.mxu0 0
      %460 = vmatpush.bf16.msra.mxu0 0
      %461 = vmatpush.bf16.msra.mxu0 0
      %462 = vmatpush.bf16.msra.mxu0 0
      %463 = vmatpush.bf16.msra.mxu0 0
      %464 = vmatpush.bf16.msra.mxu0 %v455
      %465 = vmatmul.bf16.gmra.mxu0 %v449
      %v466 = vpop.f32.mrf.mxu0
      %v467 = vadd.f32 0.0, %v466
      %v468 = vpop.f32.mrf.mxu0
      %v469 = vadd.f32 0.0, %v468
      %470 = vmatmul.bf16.gmra.mxu0 %v452
      %v471 = vpop.f32.mrf.mxu0
      %v472 = vadd.f32 0.0, %v471
      %v473 = vpop.f32.mrf.mxu0
      %v474 = vadd.f32 0.0, %v473
      %475 = vdwg.mxu0
      %v476 = vadd.f32 %v418, %v467
      %v477 = vadd.f32 %v420, %v469
      %v478 = vadd.f32 %v423, %v472
      %v479 = vadd.f32 %v425, %v474
      %v480 = vld [vmem:[%s342 + $0xc] sm:$0xf]
      %s481 = scalar_lea.vmem %s312, 12
      %v482 = vld [vmem:[%s481] sm:$0xf]
      %v484 = vunpack.c.l.b16 %v480
      %v485 = vpack.c.b16 %v484, %v355
      %v486 = vshrl.u32 %v357, 16
      %v488 = vshll.u32 %v357, 16
      %v490 = vrot.slane %v488, 1
      %v491 = vor.u32 %v486, %v490
      %v493 = vshll.u32 %v485, 16
      %v495 = vrot.slane %v493, 1
      %v496 = vsel %vm433, %v491, %v495
      %v497 = vshrl.u32 %v485, 16
      %v499 = vor.u32 %v497, %v495
      %v501 = vsel %vm359, %v496, 0
      %v504 = vsel %vm359, %v499, 0
      %v507 = vsel %vm366, %v482, 0
      %509 = vmatpush.bf16.msra.mxu0 0
      %510 = vmatpush.bf16.msra.mxu0 0
      %511 = vmatpush.bf16.msra.mxu0 0
      %512 = vmatpush.bf16.msra.mxu0 0
      %513 = vmatpush.bf16.msra.mxu0 0
      %514 = vmatpush.bf16.msra.mxu0 0
      %515 = vmatpush.bf16.msra.mxu0 0
      %516 = vmatpush.bf16.msra.mxu0 %v507
      %517 = vmatmul.bf16.gmra.mxu0 %v501
      %v518 = vpop.f32.mrf.mxu0
      %v519 = vadd.f32 0.0, %v518
      %v520 = vpop.f32.mrf.mxu0
      %v521 = vadd.f32 0.0, %v520
      %522 = vmatmul.bf16.gmra.mxu0 %v504
      %v523 = vpop.f32.mrf.mxu0
      %v524 = vadd.f32 0.0, %v523
      %v525 = vpop.f32.mrf.mxu0
      %v526 = vadd.f32 0.0, %v525
      %527 = vdwg.mxu0
      %v528 = vadd.f32 %v476, %v519
      %v529 = vadd.f32 %v477, %v521
      %v530 = vadd.f32 %v478, %v524
      %v531 = vadd.f32 %v479, %v526
      %s532 = scalar_lea.vmem %s308, 40
      %v533 = vld [vmem:[%s532] sm:$0xf]
      %v534 = vld [vmem:[%s532 + $0x4] sm:$0xf]
      %v535 = vld [vmem:[%s532 + $0x8] sm:$0xf]
      %v536 = vld [vmem:[%s532 + $0xc] sm:$0x7]
      %s537 = scalar_lea.vmem %s312, 16
      %v538 = vld [vmem:[%s537] sm:$0xf]
      %v543 = vunpack.c.l.b16 %v533
      %v544 = vunpack.c.l.b16 %v534
      %v545 = vunpack.c.l.b16 %v535
      %v546 = vunpack.c.l.b16 %v536
      %v547 = vpack.c.b16 %v544, %v543
      %v548 = vpack.c.b16 %v546, %v545
      %v550 = vsel %vm359, %v547, 0
      %v553 = vsel %vm359, %v548, 0
      %v556 = vsel %vm366, %v538, 0
      %558 = vmatpush.bf16.msra.mxu0 0
      %559 = vmatpush.bf16.msra.mxu0 0
      %560 = vmatpush.bf16.msra.mxu0 0
      %561 = vmatpush.bf16.msra.mxu0 0
      %562 = vmatpush.bf16.msra.mxu0 0
      %563 = vmatpush.bf16.msra.mxu0 0
      %564 = vmatpush.bf16.msra.mxu0 0
      %565 = vmatpush.bf16.msra.mxu0 %v556
      %566 = vmatmul.bf16.gmra.mxu0 %v550
      %v567 = vpop.f32.mrf.mxu0
      %v568 = vadd.f32 0.0, %v567
      %v569 = vpop.f32.mrf.mxu0
      %v570 = vadd.f32 0.0, %v569
      %571 = vmatmul.bf16.gmra.mxu0 %v553
      %v572 = vpop.f32.mrf.mxu0
      %v573 = vadd.f32 0.0, %v572
      %v574 = vpop.f32.mrf.mxu0
      %v575 = vadd.f32 0.0, %v574
      %576 = vdwg.mxu0
      %v577 = vadd.f32 %v528, %v568
      %v578 = vadd.f32 %v529, %v570
      %v579 = vadd.f32 %v530, %v573
      %v580 = vadd.f32 %v531, %v575
      %s581 = scalar_lea.vmem %s308, 60
      %v582 = vld [vmem:[%s581] sm:$0xf]
      %v583 = vld [vmem:[%s581 + $0x4] sm:$0xf]
      %v584 = vld [vmem:[%s581 + $0x8] sm:$0xf]
      %v585 = vld [vmem:[%s581 + $0xc] sm:$0x7]
      %s586 = scalar_lea.vmem %s312, 20
      %v587 = vld [vmem:[%s586] sm:$0xf]
      %v592 = vunpack.c.l.b16 %v582
      %v593 = vunpack.c.l.b16 %v583
      %v594 = vunpack.c.l.b16 %v584
      %v595 = vunpack.c.l.b16 %v585
      %v596 = vpack.c.b16 %v593, %v592
      %v597 = vpack.c.b16 %v595, %v594
      %v599 = vsel %vm359, %v596, 0
      %v602 = vsel %vm359, %v597, 0
      %v605 = vsel %vm366, %v587, 0
      %607 = vmatpush.bf16.msra.mxu0 0
      %608 = vmatpush.bf16.msra.mxu0 0
      %609 = vmatpush.bf16.msra.mxu0 0
      %610 = vmatpush.bf16.msra.mxu0 0
      %611 = vmatpush.bf16.msra.mxu0 0
      %612 = vmatpush.bf16.msra.mxu0 0
      %613 = vmatpush.bf16.msra.mxu0 0
      %614 = vmatpush.bf16.msra.mxu0 %v605
      %615 = vmatmul.bf16.gmra.mxu0 %v599
      %v616 = vpop.f32.mrf.mxu0
      %v617 = vadd.f32 0.0, %v616
      %v618 = vpop.f32.mrf.mxu0
      %v619 = vadd.f32 0.0, %v618
      %620 = vmatmul.bf16.gmra.mxu0 %v602
      %v621 = vpop.f32.mrf.mxu0
      %v622 = vadd.f32 0.0, %v621
      %v623 = vpop.f32.mrf.mxu0
      %v624 = vadd.f32 0.0, %v623
      %625 = vdwg.mxu0
      %v626 = vadd.f32 %v577, %v617
      %v627 = vadd.f32 %v578, %v619
      %v628 = vadd.f32 %v579, %v622
      %v629 = vadd.f32 %v580, %v624
      %v630 = vld [vmem:[%s532 + $0xc] sm:$0xf]
      %s631 = scalar_lea.vmem %s312, 24
      %v632 = vld [vmem:[%s631] sm:$0xf]
      %v634 = vunpack.c.l.b16 %v630
      %v635 = vpack.c.b16 %v634, %v545
      %v636 = vshrl.u32 %v547, 16
      %v638 = vshll.u32 %v547, 16
      %v640 = vrot.slane %v638, 1
      %v641 = vor.u32 %v636, %v640
      %v643 = vshll.u32 %v635, 16
      %v645 = vrot.slane %v643, 1
      %v646 = vsel %vm433, %v641, %v645
      %v647 = vshrl.u32 %v635, 16
      %v649 = vor.u32 %v647, %v645
      %v651 = vsel %vm359, %v646, 0
      %v654 = vsel %vm359, %v649, 0
      %v657 = vsel %vm366, %v632, 0
      %659 = vmatpush.bf16.msra.mxu0 0
      %660 = vmatpush.bf16.msra.mxu0 0
      %661 = vmatpush.bf16.msra.mxu0 0
      %662 = vmatpush.bf16.msra.mxu0 0
      %663 = vmatpush.bf16.msra.mxu0 0
      %664 = vmatpush.bf16.msra.mxu0 0
      %665 = vmatpush.bf16.msra.mxu0 0
      %666 = vmatpush.bf16.msra.mxu0 %v657
      %667 = vmatmul.bf16.gmra.mxu0 %v651
      %v668 = vpop.f32.mrf.mxu0
      %v669 = vadd.f32 0.0, %v668
      %v670 = vpop.f32.mrf.mxu0
      %v671 = vadd.f32 0.0, %v670
      %672 = vmatmul.bf16.gmra.mxu0 %v654
      %v673 = vpop.f32.mrf.mxu0
      %v674 = vadd.f32 0.0, %v673
      %v675 = vpop.f32.mrf.mxu0
      %v676 = vadd.f32 0.0, %v675
      %677 = vdwg.mxu0
      %v678 = vadd.f32 %v626, %v669
      %v679 = vadd.f32 %v627, %v671
      %v680 = vadd.f32 %v628, %v674
      %v681 = vadd.f32 %v629, %v676
      %v682 = vld [vmem:[%s581 + $0xc] sm:$0xf]
      %s683 = scalar_lea.vmem %s312, 28
      %v684 = vld [vmem:[%s683] sm:$0xf]
      %v686 = vunpack.c.l.b16 %v682
      %v687 = vpack.c.b16 %v686, %v594
      %v688 = vshrl.u32 %v596, 16
      %v690 = vshll.u32 %v596, 16
      %v692 = vrot.slane %v690, 1
      %v693 = vor.u32 %v688, %v692
      %v695 = vshll.u32 %v687, 16
      %v697 = vrot.slane %v695, 1
      %v698 = vsel %vm433, %v693, %v697
      %v699 = vshrl.u32 %v687, 16
      %v701 = vor.u32 %v699, %v697
      %v703 = vsel %vm359, %v698, 0
      %v706 = vsel %vm359, %v701, 0
      %v709 = vsel %vm366, %v684, 0
      %711 = vmatpush.bf16.msra.mxu0 0
      %712 = vmatpush.bf16.msra.mxu0 0
      %713 = vmatpush.bf16.msra.mxu0 0
      %714 = vmatpush.bf16.msra.mxu0 0
      %715 = vmatpush.bf16.msra.mxu0 0
      %716 = vmatpush.bf16.msra.mxu0 0
      %717 = vmatpush.bf16.msra.mxu0 0
      %718 = vmatpush.bf16.msra.mxu0 %v709
      %719 = vmatmul.bf16.gmra.mxu0 %v703
      %v720 = vpop.f32.mrf.mxu0
      %v721 = vadd.f32 0.0, %v720
      %v722 = vpop.f32.mrf.mxu0
      %v723 = vadd.f32 0.0, %v722
      %724 = vmatmul.bf16.gmra.mxu0 %v706
      %v725 = vpop.f32.mrf.mxu0
      %v726 = vadd.f32 0.0, %v725
      %v727 = vpop.f32.mrf.mxu0
      %v728 = vadd.f32 0.0, %v727
      %729 = vdwg.mxu0
      %v730 = vadd.f32 %v678, %v721
      %v731 = vadd.f32 %v679, %v723
      %v732 = vadd.f32 %v680, %v726
      %v733 = vadd.f32 %v681, %v728
      %v734 = vld [vmem:[%s308] sm:$0x8]
      %v735 = vld [vmem:[%s308 + $0x4] sm:$0xf]
      %v736 = vld [vmem:[%s308 + $0x8] sm:$0xf]
      %v737 = vld [vmem:[%s308 + $0xc] sm:$0xf]
      %v738 = vld [vmem:[%s308 + $0x10] sm:$0x3]
      %s739 = scalar_lea.vmem %s312, 32
      %v740 = vld [vmem:[%s739] sm:$0xf]
      %v746 = vunpack.c.l.b16 %v734
      %v747 = vunpack.c.l.b16 %v735
      %v748 = vunpack.c.l.b16 %v736
      %v749 = vunpack.c.l.b16 %v737
      %v750 = vunpack.c.l.b16 %v738
      %v751 = vpack.c.b16 %v747, %v746
      %v752 = vpack.c.b16 %v749, %v748
      %v753 = vpack.c.b16 %v750, %v750
      %vm754 = vcmask 1044480
      %v755 = vrot.slane %v751, 3
      %v756 = vrot.slane %v752, 3
      %v757 = vsel %vm754, %v755, %v756
      %v758 = vrot.slane %v753, 3
      %v759 = vsel %vm754, %v756, %v758
      %v761 = vsel %vm359, %v757, 0
      %v764 = vsel %vm359, %v759, 0
      %v767 = vsel %vm366, %v740, 0
      %769 = vmatpush.bf16.msra.mxu0 0
      %770 = vmatpush.bf16.msra.mxu0 0
      %771 = vmatpush.bf16.msra.mxu0 0
      %772 = vmatpush.bf16.msra.mxu0 0
      %773 = vmatpush.bf16.msra.mxu0 0
      %774 = vmatpush.bf16.msra.mxu0 0
      %775 = vmatpush.bf16.msra.mxu0 0
      %776 = vmatpush.bf16.msra.mxu0 %v767
      %777 = vmatmul.bf16.gmra.mxu0 %v761
      %v778 = vpop.f32.mrf.mxu0
      %v779 = vadd.f32 0.0, %v778
      %v780 = vpop.f32.mrf.mxu0
      %v781 = vadd.f32 0.0, %v780
      %782 = vmatmul.bf16.gmra.mxu0 %v764
      %v783 = vpop.f32.mrf.mxu0
      %v784 = vadd.f32 0.0, %v783
      %v785 = vpop.f32.mrf.mxu0
      %v786 = vadd.f32 0.0, %v785
      %787 = vdwg.mxu0
      %v788 = vadd.f32 %v730, %v779
      %v789 = vadd.f32 %v731, %v781
      %v790 = vadd.f32 %v732, %v784
      %v791 = vadd.f32 %v733, %v786
      %v792 = vld [vmem:[%s342] sm:$0x8]
      %v793 = vld [vmem:[%s342 + $0x4] sm:$0xf]
      %v794 = vld [vmem:[%s342 + $0x8] sm:$0xf]
      %v795 = vld [vmem:[%s342 + $0xc] sm:$0xf]
      %v796 = vld [vmem:[%s342 + $0x10] sm:$0x3]
      %s797 = scalar_lea.vmem %s312, 36
      %v798 = vld [vmem:[%s797] sm:$0xf]
      %v804 = vunpack.c.l.b16 %v792
      %v805 = vunpack.c.l.b16 %v793
      %v806 = vunpack.c.l.b16 %v794
      %v807 = vunpack.c.l.b16 %v795
      %v808 = vunpack.c.l.b16 %v796
      %v809 = vpack.c.b16 %v805, %v804
      %v810 = vpack.c.b16 %v807, %v806
      %v811 = vpack.c.b16 %v808, %v808
      %v812 = vrot.slane %v809, 3
      %v813 = vrot.slane %v810, 3
      %v814 = vsel %vm754, %v812, %v813
      %v815 = vrot.slane %v811, 3
      %v816 = vsel %vm754, %v813, %v815
      %v818 = vsel %vm359, %v814, 0
      %v821 = vsel %vm359, %v816, 0
      %v824 = vsel %vm366, %v798, 0
      %826 = vmatpush.bf16.msra.mxu0 0
      %827 = vmatpush.bf16.msra.mxu0 0
      %828 = vmatpush.bf16.msra.mxu0 0
      %829 = vmatpush.bf16.msra.mxu0 0
      %830 = vmatpush.bf16.msra.mxu0 0
      %831 = vmatpush.bf16.msra.mxu0 0
      %832 = vmatpush.bf16.msra.mxu0 0
      %833 = vmatpush.bf16.msra.mxu0 %v824
      %834 = vmatmul.bf16.gmra.mxu0 %v818
      %v835 = vpop.f32.mrf.mxu0
      %v836 = vadd.f32 0.0, %v835
      %v837 = vpop.f32.mrf.mxu0
      %v838 = vadd.f32 0.0, %v837
      %839 = vmatmul.bf16.gmra.mxu0 %v821
      %v840 = vpop.f32.mrf.mxu0
      %v841 = vadd.f32 0.0, %v840
      %v842 = vpop.f32.mrf.mxu0
      %v843 = vadd.f32 0.0, %v842
      %844 = vdwg.mxu0
      %v845 = vadd.f32 %v788, %v836
      %v846 = vadd.f32 %v789, %v838
      %v847 = vadd.f32 %v790, %v841
      %v848 = vadd.f32 %v791, %v843
      %v849 = vld [vmem:[%s308 + $0x10] sm:$0x7]
      %s850 = scalar_lea.vmem %s312, 40
      %v851 = vld [vmem:[%s850] sm:$0xf]
      %v853 = vunpack.c.l.b16 %v849
      %v854 = vpack.c.b16 %v853, %v853
      %vm855 = vsmask.f32 4352
      %v857 = vshrl.u32 %v751, 16
      %v859 = vrot.slane %v857, 3
      %v860 = vshll.u32 %v751, 16
      %v862 = vrot.slane %v860, 4
      %v863 = vor.u32 %v859, %v862
      %v865 = vshrl.u32 %v752, 16
      %v867 = vrot.slane %v865, 3
      %v868 = vshll.u32 %v752, 16
      %v870 = vrot.slane %v868, 4
      %v871 = vor.u32 %v867, %v870
      %v872 = vsel %vm855, %v863, %v871
      %v874 = vshrl.u32 %v854, 16
      %v876 = vrot.slane %v874, 3
      %v877 = vshll.u32 %v854, 16
      %v879 = vrot.slane %v877, 4
      %v880 = vor.u32 %v876, %v879
      %v881 = vsel %vm855, %v871, %v880
      %v883 = vsel %vm359, %v872, 0
      %v886 = vsel %vm359, %v881, 0
      %v889 = vsel %vm366, %v851, 0
      %891 = vmatpush.bf16.msra.mxu0 0
      %892 = vmatpush.bf16.msra.mxu0 0
      %893 = vmatpush.bf16.msra.mxu0 0
      %894 = vmatpush.bf16.msra.mxu0 0
      %895 = vmatpush.bf16.msra.mxu0 0
      %896 = vmatpush.bf16.msra.mxu0 0
      %897 = vmatpush.bf16.msra.mxu0 0
      %898 = vmatpush.bf16.msra.mxu0 %v889
      %899 = vmatmul.bf16.gmra.mxu0 %v883
      %v900 = vpop.f32.mrf.mxu0
      %v901 = vadd.f32 0.0, %v900
      %v902 = vpop.f32.mrf.mxu0
      %v903 = vadd.f32 0.0, %v902
      %904 = vmatmul.bf16.gmra.mxu0 %v886
      %v905 = vpop.f32.mrf.mxu0
      %v906 = vadd.f32 0.0, %v905
      %v907 = vpop.f32.mrf.mxu0
      %v908 = vadd.f32 0.0, %v907
      %909 = vdwg.mxu0
      %v910 = vadd.f32 %v845, %v901
      %v911 = vadd.f32 %v846, %v903
      %v912 = vadd.f32 %v847, %v906
      %v913 = vadd.f32 %v848, %v908
      %v914 = vld [vmem:[%s342 + $0x10] sm:$0x7]
      %s915 = scalar_lea.vmem %s312, 44
      %v916 = vld [vmem:[%s915] sm:$0xf]
      %v918 = vunpack.c.l.b16 %v914
      %v919 = vpack.c.b16 %v918, %v918
      %v921 = vshrl.u32 %v809, 16
      %v923 = vrot.slane %v921, 3
      %v924 = vshll.u32 %v809, 16
      %v926 = vrot.slane %v924, 4
      %v927 = vor.u32 %v923, %v926
      %v929 = vshrl.u32 %v810, 16
      %v931 = vrot.slane %v929, 3
      %v932 = vshll.u32 %v810, 16
      %v934 = vrot.slane %v932, 4
      %v935 = vor.u32 %v931, %v934
      %v936 = vsel %vm855, %v927, %v935
      %v938 = vshrl.u32 %v919, 16
      %v940 = vrot.slane %v938, 3
      %v941 = vshll.u32 %v919, 16
      %v943 = vrot.slane %v941, 4
      %v944 = vor.u32 %v940, %v943
      %v945 = vsel %vm855, %v935, %v944
      %v947 = vsel %vm359, %v936, 0
      %v950 = vsel %vm359, %v945, 0
      %v953 = vsel %vm366, %v916, 0
      %955 = vmatpush.bf16.msra.mxu0 0
      %956 = vmatpush.bf16.msra.mxu0 0
      %957 = vmatpush.bf16.msra.mxu0 0
      %958 = vmatpush.bf16.msra.mxu0 0
      %959 = vmatpush.bf16.msra.mxu0 0
      %960 = vmatpush.bf16.msra.mxu0 0
      %961 = vmatpush.bf16.msra.mxu0 0
      %962 = vmatpush.bf16.msra.mxu0 %v953
      %963 = vmatmul.bf16.gmra.mxu0 %v947
      %v964 = vpop.f32.mrf.mxu0
      %v965 = vadd.f32 0.0, %v964
      %v966 = vpop.f32.mrf.mxu0
      %v967 = vadd.f32 0.0, %v966
      %968 = vmatmul.bf16.gmra.mxu0 %v950
      %v969 = vpop.f32.mrf.mxu0
      %v970 = vadd.f32 0.0, %v969
      %v971 = vpop.f32.mrf.mxu0
      %v972 = vadd.f32 0.0, %v971
      %973 = vdwg.mxu0
      %v974 = vadd.f32 %v910, %v965
      %v975 = vadd.f32 %v911, %v967
      %v976 = vadd.f32 %v912, %v970
      %v977 = vadd.f32 %v913, %v972
      %v978 = vld [vmem:[%s532] sm:$0x8]
      %v979 = vld [vmem:[%s532 + $0x4] sm:$0xf]
      %v980 = vld [vmem:[%s532 + $0x8] sm:$0xf]
      %v981 = vld [vmem:[%s532 + $0xc] sm:$0xf]
      %v982 = vld [vmem:[%s532 + $0x10] sm:$0x3]
      %s983 = scalar_lea.vmem %s312, 48
      %v984 = vld [vmem:[%s983] sm:$0xf]
      %v990 = vunpack.c.l.b16 %v978
      %v991 = vunpack.c.l.b16 %v979
      %v992 = vunpack.c.l.b16 %v980
      %v993 = vunpack.c.l.b16 %v981
      %v994 = vunpack.c.l.b16 %v982
      %v995 = vpack.c.b16 %v991, %v990
      %v996 = vpack.c.b16 %v993, %v992
      %v997 = vpack.c.b16 %v994, %v994
      %v998 = vrot.slane %v995, 3
      %v999 = vrot.slane %v996, 3
      %v1000 = vsel %vm754, %v998, %v999
      %v1001 = vrot.slane %v997, 3
      %v1002 = vsel %vm754, %v999, %v1001
      %v1004 = vsel %vm359, %v1000, 0
      %v1007 = vsel %vm359, %v1002, 0
      %v1010 = vsel %vm366, %v984, 0
      %1012 = vmatpush.bf16.msra.mxu0 0
      %1013 = vmatpush.bf16.msra.mxu0 0
      %1014 = vmatpush.bf16.msra.mxu0 0
      %1015 = vmatpush.bf16.msra.mxu0 0
      %1016 = vmatpush.bf16.msra.mxu0 0
      %1017 = vmatpush.bf16.msra.mxu0 0
      %1018 = vmatpush.bf16.msra.mxu0 0
      %1019 = vmatpush.bf16.msra.mxu0 %v1010
      %1020 = vmatmul.bf16.gmra.mxu0 %v1004
      %v1021 = vpop.f32.mrf.mxu0
      %v1022 = vadd.f32 0.0, %v1021
      %v1023 = vpop.f32.mrf.mxu0
      %v1024 = vadd.f32 0.0, %v1023
      %1025 = vmatmul.bf16.gmra.mxu0 %v1007
      %v1026 = vpop.f32.mrf.mxu0
      %v1027 = vadd.f32 0.0, %v1026
      %v1028 = vpop.f32.mrf.mxu0
      %v1029 = vadd.f32 0.0, %v1028
      %1030 = vdwg.mxu0
      %v1031 = vadd.f32 %v974, %v1022
      %v1032 = vadd.f32 %v975, %v1024
      %v1033 = vadd.f32 %v976, %v1027
      %v1034 = vadd.f32 %v977, %v1029
      %v1035 = vld [vmem:[%s581] sm:$0x8]
      %v1036 = vld [vmem:[%s581 + $0x4] sm:$0xf]
      %v1037 = vld [vmem:[%s581 + $0x8] sm:$0xf]
      %v1038 = vld [vmem:[%s581 + $0xc] sm:$0xf]
      %v1039 = vld [vmem:[%s581 + $0x10] sm:$0x3]
      %s1040 = scalar_lea.vmem %s312, 52
      %v1041 = vld [vmem:[%s1040] sm:$0xf]
      %v1047 = vunpack.c.l.b16 %v1035
      %v1048 = vunpack.c.l.b16 %v1036
      %v1049 = vunpack.c.l.b16 %v1037
      %v1050 = vunpack.c.l.b16 %v1038
      %v1051 = vunpack.c.l.b16 %v1039
      %v1052 = vpack.c.b16 %v1048, %v1047
      %v1053 = vpack.c.b16 %v1050, %v1049
      %v1054 = vpack.c.b16 %v1051, %v1051
      %v1055 = vrot.slane %v1052, 3
      %v1056 = vrot.slane %v1053, 3
      %v1057 = vsel %vm754, %v1055, %v1056
      %v1058 = vrot.slane %v1054, 3
      %v1059 = vsel %vm754, %v1056, %v1058
      %v1061 = vsel %vm359, %v1057, 0
      %v1064 = vsel %vm359, %v1059, 0
      %v1067 = vsel %vm366, %v1041, 0
      %1069 = vmatpush.bf16.msra.mxu0 0
      %1070 = vmatpush.bf16.msra.mxu0 0
      %1071 = vmatpush.bf16.msra.mxu0 0
      %1072 = vmatpush.bf16.msra.mxu0 0
      %1073 = vmatpush.bf16.msra.mxu0 0
      %1074 = vmatpush.bf16.msra.mxu0 0
      %1075 = vmatpush.bf16.msra.mxu0 0
      %1076 = vmatpush.bf16.msra.mxu0 %v1067
      %1077 = vmatmul.bf16.gmra.mxu0 %v1061
      %v1078 = vpop.f32.mrf.mxu0
      %v1079 = vadd.f32 0.0, %v1078
      %v1080 = vpop.f32.mrf.mxu0
      %v1081 = vadd.f32 0.0, %v1080
      %1082 = vmatmul.bf16.gmra.mxu0 %v1064
      %v1083 = vpop.f32.mrf.mxu0
      %v1084 = vadd.f32 0.0, %v1083
      %v1085 = vpop.f32.mrf.mxu0
      %v1086 = vadd.f32 0.0, %v1085
      %1087 = vdwg.mxu0
      %v1088 = vadd.f32 %v1031, %v1079
      %v1089 = vadd.f32 %v1032, %v1081
      %v1090 = vadd.f32 %v1033, %v1084
      %v1091 = vadd.f32 %v1034, %v1086
      %v1092 = vld [vmem:[%s532 + $0x10] sm:$0x7]
      %s1093 = scalar_lea.vmem %s312, 56
      %v1094 = vld [vmem:[%s1093] sm:$0xf]
      %v1096 = vunpack.c.l.b16 %v1092
      %v1097 = vpack.c.b16 %v1096, %v1096
      %v1099 = vshrl.u32 %v995, 16
      %v1101 = vrot.slane %v1099, 3
      %v1102 = vshll.u32 %v995, 16
      %v1104 = vrot.slane %v1102, 4
      %v1105 = vor.u32 %v1101, %v1104
      %v1107 = vshrl.u32 %v996, 16
      %v1109 = vrot.slane %v1107, 3
      %v1110 = vshll.u32 %v996, 16
      %v1112 = vrot.slane %v1110, 4
      %v1113 = vor.u32 %v1109, %v1112
      %v1114 = vsel %vm855, %v1105, %v1113
      %v1116 = vshrl.u32 %v1097, 16
      %v1118 = vrot.slane %v1116, 3
      %v1119 = vshll.u32 %v1097, 16
      %v1121 = vrot.slane %v1119, 4
      %v1122 = vor.u32 %v1118, %v1121
      %v1123 = vsel %vm855, %v1113, %v1122
      %v1125 = vsel %vm359, %v1114, 0
      %v1128 = vsel %vm359, %v1123, 0
      %v1131 = vsel %vm366, %v1094, 0
      %1133 = vmatpush.bf16.msra.mxu0 0
      %1134 = vmatpush.bf16.msra.mxu0 0
      %1135 = vmatpush.bf16.msra.mxu0 0
      %1136 = vmatpush.bf16.msra.mxu0 0
      %1137 = vmatpush.bf16.msra.mxu0 0
      %1138 = vmatpush.bf16.msra.mxu0 0
      %1139 = vmatpush.bf16.msra.mxu0 0
      %1140 = vmatpush.bf16.msra.mxu0 %v1131
      %1141 = vmatmul.bf16.gmra.mxu0 %v1125
      %v1142 = vpop.f32.mrf.mxu0
      %v1143 = vadd.f32 0.0, %v1142
      %v1144 = vpop.f32.mrf.mxu0
      %v1145 = vadd.f32 0.0, %v1144
      %1146 = vmatmul.bf16.gmra.mxu0 %v1128
      %v1147 = vpop.f32.mrf.mxu0
      %v1148 = vadd.f32 0.0, %v1147
      %v1149 = vpop.f32.mrf.mxu0
      %v1150 = vadd.f32 0.0, %v1149
      %1151 = vdwg.mxu0
      %v1152 = vadd.f32 %v1088, %v1143
      %v1153 = vadd.f32 %v1089, %v1145
      %v1154 = vadd.f32 %v1090, %v1148
      %v1155 = vadd.f32 %v1091, %v1150
      %v1156 = vld [vmem:[%s581 + $0x10] sm:$0x7]
      %s1157 = scalar_lea.vmem %s312, 60
      %v1158 = vld [vmem:[%s1157] sm:$0xf]
      %v1160 = vunpack.c.l.b16 %v1156
      %v1161 = vpack.c.b16 %v1160, %v1160
      %v1163 = vshrl.u32 %v1052, 16
      %v1165 = vrot.slane %v1163, 3
      %v1166 = vshll.u32 %v1052, 16
      %v1168 = vrot.slane %v1166, 4
      %v1169 = vor.u32 %v1165, %v1168
      %v1171 = vshrl.u32 %v1053, 16
      %v1173 = vrot.slane %v1171, 3
      %v1174 = vshll.u32 %v1053, 16
      %v1176 = vrot.slane %v1174, 4
      %v1177 = vor.u32 %v1173, %v1176
      %v1178 = vsel %vm855, %v1169, %v1177
      %v1180 = vshrl.u32 %v1161, 16
      %v1182 = vrot.slane %v1180, 3
      %v1183 = vshll.u32 %v1161, 16
      %v1185 = vrot.slane %v1183, 4
      %v1186 = vor.u32 %v1182, %v1185
      %v1187 = vsel %vm855, %v1177, %v1186
      %v1189 = vsel %vm359, %v1178, 0
      %v1192 = vsel %vm359, %v1187, 0
      %v1195 = vsel %vm366, %v1158, 0
      %1197 = vmatpush.bf16.msra.mxu0 0
      %1198 = vmatpush.bf16.msra.mxu0 0
      %1199 = vmatpush.bf16.msra.mxu0 0
      %1200 = vmatpush.bf16.msra.mxu0 0
      %1201 = vmatpush.bf16.msra.mxu0 0
      %1202 = vmatpush.bf16.msra.mxu0 0
      %1203 = vmatpush.bf16.msra.mxu0 0
      %1204 = vmatpush.bf16.msra.mxu0 %v1195
      %1205 = vmatmul.bf16.gmra.mxu0 %v1189
      %v1206 = vpop.f32.mrf.mxu0
      %v1207 = vadd.f32 0.0, %v1206
      %v1208 = vpop.f32.mrf.mxu0
      %v1209 = vadd.f32 0.0, %v1208
      %1210 = vmatmul.bf16.gmra.mxu0 %v1192
      %v1211 = vpop.f32.mrf.mxu0
      %v1212 = vadd.f32 0.0, %v1211
      %v1213 = vpop.f32.mrf.mxu0
      %v1214 = vadd.f32 0.0, %v1213
      %1215 = vdwg.mxu0
      %v1216 = vadd.f32 %v1152, %v1207
      %v1217 = vadd.f32 %v1153, %v1209
      %v1218 = vadd.f32 %v1154, %v1212
      %v1219 = vadd.f32 %v1155, %v1214
      %v1220 = vld [vmem:[%s315] sm:$0x1]
      %v1222 = vperm.slane %v1220, 0
      %v1224 = vadd.f32 %v1216, %v1222
      %v1225 = vadd.f32 %v1217, %v1222
      %v1226 = vadd.f32 %v1218, %v1222
      %v1227 = vadd.f32 %v1219, %v1222
      %v1228 = vpack.c.bf16 %v1224, %v1224
      %v1229 = vpack.c.bf16 %v1225, %v1225
      %v1230 = vpack.c.bf16 %v1226, %v1226
      %v1231 = vpack.c.bf16 %v1227, %v1227
      %vm1232 = vcmask 125952
      %1233 = vst.msk [vmem:[%s323] sm:$0xf] %vm1232, %v1228
      %1234 = vst.msk [vmem:[%s323 + $0x4] sm:$0xf] %vm1232, %v1229
      %1235 = vst.msk [vmem:[%s323 + $0x8] sm:$0xf] %vm1232, %v1230
      %vm1236 = vcmask 124928
      %1237 = vst.msk [vmem:[%s323 + $0xc] sm:$0x7] %vm1236, %v1231
      %v1238 = vld [vmem:[%s3] sm:$0xff]
      %v1239 = vld [vmem:[%s3 + $0x8] sm:$0xff]
      %v1240 = vld [vmem:[%s3 + $0x10] sm:$0xff]
      %v1241 = vld [vmem:[%s3 + $0x18] sm:$0x3f]
      %1243 = vset.pattern.permute.xlu0 0
      %1244 = vperm.xlu0 %1243, %v1238
      %v1245 = vpop.permute.xlu0 %1244
      %1248 = vset.pattern.permute.xlu0 0
      %1249 = vperm.xlu0 %1248, %v1239
      %v1250 = vpop.permute.xlu0 %1249
      %1253 = vset.pattern.permute.xlu0 0
      %1254 = vperm.xlu0 %1253, %v1240
      %v1255 = vpop.permute.xlu0 %1254
      %1258 = vset.pattern.permute.xlu0 0
      %1259 = vperm.xlu0 %1258, %v1241
      %v1260 = vpop.permute.xlu0 %1259
      %v1262 = vmul.f32 %v1224, %v1245
      %v1263 = vmul.f32 %v1225, %v1250
      %v1264 = vmul.f32 %v1226, %v1255
      %v1265 = vmul.f32 %v1227, %v1260
      %vm1266 = vcmask 130048
      %v1267 = vsel %vm1266, %v1262, 0.0
      %v1268 = vsel %vm1266, %v1263, 0.0
      %v1269 = vadd.f32 %v1267, %v1268
      %v1270 = vsel %vm1266, %v1264, 0.0
      %v1271 = vadd.f32 %v1269, %v1270
      %vm1272 = vcmask 128000
      %v1273 = vsel %vm1272, %v1265, 0.0
      %v1274 = vadd.f32 %v1271, %v1273
      %v1275 = vrot.slane %v1274, 4
      %v1276 = vadd.f32 %v1274, %v1275
      %v1277 = vrot.slane %v1276, 2
      %v1278 = vadd.f32 %v1276, %v1277
      %v1279 = vrot.slane %v1278, 1
      %v1280 = vadd.f32 %v1278, %v1279
      %v1281 = vmul.f32 %v1280, 0.04
      %v1282 = vsub.f32 %v1224, %v1281
      %v1283 = vsub.f32 %v1225, %v1281
      %v1284 = vsub.f32 %v1226, %v1281
      %v1285 = vsub.f32 %v1227, %v1281
      %v1286 = vmul.f32 %v1282, %v1245
      %v1287 = vmul.f32 %v1283, %v1250
      %v1288 = vmul.f32 %v1284, %v1255
      %v1289 = vmul.f32 %v1285, %v1260
      %vm1290 = vcmask 122880
      %1291 = vst.msk [vmem:[%s329] sm:$0x1] %vm1290, %v1280
      %v1292 = vmul.f32 %v1286, %v1286
      %v1293 = vmul.f32 %v1287, %v1287
      %v1294 = vmul.f32 %v1288, %v1288
      %v1295 = vmul.f32 %v1289, %v1289
      %v1296 = vsel %vm1266, %v1292, 0.0
      %v1297 = vsel %vm1266, %v1293, 0.0
      %v1298 = vadd.f32 %v1296, %v1297
      %v1299 = vsel %vm1266, %v1294, 0.0
      %v1300 = vadd.f32 %v1298, %v1299
      %v1301 = vsel %vm1272, %v1295, 0.0
      %v1302 = vadd.f32 %v1300, %v1301
      %v1303 = vrot.slane %v1302, 4
      %v1304 = vadd.f32 %v1302, %v1303
      %v1305 = vrot.slane %v1304, 2
      %v1306 = vadd.f32 %v1304, %v1305
      %v1307 = vrot.slane %v1306, 1
      %v1308 = vadd.f32 %v1306, %v1307
      %1309 = vst.msk [vmem:[%s335] sm:$0x1] %vm1290, %v1308
      %p1310 = scmp.lt.s32.totalorder %s22, 1
      %s1311 = scalar_select %p1310, %s22, 1
      %p1312 = scmp.lt.s32.totalorder %s23, 0
      %s1313 = scalar_select %p1312, %s23, 0
      %s1314 = smul.addr %s1311, 4
      %s1315 = sadd.s32 %s1313, %s1314
      %s1316 = smul.addr %s1315, 4
      %s1317 = scalar_lea.vmem %s4, %s1316
      %p1318 = scmp.lt.s32.totalorder %s22, 1
      %s1319 = scalar_select %p1318, %s22, 1
      %p1320 = scmp.lt.s32.totalorder %s23, 0
      %s1321 = scalar_select %p1320, %s23, 0
      %s1322 = sadd.s32 %s1321, %s1319
      %s1323 = scalar_lea.vmem %s5, %s1322
      %p1324 = scmp.lt.s32.totalorder %s22, 1
      %s1325 = scalar_select %p1324, %s22, 1
      %p1326 = scmp.lt.s32.totalorder %s23, 0
      %s1327 = scalar_select %p1326, %s23, 0
      %s1328 = sadd.s32 %s1327, %s1325
      %s1329 = scalar_lea.vmem %s6, %s1328
      // Predicated region
      $region37: #{discriminator_forward.6} parent=35 // pred_check
        %p1330 = pneg %p149
      $region38: #{discriminator_forward.6} parent=35 // pred_check_branch
        %1332 = sbr.rel (%p1330) target = $region40
      $region39: #{discriminator_forward.6} parent=35 // pred_region
        _
      $region40: #{discriminator_forward.6} parent=35 // pred_fallthru
        _
      // Predicated region
      $region41: #{discriminator_forward.6} parent=35 // pred_check
        %p1333 = pneg %p177
      $region42: #{discriminator_forward.6} parent=35 // pred_check_branch
        %1335 = sbr.rel (%p1333) target = $region44
      $region43: #{discriminator_forward.6} parent=35 // pred_region
        _
      $region44: #{discriminator_forward.6} parent=35 // pred_fallthru
        _
      // Predicated region
      $region45: #{discriminator_forward.6} parent=35 // pred_check
        %p1336 = pneg %p205
      $region46: #{discriminator_forward.6} parent=35 // pred_check_branch
        %1338 = sbr.rel (%p1336) target = $region48
      $region47: #{discriminator_forward.6} parent=35 // pred_region
        _
      $region48: #{discriminator_forward.6} parent=35 // pred_fallthru
        _
    $region36: #{discriminator_forward.6} parent=5 // pred_fallthru
      _
    %p1339 = scmp.le.s32.totalorder 2, %s13
    // Predicated region
    $region49: #{discriminator_forward.6} parent=5 // pred_check
      %p1340 = pneg %p1339
    $region50: #{discriminator_forward.6} parent=5 // pred_check_branch
      %1342 = sbr.rel (%p1340) target = $region52
    $region51: #{discriminator_forward.6} parent=5 // pred_region
      %s1343 = ssub.s32 %s13, 2
      // Predicated region
      $region53: #{discriminator_forward.6} parent=51 // pred_check
        %p1344 = pneg %p155
      $region54: #{discriminator_forward.6} parent=51 // pred_check_branch
        %1346 = sbr.rel (%p1344) target = $region56
      $region55: #{discriminator_forward.6} parent=51 // pred_region
        %p1347 = scmp.lt.s32.totalorder %s24, 1
        %s1348 = scalar_select %p1347, %s24, 1
        %p1349 = scmp.lt.s32.totalorder %s25, 0
        %s1350 = scalar_select %p1349, %s25, 0
        %s1351 = smul.addr %s1348, 4
        %s1352 = sadd.s32 %s1350, %s1351
        %s1353 = smul.addr %s1352, 4
        %s1354 = scalar_lea.vmem %s4, %s1353
      $region56: #{discriminator_forward.6} parent=51 // pred_fallthru
        _
      // Predicated region
      $region57: #{discriminator_forward.6} parent=51 // pred_check
        %p1355 = pneg %p183
      $region58: #{discriminator_forward.6} parent=51 // pred_check_branch
        %1357 = sbr.rel (%p1355) target = $region60
      $region59: #{discriminator_forward.6} parent=51 // pred_region
        %p1358 = scmp.lt.s32.totalorder %s24, 1
        %s1359 = scalar_select %p1358, %s24, 1
        %p1360 = scmp.lt.s32.totalorder %s25, 0
        %s1361 = scalar_select %p1360, %s25, 0
        %s1362 = sadd.s32 %s1361, %s1359
        %s1363 = scalar_lea.vmem %s5, %s1362
      $region60: #{discriminator_forward.6} parent=51 // pred_fallthru
        _
      // Predicated region
      $region61: #{discriminator_forward.6} parent=51 // pred_check
        %p1364 = pneg %p211
      $region62: #{discriminator_forward.6} parent=51 // pred_check_branch
        %1366 = sbr.rel (%p1364) target = $region64
      $region63: #{discriminator_forward.6} parent=51 // pred_region
        %p1367 = scmp.lt.s32.totalorder %s24, 1
        %s1368 = scalar_select %p1367, %s24, 1
        %p1369 = scmp.lt.s32.totalorder %s25, 0
        %s1370 = scalar_select %p1369, %s25, 0
        %s1371 = sadd.s32 %s1370, %s1368
        %s1372 = scalar_lea.vmem %s6, %s1371
      $region64: #{discriminator_forward.6} parent=51 // pred_fallthru
        _
    $region52: #{discriminator_forward.6} parent=5 // pred_fallthru
      _
  $region6: #{discriminator_forward.6} parent=0 // loop_footer
    %s17 = sadd.s32 1, %s13
  $region7: #{discriminator_forward.6} parent=0 // loop_footer_branch
    %12 = sbr.rel target = $region3
  $region8: #{discriminator_forward.6} parent=0 // loop_exit
    _

// kernel: discriminator_forward.7
$region0: #{discriminator_forward.7}
  #allocation0 [shape = 'u32[]', space=smem, size = 0x4, offset = 0x4, fixed_abs, tag = 'smem constant byte address 0x4 - core index']
  #allocation1 [shape = 'u32[72,128]{1,0:T(1,128)}', space=vmem, size = 0x9000, scoped, tag = 'internal scratch']
  #allocation2 [shape = 'bf16[4,24,16]{2,1,0:T(8,128)(2,1)}', space=vmem, size = 0x6000, scoped, tag = 'scratch operand']
  %s0 = inlined_call_operand.vmem [shape: bf16[2,4,24,16], index: 0, kind: input, shape index: {}]
  %s1 = inlined_call_operand.vmem [shape: bf16[16,16,32], index: 1, kind: input, shape index: {}]
  %s2 = inlined_call_operand.vmem [shape: f32[1,1,32], index: 2, kind: input, shape index: {}]
  %s3 = inlined_call_operand.vmem [shape: f32[1,1,16], index: 3, kind: input, shape index: {}]
  %s4 = inlined_call_operand.vmem [shape: f32[1,1,16], index: 4, kind: input, shape index: {}]
  %s5 = inlined_call_operand.vmem [shape: f32[1,4,24,1], index: 5, kind: input, shape index: {}]
  %s6 = inlined_call_operand.vmem [shape: f32[1,12,1], index: 6, kind: input, shape index: {}]
  %s7 = inlined_call_operand.vmem [shape: bf16[2,12,32], index: 7, kind: output, shape index: {0}]
  %s8 = inlined_call_operand.vmem [shape: f32[2,1,32], index: 8, kind: output, shape index: {1}]
  %s9 = inlined_call_operand.vmem [shape: f32[2,1,32], index: 9, kind: output, shape index: {2}]
  %10 = xla_tuple %s7, %s8, %s9
  %s11 = sld [smem:[#allocation0]]
  $region77: #{discriminator_forward.7} parent=0
    _
  %s13 = ssub.s32 1, %s11
  %s14 = scalar_select 0, %s13, %s11
  loop: start=0, step=1, limit=4
  $region2: #{discriminator_forward.7} parent=0 // loop_pre_header
    _
  $region3: #{discriminator_forward.7} parent=0 // loop_header
    %s16 = sphi 0, %s20
    %p17 = scmp.ge.s32.totalorder %s16, 4
    %s23 = sphi 0, %s35
    %s24 = sphi 0, %s31
    %s25 = sphi 0, %s23
    %s26 = sphi 0, %s24
    %s27 = sphi 0, %s25
    %s28 = sphi 0, %s26
    %s38 = sphi 0, %s40
    %s41 = sphi 0, %s38
    %s42 = sphi 0, %s41
    %s58 = sphi 0, %s42
    %s64 = sphi 0, %s66
    %s67 = sphi 0, %s64
    %s68 = sphi 0, %s67
    %s84 = sphi 0, %s68
    %s90 = sphi 0, %s92
    %s93 = sphi 0, %s90
    %s94 = sphi 0, %s93
    %s110 = sphi 0, %s94
    %s114 = sphi 0, %s114
    %s116 = sphi 0, %s114
    %s117 = sphi 0, %s116
    %s131 = sphi 0, %s117
    %s135 = sphi 0, %s135
    %s137 = sphi 0, %s135
    %s138 = sphi 0, %s137
    %s152 = sphi 0, %s138
    %s156 = sphi 0, %s156
    %s158 = sphi 0, %s156
    %s159 = sphi 0, %s158
    %s173 = sphi 0, %s159
    %s177 = sphi 0, %s177
    %s179 = sphi 0, %s177
    %s180 = sphi 0, %s179
    %s194 = sphi 0, %s180
    %s202 = sphi 0, %s204
    %s205 = sphi 0, %s202
    %s206 = sphi 0, %s205
    %s222 = sphi 0, %s206
    %s230 = sphi 0, %s232
    %s233 = sphi 0, %s230
    %s234 = sphi 0, %s233
    %s250 = sphi 0, %s234
    %s258 = sphi 0, %s260
    %s261 = sphi 0, %s258
    %s262 = sphi 0, %s261
    %s278 = sphi 0, %s262
  $region4: #{discriminator_forward.7} parent=0 // loop_header_branch
    %19 = sbr.rel (%p17) target = $region8
  $region5: #{discriminator_forward.7} parent=0 // loop_body
    %s21 = ssub.s32 %s16, 1
    %s22 = ssub.s32 %s16, 2
    %s29 = sadd.s32 1, %s24
    %p30 = scmp.ge.s32.totalorder %s29, 1
    %s31 = scalar_select %p30, 0, %s29
    %s32 = sadd.s32 1, %s23
    %s33 = scalar_select %p30, %s32, %s23
    %p34 = scmp.ge.s32.totalorder %s33, 2
    %s35 = scalar_select %p34, 0, %s33
    %s36 = ssub.s32 %s23, %s35
    %p37 = scmp.eq.s32.totalorder %s36, 0
    %s39 = sadd.s32 %s38, 1
    %s40 = scalar_select %p37, %s38, %s39
    %p43 = pneg %p37
    %p44 = scmp.eq.s32.totalorder %s16, 1
    %p45 = por %p43, %p44
    %p46 = scmp.ne.s32.totalorder %s38, %s41
    %p47 = scmp.eq.s32.totalorder %s16, 0
    %p48 = por %p46, %p47
    %p49 = scmp.ne.s32.totalorder %s38, %s41
    %p50 = scmp.eq.s32.totalorder %s21, 1
    %p51 = por %p49, %p50
    %p52 = scmp.ne.s32.totalorder %s41, %s42
    %p53 = scmp.eq.s32.totalorder %s21, 0
    %p54 = por %p52, %p53
    %p55 = scmp.ne.s32.totalorder %s41, %s42
    %p56 = scmp.eq.s32.totalorder %s22, 1
    %p57 = por %p55, %p56
    %p59 = scmp.ne.s32.totalorder %s42, %s58
    %p60 = scmp.eq.s32.totalorder %s22, 0
    %p61 = por %p59, %p60
    %s62 = ssub.s32 %s24, %s31
    %p63 = scmp.eq.s32.totalorder %s62, 0
    %s65 = sadd.s32 %s64, 1
    %s66 = scalar_select %p63, %s64, %s65
    %p69 = pneg %p63
    %p70 = scmp.eq.s32.totalorder %s16, 1
    %p71 = por %p69, %p70
    %p72 = scmp.ne.s32.totalorder %s64, %s67
    %p73 = scmp.eq.s32.totalorder %s16, 0
    %p74 = por %p72, %p73
    %p75 = scmp.ne.s32.totalorder %s64, %s67
    %p76 = scmp.eq.s32.totalorder %s21, 1
    %p77 = por %p75, %p76
    %p78 = scmp.ne.s32.totalorder %s67, %s68
    %p79 = scmp.eq.s32.totalorder %s21, 0
    %p80 = por %p78, %p79
    %p81 = scmp.ne.s32.totalorder %s67, %s68
    %p82 = scmp.eq.s32.totalorder %s22, 1
    %p83 = por %p81, %p82
    %p85 = scmp.ne.s32.totalorder %s68, %s84
    %p86 = scmp.eq.s32.totalorder %s22, 0
    %p87 = por %p85, %p86
    %s88 = ssub.s32 %s24, %s31
    %p89 = scmp.eq.s32.totalorder %s88, 0
    %s91 = sadd.s32 %s90, 1
    %s92 = scalar_select %p89, %s90, %s91
    %p95 = pneg %p89
    %p96 = scmp.eq.s32.totalorder %s16, 1
    %p97 = por %p95, %p96
    %p98 = scmp.ne.s32.totalorder %s90, %s93
    %p99 = scmp.eq.s32.totalorder %s16, 0
    %p100 = por %p98, %p99
    %p101 = scmp.ne.s32.totalorder %s90, %s93
    %p102 = scmp.eq.s32.totalorder %s21, 1
    %p103 = por %p101, %p102
    %p104 = scmp.ne.s32.totalorder %s93, %s94
    %p105 = scmp.eq.s32.totalorder %s21, 0
    %p106 = por %p104, %p105
    %p107 = scmp.ne.s32.totalorder %s93, %s94
    %p108 = scmp.eq.s32.totalorder %s22, 1
    %p109 = por %p107, %p108
    %p111 = scmp.ne.s32.totalorder %s94, %s110
    %p112 = scmp.eq.s32.totalorder %s22, 0
    %p113 = por %p111, %p112
    %s115 = sadd.s32 %s114, 1
    %p118 = scmp.eq.s32.totalorder %s16, 1
    %p119 = scmp.ne.s32.totalorder %s114, %s116
    %p120 = scmp.eq.s32.totalorder %s16, 0
    %p121 = por %p119, %p120
    %p122 = scmp.ne.s32.totalorder %s114, %s116
    %p123 = scmp.eq.s32.totalorder %s21, 1
    %p124 = por %p122, %p123
    %p125 = scmp.ne.s32.totalorder %s116, %s117
    %p126 = scmp.eq.s32.totalorder %s21, 0
    %p127 = por %p125, %p126
    %p128 = scmp.ne.s32.totalorder %s116, %s117
    %p129 = scmp.eq.s32.totalorder %s22, 1
    %p130 = por %p128, %p129
    %p132 = scmp.ne.s32.totalorder %s117, %s131
    %p133 = scmp.eq.s32.totalorder %s22, 0
    %p134 = por %p132, %p133
    %s136 = sadd.s32 %s135, 1
    %p139 = scmp.eq.s32.totalorder %s16, 1
    %p140 = scmp.ne.s32.totalorder %s135, %s137
    %p141 = scmp.eq.s32.totalorder %s16, 0
    %p142 = por %p140, %p141
    %p143 = scmp.ne.s32.totalorder %s135, %s137
    %p144 = scmp.eq.s32.totalorder %s21, 1
    %p145 = por %p143, %p144
    %p146 = scmp.ne.s32.totalorder %s137, %s138
    %p147 = scmp.eq.s32.totalorder %s21, 0
    %p148 = por %p146, %p147
    %p149 = scmp.ne.s32.totalorder %s137, %s138
    %p150 = scmp.eq.s32.totalorder %s22, 1
    %p151 = por %p149, %p150
    %p153 = scmp.ne.s32.totalorder %s138, %s152
    %p154 = scmp.eq.s32.totalorder %s22, 0
    %p155 = por %p153, %p154
    %s157 = sadd.s32 %s156, 1
    %p160 = scmp.eq.s32.totalorder %s16, 1
    %p161 = scmp.ne.s32.totalorder %s156, %s158
    %p162 = scmp.eq.s32.totalorder %s16, 0
    %p163 = por %p161, %p162
    %p164 = scmp.ne.s32.totalorder %s156, %s158
    %p165 = scmp.eq.s32.totalorder %s21, 1
    %p166 = por %p164, %p165
    %p167 = scmp.ne.s32.totalorder %s158, %s159
    %p168 = scmp.eq.s32.totalorder %s21, 0
    %p169 = por %p167, %p168
    %p170 = scmp.ne.s32.totalorder %s158, %s159
    %p171 = scmp.eq.s32.totalorder %s22, 1
    %p172 = por %p170, %p171
    %p174 = scmp.ne.s32.totalorder %s159, %s173
    %p175 = scmp.eq.s32.totalorder %s22, 0
    %p176 = por %p174, %p175
    %s178 = sadd.s32 %s177, 1
    %p181 = scmp.eq.s32.totalorder %s16, 1
    %p182 = scmp.ne.s32.totalorder %s177, %s179
    %p183 = scmp.eq.s32.totalorder %s16, 0
    %p184 = por %p182, %p183
    %p185 = scmp.ne.s32.totalorder %s177, %s179
    %p186 = scmp.eq.s32.totalorder %s21, 1
    %p187 = por %p185, %p186
    %p188 = scmp.ne.s32.totalorder %s179, %s180
    %p189 = scmp.eq.s32.totalorder %s21, 0
    %p190 = por %p188, %p189
    %p191 = scmp.ne.s32.totalorder %s179, %s180
    %p192 = scmp.eq.s32.totalorder %s22, 1
    %p193 = por %p191, %p192
    %p195 = scmp.ne.s32.totalorder %s180, %s194
    %p196 = scmp.eq.s32.totalorder %s22, 0
    %p197 = por %p195, %p196
    %s198 = ssub.s32 %s23, %s35
    %s199 = ssub.s32 %s24, %s31
    %s200 = sor.u32 %s198, %s199
    %p201 = scmp.eq.s32.totalorder %s200, 0
    %s203 = sadd.s32 %s202, 1
    %s204 = scalar_select %p201, %s202, %s203
    %p207 = pneg %p201
    %p208 = scmp.eq.s32.totalorder %s16, 1
    %p209 = por %p207, %p208
    %p210 = scmp.ne.s32.totalorder %s202, %s205
    %p211 = scmp.eq.s32.totalorder %s16, 0
    %p212 = por %p210, %p211
    %p213 = scmp.ne.s32.totalorder %s202, %s205
    %p214 = scmp.eq.s32.totalorder %s21, 1
    %p215 = por %p213, %p214
    %p216 = scmp.ne.s32.totalorder %s205, %s206
    %p217 = scmp.eq.s32.totalorder %s21, 0
    %p218 = por %p216, %p217
    %p219 = scmp.ne.s32.totalorder %s205, %s206
    %p220 = scmp.eq.s32.totalorder %s22, 1
    %p221 = por %p219, %p220
    %p223 = scmp.ne.s32.totalorder %s206, %s222
    %p224 = scmp.eq.s32.totalorder %s22, 0
    %p225 = por %p223, %p224
    %s226 = ssub.s32 %s23, %s35
    %s227 = ssub.s32 %s24, %s31
    %s228 = sor.u32 %s226, %s227
    %p229 = scmp.eq.s32.totalorder %s228, 0
    %s231 = sadd.s32 %s230, 1
    %s232 = scalar_select %p229, %s230, %s231
    %p235 = pneg %p229
    %p236 = scmp.eq.s32.totalorder %s16, 1
    %p237 = por %p235, %p236
    %p238 = scmp.ne.s32.totalorder %s230, %s233
    %p239 = scmp.eq.s32.totalorder %s16, 0
    %p240 = por %p238, %p239
    %p241 = scmp.ne.s32.totalorder %s230, %s233
    %p242 = scmp.eq.s32.totalorder %s21, 1
    %p243 = por %p241, %p242
    %p244 = scmp.ne.s32.totalorder %s233, %s234
    %p245 = scmp.eq.s32.totalorder %s21, 0
    %p246 = por %p244, %p245
    %p247 = scmp.ne.s32.totalorder %s233, %s234
    %p248 = scmp.eq.s32.totalorder %s22, 1
    %p249 = por %p247, %p248
    %p251 = scmp.ne.s32.totalorder %s234, %s250
    %p252 = scmp.eq.s32.totalorder %s22, 0
    %p253 = por %p251, %p252
    %s254 = ssub.s32 %s23, %s35
    %s255 = ssub.s32 %s24, %s31
    %s256 = sor.u32 %s254, %s255
    %p257 = scmp.eq.s32.totalorder %s256, 0
    %s259 = sadd.s32 %s258, 1
    %s260 = scalar_select %p257, %s258, %s259
    %p263 = pneg %p257
    %p264 = scmp.eq.s32.totalorder %s16, 1
    %p265 = por %p263, %p264
    %p266 = scmp.ne.s32.totalorder %s258, %s261
    %p267 = scmp.eq.s32.totalorder %s16, 0
    %p268 = por %p266, %p267
    %p269 = scmp.ne.s32.totalorder %s258, %s261
    %p270 = scmp.eq.s32.totalorder %s21, 1
    %p271 = por %p269, %p270
    %p272 = scmp.ne.s32.totalorder %s261, %s262
    %p273 = scmp.eq.s32.totalorder %s21, 0
    %p274 = por %p272, %p273
    %p275 = scmp.ne.s32.totalorder %s261, %s262
    %p276 = scmp.eq.s32.totalorder %s22, 1
    %p277 = por %p275, %p276
    %p279 = scmp.ne.s32.totalorder %s262, %s278
    %p280 = scmp.eq.s32.totalorder %s22, 0
    %p281 = por %p279, %p280
    %p282 = scmp.le.s32.totalorder 1, %s16
    %p283 = scmp.lt.s32.totalorder %s16, 3
    %p284 = pnand %p282, %p283
    %p285 = pneg %p284
    // Predicated region
    $region9: #{discriminator_forward.7} parent=5 // pred_check
      _
    $region10: #{discriminator_forward.7} parent=5 // pred_check_branch
      %287 = sbr.rel (%p284) target = $region12
    $region11: #{discriminator_forward.7} parent=5 // pred_region
      %s288 = ssub.s32 %s16, 1
      // Predicated region
      $region13: #{discriminator_forward.7} parent=11 // pred_check
        %p289 = pneg %p80
      $region14: #{discriminator_forward.7} parent=11 // pred_check_branch
        %291 = sbr.rel (%p289) target = $region16
      $region15: #{discriminator_forward.7} parent=11 // pred_region
        %p292 = scmp.lt.s32.totalorder %s26, 0
        %s293 = scalar_select %p292, %s26, 0
        %s294 = smul.addr %s293, 4
        %s295 = scalar_lea.vmem %s1, %s294
      $region16: #{discriminator_forward.7} parent=11 // pred_fallthru
        _
      // Predicated region
      $region17: #{discriminator_forward.7} parent=11 // pred_check
        %p296 = pneg %p106
      $region18: #{discriminator_forward.7} parent=11 // pred_check_branch
        %298 = sbr.rel (%p296) target = $region20
      $region19: #{discriminator_forward.7} parent=11 // pred_region
        %p299 = scmp.lt.s32.totalorder %s26, 0
        %s300 = scalar_select %p299, %s26, 0
        %s301 = scalar_lea.vmem %s2, %s300
      $region20: #{discriminator_forward.7} parent=11 // pred_fallthru
        _
      // Predicated region
      $region21: #{discriminator_forward.7} parent=11 // pred_check
        %p302 = pneg %p127
      $region22: #{discriminator_forward.7} parent=11 // pred_check_branch
        %304 = sbr.rel (%p302) target = $region24
      $region23: #{discriminator_forward.7} parent=11 // pred_region
        _
      $region24: #{discriminator_forward.7} parent=11 // pred_fallthru
        _
      // Predicated region
      $region25: #{discriminator_forward.7} parent=11 // pred_check
        %p305 = pneg %p148
      $region26: #{discriminator_forward.7} parent=11 // pred_check_branch
        %307 = sbr.rel (%p305) target = $region28
      $region27: #{discriminator_forward.7} parent=11 // pred_region
        _
      $region28: #{discriminator_forward.7} parent=11 // pred_fallthru
        _
      // Predicated region
      $region29: #{discriminator_forward.7} parent=11 // pred_check
        %p308 = pneg %p169
      $region30: #{discriminator_forward.7} parent=11 // pred_check_branch
        %310 = sbr.rel (%p308) target = $region32
      $region31: #{discriminator_forward.7} parent=11 // pred_region
        _
      $region32: #{discriminator_forward.7} parent=11 // pred_fallthru
        _
      // Predicated region
      $region33: #{discriminator_forward.7} parent=11 // pred_check
        %p311 = pneg %p190
      $region34: #{discriminator_forward.7} parent=11 // pred_check_branch
        %313 = sbr.rel (%p311) target = $region36
      $region35: #{discriminator_forward.7} parent=11 // pred_region
        _
      $region36: #{discriminator_forward.7} parent=11 // pred_fallthru
        _
    $region12: #{discriminator_forward.7} parent=5 // pred_fallthru
      _
    %p314 = scmp.lt.s32.totalorder %s16, 2
    // Predicated region
    $region37: #{discriminator_forward.7} parent=5 // pred_check
      %p315 = pneg %p314
    $region38: #{discriminator_forward.7} parent=5 // pred_check_branch
      %317 = sbr.rel (%p315) target = $region40
    $region39: #{discriminator_forward.7} parent=5 // pred_region
      // Predicated region
      $region41: #{discriminator_forward.7} parent=39 // pred_check
        %p318 = pneg %p48
      $region42: #{discriminator_forward.7} parent=39 // pred_check_branch
        %320 = sbr.rel (%p318) target = $region44
      $region43: #{discriminator_forward.7} parent=39 // pred_region
        %p321 = scmp.lt.s32.totalorder %s23, 1
        %s322 = scalar_select %p321, %s23, 1
        %s323 = smul.addr %s322, 12
        %s324 = smul.addr %s323, 4
        %s325 = scalar_lea.vmem %s0, %s324
      $region44: #{discriminator_forward.7} parent=39 // pred_fallthru
        _
    $region40: #{discriminator_forward.7} parent=5 // pred_fallthru
      _
    %p326 = scmp.le.s32.totalorder 1, %s16
    %p327 = scmp.lt.s32.totalorder %s16, 3
    %p328 = pnand %p326, %p327
    %p329 = pneg %p328
    // Predicated region
    $region45: #{discriminator_forward.7} parent=5 // pred_check
      _
    $region46: #{discriminator_forward.7} parent=5 // pred_check_branch
      %331 = sbr.rel (%p328) target = $region48
    $region47: #{discriminator_forward.7} parent=5 // pred_region
      %s332 = ssub.s32 %s16, 1
      %p333 = scmp.lt.s32.totalorder %s25, 1
      %s334 = scalar_select %p333, %s25, 1
      %s335 = smul.addr %s334, 12
      %s336 = smul.addr %s335, 4
      %s337 = scalar_lea.vmem %s0, %s336
      %p338 = pneg %p54
      %p339 = pneg %p51
      %p340 = scmp.lt.s32.totalorder %s26, 0
      %s341 = scalar_select %p340, %s26, 0
      %s342 = smul.addr %s341, 4
      %s343 = scalar_lea.vmem %s1, %s342
      %p344 = pneg %p80
      %p345 = pneg %p77
      %p346 = scmp.lt.s32.totalorder %s26, 0
      %s347 = scalar_select %p346, %s26, 0
      %s348 = scalar_lea.vmem %s2, %s347
      %p349 = pneg %p106
      %p350 = pneg %p103
      %p351 = pneg %p127
      %p352 = pneg %p124
      %p353 = pneg %p148
      %p354 = pneg %p145
      %p355 = pneg %p169
      %p356 = pneg %p166
      %p357 = pneg %p190
      %p358 = pneg %p187
      %p359 = pneg %p218
      %p360 = pneg %p215
      %p361 = scmp.lt.s32.totalorder %s25, 1
      %s362 = scalar_select %p361, %s25, 1
      %p363 = scmp.lt.s32.totalorder %s26, 0
      %s364 = scalar_select %p363, %s26, 0
      %s365 = smul.addr %s362, 2
      %s366 = sadd.s32 %s364, %s365
      %s367 = smul.addr %s366, 4
      %s368 = scalar_lea.vmem %s7, %s367
      %p369 = pneg %p246
      %p370 = pneg %p243
      %p371 = scmp.lt.s32.totalorder %s25, 1
      %s372 = scalar_select %p371, %s25, 1
      %p373 = scmp.lt.s32.totalorder %s26, 0
      %s374 = scalar_select %p373, %s26, 0
      %s375 = sadd.s32 %s374, %s372
      %s376 = scalar_lea.vmem %s8, %s375
      %p377 = pneg %p274
      %p378 = pneg %p271
      %p379 = scmp.lt.s32.totalorder %s25, 1
      %s380 = scalar_select %p379, %s25, 1
      %p381 = scmp.lt.s32.totalorder %s26, 0
      %s382 = scalar_select %p381, %s26, 0
      %s383 = sadd.s32 %s382, %s380
      %s384 = scalar_lea.vmem %s9, %s383
      %p385 = scmp.lt.s32.totalorder %s25, 1
      %s386 = scalar_select %p385, %s25, 1
      %s387 = smul.addr %s386, 12
      %s388 = smul.addr %s387, 4
      %s389 = scalar_lea.vmem %s0, %s388
      %p390 = scmp.lt.s32.totalorder %s26, 0
      %s391 = scalar_select %p390, %s26, 0
      %s392 = smul.addr %s391, 4
      %s393 = scalar_lea.vmem %s1, %s392
      %p394 = scmp.lt.s32.totalorder %s26, 0
      %s395 = scalar_select %p394, %s26, 0
      %s396 = scalar_lea.vmem %s2, %s395
      %p397 = scmp.lt.s32.totalorder %s25, 1
      %s398 = scalar_select %p397, %s25, 1
      %p399 = scmp.lt.s32.totalorder %s26, 0
      %s400 = scalar_select %p399, %s26, 0
      %s401 = smul.addr %s398, 2
      %s402 = sadd.s32 %s400, %s401
      %s403 = smul.addr %s402, 4
      %s404 = scalar_lea.vmem %s7, %s403
      %p405 = scmp.lt.s32.totalorder %s25, 1
      %s406 = scalar_select %p405, %s25, 1
      %p407 = scmp.lt.s32.totalorder %s26, 0
      %s408 = scalar_select %p407, %s26, 0
      %s409 = sadd.s32 %s408, %s406
      %s410 = scalar_lea.vmem %s8, %s409
      %p411 = scmp.lt.s32.totalorder %s25, 1
      %s412 = scalar_select %p411, %s25, 1
      %p413 = scmp.lt.s32.totalorder %s26, 0
      %s414 = scalar_select %p413, %s26, 0
      %s415 = sadd.s32 %s414, %s412
      %s416 = scalar_lea.vmem %s9, %s415
      %v418 = vld [vmem:[%s389] sm:$0xf]
      %v419 = vld [vmem:[%s389 + $0x4] sm:$0xf]
      %v420 = vld [vmem:[%s389 + $0x8] sm:$0xf]
      %v421 = vld [vmem:[%s389 + $0xc] sm:$0xf]
      %v422 = vld [vmem:[%s389 + $0x10] sm:$0xf]
      %v423 = vld [vmem:[%s389 + $0x14] sm:$0xf]
      %v424 = vld [vmem:[%s389 + $0x18] sm:$0xf]
      %v425 = vld [vmem:[%s389 + $0x1c] sm:$0xf]
      %v426 = vld [vmem:[%s389 + $0x20] sm:$0xf]
      %v427 = vld [vmem:[%s389 + $0x24] sm:$0xf]
      %v428 = vld [vmem:[%s389 + $0x28] sm:$0xf]
      %v429 = vld [vmem:[%s389 + $0x2c] sm:$0xf]
      %v430 = vunpack.c.l.bf16 %v418
      %v431 = vunpack.c.l.bf16 %v419
      %v432 = vunpack.c.l.bf16 %v420
      %v433 = vunpack.c.l.bf16 %v421
      %v434 = vunpack.c.l.bf16 %v422
      %v435 = vunpack.c.l.bf16 %v423
      %v436 = vunpack.c.l.bf16 %v424
      %v437 = vunpack.c.l.bf16 %v425
      %v438 = vunpack.c.l.bf16 %v426
      %v439 = vunpack.c.l.bf16 %v427
      %v440 = vunpack.c.l.bf16 %v428
      %v441 = vunpack.c.l.bf16 %v429
      %v442 = vld [vmem:[%s3] sm:$0x1]
      %v444 = vperm.slane %v442, 0
      %v446 = vmul.f32 %v430, %v444
      %v447 = vmul.f32 %v431, %v444
      %v448 = vmul.f32 %v432, %v444
      %v449 = vmul.f32 %v433, %v444
      %v450 = vmul.f32 %v434, %v444
      %v451 = vmul.f32 %v435, %v444
      %v452 = vmul.f32 %v436, %v444
      %v453 = vmul.f32 %v437, %v444
      %v454 = vmul.f32 %v438, %v444
      %v455 = vmul.f32 %v439, %v444
      %v456 = vmul.f32 %v440, %v444
      %v457 = vmul.f32 %v441, %v444
      %v458 = vld [vmem:[%s4] sm:$0x1]
      %v460 = vperm.slane %v458, 0
      %v462 = vadd.f32 %v446, %v460
      %v463 = vadd.f32 %v447, %v460
      %v464 = vadd.f32 %v448, %v460
      %v465 = vadd.f32 %v449, %v460
      %v466 = vadd.f32 %v450, %v460
      %v467 = vadd.f32 %v451, %v460
      %v468 = vadd.f32 %v452, %v460
      %v469 = vadd.f32 %v453, %v460
      %v470 = vadd.f32 %v454, %v460
      %v471 = vadd.f32 %v455, %v460
      %v472 = vadd.f32 %v456, %v460
      %v473 = vadd.f32 %v457, %v460
      %vm474 = vcmp.gt.f32.partialorder %v462, 0.0
      %vm475 = vcmp.gt.f32.partialorder %v463, 0.0
      %vm476 = vcmp.gt.f32.partialorder %v464, 0.0
      %vm477 = vcmp.gt.f32.partialorder %v465, 0.0
      %vm478 = vcmp.gt.f32.partialorder %v466, 0.0
      %vm479 = vcmp.gt.f32.partialorder %v467, 0.0
      %vm480 = vcmp.gt.f32.partialorder %v468, 0.0
      %vm481 = vcmp.gt.f32.partialorder %v469, 0.0
      %vm482 = vcmp.gt.f32.partialorder %v470, 0.0
      %vm483 = vcmp.gt.f32.partialorder %v471, 0.0
      %vm484 = vcmp.gt.f32.partialorder %v472, 0.0
      %vm485 = vcmp.gt.f32.partialorder %v473, 0.0
      %v486 = vmul.f32 %v462, 0.2
      %v487 = vmul.f32 %v463, 0.2
      %v488 = vmul.f32 %v464, 0.2
      %v489 = vmul.f32 %v465, 0.2
      %v490 = vmul.f32 %v466, 0.2
      %v491 = vmul.f32 %v467, 0.2
      %v492 = vmul.f32 %v468, 0.2
      %v493 = vmul.f32 %v469, 0.2
      %v494 = vmul.f32 %v470, 0.2
      %v495 = vmul.f32 %v471, 0.2
      %v496 = vmul.f32 %v472, 0.2
      %v497 = vmul.f32 %v473, 0.2
      %v498 = vsel %vm474, %v462, %v486
      %v499 = vsel %vm475, %v463, %v487
      %v500 = vsel %vm476, %v464, %v488
      %v501 = vsel %vm477, %v465, %v489
      %v502 = vsel %vm478, %v466, %v490
      %v503 = vsel %vm479, %v467, %v491
      %v504 = vsel %vm480, %v468, %v492
      %v505 = vsel %vm481, %v469, %v493
      %v506 = vsel %vm482, %v470, %v494
      %v507 = vsel %vm483, %v471, %v495
      %v508 = vsel %vm484, %v472, %v496
      %v509 = vsel %vm485, %v473, %v497
      %v510 = vld [vmem:[%s5] sm:$0xff]
      %v511 = vld [vmem:[%s5 + $0x8] sm:$0xff]
      %v512 = vld [vmem:[%s5 + $0x10] sm:$0xff]
      %v513 = vld [vmem:[%s5 + $0x18] sm:$0xff]
      %v514 = vld [vmem:[%s5 + $0x20] sm:$0xff]
      %v515 = vld [vmem:[%s5 + $0x28] sm:$0xff]
      %v516 = vld [vmem:[%s5 + $0x30] sm:$0xff]
      %v517 = vld [vmem:[%s5 + $0x38] sm:$0xff]
      %v518 = vld [vmem:[%s5 + $0x40] sm:$0xff]
      %v519 = vld [vmem:[%s5 + $0x48] sm:$0xff]
      %v520 = vld [vmem:[%s5 + $0x50] sm:$0xff]
      %v521 = vld [vmem:[%s5 + $0x58] sm:$0xff]
      %523 = vset.pattern.permute.xlu0 0
      %524 = vperm.xlu0 %523, %v510
      %v525 = vpop.permute.xlu0 %524
      %528 = vset.pattern.permute.xlu0 0
      %529 = vperm.xlu0 %528, %v511
      %v530 = vpop.permute.xlu0 %529
      %533 = vset.pattern.permute.xlu0 0
      %534 = vperm.xlu0 %533, %v512
      %v535 = vpop.permute.xlu0 %534
      %538 = vset.pattern.permute.xlu0 0
      %539 = vperm.xlu0 %538, %v513
      %v540 = vpop.permute.xlu0 %539
      %543 = vset.pattern.permute.xlu0 0
      %544 = vperm.xlu0 %543, %v514
      %v545 = vpop.permute.xlu0 %544
      %548 = vset.pattern.permute.xlu0 0
      %549 = vperm.xlu0 %548, %v515
      %v550 = vpop.permute.xlu0 %549
      %553 = vset.pattern.permute.xlu0 0
      %554 = vperm.xlu0 %553, %v516
      %v555 = vpop.permute.xlu0 %554
      %558 = vset.pattern.permute.xlu0 0
      %559 = vperm.xlu0 %558, %v517
      %v560 = vpop.permute.xlu0 %559
      %563 = vset.pattern.permute.xlu0 0
      %564 = vperm.xlu0 %563, %v518
      %v565 = vpop.permute.xlu0 %564
      %568 = vset.pattern.permute.xlu0 0
      %569 = vperm.xlu0 %568, %v519
      %v570 = vpop.permute.xlu0 %569
      %573 = vset.pattern.permute.xlu0 0
      %574 = vperm.xlu0 %573, %v520
      %v575 = vpop.permute.xlu0 %574
      %578 = vset.pattern.permute.xlu0 0
      %579 = vperm.xlu0 %578, %v521
      %v580 = vpop.permute.xlu0 %579
      %v582 = vmul.f32 %v498, %v525
      %v583 = vmul.f32 %v499, %v530
      %v584 = vmul.f32 %v500, %v535
      %v585 = vmul.f32 %v501, %v540
      %v586 = vmul.f32 %v502, %v545
      %v587 = vmul.f32 %v503, %v550
      %v588 = vmul.f32 %v504, %v555
      %v589 = vmul.f32 %v505, %v560
      %v590 = vmul.f32 %v506, %v565
      %v591 = vmul.f32 %v507, %v570
      %v592 = vmul.f32 %v508, %v575
      %v593 = vmul.f32 %v509, %v580
      %v594 = vpack.c.bf16 %v582, %v582
      %v595 = vpack.c.bf16 %v583, %v583
      %v596 = vpack.c.bf16 %v584, %v584
      %v597 = vpack.c.bf16 %v585, %v585
      %v598 = vpack.c.bf16 %v586, %v586
      %v599 = vpack.c.bf16 %v587, %v587
      %v600 = vpack.c.bf16 %v588, %v588
      %v601 = vpack.c.bf16 %v589, %v589
      %v602 = vpack.c.bf16 %v590, %v590
      %v603 = vpack.c.bf16 %v591, %v591
      %v604 = vpack.c.bf16 %v592, %v592
      %v605 = vpack.c.bf16 %v593, %v593
      %vm606 = vcmask 125952
      %607 = vst.msk [vmem:[#allocation2] sm:$0xf] %vm606, %v594
      %608 = vst.msk [vmem:[#allocation2 + $0x4] sm:$0xf] %vm606, %v595
      %609 = vst.msk [vmem:[#allocation2 + $0x8] sm:$0xf] %vm606, %v596
      %610 = vst.msk [vmem:[#allocation2 + $0xc] sm:$0xf] %vm606, %v597
      %611 = vst.msk [vmem:[#allocation2 + $0x10] sm:$0xf] %vm606, %v598
      %612 = vst.msk [vmem:[#allocation2 + $0x14] sm:$0xf] %vm606, %v599
      %613 = vst.msk [vmem:[#allocation2 + $0x18] sm:$0xf] %vm606, %v600
      %614 = vst.msk [vmem:[#allocation2 + $0x1c] sm:$0xf] %vm606, %v601
      %615 = vst.msk [vmem:[#allocation2 + $0x20] sm:$0xf] %vm606, %v602
      %616 = vst.msk [vmem:[#allocation2 + $0x24] sm:$0xf] %vm606, %v603
      %617 = vst.msk [vmem:[#allocation2 + $0x28] sm:$0xf] %vm606, %v604
      %618 = vst.msk [vmem:[#allocation2 + $0x2c] sm:$0xf] %vm606, %v605
      %v619 = vld [vmem:[#allocation2] sm:$0xf]
      %v620 = vld [vmem:[#allocation2 + $0x4] sm:$0x3]
      %v621 = vld [vmem:[%s393] sm:$0xf]
      %v622 = vld [vmem:[%s393 + $0x4] sm:$0xf]
      %s623 = scalar_lea.vmem [#allocation2], 12
      %v624 = vld [vmem:[%s623] sm:$0xf]
      %v625 = vld [vmem:[%s623 + $0x4] sm:$0x3]
      %s626 = scalar_lea.vmem %s393, 8
      %v627 = vld [vmem:[%s626] sm:$0xf]
      %v628 = vld [vmem:[%s626 + $0x4] sm:$0xf]
      %v631 = vunpack.c.l.b16 %v624
      %v632 = vunpack.c.l.b16 %v625
      %v633 = vpack.c.b16 %v632, %v631
      %v636 = vunpack.c.l.b16 %v627
      %v637 = vunpack.c.l.b16 %v628
      %v638 = vpack.c.b16 %v637, %v636
      %vm640 = vcmask 130048
      %v642 = vsel %vm640, %v633, 0
      %644 = vmatpush.bf16.msra.mxu0 0
      %645 = vmatpush.bf16.msra.mxu0 0
      %646 = vmatpush.bf16.msra.mxu0 0
      %647 = vmatpush.bf16.msra.mxu0 0
      %648 = vmatpush.bf16.msra.mxu0 0
      %649 = vmatpush.bf16.msra.mxu0 0
      %650 = vmatpush.bf16.msra.mxu0 0
      %651 = vmatpush.bf16.msra.mxu0 %v638
      %652 = vmatmul.bf16.gmra.mxu0 %v642
      %v653 = vpop.f32.mrf.mxu0
      %v654 = vadd.f32 0.0, %v653
      %v655 = vpop.f32.mrf.mxu0
      %v656 = vadd.f32 0.0, %v655
      %657 = vdwg.mxu0
      %v660 = vunpack.c.l.b16 %v619
      %v661 = vunpack.c.l.b16 %v620
      %v662 = vpack.c.b16 %v661, %v660
      %v665 = vunpack.c.l.b16 %v621
      %v666 = vunpack.c.l.b16 %v622
      %v667 = vpack.c.b16 %v666, %v665
      %v670 = vsel %vm640, %v662, 0
      %672 = vmatpush.bf16.msra.mxu0 0
      %673 = vmatpush.bf16.msra.mxu0 0
      %674 = vmatpush.bf16.msra.mxu0 0
      %675 = vmatpush.bf16.msra.mxu0 0
      %676 = vmatpush.bf16.msra.mxu0 0
      %677 = vmatpush.bf16.msra.mxu0 0
      %678 = vmatpush.bf16.msra.mxu0 0
      %679 = vmatpush.bf16.msra.mxu0 %v667
      %680 = vmatmul.bf16.gmra.mxu0 %v670
      %v681 = vpop.f32.mrf.mxu0
      %v682 = vadd.f32 %v654, %v681
      %v683 = vpop.f32.mrf.mxu0
      %v684 = vadd.f32 %v656, %v683
      %685 = vdwg.mxu0
      %v686 = vld [vmem:[#allocation2 + $0x4] sm:$0x7]
      %s687 = scalar_lea.vmem %s393, 16
      %v688 = vld [vmem:[%s687] sm:$0xf]
      %v689 = vld [vmem:[%s687 + $0x4] sm:$0xf]
      %v691 = vunpack.c.l.b16 %v686
      %v692 = vpack.c.b16 %v691, %v660
      %v694 = vshrl.u32 %v692, 16
      %v696 = vshll.u32 %v692, 16
      %v698 = vrot.slane %v696, 1
      %v699 = vor.u32 %v694, %v698
      %v702 = vunpack.c.l.b16 %v688
      %v703 = vunpack.c.l.b16 %v689
      %v704 = vpack.c.b16 %v703, %v702
      %v707 = vsel %vm640, %v699, 0
      %709 = vmatpush.bf16.msra.mxu0 0
      %710 = vmatpush.bf16.msra.mxu0 0
      %711 = vmatpush.bf16.msra.mxu0 0
      %712 = vmatpush.bf16.msra.mxu0 0
      %713 = vmatpush.bf16.msra.mxu0 0
      %714 = vmatpush.bf16.msra.mxu0 0
      %715 = vmatpush.bf16.msra.mxu0 0
      %716 = vmatpush.bf16.msra.mxu0 %v704
      %717 = vmatmul.bf16.gmra.mxu0 %v707
      %v718 = vpop.f32.mrf.mxu0
      %v719 = vadd.f32 0.0, %v718
      %v720 = vpop.f32.mrf.mxu0
      %v721 = vadd.f32 0.0, %v720
      %722 = vdwg.mxu0
      %v723 = vadd.f32 %v682, %v719
      %v724 = vadd.f32 %v684, %v721
      %v725 = vld [vmem:[%s623 + $0x4] sm:$0x7]
      %s726 = scalar_lea.vmem %s393, 24
      %v727 = vld [vmem:[%s726] sm:$0xf]
      %v728 = vld [vmem:[%s726 + $0x4] sm:$0xf]
      %v730 = vunpack.c.l.b16 %v725
      %v731 = vpack.c.b16 %v730, %v631
      %v733 = vshrl.u32 %v731, 16
      %v735 = vshll.u32 %v731, 16
      %v737 = vrot.slane %v735, 1
      %v738 = vor.u32 %v733, %v737
      %v741 = vunpack.c.l.b16 %v727
      %v742 = vunpack.c.l.b16 %v728
      %v743 = vpack.c.b16 %v742, %v741
      %v746 = vsel %vm640, %v738, 0
      %748 = vmatpush.bf16.msra.mxu0 0
      %749 = vmatpush.bf16.msra.mxu0 0
      %750 = vmatpush.bf16.msra.mxu0 0
      %751 = vmatpush.bf16.msra.mxu0 0
      %752 = vmatpush.bf16.msra.mxu0 0
      %753 = vmatpush.bf16.msra.mxu0 0
      %754 = vmatpush.bf16.msra.mxu0 0
      %755 = vmatpush.bf16.msra.mxu0 %v743
      %756 = vmatmul.bf16.gmra.mxu0 %v746
      %v757 = vpop.f32.mrf.mxu0
      %v758 = vadd.f32 0.0, %v757
      %v759 = vpop.f32.mrf.mxu0
      %v760 = vadd.f32 0.0, %v759
      %761 = vdwg.mxu0
      %v762 = vadd.f32 %v723, %v758
      %v763 = vadd.f32 %v724, %v760
      %s764 = scalar_lea.vmem [#allocation2], 24
      %v765 = vld [vmem:[%s764] sm:$0xf]
      %v766 = vld [vmem:[%s764 + $0x4] sm:$0x3]
      %s767 = scalar_lea.vmem %s393, 32
      %v768 = vld [vmem:[%s767] sm:$0xf]
      %v769 = vld [vmem:[%s767 + $0x4] sm:$0xf]
      %v772 = vunpack.c.l.b16 %v765
      %v773 = vunpack.c.l.b16 %v766
      %v774 = vpack.c.b16 %v773, %v772
      %v777 = vunpack.c.l.b16 %v768
      %v778 = vunpack.c.l.b16 %v769
      %v779 = vpack.c.b16 %v778, %v777
      %v782 = vsel %vm640, %v774, 0
      %784 = vmatpush.bf16.msra.mxu0 0
      %785 = vmatpush.bf16.msra.mxu0 0
      %786 = vmatpush.bf16.msra.mxu0 0
      %787 = vmatpush.bf16.msra.mxu0 0
      %788 = vmatpush.bf16.msra.mxu0 0
      %789 = vmatpush.bf16.msra.mxu0 0
      %790 = vmatpush.bf16.msra.mxu0 0
      %791 = vmatpush.bf16.msra.mxu0 %v779
      %792 = vmatmul.bf16.gmra.mxu0 %v782
      %v793 = vpop.f32.mrf.mxu0
      %v794 = vadd.f32 0.0, %v793
      %v795 = vpop.f32.mrf.mxu0
      %v796 = vadd.f32 0.0, %v795
      %797 = vdwg.mxu0
      %v798 = vadd.f32 %v762, %v794
      %v799 = vadd.f32 %v763, %v796
      %s800 = scalar_lea.vmem [#allocation2], 36
      %v801 = vld [vmem:[%s800] sm:$0xf]
      %v802 = vld [vmem:[%s800 + $0x4] sm:$0x3]
      %s803 = scalar_lea.vmem %s393, 40
      %v804 = vld [vmem:[%s803] sm:$0xf]
      %v805 = vld [vmem:[%s803 + $0x4] sm:$0xf]
      %v808 = vunpack.c.l.b16 %v801
      %v809 = vunpack.c.l.b16 %v802
      %v810 = vpack.c.b16 %v809, %v808
      %v813 = vunpack.c.l.b16 %v804
      %v814 = vunpack.c.l.b16 %v805
      %v815 = vpack.c.b16 %v814, %v813
      %v818 = vsel %vm640, %v810, 0
      %820 = vmatpush.bf16.msra.mxu0 0
      %821 = vmatpush.bf16.msra.mxu0 0
      %822 = vmatpush.bf16.msra.mxu0 0
      %823 = vmatpush.bf16.msra.mxu0 0
      %824 = vmatpush.bf16.msra.mxu0 0
      %825 = vmatpush.bf16.msra.mxu0 0
      %826 = vmatpush.bf16.msra.mxu0 0
      %827 = vmatpush.bf16.msra.mxu0 %v815
      %828 = vmatmul.bf16.gmra.mxu0 %v818
      %v829 = vpop.f32.mrf.mxu0
      %v830 = vadd.f32 0.0, %v829
      %v831 = vpop.f32.mrf.mxu0
      %v832 = vadd.f32 0.0, %v831
      %833 = vdwg.mxu0
      %v834 = vadd.f32 %v798, %v830
      %v835 = vadd.f32 %v799, %v832
      %v836 = vld [vmem:[%s764 + $0x4] sm:$0x7]
      %s837 = scalar_lea.vmem %s393, 48
      %v838 = vld [vmem:[%s837] sm:$0xf]
      %v839 = vld [vmem:[%s837 + $0x4] sm:$0xf]
      %v841 = vunpack.c.l.b16 %v836
      %v842 = vpack.c.b16 %v841, %v772
      %v844 = vshrl.u32 %v842, 16
      %v846 = vshll.u32 %v842, 16
      %v848 = vrot.slane %v846, 1
      %v849 = vor.u32 %v844, %v848
      %v852 = vunpack.c.l.b16 %v838
      %v853 = vunpack.c.l.b16 %v839
      %v854 = vpack.c.b16 %v853, %v852
      %v857 = vsel %vm640, %v849, 0
      %859 = vmatpush.bf16.msra.mxu0 0
      %860 = vmatpush.bf16.msra.mxu0 0
      %861 = vmatpush.bf16.msra.mxu0 0
      %862 = vmatpush.bf16.msra.mxu0 0
      %863 = vmatpush.bf16.msra.mxu0 0
      %864 = vmatpush.bf16.msra.mxu0 0
      %865 = vmatpush.bf16.msra.mxu0 0
      %866 = vmatpush.bf16.msra.mxu0 %v854
      %867 = vmatmul.bf16.gmra.mxu0 %v857
      %v868 = vpop.f32.mrf.mxu0
      %v869 = vadd.f32 0.0, %v868
      %v870 = vpop.f32.mrf.mxu0
      %v871 = vadd.f32 0.0, %v870
      %872 = vdwg.mxu0
      %v873 = vadd.f32 %v834, %v869
      %v874 = vadd.f32 %v835, %v871
      %v875 = vld [vmem:[%s800 + $0x4] sm:$0x7]
      %s876 = scalar_lea.vmem %s393, 56
      %v877 = vld [vmem:[%s876] sm:$0xf]
      %v878 = vld [vmem:[%s876 + $0x4] sm:$0xf]
      %v880 = vunpack.c.l.b16 %v875
      %v881 = vpack.c.b16 %v880, %v808
      %v883 = vshrl.u32 %v881, 16
      %v885 = vshll.u32 %v881, 16
      %v887 = vrot.slane %v885, 1
      %v888 = vor.u32 %v883, %v887
      %v891 = vunpack.c.l.b16 %v877
      %v892 = vunpack.c.l.b16 %v878
      %v893 = vpack.c.b16 %v892, %v891
      %v896 = vsel %vm640, %v888, 0
      %898 = vmatpush.bf16.msra.mxu0 0
      %899 = vmatpush.bf16.msra.mxu0 0
      %900 = vmatpush.bf16.msra.mxu0 0
      %901 = vmatpush.bf16.msra.mxu0 0
      %902 = vmatpush.bf16.msra.mxu0 0
      %903 = vmatpush.bf16.msra.mxu0 0
      %904 = vmatpush.bf16.msra.mxu0 0
      %905 = vmatpush.bf16.msra.mxu0 %v893
      %906 = vmatmul.bf16.gmra.mxu0 %v896
      %v907 = vpop.f32.mrf.mxu0
      %v908 = vadd.f32 0.0, %v907
      %v909 = vpop.f32.mrf.mxu0
      %v910 = vadd.f32 0.0, %v909
      %911 = vdwg.mxu0
      %v912 = vadd.f32 %v873, %v908
      %v913 = vadd.f32 %v874, %v910
      %v914 = vld [vmem:[#allocation2] sm:$0xc]
      %v915 = vld [vmem:[#allocation2 + $0x4] sm:$0xf]
      %s916 = scalar_lea.vmem %s393, 64
      %v917 = vld [vmem:[%s916] sm:$0xf]
      %v918 = vld [vmem:[%s916 + $0x4] sm:$0xf]
      %v921 = vunpack.c.l.b16 %v914
      %v922 = vunpack.c.l.b16 %v915
      %v923 = vpack.c.b16 %v922, %v921
      %v924 = vrot.slane %v923, 2
      %v927 = vunpack.c.l.b16 %v917
      %v928 = vunpack.c.l.b16 %v918
      %v929 = vpack.c.b16 %v928, %v927
      %v932 = vsel %vm640, %v924, 0
      %934 = vmatpush.bf16.msra.mxu0 0
      %935 = vmatpush.bf16.msra.mxu0 0
      %936 = vmatpush.bf16.msra.mxu0 0
      %937 = vmatpush.bf16.msra.mxu0 0
      %938 = vmatpush.bf16.msra.mxu0 0
      %939 = vmatpush.bf16.msra.mxu0 0
      %940 = vmatpush.bf16.msra.mxu0 0
      %941 = vmatpush.bf16.msra.mxu0 %v929
      %942 = vmatmul.bf16.gmra.mxu0 %v932
      %v943 = vpop.f32.mrf.mxu0
      %v944 = vadd.f32 0.0, %v943
      %v945 = vpop.f32.mrf.mxu0
      %v946 = vadd.f32 0.0, %v945
      %947 = vdwg.mxu0
      %v948 = vadd.f32 %v912, %v944
      %v949 = vadd.f32 %v913, %v946
      %v950 = vld [vmem:[%s623] sm:$0xc]
      %v951 = vld [vmem:[%s623 + $0x4] sm:$0xf]
      %s952 = scalar_lea.vmem %s393, 72
      %v953 = vld [vmem:[%s952] sm:$0xf]
      %v954 = vld [vmem:[%s952 + $0x4] sm:$0xf]
      %v957 = vunpack.c.l.b16 %v950
      %v958 = vunpack.c.l.b16 %v951
      %v959 = vpack.c.b16 %v958, %v957
      %v960 = vrot.slane %v959, 2
      %v963 = vunpack.c.l.b16 %v953
      %v964 = vunpack.c.l.b16 %v954
      %v965 = vpack.c.b16 %v964, %v963
      %v968 = vsel %vm640, %v960, 0
      %970 = vmatpush.bf16.msra.mxu0 0
      %971 = vmatpush.bf16.msra.mxu0 0
      %972 = vmatpush.bf16.msra.mxu0 0
      %973 = vmatpush.bf16.msra.mxu0 0
      %974 = vmatpush.bf16.msra.mxu0 0
      %975 = vmatpush.bf16.msra.mxu0 0
      %976 = vmatpush.bf16.msra.mxu0 0
      %977 = vmatpush.bf16.msra.mxu0 %v965
      %978 = vmatmul.bf16.gmra.mxu0 %v968
      %v979 = vpop.f32.mrf.mxu0
      %v980 = vadd.f32 0.0, %v979
      %v981 = vpop.f32.mrf.mxu0
      %v982 = vadd.f32 0.0, %v981
      %983 = vdwg.mxu0
      %v984 = vadd.f32 %v948, %v980
      %v985 = vadd.f32 %v949, %v982
      %v986 = vld [vmem:[#allocation2] sm:$0xc]
      %v987 = vld [vmem:[#allocation2 + $0x4] sm:$0xf]
      %v988 = vld [vmem:[#allocation2 + $0x8] sm:$0x1]
      %s989 = scalar_lea.vmem %s393, 80
      %v990 = vld [vmem:[%s989] sm:$0xf]
      %v991 = vld [vmem:[%s989 + $0x4] sm:$0xf]
      %v995 = vunpack.c.l.b16 %v986
      %v996 = vunpack.c.l.b16 %v987
      %v997 = vunpack.c.l.b16 %v988
      %v998 = vpack.c.b16 %v996, %v995
      %v999 = vpack.c.b16 %v997, %v997
      %vm1000 = vsmask.f32 5376
      %v1002 = vshrl.u32 %v998, 16
      %v1004 = vrot.slane %v1002, 2
      %v1005 = vshll.u32 %v998, 16
      %v1007 = vrot.slane %v1005, 3
      %v1008 = vor.u32 %v1004, %v1007
      %v1010 = vshll.u32 %v999, 16
      %v1012 = vrot.slane %v1010, 3
      %v1013 = vsel %vm1000, %v1008, %v1012
      %v1016 = vunpack.c.l.b16 %v990
      %v1017 = vunpack.c.l.b16 %v991
      %v1018 = vpack.c.b16 %v1017, %v1016
      %v1021 = vsel %vm640, %v1013, 0
      %1023 = vmatpush.bf16.msra.mxu0 0
      %1024 = vmatpush.bf16.msra.mxu0 0
      %1025 = vmatpush.bf16.msra.mxu0 0
      %1026 = vmatpush.bf16.msra.mxu0 0
      %1027 = vmatpush.bf16.msra.mxu0 0
      %1028 = vmatpush.bf16.msra.mxu0 0
      %1029 = vmatpush.bf16.msra.mxu0 0
      %1030 = vmatpush.bf16.msra.mxu0 %v1018
      %1031 = vmatmul.bf16.gmra.mxu0 %v1021
      %v1032 = vpop.f32.mrf.mxu0
      %v1033 = vadd.f32 0.0, %v1032
      %v1034 = vpop.f32.mrf.mxu0
      %v1035 = vadd.f32 0.0, %v1034
      %1036 = vdwg.mxu0
      %v1037 = vadd.f32 %v984, %v1033
      %v1038 = vadd.f32 %v985, %v1035
      %v1039 = vld [vmem:[%s623] sm:$0xc]
      %v1040 = vld [vmem:[%s623 + $0x4] sm:$0xf]
      %v1041 = vld [vmem:[%s623 + $0x8] sm:$0x1]
      %s1042 = scalar_lea.vmem %s393, 88
      %v1043 = vld [vmem:[%s1042] sm:$0xf]
      %v1044 = vld [vmem:[%s1042 + $0x4] sm:$0xf]
      %v1048 = vunpack.c.l.b16 %v1039
      %v1049 = vunpack.c.l.b16 %v1040
      %v1050 = vunpack.c.l.b16 %v1041
      %v1051 = vpack.c.b16 %v1049, %v1048
      %v1052 = vpack.c.b16 %v1050, %v1050
      %v1054 = vshrl.u32 %v1051, 16
      %v1056 = vrot.slane %v1054, 2
      %v1057 = vshll.u32 %v1051, 16
      %v1059 = vrot.slane %v1057, 3
      %v1060 = vor.u32 %v1056, %v1059
      %v1062 = vshll.u32 %v1052, 16
      %v1064 = vrot.slane %v1062, 3
      %v1065 = vsel %vm1000, %v1060, %v1064
      %v1068 = vunpack.c.l.b16 %v1043
      %v1069 = vunpack.c.l.b16 %v1044
      %v1070 = vpack.c.b16 %v1069, %v1068
      %v1073 = vsel %vm640, %v1065, 0
      %1075 = vmatpush.bf16.msra.mxu0 0
      %1076 = vmatpush.bf16.msra.mxu0 0
      %1077 = vmatpush.bf16.msra.mxu0 0
      %1078 = vmatpush.bf16.msra.mxu0 0
      %1079 = vmatpush.bf16.msra.mxu0 0
      %1080 = vmatpush.bf16.msra.mxu0 0
      %1081 = vmatpush.bf16.msra.mxu0 0
      %1082 = vmatpush.bf16.msra.mxu0 %v1070
      %1083 = vmatmul.bf16.gmra.mxu0 %v1073
      %v1084 = vpop.f32.mrf.mxu0
      %v1085 = vadd.f32 0.0, %v1084
      %v1086 = vpop.f32.mrf.mxu0
      %v1087 = vadd.f32 0.0, %v1086
      %1088 = vdwg.mxu0
      %v1089 = vadd.f32 %v1037, %v1085
      %v1090 = vadd.f32 %v1038, %v1087
      %v1091 = vld [vmem:[%s764] sm:$0xc]
      %v1092 = vld [vmem:[%s764 + $0x4] sm:$0xf]
      %s1093 = scalar_lea.vmem %s393, 96
      %v1094 = vld [vmem:[%s1093] sm:$0xf]
      %v1095 = vld [vmem:[%s1093 + $0x4] sm:$0xf]
      %v1098 = vunpack.c.l.b16 %v1091
      %v1099 = vunpack.c.l.b16 %v1092
      %v1100 = vpack.c.b16 %v1099, %v1098
      %v1101 = vrot.slane %v1100, 2
      %v1104 = vunpack.c.l.b16 %v1094
      %v1105 = vunpack.c.l.b16 %v1095
      %v1106 = vpack.c.b16 %v1105, %v1104
      %v1109 = vsel %vm640, %v1101, 0
      %1111 = vmatpush.bf16.msra.mxu0 0
      %1112 = vmatpush.bf16.msra.mxu0 0
      %1113 = vmatpush.bf16.msra.mxu0 0
      %1114 = vmatpush.bf16.msra.mxu0 0
      %1115 = vmatpush.bf16.msra.mxu0 0
      %1116 = vmatpush.bf16.msra.mxu0 0
      %1117 = vmatpush.bf16.msra.mxu0 0
      %1118 = vmatpush.bf16.msra.mxu0 %v1106
      %1119 = vmatmul.bf16.gmra.mxu0 %v1109
      %v1120 = vpop.f32.mrf.mxu0
      %v1121 = vadd.f32 0.0, %v1120
      %v1122 = vpop.f32.mrf.mxu0
      %v1123 = vadd.f32 0.0, %v1122
      %1124 = vdwg.mxu0
      %v1125 = vadd.f32 %v1089, %v1121
      %v1126 = vadd.f32 %v1090, %v1123
      %v1127 = vld [vmem:[%s800] sm:$0xc]
      %v1128 = vld [vmem:[%s800 + $0x4] sm:$0xf]
      %s1129 = scalar_lea.vmem %s393, 104
      %v1130 = vld [vmem:[%s1129] sm:$0xf]
      %v1131 = vld [vmem:[%s1129 + $0x4] sm:$0xf]
      %v1134 = vunpack.c.l.b16 %v1127
      %v1135 = vunpack.c.l.b16 %v1128
      %v1136 = vpack.c.b16 %v1135, %v1134
      %v1137 = vrot.slane %v1136, 2
      %v1140 = vunpack.c.l.b16 %v1130
      %v1141 = vunpack.c.l.b16 %v1131
      %v1142 = vpack.c.b16 %v1141, %v1140
      %v1145 = vsel %vm640, %v1137, 0
      %1147 = vmatpush.bf16.msra.mxu0 0
      %1148 = vmatpush.bf16.msra.mxu0 0
      %1149 = vmatpush.bf16.msra.mxu0 0
      %1150 = vmatpush.bf16.msra.mxu0 0
      %1151 = vmatpush.bf16.msra.mxu0 0
      %1152 = vmatpush.bf16.msra.mxu0 0
      %1153 = vmatpush.bf16.msra.mxu0 0
      %1154 = vmatpush.bf16.msra.mxu0 %v1142
      %1155 = vmatmul.bf16.gmra.mxu0 %v1145
      %v1156 = vpop.f32.mrf.mxu0
      %v1157 = vadd.f32 0.0, %v1156
      %v1158 = vpop.f32.mrf.mxu0
      %v1159 = vadd.f32 0.0, %v1158
      %1160 = vdwg.mxu0
      %v1161 = vadd.f32 %v1125, %v1157
      %v1162 = vadd.f32 %v1126, %v1159
      %v1163 = vld [vmem:[%s764] sm:$0xc]
      %v1164 = vld [vmem:[%s764 + $0x4] sm:$0xf]
      %v1165 = vld [vmem:[%s764 + $0x8] sm:$0x1]
      %s1166 = scalar_lea.vmem %s393, 112
      %v1167 = vld [vmem:[%s1166] sm:$0xf]
      %v1168 = vld [vmem:[%s1166 + $0x4] sm:$0xf]
      %v1172 = vunpack.c.l.b16 %v1163
      %v1173 = vunpack.c.l.b16 %v1164
      %v1174 = vunpack.c.l.b16 %v1165
      %v1175 = vpack.c.b16 %v1173, %v1172
      %v1176 = vpack.c.b16 %v1174, %v1174
      %v1178 = vshrl.u32 %v1175, 16
      %v1180 = vrot.slane %v1178, 2
      %v1181 = vshll.u32 %v1175, 16
      %v1183 = vrot.slane %v1181, 3
      %v1184 = vor.u32 %v1180, %v1183
      %v1186 = vshll.u32 %v1176, 16
      %v1188 = vrot.slane %v1186, 3
      %v1189 = vsel %vm1000, %v1184, %v1188
      %v1192 = vunpack.c.l.b16 %v1167
      %v1193 = vunpack.c.l.b16 %v1168
      %v1194 = vpack.c.b16 %v1193, %v1192
      %v1197 = vsel %vm640, %v1189, 0
      %1199 = vmatpush.bf16.msra.mxu0 0
      %1200 = vmatpush.bf16.msra.mxu0 0
      %1201 = vmatpush.bf16.msra.mxu0 0
      %1202 = vmatpush.bf16.msra.mxu0 0
      %1203 = vmatpush.bf16.msra.mxu0 0
      %1204 = vmatpush.bf16.msra.mxu0 0
      %1205 = vmatpush.bf16.msra.mxu0 0
      %1206 = vmatpush.bf16.msra.mxu0 %v1194
      %1207 = vmatmul.bf16.gmra.mxu0 %v1197
      %v1208 = vpop.f32.mrf.mxu0
      %v1209 = vadd.f32 0.0, %v1208
      %v1210 = vpop.f32.mrf.mxu0
      %v1211 = vadd.f32 0.0, %v1210
      %1212 = vdwg.mxu0
      %v1213 = vadd.f32 %v1161, %v1209
      %v1214 = vadd.f32 %v1162, %v1211
      %v1215 = vld [vmem:[%s800] sm:$0xc]
      %v1216 = vld [vmem:[%s800 + $0x4] sm:$0xf]
      %v1217 = vld [vmem:[%s800 + $0x8] sm:$0x1]
      %s1218 = scalar_lea.vmem %s393, 120
      %v1219 = vld [vmem:[%s1218] sm:$0xf]
      %v1220 = vld [vmem:[%s1218 + $0x4] sm:$0xf]
      %v1224 = vunpack.c.l.b16 %v1215
      %v1225 = vunpack.c.l.b16 %v1216
      %v1226 = vunpack.c.l.b16 %v1217
      %v1227 = vpack.c.b16 %v1225, %v1224
      %v1228 = vpack.c.b16 %v1226, %v1226
      %v1230 = vshrl.u32 %v1227, 16
      %v1232 = vrot.slane %v1230, 2
      %v1233 = vshll.u32 %v1227, 16
      %v1235 = vrot.slane %v1233, 3
      %v1236 = vor.u32 %v1232, %v1235
      %v1238 = vshll.u32 %v1228, 16
      %v1240 = vrot.slane %v1238, 3
      %v1241 = vsel %vm1000, %v1236, %v1240
      %v1244 = vunpack.c.l.b16 %v1219
      %v1245 = vunpack.c.l.b16 %v1220
      %v1246 = vpack.c.b16 %v1245, %v1244
      %v1249 = vsel %vm640, %v1241, 0
      %1251 = vmatpush.bf16.msra.mxu0 0
      %1252 = vmatpush.bf16.msra.mxu0 0
      %1253 = vmatpush.bf16.msra.mxu0 0
      %1254 = vmatpush.bf16.msra.mxu0 0
      %1255 = vmatpush.bf16.msra.mxu0 0
      %1256 = vmatpush.bf16.msra.mxu0 0
      %1257 = vmatpush.bf16.msra.mxu0 0
      %1258 = vmatpush.bf16.msra.mxu0 %v1246
      %1259 = vmatmul.bf16.gmra.mxu0 %v1249
      %v1260 = vpop.f32.mrf.mxu0
      %v1261 = vadd.f32 0.0, %v1260
      %v1262 = vpop.f32.mrf.mxu0
      %v1263 = vadd.f32 0.0, %v1262
      %1264 = vdwg.mxu0
      %v1265 = vadd.f32 %v1213, %v1261
      %v1266 = vadd.f32 %v1214, %v1263
      %v1267 = vld [vmem:[%s396] sm:$0x1]
      %v1269 = vperm.slane %v1267, 0
      %v1271 = vadd.f32 %v1265, %v1269
      %v1272 = vadd.f32 %v1266, %v1269
      %v1273 = vpack.c.bf16 %v1271, %v1271
      %v1274 = vpack.c.bf16 %v1272, %v1272
      %vm1275 = vcmask 257024
      %1276 = vst.msk [vmem:[%s404] sm:$0xf] %vm1275, %v1273
      %vm1277 = vcmask 254976
      %1278 = vst.msk [vmem:[%s404 + $0x4] sm:$0x3] %vm1277, %v1274
      %v1279 = vld [vmem:[%s6] sm:$0xff]
      %v1280 = vld [vmem:[%s6 + $0x8] sm:$0xf]
      %1282 = vset.pattern.permute.xlu0 0
      %1283 = vperm.xlu0 %1282, %v1279
      %v1284 = vpop.permute.xlu0 %1283
      %1287 = vset.pattern.permute.xlu0 0
      %1288 = vperm.xlu0 %1287, %v1280
      %v1289 = vpop.permute.xlu0 %1288
      %v1291 = vmul.f32 %v1271, %v1284
      %v1292 = vmul.f32 %v1272, %v1289
      %vm1293 = vcmask 261120
      %v1294 = vsel %vm1293, %v1291, 0.0
      %v1295 = vsel %vm1275, %v1292, 0.0
      %v1296 = vadd.f32 %v1294, %v1295
      %v1297 = vrot.slane %v1296, 4
      %v1298 = vadd.f32 %v1296, %v1297
      %v1299 = vrot.slane %v1298, 2
      %v1300 = vadd.f32 %v1298, %v1299
      %v1301 = vrot.slane %v1300, 1
      %v1302 = vadd.f32 %v1300, %v1301
      %v1303 = vmul.f32 %v1302, 0.11111111
      %v1304 = vsub.f32 %v1271, %v1303
      %v1305 = vsub.f32 %v1272, %v1303
      %v1306 = vmul.f32 %v1304, %v1284
      %v1307 = vmul.f32 %v1305, %v1289
      %vm1308 = vcmask 253952
      %1309 = vst.msk [vmem:[%s410] sm:$0x1] %vm1308, %v1302
      %v1310 = vmul.f32 %v1306, %v1306
      %v1311 = vmul.f32 %v1307, %v1307
      %v1312 = vsel %vm1293, %v1310, 0.0
      %v1313 = vsel %vm1275, %v1311, 0.0
      %v1314 = vadd.f32 %v1312, %v1313
      %v1315 = vrot.slane %v1314, 4
      %v1316 = vadd.f32 %v1314, %v1315
      %v1317 = vrot.slane %v1316, 2
      %v1318 = vadd.f32 %v1316, %v1317
      %v1319 = vrot.slane %v1318, 1
      %v1320 = vadd.f32 %v1318, %v1319
      %1321 = vst.msk [vmem:[%s416] sm:$0x1] %vm1308, %v1320
      %p1322 = scmp.lt.s32.totalorder %s25, 1
      %s1323 = scalar_select %p1322, %s25, 1
      %p1324 = scmp.lt.s32.totalorder %s26, 0
      %s1325 = scalar_select %p1324, %s26, 0
      %s1326 = smul.addr %s1323, 2
      %s1327 = sadd.s32 %s1325, %s1326
      %s1328 = smul.addr %s1327, 4
      %s1329 = scalar_lea.vmem %s7, %s1328
      %p1330 = scmp.lt.s32.totalorder %s25, 1
      %s1331 = scalar_select %p1330, %s25, 1
      %p1332 = scmp.lt.s32.totalorder %s26, 0
      %s1333 = scalar_select %p1332, %s26, 0
      %s1334 = sadd.s32 %s1333, %s1331
      %s1335 = scalar_lea.vmem %s8, %s1334
      %p1336 = scmp.lt.s32.totalorder %s25, 1
      %s1337 = scalar_select %p1336, %s25, 1
      %p1338 = scmp.lt.s32.totalorder %s26, 0
      %s1339 = scalar_select %p1338, %s26, 0
      %s1340 = sadd.s32 %s1339, %s1337
      %s1341 = scalar_lea.vmem %s9, %s1340
      // Predicated region
      $region49: #{discriminator_forward.7} parent=47 // pred_check
        %p1342 = pneg %p215
      $region50: #{discriminator_forward.7} parent=47 // pred_check_branch
        %1344 = sbr.rel (%p1342) target = $region52
      $region51: #{discriminator_forward.7} parent=47 // pred_region
        _
      $region52: #{discriminator_forward.7} parent=47 // pred_fallthru
        _
      // Predicated region
      $region53: #{discriminator_forward.7} parent=47 // pred_check
        %p1345 = pneg %p243
      $region54: #{discriminator_forward.7} parent=47 // pred_check_branch
        %1347 = sbr.rel (%p1345) target = $region56
      $region55: #{discriminator_forward.7} parent=47 // pred_region
        _
      $region56: #{discriminator_forward.7} parent=47 // pred_fallthru
        _
      // Predicated region
      $region57: #{discriminator_forward.7} parent=47 // pred_check
        %p1348 = pneg %p271
      $region58: #{discriminator_forward.7} parent=47 // pred_check_branch
        %1350 = sbr.rel (%p1348) target = $region60
      $region59: #{discriminator_forward.7} parent=47 // pred_region
        _
      $region60: #{discriminator_forward.7} parent=47 // pred_fallthru
        _
    $region48: #{discriminator_forward.7} parent=5 // pred_fallthru
      _
    %p1351 = scmp.le.s32.totalorder 2, %s16
    // Predicated region
    $region61: #{discriminator_forward.7} parent=5 // pred_check
      %p1352 = pneg %p1351
    $region62: #{discriminator_forward.7} parent=5 // pred_check_branch
      %1354 = sbr.rel (%p1352) target = $region64
    $region63: #{discriminator_forward.7} parent=5 // pred_region
      %s1355 = ssub.s32 %s16, 2
      // Predicated region
      $region65: #{discriminator_forward.7} parent=63 // pred_check
        %p1356 = pneg %p221
      $region66: #{discriminator_forward.7} parent=63 // pred_check_branch
        %1358 = sbr.rel (%p1356) target = $region68
      $region67: #{discriminator_forward.7} parent=63 // pred_region
        %p1359 = scmp.lt.s32.totalorder %s27, 1
        %s1360 = scalar_select %p1359, %s27, 1
        %p1361 = scmp.lt.s32.totalorder %s28, 0
        %s1362 = scalar_select %p1361, %s28, 0
        %s1363 = smul.addr %s1360, 2
        %s1364 = sadd.s32 %s1362, %s1363
        %s1365 = smul.addr %s1364, 4
        %s1366 = scalar_lea.vmem %s7, %s1365
      $region68: #{discriminator_forward.7} parent=63 // pred_fallthru
        _
      // Predicated region
      $region69: #{discriminator_forward.7} parent=63 // pred_check
        %p1367 = pneg %p249
      $region70: #{discriminator_forward.7} parent=63 // pred_check_branch
        %1369 = sbr.rel (%p1367) target = $region72
      $region71: #{discriminator_forward.7} parent=63 // pred_region
        %p1370 = scmp.lt.s32.totalorder %s27, 1
        %s1371 = scalar_select %p1370, %s27, 1
        %p1372 = scmp.lt.s32.totalorder %s28, 0
        %s1373 = scalar_select %p1372, %s28, 0
        %s1374 = sadd.s32 %s1373, %s1371
        %s1375 = scalar_lea.vmem %s8, %s1374
      $region72: #{discriminator_forward.7} parent=63 // pred_fallthru
        _
      // Predicated region
      $region73: #{discriminator_forward.7} parent=63 // pred_check
        %p1376 = pneg %p277
      $region74: #{discriminator_forward.7} parent=63 // pred_check_branch
        %1378 = sbr.rel (%p1376) target = $region76
      $region75: #{discriminator_forward.7} parent=63 // pred_region
        %p1379 = scmp.lt.s32.totalorder %s27, 1
        %s1380 = scalar_select %p1379, %s27, 1
        %p1381 = scmp.lt.s32.totalorder %s28, 0
        %s1382 = scalar_select %p1381, %s28, 0
        %s1383 = sadd.s32 %s1382, %s1380
        %s1384 = scalar_lea.vmem %s9, %s1383
      $region76: #{discriminator_forward.7} parent=63 // pred_fallthru
        _
    $region64: #{discriminator_forward.7} parent=5 // pred_fallthru
      _
  $region6: #{discriminator_forward.7} parent=0 // loop_footer
    %s20 = sadd.s32 1, %s16
  $region7: #{discriminator_forward.7} parent=0 // loop_footer_branch
    %15 = sbr.rel target = $region3
  $region8: #{discriminator_forward.7} parent=0 // loop_exit
    _

// kernel: discriminator_forward.8
$region0: #{discriminator_forward.8}
  #allocation0 [shape = 'u32[]', space=smem, size = 0x4, offset = 0x4, fixed_abs, tag = 'smem constant byte address 0x4 - core index']
  #allocation1 [shape = 'u32[72,128]{1,0:T(1,128)}', space=vmem, size = 0x9000, scoped, tag = 'internal scratch']
  #allocation2 [shape = 'bf16[1,56,32]{2,1,0:T(8,128)(2,1)}', space=vmem, size = 0x3800, scoped, tag = 'scratch operand']
  %s0 = inlined_call_operand.vmem [shape: bf16[2,1,56,32], index: 0, kind: input, shape index: {}]
  %s1 = inlined_call_operand.vmem [shape: bf16[16,32,64], index: 1, kind: input, shape index: {}]
  %s2 = inlined_call_operand.vmem [shape: f32[1,1,64], index: 2, kind: input, shape index: {}]
  %s3 = inlined_call_operand.vmem [shape: f32[1,1,32], index: 3, kind: input, shape index: {}]
  %s4 = inlined_call_operand.vmem [shape: f32[1,1,32], index: 4, kind: input, shape index: {}]
  %s5 = inlined_call_operand.vmem [shape: f32[1,1,56,1], index: 5, kind: input, shape index: {}]
  %s6 = inlined_call_operand.vmem [shape: f32[1,28,1], index: 6, kind: input, shape index: {}]
  %s7 = inlined_call_operand.vmem [shape: bf16[2,28,64], index: 7, kind: output, shape index: {0}]
  %s8 = inlined_call_operand.vmem [shape: f32[2,1,64], index: 8, kind: output, shape index: {1}]
  %s9 = inlined_call_operand.vmem [shape: f32[2,1,64], index: 9, kind: output, shape index: {2}]
  %10 = xla_tuple %s7, %s8, %s9
  %s11 = sld [smem:[#allocation0]]
  $region77: #{discriminator_forward.8} parent=0
    _
  %s13 = ssub.s32 1, %s11
  %s14 = scalar_select 0, %s13, %s11
  loop: start=0, step=1, limit=4
  $region2: #{discriminator_forward.8} parent=0 // loop_pre_header
    _
  $region3: #{discriminator_forward.8} parent=0 // loop_header
    %s16 = sphi 0, %s20
    %p17 = scmp.ge.s32.totalorder %s16, 4
    %s23 = sphi 0, %s35
    %s24 = sphi 0, %s31
    %s25 = sphi 0, %s23
    %s26 = sphi 0, %s24
    %s27 = sphi 0, %s25
    %s28 = sphi 0, %s26
    %s38 = sphi 0, %s40
    %s41 = sphi 0, %s38
    %s42 = sphi 0, %s41
    %s58 = sphi 0, %s42
    %s64 = sphi 0, %s66
    %s67 = sphi 0, %s64
    %s68 = sphi 0, %s67
    %s84 = sphi 0, %s68
    %s90 = sphi 0, %s92
    %s93 = sphi 0, %s90
    %s94 = sphi 0, %s93
    %s110 = sphi 0, %s94
    %s114 = sphi 0, %s114
    %s116 = sphi 0, %s114
    %s117 = sphi 0, %s116
    %s131 = sphi 0, %s117
    %s135 = sphi 0, %s135
    %s137 = sphi 0, %s135
    %s138 = sphi 0, %s137
    %s152 = sphi 0, %s138
    %s156 = sphi 0, %s156
    %s158 = sphi 0, %s156
    %s159 = sphi 0, %s158
    %s173 = sphi 0, %s159
    %s177 = sphi 0, %s177
    %s179 = sphi 0, %s177
    %s180 = sphi 0, %s179
    %s194 = sphi 0, %s180
    %s202 = sphi 0, %s204
    %s205 = sphi 0, %s202
    %s206 = sphi 0, %s205
    %s222 = sphi 0, %s206
    %s230 = sphi 0, %s232
    %s233 = sphi 0, %s230
    %s234 = sphi 0, %s233
    %s250 = sphi 0, %s234
    %s258 = sphi 0, %s260
    %s261 = sphi 0, %s258
    %s262 = sphi 0, %s261
    %s278 = sphi 0, %s262
  $region4: #{discriminator_forward.8} parent=0 // loop_header_branch
    %19 = sbr.rel (%p17) target = $region8
  $region5: #{discriminator_forward.8} parent=0 // loop_body
    %s21 = ssub.s32 %s16, 1
    %s22 = ssub.s32 %s16, 2
    %s29 = sadd.s32 1, %s24
    %p30 = scmp.ge.s32.totalorder %s29, 1
    %s31 = scalar_select %p30, 0, %s29
    %s32 = sadd.s32 1, %s23
    %s33 = scalar_select %p30, %s32, %s23
    %p34 = scmp.ge.s32.totalorder %s33, 2
    %s35 = scalar_select %p34, 0, %s33
    %s36 = ssub.s32 %s23, %s35
    %p37 = scmp.eq.s32.totalorder %s36, 0
    %s39 = sadd.s32 %s38, 1
    %s40 = scalar_select %p37, %s38, %s39
    %p43 = pneg %p37
    %p44 = scmp.eq.s32.totalorder %s16, 1
    %p45 = por %p43, %p44
    %p46 = scmp.ne.s32.totalorder %s38, %s41
    %p47 = scmp.eq.s32.totalorder %s16, 0
    %p48 = por %p46, %p47
    %p49 = scmp.ne.s32.totalorder %s38, %s41
    %p50 = scmp.eq.s32.totalorder %s21, 1
    %p51 = por %p49, %p50
    %p52 = scmp.ne.s32.totalorder %s41, %s42
    %p53 = scmp.eq.s32.totalorder %s21, 0
    %p54 = por %p52, %p53
    %p55 = scmp.ne.s32.totalorder %s41, %s42
    %p56 = scmp.eq.s32.totalorder %s22, 1
    %p57 = por %p55, %p56
    %p59 = scmp.ne.s32.totalorder %s42, %s58
    %p60 = scmp.eq.s32.totalorder %s22, 0
    %p61 = por %p59, %p60
    %s62 = ssub.s32 %s24, %s31
    %p63 = scmp.eq.s32.totalorder %s62, 0
    %s65 = sadd.s32 %s64, 1
    %s66 = scalar_select %p63, %s64, %s65
    %p69 = pneg %p63
    %p70 = scmp.eq.s32.totalorder %s16, 1
    %p71 = por %p69, %p70
    %p72 = scmp.ne.s32.totalorder %s64, %s67
    %p73 = scmp.eq.s32.totalorder %s16, 0
    %p74 = por %p72, %p73
    %p75 = scmp.ne.s32.totalorder %s64, %s67
    %p76 = scmp.eq.s32.totalorder %s21, 1
    %p77 = por %p75, %p76
    %p78 = scmp.ne.s32.totalorder %s67, %s68
    %p79 = scmp.eq.s32.totalorder %s21, 0
    %p80 = por %p78, %p79
    %p81 = scmp.ne.s32.totalorder %s67, %s68
    %p82 = scmp.eq.s32.totalorder %s22, 1
    %p83 = por %p81, %p82
    %p85 = scmp.ne.s32.totalorder %s68, %s84
    %p86 = scmp.eq.s32.totalorder %s22, 0
    %p87 = por %p85, %p86
    %s88 = ssub.s32 %s24, %s31
    %p89 = scmp.eq.s32.totalorder %s88, 0
    %s91 = sadd.s32 %s90, 1
    %s92 = scalar_select %p89, %s90, %s91
    %p95 = pneg %p89
    %p96 = scmp.eq.s32.totalorder %s16, 1
    %p97 = por %p95, %p96
    %p98 = scmp.ne.s32.totalorder %s90, %s93
    %p99 = scmp.eq.s32.totalorder %s16, 0
    %p100 = por %p98, %p99
    %p101 = scmp.ne.s32.totalorder %s90, %s93
    %p102 = scmp.eq.s32.totalorder %s21, 1
    %p103 = por %p101, %p102
    %p104 = scmp.ne.s32.totalorder %s93, %s94
    %p105 = scmp.eq.s32.totalorder %s21, 0
    %p106 = por %p104, %p105
    %p107 = scmp.ne.s32.totalorder %s93, %s94
    %p108 = scmp.eq.s32.totalorder %s22, 1
    %p109 = por %p107, %p108
    %p111 = scmp.ne.s32.totalorder %s94, %s110
    %p112 = scmp.eq.s32.totalorder %s22, 0
    %p113 = por %p111, %p112
    %s115 = sadd.s32 %s114, 1
    %p118 = scmp.eq.s32.totalorder %s16, 1
    %p119 = scmp.ne.s32.totalorder %s114, %s116
    %p120 = scmp.eq.s32.totalorder %s16, 0
    %p121 = por %p119, %p120
    %p122 = scmp.ne.s32.totalorder %s114, %s116
    %p123 = scmp.eq.s32.totalorder %s21, 1
    %p124 = por %p122, %p123
    %p125 = scmp.ne.s32.totalorder %s116, %s117
    %p126 = scmp.eq.s32.totalorder %s21, 0
    %p127 = por %p125, %p126
    %p128 = scmp.ne.s32.totalorder %s116, %s117
    %p129 = scmp.eq.s32.totalorder %s22, 1
    %p130 = por %p128, %p129
    %p132 = scmp.ne.s32.totalorder %s117, %s131
    %p133 = scmp.eq.s32.totalorder %s22, 0
    %p134 = por %p132, %p133
    %s136 = sadd.s32 %s135, 1
    %p139 = scmp.eq.s32.totalorder %s16, 1
    %p140 = scmp.ne.s32.totalorder %s135, %s137
    %p141 = scmp.eq.s32.totalorder %s16, 0
    %p142 = por %p140, %p141
    %p143 = scmp.ne.s32.totalorder %s135, %s137
    %p144 = scmp.eq.s32.totalorder %s21, 1
    %p145 = por %p143, %p144
    %p146 = scmp.ne.s32.totalorder %s137, %s138
    %p147 = scmp.eq.s32.totalorder %s21, 0
    %p148 = por %p146, %p147
    %p149 = scmp.ne.s32.totalorder %s137, %s138
    %p150 = scmp.eq.s32.totalorder %s22, 1
    %p151 = por %p149, %p150
    %p153 = scmp.ne.s32.totalorder %s138, %s152
    %p154 = scmp.eq.s32.totalorder %s22, 0
    %p155 = por %p153, %p154
    %s157 = sadd.s32 %s156, 1
    %p160 = scmp.eq.s32.totalorder %s16, 1
    %p161 = scmp.ne.s32.totalorder %s156, %s158
    %p162 = scmp.eq.s32.totalorder %s16, 0
    %p163 = por %p161, %p162
    %p164 = scmp.ne.s32.totalorder %s156, %s158
    %p165 = scmp.eq.s32.totalorder %s21, 1
    %p166 = por %p164, %p165
    %p167 = scmp.ne.s32.totalorder %s158, %s159
    %p168 = scmp.eq.s32.totalorder %s21, 0
    %p169 = por %p167, %p168
    %p170 = scmp.ne.s32.totalorder %s158, %s159
    %p171 = scmp.eq.s32.totalorder %s22, 1
    %p172 = por %p170, %p171
    %p174 = scmp.ne.s32.totalorder %s159, %s173
    %p175 = scmp.eq.s32.totalorder %s22, 0
    %p176 = por %p174, %p175
    %s178 = sadd.s32 %s177, 1
    %p181 = scmp.eq.s32.totalorder %s16, 1
    %p182 = scmp.ne.s32.totalorder %s177, %s179
    %p183 = scmp.eq.s32.totalorder %s16, 0
    %p184 = por %p182, %p183
    %p185 = scmp.ne.s32.totalorder %s177, %s179
    %p186 = scmp.eq.s32.totalorder %s21, 1
    %p187 = por %p185, %p186
    %p188 = scmp.ne.s32.totalorder %s179, %s180
    %p189 = scmp.eq.s32.totalorder %s21, 0
    %p190 = por %p188, %p189
    %p191 = scmp.ne.s32.totalorder %s179, %s180
    %p192 = scmp.eq.s32.totalorder %s22, 1
    %p193 = por %p191, %p192
    %p195 = scmp.ne.s32.totalorder %s180, %s194
    %p196 = scmp.eq.s32.totalorder %s22, 0
    %p197 = por %p195, %p196
    %s198 = ssub.s32 %s23, %s35
    %s199 = ssub.s32 %s24, %s31
    %s200 = sor.u32 %s198, %s199
    %p201 = scmp.eq.s32.totalorder %s200, 0
    %s203 = sadd.s32 %s202, 1
    %s204 = scalar_select %p201, %s202, %s203
    %p207 = pneg %p201
    %p208 = scmp.eq.s32.totalorder %s16, 1
    %p209 = por %p207, %p208
    %p210 = scmp.ne.s32.totalorder %s202, %s205
    %p211 = scmp.eq.s32.totalorder %s16, 0
    %p212 = por %p210, %p211
    %p213 = scmp.ne.s32.totalorder %s202, %s205
    %p214 = scmp.eq.s32.totalorder %s21, 1
    %p215 = por %p213, %p214
    %p216 = scmp.ne.s32.totalorder %s205, %s206
    %p217 = scmp.eq.s32.totalorder %s21, 0
    %p218 = por %p216, %p217
    %p219 = scmp.ne.s32.totalorder %s205, %s206
    %p220 = scmp.eq.s32.totalorder %s22, 1
    %p221 = por %p219, %p220
    %p223 = scmp.ne.s32.totalorder %s206, %s222
    %p224 = scmp.eq.s32.totalorder %s22, 0
    %p225 = por %p223, %p224
    %s226 = ssub.s32 %s23, %s35
    %s227 = ssub.s32 %s24, %s31
    %s228 = sor.u32 %s226, %s227
    %p229 = scmp.eq.s32.totalorder %s228, 0
    %s231 = sadd.s32 %s230, 1
    %s232 = scalar_select %p229, %s230, %s231
    %p235 = pneg %p229
    %p236 = scmp.eq.s32.totalorder %s16, 1
    %p237 = por %p235, %p236
    %p238 = scmp.ne.s32.totalorder %s230, %s233
    %p239 = scmp.eq.s32.totalorder %s16, 0
    %p240 = por %p238, %p239
    %p241 = scmp.ne.s32.totalorder %s230, %s233
    %p242 = scmp.eq.s32.totalorder %s21, 1
    %p243 = por %p241, %p242
    %p244 = scmp.ne.s32.totalorder %s233, %s234
    %p245 = scmp.eq.s32.totalorder %s21, 0
    %p246 = por %p244, %p245
    %p247 = scmp.ne.s32.totalorder %s233, %s234
    %p248 = scmp.eq.s32.totalorder %s22, 1
    %p249 = por %p247, %p248
    %p251 = scmp.ne.s32.totalorder %s234, %s250
    %p252 = scmp.eq.s32.totalorder %s22, 0
    %p253 = por %p251, %p252
    %s254 = ssub.s32 %s23, %s35
    %s255 = ssub.s32 %s24, %s31
    %s256 = sor.u32 %s254, %s255
    %p257 = scmp.eq.s32.totalorder %s256, 0
    %s259 = sadd.s32 %s258, 1
    %s260 = scalar_select %p257, %s258, %s259
    %p263 = pneg %p257
    %p264 = scmp.eq.s32.totalorder %s16, 1
    %p265 = por %p263, %p264
    %p266 = scmp.ne.s32.totalorder %s258, %s261
    %p267 = scmp.eq.s32.totalorder %s16, 0
    %p268 = por %p266, %p267
    %p269 = scmp.ne.s32.totalorder %s258, %s261
    %p270 = scmp.eq.s32.totalorder %s21, 1
    %p271 = por %p269, %p270
    %p272 = scmp.ne.s32.totalorder %s261, %s262
    %p273 = scmp.eq.s32.totalorder %s21, 0
    %p274 = por %p272, %p273
    %p275 = scmp.ne.s32.totalorder %s261, %s262
    %p276 = scmp.eq.s32.totalorder %s22, 1
    %p277 = por %p275, %p276
    %p279 = scmp.ne.s32.totalorder %s262, %s278
    %p280 = scmp.eq.s32.totalorder %s22, 0
    %p281 = por %p279, %p280
    %p282 = scmp.le.s32.totalorder 1, %s16
    %p283 = scmp.lt.s32.totalorder %s16, 3
    %p284 = pnand %p282, %p283
    %p285 = pneg %p284
    // Predicated region
    $region9: #{discriminator_forward.8} parent=5 // pred_check
      _
    $region10: #{discriminator_forward.8} parent=5 // pred_check_branch
      %287 = sbr.rel (%p284) target = $region12
    $region11: #{discriminator_forward.8} parent=5 // pred_region
      %s288 = ssub.s32 %s16, 1
      // Predicated region
      $region13: #{discriminator_forward.8} parent=11 // pred_check
        %p289 = pneg %p80
      $region14: #{discriminator_forward.8} parent=11 // pred_check_branch
        %291 = sbr.rel (%p289) target = $region16
      $region15: #{discriminator_forward.8} parent=11 // pred_region
        %p292 = scmp.lt.s32.totalorder %s26, 0
        %s293 = scalar_select %p292, %s26, 0
        %s294 = smul.addr %s293, 4
        %s295 = scalar_lea.vmem %s1, %s294
      $region16: #{discriminator_forward.8} parent=11 // pred_fallthru
        _
      // Predicated region
      $region17: #{discriminator_forward.8} parent=11 // pred_check
        %p296 = pneg %p106
      $region18: #{discriminator_forward.8} parent=11 // pred_check_branch
        %298 = sbr.rel (%p296) target = $region20
      $region19: #{discriminator_forward.8} parent=11 // pred_region
        %p299 = scmp.lt.s32.totalorder %s26, 0
        %s300 = scalar_select %p299, %s26, 0
        %s301 = scalar_lea.vmem %s2, %s300
      $region20: #{discriminator_forward.8} parent=11 // pred_fallthru
        _
      // Predicated region
      $region21: #{discriminator_forward.8} parent=11 // pred_check
        %p302 = pneg %p127
      $region22: #{discriminator_forward.8} parent=11 // pred_check_branch
        %304 = sbr.rel (%p302) target = $region24
      $region23: #{discriminator_forward.8} parent=11 // pred_region
        _
      $region24: #{discriminator_forward.8} parent=11 // pred_fallthru
        _
      // Predicated region
      $region25: #{discriminator_forward.8} parent=11 // pred_check
        %p305 = pneg %p148
      $region26: #{discriminator_forward.8} parent=11 // pred_check_branch
        %307 = sbr.rel (%p305) target = $region28
      $region27: #{discriminator_forward.8} parent=11 // pred_region
        _
      $region28: #{discriminator_forward.8} parent=11 // pred_fallthru
        _
      // Predicated region
      $region29: #{discriminator_forward.8} parent=11 // pred_check
        %p308 = pneg %p169
      $region30: #{discriminator_forward.8} parent=11 // pred_check_branch
        %310 = sbr.rel (%p308) target = $region32
      $region31: #{discriminator_forward.8} parent=11 // pred_region
        _
      $region32: #{discriminator_forward.8} parent=11 // pred_fallthru
        _
      // Predicated region
      $region33: #{discriminator_forward.8} parent=11 // pred_check
        %p311 = pneg %p190
      $region34: #{discriminator_forward.8} parent=11 // pred_check_branch
        %313 = sbr.rel (%p311) target = $region36
      $region35: #{discriminator_forward.8} parent=11 // pred_region
        _
      $region36: #{discriminator_forward.8} parent=11 // pred_fallthru
        _
    $region12: #{discriminator_forward.8} parent=5 // pred_fallthru
      _
    %p314 = scmp.lt.s32.totalorder %s16, 2
    // Predicated region
    $region37: #{discriminator_forward.8} parent=5 // pred_check
      %p315 = pneg %p314
    $region38: #{discriminator_forward.8} parent=5 // pred_check_branch
      %317 = sbr.rel (%p315) target = $region40
    $region39: #{discriminator_forward.8} parent=5 // pred_region
      // Predicated region
      $region41: #{discriminator_forward.8} parent=39 // pred_check
        %p318 = pneg %p48
      $region42: #{discriminator_forward.8} parent=39 // pred_check_branch
        %320 = sbr.rel (%p318) target = $region44
      $region43: #{discriminator_forward.8} parent=39 // pred_region
        %p321 = scmp.lt.s32.totalorder %s23, 1
        %s322 = scalar_select %p321, %s23, 1
        %s323 = smul.addr %s322, 7
        %s324 = smul.addr %s323, 4
        %s325 = scalar_lea.vmem %s0, %s324
      $region44: #{discriminator_forward.8} parent=39 // pred_fallthru
        _
    $region40: #{discriminator_forward.8} parent=5 // pred_fallthru
      _
    %p326 = scmp.le.s32.totalorder 1, %s16
    %p327 = scmp.lt.s32.totalorder %s16, 3
    %p328 = pnand %p326, %p327
    %p329 = pneg %p328
    // Predicated region
    $region45: #{discriminator_forward.8} parent=5 // pred_check
      _
    $region46: #{discriminator_forward.8} parent=5 // pred_check_branch
      %331 = sbr.rel (%p328) target = $region48
    $region47: #{discriminator_forward.8} parent=5 // pred_region
      %s332 = ssub.s32 %s16, 1
      %p333 = scmp.lt.s32.totalorder %s25, 1
      %s334 = scalar_select %p333, %s25, 1
      %s335 = smul.addr %s334, 7
      %s336 = smul.addr %s335, 4
      %s337 = scalar_lea.vmem %s0, %s336
      %p338 = pneg %p54
      %p339 = pneg %p51
      %p340 = scmp.lt.s32.totalorder %s26, 0
      %s341 = scalar_select %p340, %s26, 0
      %s342 = smul.addr %s341, 4
      %s343 = scalar_lea.vmem %s1, %s342
      %p344 = pneg %p80
      %p345 = pneg %p77
      %p346 = scmp.lt.s32.totalorder %s26, 0
      %s347 = scalar_select %p346, %s26, 0
      %s348 = scalar_lea.vmem %s2, %s347
      %p349 = pneg %p106
      %p350 = pneg %p103
      %p351 = pneg %p127
      %p352 = pneg %p124
      %p353 = pneg %p148
      %p354 = pneg %p145
      %p355 = pneg %p169
      %p356 = pneg %p166
      %p357 = pneg %p190
      %p358 = pneg %p187
      %p359 = pneg %p218
      %p360 = pneg %p215
      %p361 = scmp.lt.s32.totalorder %s25, 1
      %s362 = scalar_select %p361, %s25, 1
      %p363 = scmp.lt.s32.totalorder %s26, 0
      %s364 = scalar_select %p363, %s26, 0
      %s365 = smul.addr %s362, 4
      %s366 = sadd.s32 %s364, %s365
      %s367 = smul.addr %s366, 4
      %s368 = scalar_lea.vmem %s7, %s367
      %p369 = pneg %p246
      %p370 = pneg %p243
      %p371 = scmp.lt.s32.totalorder %s25, 1
      %s372 = scalar_select %p371, %s25, 1
      %p373 = scmp.lt.s32.totalorder %s26, 0
      %s374 = scalar_select %p373, %s26, 0
      %s375 = sadd.s32 %s374, %s372
      %s376 = scalar_lea.vmem %s8, %s375
      %p377 = pneg %p274
      %p378 = pneg %p271
      %p379 = scmp.lt.s32.totalorder %s25, 1
      %s380 = scalar_select %p379, %s25, 1
      %p381 = scmp.lt.s32.totalorder %s26, 0
      %s382 = scalar_select %p381, %s26, 0
      %s383 = sadd.s32 %s382, %s380
      %s384 = scalar_lea.vmem %s9, %s383
      %p385 = scmp.lt.s32.totalorder %s25, 1
      %s386 = scalar_select %p385, %s25, 1
      %s387 = smul.addr %s386, 7
      %s388 = smul.addr %s387, 4
      %s389 = scalar_lea.vmem %s0, %s388
      %p390 = scmp.lt.s32.totalorder %s26, 0
      %s391 = scalar_select %p390, %s26, 0
      %s392 = smul.addr %s391, 4
      %s393 = scalar_lea.vmem %s1, %s392
      %p394 = scmp.lt.s32.totalorder %s26, 0
      %s395 = scalar_select %p394, %s26, 0
      %s396 = scalar_lea.vmem %s2, %s395
      %p397 = scmp.lt.s32.totalorder %s25, 1
      %s398 = scalar_select %p397, %s25, 1
      %p399 = scmp.lt.s32.totalorder %s26, 0
      %s400 = scalar_select %p399, %s26, 0
      %s401 = smul.addr %s398, 4
      %s402 = sadd.s32 %s400, %s401
      %s403 = smul.addr %s402, 4
      %s404 = scalar_lea.vmem %s7, %s403
      %p405 = scmp.lt.s32.totalorder %s25, 1
      %s406 = scalar_select %p405, %s25, 1
      %p407 = scmp.lt.s32.totalorder %s26, 0
      %s408 = scalar_select %p407, %s26, 0
      %s409 = sadd.s32 %s408, %s406
      %s410 = scalar_lea.vmem %s8, %s409
      %p411 = scmp.lt.s32.totalorder %s25, 1
      %s412 = scalar_select %p411, %s25, 1
      %p413 = scmp.lt.s32.totalorder %s26, 0
      %s414 = scalar_select %p413, %s26, 0
      %s415 = sadd.s32 %s414, %s412
      %s416 = scalar_lea.vmem %s9, %s415
      %v418 = vld [vmem:[%s389] sm:$0xf]
      %v419 = vld [vmem:[%s389 + $0x4] sm:$0xf]
      %v420 = vld [vmem:[%s389 + $0x8] sm:$0xf]
      %v421 = vld [vmem:[%s389 + $0xc] sm:$0xf]
      %v422 = vld [vmem:[%s389 + $0x10] sm:$0xf]
      %v423 = vld [vmem:[%s389 + $0x14] sm:$0xf]
      %v424 = vld [vmem:[%s389 + $0x18] sm:$0xf]
      %v425 = vunpack.c.l.bf16 %v418
      %v426 = vunpack.c.l.bf16 %v419
      %v427 = vunpack.c.l.bf16 %v420
      %v428 = vunpack.c.l.bf16 %v421
      %v429 = vunpack.c.l.bf16 %v422
      %v430 = vunpack.c.l.bf16 %v423
      %v431 = vunpack.c.l.bf16 %v424
      %v432 = vld [vmem:[%s3] sm:$0x1]
      %v434 = vperm.slane %v432, 0
      %v436 = vmul.f32 %v425, %v434
      %v437 = vmul.f32 %v426, %v434
      %v438 = vmul.f32 %v427, %v434
      %v439 = vmul.f32 %v428, %v434
      %v440 = vmul.f32 %v429, %v434
      %v441 = vmul.f32 %v430, %v434
      %v442 = vmul.f32 %v431, %v434
      %v443 = vld [vmem:[%s4] sm:$0x1]
      %v445 = vperm.slane %v443, 0
      %v447 = vadd.f32 %v436, %v445
      %v448 = vadd.f32 %v437, %v445
      %v449 = vadd.f32 %v438, %v445
      %v450 = vadd.f32 %v439, %v445
      %v451 = vadd.f32 %v440, %v445
      %v452 = vadd.f32 %v441, %v445
      %v453 = vadd.f32 %v442, %v445
      %vm454 = vcmp.gt.f32.partialorder %v447, 0.0
      %vm455 = vcmp.gt.f32.partialorder %v448, 0.0
      %vm456 = vcmp.gt.f32.partialorder %v449, 0.0
      %vm457 = vcmp.gt.f32.partialorder %v450, 0.0
      %vm458 = vcmp.gt.f32.partialorder %v451, 0.0
      %vm459 = vcmp.gt.f32.partialorder %v452, 0.0
      %vm460 = vcmp.gt.f32.partialorder %v453, 0.0
      %v461 = vmul.f32 %v447, 0.2
      %v462 = vmul.f32 %v448, 0.2
      %v463 = vmul.f32 %v449, 0.2
      %v464 = vmul.f32 %v450, 0.2
      %v465 = vmul.f32 %v451, 0.2
      %v466 = vmul.f32 %v452, 0.2
      %v467 = vmul.f32 %v453, 0.2
      %v468 = vsel %vm454, %v447, %v461
      %v469 = vsel %vm455, %v448, %v462
      %v470 = vsel %vm456, %v449, %v463
      %v471 = vsel %vm457, %v450, %v464
      %v472 = vsel %vm458, %v451, %v465
      %v473 = vsel %vm459, %v452, %v466
      %v474 = vsel %vm460, %v453, %v467
      %v475 = vld [vmem:[%s5] sm:$0xff]
      %v476 = vld [vmem:[%s5 + $0x8] sm:$0xff]
      %v477 = vld [vmem:[%s5 + $0x10] sm:$0xff]
      %v478 = vld [vmem:[%s5 + $0x18] sm:$0xff]
      %v479 = vld [vmem:[%s5 + $0x20] sm:$0xff]
      %v480 = vld [vmem:[%s5 + $0x28] sm:$0xff]
      %v481 = vld [vmem:[%s5 + $0x30] sm:$0xff]
      %483 = vset.pattern.permute.xlu0 0
      %484 = vperm.xlu0 %483, %v475
      %v485 = vpop.permute.xlu0 %484
      %488 = vset.pattern.permute.xlu0 0
      %489 = vperm.xlu0 %488, %v476
      %v490 = vpop.permute.xlu0 %489
      %493 = vset.pattern.permute.xlu0 0
      %494 = vperm.xlu0 %493, %v477
      %v495 = vpop.permute.xlu0 %494
      %498 = vset.pattern.permute.xlu0 0
      %499 = vperm.xlu0 %498, %v478
      %v500 = vpop.permute.xlu0 %499
      %503 = vset.pattern.permute.xlu0 0
      %504 = vperm.xlu0 %503, %v479
      %v505 = vpop.permute.xlu0 %504
      %508 = vset.pattern.permute.xlu0 0
      %509 = vperm.xlu0 %508, %v480
      %v510 = vpop.permute.xlu0 %509
      %513 = vset.pattern.permute.xlu0 0
      %514 = vperm.xlu0 %513, %v481
      %v515 = vpop.permute.xlu0 %514
      %v517 = vmul.f32 %v468, %v485
      %v518 = vmul.f32 %v469, %v490
      %v519 = vmul.f32 %v470, %v495
      %v520 = vmul.f32 %v471, %v500
      %v521 = vmul.f32 %v472, %v505
      %v522 = vmul.f32 %v473, %v510
      %v523 = vmul.f32 %v474, %v515
      %v524 = vpack.c.bf16 %v517, %v517
      %v525 = vpack.c.bf16 %v518, %v518
      %v526 = vpack.c.bf16 %v519, %v519
      %v527 = vpack.c.bf16 %v520, %v520
      %v528 = vpack.c.bf16 %v521, %v521
      %v529 = vpack.c.bf16 %v522, %v522
      %v530 = vpack.c.bf16 %v523, %v523
      %vm531 = vcmask 257024
      %532 = vst.msk [vmem:[#allocation2] sm:$0xf] %vm531, %v524
      %533 = vst.msk [vmem:[#allocation2 + $0x4] sm:$0xf] %vm531, %v525
      %534 = vst.msk [vmem:[#allocation2 + $0x8] sm:$0xf] %vm531, %v526
      %535 = vst.msk [vmem:[#allocation2 + $0xc] sm:$0xf] %vm531, %v527
      %536 = vst.msk [vmem:[#allocation2 + $0x10] sm:$0xf] %vm531, %v528
      %537 = vst.msk [vmem:[#allocation2 + $0x14] sm:$0xf] %vm531, %v529
      %538 = vst.msk [vmem:[#allocation2 + $0x18] sm:$0xf] %vm531, %v530
      %v539 = vld [vmem:[#allocation2] sm:$0xf]
      %v540 = vld [vmem:[#allocation2 + $0x4] sm:$0xf]
      %v541 = vld [vmem:[#allocation2 + $0x8] sm:$0xf]
      %v542 = vld [vmem:[#allocation2 + $0xc] sm:$0x3]
      %v543 = vld [vmem:[%s393] sm:$0xf]
      %v544 = vld [vmem:[%s393 + $0x4] sm:$0xf]
      %v545 = vld [vmem:[%s393 + $0x8] sm:$0xf]
      %v546 = vld [vmem:[%s393 + $0xc] sm:$0xf]
      %v547 = vld [vmem:[#allocation2 + $0xc] sm:$0x7]
      %s548 = scalar_lea.vmem %s393, 16
      %v549 = vld [vmem:[%s548] sm:$0xf]
      %v550 = vld [vmem:[%s548 + $0x4] sm:$0xf]
      %v551 = vld [vmem:[%s548 + $0x8] sm:$0xf]
      %v552 = vld [vmem:[%s548 + $0xc] sm:$0xf]
      %v557 = vunpack.c.l.b16 %v539
      %v558 = vunpack.c.l.b16 %v540
      %v559 = vunpack.c.l.b16 %v541
      %v560 = vunpack.c.l.b16 %v547
      %v561 = vpack.c.b16 %v558, %v557
      %v562 = vpack.c.b16 %v560, %v559
      %vm563 = vsmask.f32 7424
      %v565 = vshrl.u32 %v561, 16
      %v567 = vshll.u32 %v561, 16
      %v569 = vrot.slane %v567, 1
      %v570 = vor.u32 %v565, %v569
      %v572 = vshll.u32 %v562, 16
      %v574 = vrot.slane %v572, 1
      %v575 = vsel %vm563, %v570, %v574
      %v576 = vshrl.u32 %v562, 16
      %v578 = vor.u32 %v576, %v574
      %v583 = vunpack.c.l.b16 %v549
      %v584 = vunpack.c.l.b16 %v550
      %v585 = vunpack.c.l.b16 %v551
      %v586 = vunpack.c.l.b16 %v552
      %v587 = vpack.c.b16 %v584, %v583
      %v588 = vpack.c.b16 %v586, %v585
      %vm591 = vcmask 261120
      %v593 = vsel %vm591, %v575, 0
      %v596 = vsel %vm591, %v578, 0
      %598 = vmatpush.bf16.msra.mxu0 0
      %599 = vmatpush.bf16.msra.mxu0 0
      %600 = vmatpush.bf16.msra.mxu0 0
      %601 = vmatpush.bf16.msra.mxu0 0
      %602 = vmatpush.bf16.msra.mxu0 0
      %603 = vmatpush.bf16.msra.mxu0 0
      %604 = vmatpush.bf16.msra.mxu0 %v588
      %605 = vmatpush.bf16.msra.mxu0 %v587
      %606 = vmatmul.bf16.gmra.mxu0 %v593
      %v607 = vpop.f32.mrf.mxu0
      %v608 = vadd.f32 0.0, %v607
      %v609 = vpop.f32.mrf.mxu0
      %v610 = vadd.f32 0.0, %v609
      %611 = vmatmul.bf16.gmra.mxu0 %v596
      %v612 = vpop.f32.mrf.mxu0
      %v613 = vadd.f32 0.0, %v612
      %v614 = vpop.f32.mrf.mxu0
      %v615 = vadd.f32 0.0, %v614
      %616 = vdwg.mxu0
      %v618 = vunpack.c.l.b16 %v542
      %v619 = vpack.c.b16 %v618, %v559
      %v624 = vunpack.c.l.b16 %v543
      %v625 = vunpack.c.l.b16 %v544
      %v626 = vunpack.c.l.b16 %v545
      %v627 = vunpack.c.l.b16 %v546
      %v628 = vpack.c.b16 %v625, %v624
      %v629 = vpack.c.b16 %v627, %v626
      %v632 = vsel %vm591, %v561, 0
      %v635 = vsel %vm591, %v619, 0
      %637 = vmatpush.bf16.msra.mxu0 0
      %638 = vmatpush.bf16.msra.mxu0 0
      %639 = vmatpush.bf16.msra.mxu0 0
      %640 = vmatpush.bf16.msra.mxu0 0
      %641 = vmatpush.bf16.msra.mxu0 0
      %642 = vmatpush.bf16.msra.mxu0 0
      %643 = vmatpush.bf16.msra.mxu0 %v629
      %644 = vmatpush.bf16.msra.mxu0 %v628
      %645 = vmatmul.bf16.gmra.mxu0 %v632
      %v646 = vpop.f32.mrf.mxu0
      %v647 = vadd.f32 %v608, %v646
      %v648 = vpop.f32.mrf.mxu0
      %v649 = vadd.f32 %v610, %v648
      %650 = vmatmul.bf16.gmra.mxu0 %v635
      %v651 = vpop.f32.mrf.mxu0
      %v652 = vadd.f32 %v613, %v651
      %v653 = vpop.f32.mrf.mxu0
      %v654 = vadd.f32 %v615, %v653
      %655 = vdwg.mxu0
      %v656 = vld [vmem:[#allocation2] sm:$0xe]
      %s657 = scalar_lea.vmem %s393, 32
      %v658 = vld [vmem:[%s657] sm:$0xf]
      %v659 = vld [vmem:[%s657 + $0x4] sm:$0xf]
      %v660 = vld [vmem:[%s657 + $0x8] sm:$0xf]
      %v661 = vld [vmem:[%s657 + $0xc] sm:$0xf]
      %v663 = vunpack.c.l.b16 %v656
      %v664 = vpack.c.b16 %v558, %v663
      %vm665 = vcmask 1046528
      %v666 = vrot.slane %v664, 1
      %v667 = vrot.slane %v562, 1
      %v668 = vsel %vm665, %v666, %v667
      %v673 = vunpack.c.l.b16 %v658
      %v674 = vunpack.c.l.b16 %v659
      %v675 = vunpack.c.l.b16 %v660
      %v676 = vunpack.c.l.b16 %v661
      %v677 = vpack.c.b16 %v674, %v673
      %v678 = vpack.c.b16 %v676, %v675
      %v682 = vsel %vm591, %v668, 0
      %v685 = vsel %vm591, %v667, 0
      %687 = vmatpush.bf16.msra.mxu0 0
      %688 = vmatpush.bf16.msra.mxu0 0
      %689 = vmatpush.bf16.msra.mxu0 0
      %690 = vmatpush.bf16.msra.mxu0 0
      %691 = vmatpush.bf16.msra.mxu0 0
      %692 = vmatpush.bf16.msra.mxu0 0
      %693 = vmatpush.bf16.msra.mxu0 %v678
      %694 = vmatpush.bf16.msra.mxu0 %v677
      %695 = vmatmul.bf16.gmra.mxu0 %v682
      %v696 = vpop.f32.mrf.mxu0
      %v697 = vadd.f32 0.0, %v696
      %v698 = vpop.f32.mrf.mxu0
      %v699 = vadd.f32 0.0, %v698
      %700 = vmatmul.bf16.gmra.mxu0 %v685
      %v701 = vpop.f32.mrf.mxu0
      %v702 = vadd.f32 0.0, %v701
      %v703 = vpop.f32.mrf.mxu0
      %v704 = vadd.f32 0.0, %v703
      %705 = vdwg.mxu0
      %v706 = vadd.f32 %v647, %v697
      %v707 = vadd.f32 %v649, %v699
      %v708 = vadd.f32 %v652, %v702
      %v709 = vadd.f32 %v654, %v704
      %v710 = vld [vmem:[#allocation2 + $0xc] sm:$0xf]
      %s711 = scalar_lea.vmem %s393, 48
      %v712 = vld [vmem:[%s711] sm:$0xf]
      %v713 = vld [vmem:[%s711 + $0x4] sm:$0xf]
      %v714 = vld [vmem:[%s711 + $0x8] sm:$0xf]
      %v715 = vld [vmem:[%s711 + $0xc] sm:$0xf]
      %v717 = vunpack.c.l.b16 %v710
      %v718 = vpack.c.b16 %v717, %v559
      %vm719 = vsmask.f32 6400
      %v721 = vshrl.u32 %v664, 16
      %v723 = vrot.slane %v721, 1
      %v724 = vshll.u32 %v664, 16
      %v726 = vrot.slane %v724, 2
      %v727 = vor.u32 %v723, %v726
      %v729 = vshrl.u32 %v718, 16
      %v731 = vrot.slane %v729, 1
      %v732 = vshll.u32 %v718, 16
      %v734 = vrot.slane %v732, 2
      %v735 = vor.u32 %v731, %v734
      %v736 = vsel %vm719, %v727, %v735
      %v741 = vunpack.c.l.b16 %v712
      %v742 = vunpack.c.l.b16 %v713
      %v743 = vunpack.c.l.b16 %v714
      %v744 = vunpack.c.l.b16 %v715
      %v745 = vpack.c.b16 %v742, %v741
      %v746 = vpack.c.b16 %v744, %v743
      %v750 = vsel %vm591, %v736, 0
      %v753 = vsel %vm591, %v735, 0
      %755 = vmatpush.bf16.msra.mxu0 0
      %756 = vmatpush.bf16.msra.mxu0 0
      %757 = vmatpush.bf16.msra.mxu0 0
      %758 = vmatpush.bf16.msra.mxu0 0
      %759 = vmatpush.bf16.msra.mxu0 0
      %760 = vmatpush.bf16.msra.mxu0 0
      %761 = vmatpush.bf16.msra.mxu0 %v746
      %762 = vmatpush.bf16.msra.mxu0 %v745
      %763 = vmatmul.bf16.gmra.mxu0 %v750
      %v764 = vpop.f32.mrf.mxu0
      %v765 = vadd.f32 0.0, %v764
      %v766 = vpop.f32.mrf.mxu0
      %v767 = vadd.f32 0.0, %v766
      %768 = vmatmul.bf16.gmra.mxu0 %v753
      %v769 = vpop.f32.mrf.mxu0
      %v770 = vadd.f32 0.0, %v769
      %v771 = vpop.f32.mrf.mxu0
      %v772 = vadd.f32 0.0, %v771
      %773 = vdwg.mxu0
      %v774 = vadd.f32 %v706, %v765
      %v775 = vadd.f32 %v707, %v767
      %v776 = vadd.f32 %v708, %v770
      %v777 = vadd.f32 %v709, %v772
      %v778 = vld [vmem:[#allocation2] sm:$0x8]
      %v779 = vld [vmem:[#allocation2 + $0x4] sm:$0xf]
      %v780 = vld [vmem:[#allocation2 + $0x8] sm:$0xf]
      %v781 = vld [vmem:[#allocation2 + $0xc] sm:$0xf]
      %v782 = vld [vmem:[#allocation2 + $0x10] sm:$0x3]
      %s783 = scalar_lea.vmem %s393, 64
      %v784 = vld [vmem:[%s783] sm:$0xf]
      %v785 = vld [vmem:[%s783 + $0x4] sm:$0xf]
      %v786 = vld [vmem:[%s783 + $0x8] sm:$0xf]
      %v787 = vld [vmem:[%s783 + $0xc] sm:$0xf]
      %v793 = vunpack.c.l.b16 %v778
      %v794 = vunpack.c.l.b16 %v779
      %v795 = vunpack.c.l.b16 %v780
      %v796 = vunpack.c.l.b16 %v781
      %v797 = vunpack.c.l.b16 %v782
      %v798 = vpack.c.b16 %v794, %v793
      %v799 = vpack.c.b16 %v796, %v795
      %v800 = vpack.c.b16 %v797, %v797
      %vm801 = vsmask.f32 4352
      %v803 = vshrl.u32 %v798, 16
      %v805 = vrot.slane %v803, 3
      %v806 = vshll.u32 %v798, 16
      %v808 = vrot.slane %v806, 4
      %v809 = vor.u32 %v805, %v808
      %v811 = vshrl.u32 %v799, 16
      %v813 = vrot.slane %v811, 3
      %v814 = vshll.u32 %v799, 16
      %v816 = vrot.slane %v814, 4
      %v817 = vor.u32 %v813, %v816
      %v818 = vsel %vm801, %v809, %v817
      %v820 = vshrl.u32 %v800, 16
      %v822 = vrot.slane %v820, 3
      %v823 = vshll.u32 %v800, 16
      %v825 = vrot.slane %v823, 4
      %v826 = vor.u32 %v822, %v825
      %v827 = vsel %vm801, %v817, %v826
      %v832 = vunpack.c.l.b16 %v784
      %v833 = vunpack.c.l.b16 %v785
      %v834 = vunpack.c.l.b16 %v786
      %v835 = vunpack.c.l.b16 %v787
      %v836 = vpack.c.b16 %v833, %v832
      %v837 = vpack.c.b16 %v835, %v834
      %v841 = vsel %vm591, %v818, 0
      %v844 = vsel %vm591, %v827, 0
      %846 = vmatpush.bf16.msra.mxu0 0
      %847 = vmatpush.bf16.msra.mxu0 0
      %848 = vmatpush.bf16.msra.mxu0 0
      %849 = vmatpush.bf16.msra.mxu0 0
      %850 = vmatpush.bf16.msra.mxu0 0
      %851 = vmatpush.bf16.msra.mxu0 0
      %852 = vmatpush.bf16.msra.mxu0 %v837
      %853 = vmatpush.bf16.msra.mxu0 %v836
      %854 = vmatmul.bf16.gmra.mxu0 %v841
      %v855 = vpop.f32.mrf.mxu0
      %v856 = vadd.f32 0.0, %v855
      %v857 = vpop.f32.mrf.mxu0
      %v858 = vadd.f32 0.0, %v857
      %859 = vmatmul.bf16.gmra.mxu0 %v844
      %v860 = vpop.f32.mrf.mxu0
      %v861 = vadd.f32 0.0, %v860
      %v862 = vpop.f32.mrf.mxu0
      %v863 = vadd.f32 0.0, %v862
      %864 = vdwg.mxu0
      %v865 = vadd.f32 %v774, %v856
      %v866 = vadd.f32 %v775, %v858
      %v867 = vadd.f32 %v776, %v861
      %v868 = vadd.f32 %v777, %v863
      %s869 = scalar_lea.vmem %s393, 80
      %v870 = vld [vmem:[%s869] sm:$0xf]
      %v871 = vld [vmem:[%s869 + $0x4] sm:$0xf]
      %v872 = vld [vmem:[%s869 + $0x8] sm:$0xf]
      %v873 = vld [vmem:[%s869 + $0xc] sm:$0xf]
      %v874 = vpack.c.b16 %v795, %v794
      %v875 = vpack.c.b16 %v797, %v796
      %v880 = vunpack.c.l.b16 %v870
      %v881 = vunpack.c.l.b16 %v871
      %v882 = vunpack.c.l.b16 %v872
      %v883 = vunpack.c.l.b16 %v873
      %v884 = vpack.c.b16 %v881, %v880
      %v885 = vpack.c.b16 %v883, %v882
      %v889 = vsel %vm591, %v874, 0
      %v892 = vsel %vm591, %v875, 0
      %894 = vmatpush.bf16.msra.mxu0 0
      %895 = vmatpush.bf16.msra.mxu0 0
      %896 = vmatpush.bf16.msra.mxu0 0
      %897 = vmatpush.bf16.msra.mxu0 0
      %898 = vmatpush.bf16.msra.mxu0 0
      %899 = vmatpush.bf16.msra.mxu0 0
      %900 = vmatpush.bf16.msra.mxu0 %v885
      %901 = vmatpush.bf16.msra.mxu0 %v884
      %902 = vmatmul.bf16.gmra.mxu0 %v889
      %v903 = vpop.f32.mrf.mxu0
      %v904 = vadd.f32 0.0, %v903
      %v905 = vpop.f32.mrf.mxu0
      %v906 = vadd.f32 0.0, %v905
      %907 = vmatmul.bf16.gmra.mxu0 %v892
      %v908 = vpop.f32.mrf.mxu0
      %v909 = vadd.f32 0.0, %v908
      %v910 = vpop.f32.mrf.mxu0
      %v911 = vadd.f32 0.0, %v910
      %912 = vdwg.mxu0
      %v913 = vadd.f32 %v865, %v904
      %v914 = vadd.f32 %v866, %v906
      %v915 = vadd.f32 %v867, %v909
      %v916 = vadd.f32 %v868, %v911
      %v917 = vld [vmem:[#allocation2 + $0x10] sm:$0x7]
      %s918 = scalar_lea.vmem %s393, 96
      %v919 = vld [vmem:[%s918] sm:$0xf]
      %v920 = vld [vmem:[%s918 + $0x4] sm:$0xf]
      %v921 = vld [vmem:[%s918 + $0x8] sm:$0xf]
      %v922 = vld [vmem:[%s918 + $0xc] sm:$0xf]
      %v924 = vunpack.c.l.b16 %v917
      %v925 = vpack.c.b16 %v924, %v796
      %v926 = vshrl.u32 %v874, 16
      %v928 = vshll.u32 %v874, 16
      %v930 = vrot.slane %v928, 1
      %v931 = vor.u32 %v926, %v930
      %v933 = vshll.u32 %v925, 16
      %v935 = vrot.slane %v933, 1
      %v936 = vsel %vm563, %v931, %v935
      %v937 = vshrl.u32 %v925, 16
      %v939 = vor.u32 %v937, %v935
      %v944 = vunpack.c.l.b16 %v919
      %v945 = vunpack.c.l.b16 %v920
      %v946 = vunpack.c.l.b16 %v921
      %v947 = vunpack.c.l.b16 %v922
      %v948 = vpack.c.b16 %v945, %v944
      %v949 = vpack.c.b16 %v947, %v946
      %v953 = vsel %vm591, %v936, 0
      %v956 = vsel %vm591, %v939, 0
      %958 = vmatpush.bf16.msra.mxu0 0
      %959 = vmatpush.bf16.msra.mxu0 0
      %960 = vmatpush.bf16.msra.mxu0 0
      %961 = vmatpush.bf16.msra.mxu0 0
      %962 = vmatpush.bf16.msra.mxu0 0
      %963 = vmatpush.bf16.msra.mxu0 0
      %964 = vmatpush.bf16.msra.mxu0 %v949
      %965 = vmatpush.bf16.msra.mxu0 %v948
      %966 = vmatmul.bf16.gmra.mxu0 %v953
      %v967 = vpop.f32.mrf.mxu0
      %v968 = vadd.f32 0.0, %v967
      %v969 = vpop.f32.mrf.mxu0
      %v970 = vadd.f32 0.0, %v969
      %971 = vmatmul.bf16.gmra.mxu0 %v956
      %v972 = vpop.f32.mrf.mxu0
      %v973 = vadd.f32 0.0, %v972
      %v974 = vpop.f32.mrf.mxu0
      %v975 = vadd.f32 0.0, %v974
      %976 = vdwg.mxu0
      %v977 = vadd.f32 %v913, %v968
      %v978 = vadd.f32 %v914, %v970
      %v979 = vadd.f32 %v915, %v973
      %v980 = vadd.f32 %v916, %v975
      %v981 = vld [vmem:[#allocation2 + $0x4] sm:$0xe]
      %s982 = scalar_lea.vmem %s393, 112
      %v983 = vld [vmem:[%s982] sm:$0xf]
      %v984 = vld [vmem:[%s982 + $0x4] sm:$0xf]
      %v985 = vld [vmem:[%s982 + $0x8] sm:$0xf]
      %v986 = vld [vmem:[%s982 + $0xc] sm:$0xf]
      %v988 = vunpack.c.l.b16 %v981
      %v989 = vpack.c.b16 %v795, %v988
      %v990 = vrot.slane %v989, 1
      %v991 = vrot.slane %v925, 1
      %v992 = vsel %vm665, %v990, %v991
      %v997 = vunpack.c.l.b16 %v983
      %v998 = vunpack.c.l.b16 %v984
      %v999 = vunpack.c.l.b16 %v985
      %v1000 = vunpack.c.l.b16 %v986
      %v1001 = vpack.c.b16 %v998, %v997
      %v1002 = vpack.c.b16 %v1000, %v999
      %v1006 = vsel %vm591, %v992, 0
      %v1009 = vsel %vm591, %v991, 0
      %1011 = vmatpush.bf16.msra.mxu0 0
      %1012 = vmatpush.bf16.msra.mxu0 0
      %1013 = vmatpush.bf16.msra.mxu0 0
      %1014 = vmatpush.bf16.msra.mxu0 0
      %1015 = vmatpush.bf16.msra.mxu0 0
      %1016 = vmatpush.bf16.msra.mxu0 0
      %1017 = vmatpush.bf16.msra.mxu0 %v1002
      %1018 = vmatpush.bf16.msra.mxu0 %v1001
      %1019 = vmatmul.bf16.gmra.mxu0 %v1006
      %v1020 = vpop.f32.mrf.mxu0
      %v1021 = vadd.f32 0.0, %v1020
      %v1022 = vpop.f32.mrf.mxu0
      %v1023 = vadd.f32 0.0, %v1022
      %1024 = vmatmul.bf16.gmra.mxu0 %v1009
      %v1025 = vpop.f32.mrf.mxu0
      %v1026 = vadd.f32 0.0, %v1025
      %v1027 = vpop.f32.mrf.mxu0
      %v1028 = vadd.f32 0.0, %v1027
      %1029 = vdwg.mxu0
      %v1030 = vadd.f32 %v977, %v1021
      %v1031 = vadd.f32 %v978, %v1023
      %v1032 = vadd.f32 %v979, %v1026
      %v1033 = vadd.f32 %v980, %v1028
      %v1034 = vld [vmem:[#allocation2 + $0x4] sm:$0x8]
      %v1035 = vld [vmem:[#allocation2 + $0x8] sm:$0xf]
      %v1036 = vld [vmem:[#allocation2 + $0xc] sm:$0xf]
      %v1037 = vld [vmem:[#allocation2 + $0x10] sm:$0xf]
      %v1038 = vld [vmem:[#allocation2 + $0x14] sm:$0x1]
      %s1039 = scalar_lea.vmem %s393, 128
      %v1040 = vld [vmem:[%s1039] sm:$0xf]
      %v1041 = vld [vmem:[%s1039 + $0x4] sm:$0xf]
      %v1042 = vld [vmem:[%s1039 + $0x8] sm:$0xf]
      %v1043 = vld [vmem:[%s1039 + $0xc] sm:$0xf]
      %v1049 = vunpack.c.l.b16 %v1034
      %v1050 = vunpack.c.l.b16 %v1035
      %v1051 = vunpack.c.l.b16 %v1036
      %v1052 = vunpack.c.l.b16 %v1037
      %v1053 = vunpack.c.l.b16 %v1038
      %v1054 = vpack.c.b16 %v1050, %v1049
      %v1055 = vpack.c.b16 %v1052, %v1051
      %v1056 = vpack.c.b16 %v1053, %v1053
      %vm1057 = vcmask 1044480
      %v1058 = vrot.slane %v1054, 3
      %v1059 = vrot.slane %v1055, 3
      %v1060 = vsel %vm1057, %v1058, %v1059
      %v1061 = vrot.slane %v1056, 3
      %v1062 = vsel %vm1057, %v1059, %v1061
      %v1067 = vunpack.c.l.b16 %v1040
      %v1068 = vunpack.c.l.b16 %v1041
      %v1069 = vunpack.c.l.b16 %v1042
      %v1070 = vunpack.c.l.b16 %v1043
      %v1071 = vpack.c.b16 %v1068, %v1067
      %v1072 = vpack.c.b16 %v1070, %v1069
      %v1076 = vsel %vm591, %v1060, 0
      %v1079 = vsel %vm591, %v1062, 0
      %1081 = vmatpush.bf16.msra.mxu0 0
      %1082 = vmatpush.bf16.msra.mxu0 0
      %1083 = vmatpush.bf16.msra.mxu0 0
      %1084 = vmatpush.bf16.msra.mxu0 0
      %1085 = vmatpush.bf16.msra.mxu0 0
      %1086 = vmatpush.bf16.msra.mxu0 0
      %1087 = vmatpush.bf16.msra.mxu0 %v1072
      %1088 = vmatpush.bf16.msra.mxu0 %v1071
      %1089 = vmatmul.bf16.gmra.mxu0 %v1076
      %v1090 = vpop.f32.mrf.mxu0
      %v1091 = vadd.f32 0.0, %v1090
      %v1092 = vpop.f32.mrf.mxu0
      %v1093 = vadd.f32 0.0, %v1092
      %1094 = vmatmul.bf16.gmra.mxu0 %v1079
      %v1095 = vpop.f32.mrf.mxu0
      %v1096 = vadd.f32 0.0, %v1095
      %v1097 = vpop.f32.mrf.mxu0
      %v1098 = vadd.f32 0.0, %v1097
      %1099 = vdwg.mxu0
      %v1100 = vadd.f32 %v1030, %v1091
      %v1101 = vadd.f32 %v1031, %v1093
      %v1102 = vadd.f32 %v1032, %v1096
      %v1103 = vadd.f32 %v1033, %v1098
      %v1104 = vld [vmem:[#allocation2 + $0x14] sm:$0x3]
      %s1105 = scalar_lea.vmem %s393, 144
      %v1106 = vld [vmem:[%s1105] sm:$0xf]
      %v1107 = vld [vmem:[%s1105 + $0x4] sm:$0xf]
      %v1108 = vld [vmem:[%s1105 + $0x8] sm:$0xf]
      %v1109 = vld [vmem:[%s1105 + $0xc] sm:$0xf]
      %v1111 = vunpack.c.l.b16 %v1104
      %v1112 = vpack.c.b16 %v1111, %v1111
      %v1114 = vshrl.u32 %v1054, 16
      %v1116 = vrot.slane %v1114, 3
      %v1117 = vshll.u32 %v1054, 16
      %v1119 = vrot.slane %v1117, 4
      %v1120 = vor.u32 %v1116, %v1119
      %v1122 = vshrl.u32 %v1055, 16
      %v1124 = vrot.slane %v1122, 3
      %v1125 = vshll.u32 %v1055, 16
      %v1127 = vrot.slane %v1125, 4
      %v1128 = vor.u32 %v1124, %v1127
      %v1129 = vsel %vm801, %v1120, %v1128
      %v1131 = vshrl.u32 %v1112, 16
      %v1133 = vrot.slane %v1131, 3
      %v1134 = vshll.u32 %v1112, 16
      %v1136 = vrot.slane %v1134, 4
      %v1137 = vor.u32 %v1133, %v1136
      %v1138 = vsel %vm801, %v1128, %v1137
      %v1143 = vunpack.c.l.b16 %v1106
      %v1144 = vunpack.c.l.b16 %v1107
      %v1145 = vunpack.c.l.b16 %v1108
      %v1146 = vunpack.c.l.b16 %v1109
      %v1147 = vpack.c.b16 %v1144, %v1143
      %v1148 = vpack.c.b16 %v1146, %v1145
      %v1152 = vsel %vm591, %v1129, 0
      %v1155 = vsel %vm591, %v1138, 0
      %1157 = vmatpush.bf16.msra.mxu0 0
      %1158 = vmatpush.bf16.msra.mxu0 0
      %1159 = vmatpush.bf16.msra.mxu0 0
      %1160 = vmatpush.bf16.msra.mxu0 0
      %1161 = vmatpush.bf16.msra.mxu0 0
      %1162 = vmatpush.bf16.msra.mxu0 0
      %1163 = vmatpush.bf16.msra.mxu0 %v1148
      %1164 = vmatpush.bf16.msra.mxu0 %v1147
      %1165 = vmatmul.bf16.gmra.mxu0 %v1152
      %v1166 = vpop.f32.mrf.mxu0
      %v1167 = vadd.f32 0.0, %v1166
      %v1168 = vpop.f32.mrf.mxu0
      %v1169 = vadd.f32 0.0, %v1168
      %1170 = vmatmul.bf16.gmra.mxu0 %v1155
      %v1171 = vpop.f32.mrf.mxu0
      %v1172 = vadd.f32 0.0, %v1171
      %v1173 = vpop.f32.mrf.mxu0
      %v1174 = vadd.f32 0.0, %v1173
      %1175 = vdwg.mxu0
      %v1176 = vadd.f32 %v1100, %v1167
      %v1177 = vadd.f32 %v1101, %v1169
      %v1178 = vadd.f32 %v1102, %v1172
      %v1179 = vadd.f32 %v1103, %v1174
      %s1180 = scalar_lea.vmem %s393, 160
      %v1181 = vld [vmem:[%s1180] sm:$0xf]
      %v1182 = vld [vmem:[%s1180 + $0x4] sm:$0xf]
      %v1183 = vld [vmem:[%s1180 + $0x8] sm:$0xf]
      %v1184 = vld [vmem:[%s1180 + $0xc] sm:$0xf]
      %v1185 = vpack.c.b16 %v1051, %v1050
      %v1186 = vpack.c.b16 %v1111, %v1052
      %v1191 = vunpack.c.l.b16 %v1181
      %v1192 = vunpack.c.l.b16 %v1182
      %v1193 = vunpack.c.l.b16 %v1183
      %v1194 = vunpack.c.l.b16 %v1184
      %v1195 = vpack.c.b16 %v1192, %v1191
      %v1196 = vpack.c.b16 %v1194, %v1193
      %v1200 = vsel %vm591, %v1185, 0
      %v1203 = vsel %vm591, %v1186, 0
      %1205 = vmatpush.bf16.msra.mxu0 0
      %1206 = vmatpush.bf16.msra.mxu0 0
      %1207 = vmatpush.bf16.msra.mxu0 0
      %1208 = vmatpush.bf16.msra.mxu0 0
      %1209 = vmatpush.bf16.msra.mxu0 0
      %1210 = vmatpush.bf16.msra.mxu0 0
      %1211 = vmatpush.bf16.msra.mxu0 %v1196
      %1212 = vmatpush.bf16.msra.mxu0 %v1195
      %1213 = vmatmul.bf16.gmra.mxu0 %v1200
      %v1214 = vpop.f32.mrf.mxu0
      %v1215 = vadd.f32 0.0, %v1214
      %v1216 = vpop.f32.mrf.mxu0
      %v1217 = vadd.f32 0.0, %v1216
      %1218 = vmatmul.bf16.gmra.mxu0 %v1203
      %v1219 = vpop.f32.mrf.mxu0
      %v1220 = vadd.f32 0.0, %v1219
      %v1221 = vpop.f32.mrf.mxu0
      %v1222 = vadd.f32 0.0, %v1221
      %1223 = vdwg.mxu0
      %v1224 = vadd.f32 %v1176, %v1215
      %v1225 = vadd.f32 %v1177, %v1217
      %v1226 = vadd.f32 %v1178, %v1220
      %v1227 = vadd.f32 %v1179, %v1222
      %v1228 = vld [vmem:[#allocation2 + $0x14] sm:$0x7]
      %s1229 = scalar_lea.vmem %s393, 176
      %v1230 = vld [vmem:[%s1229] sm:$0xf]
      %v1231 = vld [vmem:[%s1229 + $0x4] sm:$0xf]
      %v1232 = vld [vmem:[%s1229 + $0x8] sm:$0xf]
      %v1233 = vld [vmem:[%s1229 + $0xc] sm:$0xf]
      %v1235 = vunpack.c.l.b16 %v1228
      %v1236 = vpack.c.b16 %v1235, %v1052
      %v1237 = vshrl.u32 %v1185, 16
      %v1239 = vshll.u32 %v1185, 16
      %v1241 = vrot.slane %v1239, 1
      %v1242 = vor.u32 %v1237, %v1241
      %v1244 = vshll.u32 %v1236, 16
      %v1246 = vrot.slane %v1244, 1
      %v1247 = vsel %vm563, %v1242, %v1246
      %v1248 = vshrl.u32 %v1236, 16
      %v1250 = vor.u32 %v1248, %v1246
      %v1255 = vunpack.c.l.b16 %v1230
      %v1256 = vunpack.c.l.b16 %v1231
      %v1257 = vunpack.c.l.b16 %v1232
      %v1258 = vunpack.c.l.b16 %v1233
      %v1259 = vpack.c.b16 %v1256, %v1255
      %v1260 = vpack.c.b16 %v1258, %v1257
      %v1264 = vsel %vm591, %v1247, 0
      %v1267 = vsel %vm591, %v1250, 0
      %1269 = vmatpush.bf16.msra.mxu0 0
      %1270 = vmatpush.bf16.msra.mxu0 0
      %1271 = vmatpush.bf16.msra.mxu0 0
      %1272 = vmatpush.bf16.msra.mxu0 0
      %1273 = vmatpush.bf16.msra.mxu0 0
      %1274 = vmatpush.bf16.msra.mxu0 0
      %1275 = vmatpush.bf16.msra.mxu0 %v1260
      %1276 = vmatpush.bf16.msra.mxu0 %v1259
      %1277 = vmatmul.bf16.gmra.mxu0 %v1264
      %v1278 = vpop.f32.mrf.mxu0
      %v1279 = vadd.f32 0.0, %v1278
      %v1280 = vpop.f32.mrf.mxu0
      %v1281 = vadd.f32 0.0, %v1280
      %1282 = vmatmul.bf16.gmra.mxu0 %v1267
      %v1283 = vpop.f32.mrf.mxu0
      %v1284 = vadd.f32 0.0, %v1283
      %v1285 = vpop.f32.mrf.mxu0
      %v1286 = vadd.f32 0.0, %v1285
      %1287 = vdwg.mxu0
      %v1288 = vadd.f32 %v1224, %v1279
      %v1289 = vadd.f32 %v1225, %v1281
      %v1290 = vadd.f32 %v1226, %v1284
      %v1291 = vadd.f32 %v1227, %v1286
      %v1292 = vld [vmem:[#allocation2 + $0x8] sm:$0xc]
      %v1293 = vld [vmem:[#allocation2 + $0xc] sm:$0xf]
      %v1294 = vld [vmem:[#allocation2 + $0x10] sm:$0xf]
      %v1295 = vld [vmem:[#allocation2 + $0x14] sm:$0xf]
      %v1296 = vld [vmem:[#allocation2 + $0x18] sm:$0x1]
      %s1297 = scalar_lea.vmem %s393, 192
      %v1298 = vld [vmem:[%s1297] sm:$0xf]
      %v1299 = vld [vmem:[%s1297 + $0x4] sm:$0xf]
      %v1300 = vld [vmem:[%s1297 + $0x8] sm:$0xf]
      %v1301 = vld [vmem:[%s1297 + $0xc] sm:$0xf]
      %v1307 = vunpack.c.l.b16 %v1292
      %v1308 = vunpack.c.l.b16 %v1293
      %v1309 = vunpack.c.l.b16 %v1294
      %v1310 = vunpack.c.l.b16 %v1295
      %v1311 = vunpack.c.l.b16 %v1296
      %v1312 = vpack.c.b16 %v1308, %v1307
      %v1313 = vpack.c.b16 %v1310, %v1309
      %v1314 = vpack.c.b16 %v1311, %v1311
      %vm1315 = vsmask.f32 5376
      %v1317 = vshrl.u32 %v1312, 16
      %v1319 = vrot.slane %v1317, 2
      %v1320 = vshll.u32 %v1312, 16
      %v1322 = vrot.slane %v1320, 3
      %v1323 = vor.u32 %v1319, %v1322
      %v1325 = vshrl.u32 %v1313, 16
      %v1327 = vrot.slane %v1325, 2
      %v1328 = vshll.u32 %v1313, 16
      %v1330 = vrot.slane %v1328, 3
      %v1331 = vor.u32 %v1327, %v1330
      %v1332 = vsel %vm1315, %v1323, %v1331
      %v1334 = vshll.u32 %v1314, 16
      %v1336 = vrot.slane %v1334, 3
      %v1337 = vsel %vm1315, %v1331, %v1336
      %v1342 = vunpack.c.l.b16 %v1298
      %v1343 = vunpack.c.l.b16 %v1299
      %v1344 = vunpack.c.l.b16 %v1300
      %v1345 = vunpack.c.l.b16 %v1301
      %v1346 = vpack.c.b16 %v1343, %v1342
      %v1347 = vpack.c.b16 %v1345, %v1344
      %v1351 = vsel %vm591, %v1332, 0
      %v1354 = vsel %vm591, %v1337, 0
      %1356 = vmatpush.bf16.msra.mxu0 0
      %1357 = vmatpush.bf16.msra.mxu0 0
      %1358 = vmatpush.bf16.msra.mxu0 0
      %1359 = vmatpush.bf16.msra.mxu0 0
      %1360 = vmatpush.bf16.msra.mxu0 0
      %1361 = vmatpush.bf16.msra.mxu0 0
      %1362 = vmatpush.bf16.msra.mxu0 %v1347
      %1363 = vmatpush.bf16.msra.mxu0 %v1346
      %1364 = vmatmul.bf16.gmra.mxu0 %v1351
      %v1365 = vpop.f32.mrf.mxu0
      %v1366 = vadd.f32 0.0, %v1365
      %v1367 = vpop.f32.mrf.mxu0
      %v1368 = vadd.f32 0.0, %v1367
      %1369 = vmatmul.bf16.gmra.mxu0 %v1354
      %v1370 = vpop.f32.mrf.mxu0
      %v1371 = vadd.f32 0.0, %v1370
      %v1372 = vpop.f32.mrf.mxu0
      %v1373 = vadd.f32 0.0, %v1372
      %1374 = vdwg.mxu0
      %v1375 = vadd.f32 %v1288, %v1366
      %v1376 = vadd.f32 %v1289, %v1368
      %v1377 = vadd.f32 %v1290, %v1371
      %v1378 = vadd.f32 %v1291, %v1373
      %v1379 = vld [vmem:[#allocation2 + $0x8] sm:$0x8]
      %s1380 = scalar_lea.vmem %s393, 208
      %v1381 = vld [vmem:[%s1380] sm:$0xf]
      %v1382 = vld [vmem:[%s1380 + $0x4] sm:$0xf]
      %v1383 = vld [vmem:[%s1380 + $0x8] sm:$0xf]
      %v1384 = vld [vmem:[%s1380 + $0xc] sm:$0xf]
      %v1386 = vunpack.c.l.b16 %v1379
      %v1387 = vpack.c.b16 %v1308, %v1386
      %v1388 = vrot.slane %v1387, 3
      %v1389 = vrot.slane %v1313, 3
      %v1390 = vsel %vm1057, %v1388, %v1389
      %v1391 = vrot.slane %v1314, 3
      %v1392 = vsel %vm1057, %v1389, %v1391
      %v1397 = vunpack.c.l.b16 %v1381
      %v1398 = vunpack.c.l.b16 %v1382
      %v1399 = vunpack.c.l.b16 %v1383
      %v1400 = vunpack.c.l.b16 %v1384
      %v1401 = vpack.c.b16 %v1398, %v1397
      %v1402 = vpack.c.b16 %v1400, %v1399
      %v1406 = vsel %vm591, %v1390, 0
      %v1409 = vsel %vm591, %v1392, 0
      %1411 = vmatpush.bf16.msra.mxu0 0
      %1412 = vmatpush.bf16.msra.mxu0 0
      %1413 = vmatpush.bf16.msra.mxu0 0
      %1414 = vmatpush.bf16.msra.mxu0 0
      %1415 = vmatpush.bf16.msra.mxu0 0
      %1416 = vmatpush.bf16.msra.mxu0 0
      %1417 = vmatpush.bf16.msra.mxu0 %v1402
      %1418 = vmatpush.bf16.msra.mxu0 %v1401
      %1419 = vmatmul.bf16.gmra.mxu0 %v1406
      %v1420 = vpop.f32.mrf.mxu0
      %v1421 = vadd.f32 0.0, %v1420
      %v1422 = vpop.f32.mrf.mxu0
      %v1423 = vadd.f32 0.0, %v1422
      %1424 = vmatmul.bf16.gmra.mxu0 %v1409
      %v1425 = vpop.f32.mrf.mxu0
      %v1426 = vadd.f32 0.0, %v1425
      %v1427 = vpop.f32.mrf.mxu0
      %v1428 = vadd.f32 0.0, %v1427
      %1429 = vdwg.mxu0
      %v1430 = vadd.f32 %v1375, %v1421
      %v1431 = vadd.f32 %v1376, %v1423
      %v1432 = vadd.f32 %v1377, %v1426
      %v1433 = vadd.f32 %v1378, %v1428
      %v1434 = vld [vmem:[#allocation2 + $0x18] sm:$0x3]
      %s1435 = scalar_lea.vmem %s393, 224
      %v1436 = vld [vmem:[%s1435] sm:$0xf]
      %v1437 = vld [vmem:[%s1435 + $0x4] sm:$0xf]
      %v1438 = vld [vmem:[%s1435 + $0x8] sm:$0xf]
      %v1439 = vld [vmem:[%s1435 + $0xc] sm:$0xf]
      %v1441 = vunpack.c.l.b16 %v1434
      %v1442 = vpack.c.b16 %v1441, %v1441
      %v1444 = vshrl.u32 %v1387, 16
      %v1446 = vrot.slane %v1444, 3
      %v1447 = vshll.u32 %v1387, 16
      %v1449 = vrot.slane %v1447, 4
      %v1450 = vor.u32 %v1446, %v1449
      %v1451 = vrot.slane %v1325, 3
      %v1452 = vrot.slane %v1328, 4
      %v1453 = vor.u32 %v1451, %v1452
      %v1454 = vsel %vm801, %v1450, %v1453
      %v1456 = vshrl.u32 %v1442, 16
      %v1458 = vrot.slane %v1456, 3
      %v1459 = vshll.u32 %v1442, 16
      %v1461 = vrot.slane %v1459, 4
      %v1462 = vor.u32 %v1458, %v1461
      %v1463 = vsel %vm801, %v1453, %v1462
      %v1468 = vunpack.c.l.b16 %v1436
      %v1469 = vunpack.c.l.b16 %v1437
      %v1470 = vunpack.c.l.b16 %v1438
      %v1471 = vunpack.c.l.b16 %v1439
      %v1472 = vpack.c.b16 %v1469, %v1468
      %v1473 = vpack.c.b16 %v1471, %v1470
      %v1477 = vsel %vm591, %v1454, 0
      %v1480 = vsel %vm591, %v1463, 0
      %1482 = vmatpush.bf16.msra.mxu0 0
      %1483 = vmatpush.bf16.msra.mxu0 0
      %1484 = vmatpush.bf16.msra.mxu0 0
      %1485 = vmatpush.bf16.msra.mxu0 0
      %1486 = vmatpush.bf16.msra.mxu0 0
      %1487 = vmatpush.bf16.msra.mxu0 0
      %1488 = vmatpush.bf16.msra.mxu0 %v1473
      %1489 = vmatpush.bf16.msra.mxu0 %v1472
      %1490 = vmatmul.bf16.gmra.mxu0 %v1477
      %v1491 = vpop.f32.mrf.mxu0
      %v1492 = vadd.f32 0.0, %v1491
      %v1493 = vpop.f32.mrf.mxu0
      %v1494 = vadd.f32 0.0, %v1493
      %1495 = vmatmul.bf16.gmra.mxu0 %v1480
      %v1496 = vpop.f32.mrf.mxu0
      %v1497 = vadd.f32 0.0, %v1496
      %v1498 = vpop.f32.mrf.mxu0
      %v1499 = vadd.f32 0.0, %v1498
      %1500 = vdwg.mxu0
      %v1501 = vadd.f32 %v1430, %v1492
      %v1502 = vadd.f32 %v1431, %v1494
      %v1503 = vadd.f32 %v1432, %v1497
      %v1504 = vadd.f32 %v1433, %v1499
      %s1505 = scalar_lea.vmem %s393, 240
      %v1506 = vld [vmem:[%s1505] sm:$0xf]
      %v1507 = vld [vmem:[%s1505 + $0x4] sm:$0xf]
      %v1508 = vld [vmem:[%s1505 + $0x8] sm:$0xf]
      %v1509 = vld [vmem:[%s1505 + $0xc] sm:$0xf]
      %v1510 = vpack.c.b16 %v1309, %v1308
      %v1511 = vpack.c.b16 %v1441, %v1310
      %v1516 = vunpack.c.l.b16 %v1506
      %v1517 = vunpack.c.l.b16 %v1507
      %v1518 = vunpack.c.l.b16 %v1508
      %v1519 = vunpack.c.l.b16 %v1509
      %v1520 = vpack.c.b16 %v1517, %v1516
      %v1521 = vpack.c.b16 %v1519, %v1518
      %v1525 = vsel %vm591, %v1510, 0
      %v1528 = vsel %vm591, %v1511, 0
      %1530 = vmatpush.bf16.msra.mxu0 0
      %1531 = vmatpush.bf16.msra.mxu0 0
      %1532 = vmatpush.bf16.msra.mxu0 0
      %1533 = vmatpush.bf16.msra.mxu0 0
      %1534 = vmatpush.bf16.msra.mxu0 0
      %1535 = vmatpush.bf16.msra.mxu0 0
      %1536 = vmatpush.bf16.msra.mxu0 %v1521
      %1537 = vmatpush.bf16.msra.mxu0 %v1520
      %1538 = vmatmul.bf16.gmra.mxu0 %v1525
      %v1539 = vpop.f32.mrf.mxu0
      %v1540 = vadd.f32 0.0, %v1539
      %v1541 = vpop.f32.mrf.mxu0
      %v1542 = vadd.f32 0.0, %v1541
      %1543 = vmatmul.bf16.gmra.mxu0 %v1528
      %v1544 = vpop.f32.mrf.mxu0
      %v1545 = vadd.f32 0.0, %v1544
      %v1546 = vpop.f32.mrf.mxu0
      %v1547 = vadd.f32 0.0, %v1546
      %1548 = vdwg.mxu0
      %v1549 = vadd.f32 %v1501, %v1540
      %v1550 = vadd.f32 %v1502, %v1542
      %v1551 = vadd.f32 %v1503, %v1545
      %v1552 = vadd.f32 %v1504, %v1547
      %v1553 = vld [vmem:[%s396] sm:$0x1]
      %v1555 = vperm.slane %v1553, 0
      %v1557 = vadd.f32 %v1549, %v1555
      %v1558 = vadd.f32 %v1550, %v1555
      %v1559 = vadd.f32 %v1551, %v1555
      %v1560 = vadd.f32 %v1552, %v1555
      %v1561 = vpack.c.bf16 %v1557, %v1557
      %v1562 = vpack.c.bf16 %v1558, %v1558
      %v1563 = vpack.c.bf16 %v1559, %v1559
      %v1564 = vpack.c.bf16 %v1560, %v1560
      %vm1565 = vcmask 519168
      %1566 = vst.msk [vmem:[%s404] sm:$0xf] %vm1565, %v1561
      %1567 = vst.msk [vmem:[%s404 + $0x4] sm:$0xf] %vm1565, %v1562
      %1568 = vst.msk [vmem:[%s404 + $0x8] sm:$0xf] %vm1565, %v1563
      %vm1569 = vcmask 517120
      %1570 = vst.msk [vmem:[%s404 + $0xc] sm:$0x3] %vm1569, %v1564
      %v1571 = vld [vmem:[%s6] sm:$0xff]
      %v1572 = vld [vmem:[%s6 + $0x8] sm:$0xff]
      %v1573 = vld [vmem:[%s6 + $0x10] sm:$0xff]
      %v1574 = vld [vmem:[%s6 + $0x18] sm:$0xf]
      %1576 = vset.pattern.permute.xlu0 0
      %1577 = vperm.xlu0 %1576, %v1571
      %v1578 = vpop.permute.xlu0 %1577
      %1581 = vset.pattern.permute.xlu0 0
      %1582 = vperm.xlu0 %1581, %v1572
      %v1583 = vpop.permute.xlu0 %1582
      %1586 = vset.pattern.permute.xlu0 0
      %1587 = vperm.xlu0 %1586, %v1573
      %v1588 = vpop.permute.xlu0 %1587
      %1591 = vset.pattern.permute.xlu0 0
      %1592 = vperm.xlu0 %1591, %v1574
      %v1593 = vpop.permute.xlu0 %1592
      %v1595 = vmul.f32 %v1557, %v1578
      %v1596 = vmul.f32 %v1558, %v1583
      %v1597 = vmul.f32 %v1559, %v1588
      %v1598 = vmul.f32 %v1560, %v1593
      %vm1599 = vcmask 523264
      %v1600 = vsel %vm1599, %v1595, 0.0
      %v1601 = vsel %vm1599, %v1596, 0.0
      %v1602 = vadd.f32 %v1600, %v1601
      %v1603 = vsel %vm1599, %v1597, 0.0
      %v1604 = vadd.f32 %v1602, %v1603
      %v1605 = vsel %vm1565, %v1598, 0.0
      %v1606 = vadd.f32 %v1604, %v1605
      %v1607 = vrot.slane %v1606, 4
      %v1608 = vadd.f32 %v1606, %v1607
      %v1609 = vrot.slane %v1608, 2
      %v1610 = vadd.f32 %v1608, %v1609
      %v1611 = vrot.slane %v1610, 1
      %v1612 = vadd.f32 %v1610, %v1611
      %v1613 = vmul.f32 %v1612, 0.0625
      %v1614 = vsub.f32 %v1557, %v1613
      %v1615 = vsub.f32 %v1558, %v1613
      %v1616 = vsub.f32 %v1559, %v1613
      %v1617 = vsub.f32 %v1560, %v1613
      %v1618 = vmul.f32 %v1614, %v1578
      %v1619 = vmul.f32 %v1615, %v1583
      %v1620 = vmul.f32 %v1616, %v1588
      %v1621 = vmul.f32 %v1617, %v1593
      %vm1622 = vcmask 516096
      %1623 = vst.msk [vmem:[%s410] sm:$0x1] %vm1622, %v1612
      %v1624 = vmul.f32 %v1618, %v1618
      %v1625 = vmul.f32 %v1619, %v1619
      %v1626 = vmul.f32 %v1620, %v1620
      %v1627 = vmul.f32 %v1621, %v1621
      %v1628 = vsel %vm1599, %v1624, 0.0
      %v1629 = vsel %vm1599, %v1625, 0.0
      %v1630 = vadd.f32 %v1628, %v1629
      %v1631 = vsel %vm1599, %v1626, 0.0
      %v1632 = vadd.f32 %v1630, %v1631
      %v1633 = vsel %vm1565, %v1627, 0.0
      %v1634 = vadd.f32 %v1632, %v1633
      %v1635 = vrot.slane %v1634, 4
      %v1636 = vadd.f32 %v1634, %v1635
      %v1637 = vrot.slane %v1636, 2
      %v1638 = vadd.f32 %v1636, %v1637
      %v1639 = vrot.slane %v1638, 1
      %v1640 = vadd.f32 %v1638, %v1639
      %1641 = vst.msk [vmem:[%s416] sm:$0x1] %vm1622, %v1640
      %p1642 = scmp.lt.s32.totalorder %s25, 1
      %s1643 = scalar_select %p1642, %s25, 1
      %p1644 = scmp.lt.s32.totalorder %s26, 0
      %s1645 = scalar_select %p1644, %s26, 0
      %s1646 = smul.addr %s1643, 4
      %s1647 = sadd.s32 %s1645, %s1646
      %s1648 = smul.addr %s1647, 4
      %s1649 = scalar_lea.vmem %s7, %s1648
      %p1650 = scmp.lt.s32.totalorder %s25, 1
      %s1651 = scalar_select %p1650, %s25, 1
      %p1652 = scmp.lt.s32.totalorder %s26, 0
      %s1653 = scalar_select %p1652, %s26, 0
      %s1654 = sadd.s32 %s1653, %s1651
      %s1655 = scalar_lea.vmem %s8, %s1654
      %p1656 = scmp.lt.s32.totalorder %s25, 1
      %s1657 = scalar_select %p1656, %s25, 1
      %p1658 = scmp.lt.s32.totalorder %s26, 0
      %s1659 = scalar_select %p1658, %s26, 0
      %s1660 = sadd.s32 %s1659, %s1657
      %s1661 = scalar_lea.vmem %s9, %s1660
      // Predicated region
      $region49: #{discriminator_forward.8} parent=47 // pred_check
        %p1662 = pneg %p215
      $region50: #{discriminator_forward.8} parent=47 // pred_check_branch
        %1664 = sbr.rel (%p1662) target = $region52
      $region51: #{discriminator_forward.8} parent=47 // pred_region
        _
      $region52: #{discriminator_forward.8} parent=47 // pred_fallthru
        _
      // Predicated region
      $region53: #{discriminator_forward.8} parent=47 // pred_check
        %p1665 = pneg %p243
      $region54: #{discriminator_forward.8} parent=47 // pred_check_branch
        %1667 = sbr.rel (%p1665) target = $region56
      $region55: #{discriminator_forward.8} parent=47 // pred_region
        _
      $region56: #{discriminator_forward.8} parent=47 // pred_fallthru
        _
      // Predicated region
      $region57: #{discriminator_forward.8} parent=47 // pred_check
        %p1668 = pneg %p271
      $region58: #{discriminator_forward.8} parent=47 // pred_check_branch
        %1670 = sbr.rel (%p1668) target = $region60
      $region59: #{discriminator_forward.8} parent=47 // pred_region
        _
      $region60: #{discriminator_forward.8} parent=47 // pred_fallthru
        _
    $region48: #{discriminator_forward.8} parent=5 // pred_fallthru
      _
    %p1671 = scmp.le.s32.totalorder 2, %s16
    // Predicated region
    $region61: #{discriminator_forward.8} parent=5 // pred_check
      %p1672 = pneg %p1671
    $region62: #{discriminator_forward.8} parent=5 // pred_check_branch
      %1674 = sbr.rel (%p1672) target = $region64
    $region63: #{discriminator_forward.8} parent=5 // pred_region
      %s1675 = ssub.s32 %s16, 2
      // Predicated region
      $region65: #{discriminator_forward.8} parent=63 // pred_check
        %p1676 = pneg %p221
      $region66: #{discriminator_forward.8} parent=63 // pred_check_branch
        %1678 = sbr.rel (%p1676) target = $region68
      $region67: #{discriminator_forward.8} parent=63 // pred_region
        %p1679 = scmp.lt.s32.totalorder %s27, 1
        %s1680 = scalar_select %p1679, %s27, 1
        %p1681 = scmp.lt.s32.totalorder %s28, 0
        %s1682 = scalar_select %p1681, %s28, 0
        %s1683 = smul.addr %s1680, 4
        %s1684 = sadd.s32 %s1682, %s1683
        %s1685 = smul.addr %s1684, 4
        %s1686 = scalar_lea.vmem %s7, %s1685
      $region68: #{discriminator_forward.8} parent=63 // pred_fallthru
        _
      // Predicated region
      $region69: #{discriminator_forward.8} parent=63 // pred_check
        %p1687 = pneg %p249
      $region70: #{discriminator_forward.8} parent=63 // pred_check_branch
        %1689 = sbr.rel (%p1687) target = $region72
      $region71: #{discriminator_forward.8} parent=63 // pred_region
        %p1690 = scmp.lt.s32.totalorder %s27, 1
        %s1691 = scalar_select %p1690, %s27, 1
        %p1692 = scmp.lt.s32.totalorder %s28, 0
        %s1693 = scalar_select %p1692, %s28, 0
        %s1694 = sadd.s32 %s1693, %s1691
        %s1695 = scalar_lea.vmem %s8, %s1694
      $region72: #{discriminator_forward.8} parent=63 // pred_fallthru
        _
      // Predicated region
      $region73: #{discriminator_forward.8} parent=63 // pred_check
        %p1696 = pneg %p277
      $region74: #{discriminator_forward.8} parent=63 // pred_check_branch
        %1698 = sbr.rel (%p1696) target = $region76
      $region75: #{discriminator_forward.8} parent=63 // pred_region
        %p1699 = scmp.lt.s32.totalorder %s27, 1
        %s1700 = scalar_select %p1699, %s27, 1
        %p1701 = scmp.lt.s32.totalorder %s28, 0
        %s1702 = scalar_select %p1701, %s28, 0
        %s1703 = sadd.s32 %s1702, %s1700
        %s1704 = scalar_lea.vmem %s9, %s1703
      $region76: #{discriminator_forward.8} parent=63 // pred_fallthru
        _
    $region64: #{discriminator_forward.8} parent=5 // pred_fallthru
      _
  $region6: #{discriminator_forward.8} parent=0 // loop_footer
    %s20 = sadd.s32 1, %s16
  $region7: #{discriminator_forward.8} parent=0 // loop_footer_branch
    %15 = sbr.rel target = $region3
  $region8: #{discriminator_forward.8} parent=0 // loop_exit
    _

// kernel: discriminator_forward.9
$region0: #{discriminator_forward.9}
  #allocation0 [shape = 'u32[]', space=smem, size = 0x4, offset = 0x4, fixed_abs, tag = 'smem constant byte address 0x4 - core index']
  #allocation1 [shape = 'u32[72,128]{1,0:T(1,128)}', space=vmem, size = 0x9000, scoped, tag = 'internal scratch']
  #allocation2 [shape = 'bf16[1,72,64]{2,1,0:T(8,128)(2,1)}', space=vmem, size = 0x4800, scoped, tag = 'scratch operand']
  #allocation3 [shape = 'f32[1,1,1]{2,1,0:T(1,128)S(1)}', space=vmem, size = 0x200, scoped, tag = 'scoped memory for discriminator_forward.9']
  %s0 = inlined_call_operand.vmem [shape: bf16[2,1,72,64], index: 0, kind: input, shape index: {}]
  %s1 = inlined_call_operand.vmem [shape: bf16[16,64,1], index: 1, kind: input, shape index: {}]
  %s2 = inlined_call_operand.<no memory space> [shape: f32[1,1,1], index: 2, kind: input, shape index: {}]
  %s3 = inlined_call_operand.vmem [shape: f32[1,1,64], index: 3, kind: input, shape index: {}]
  %s4 = inlined_call_operand.vmem [shape: f32[1,1,64], index: 4, kind: input, shape index: {}]
  %s5 = inlined_call_operand.vmem [shape: f32[1,1,72,1], index: 5, kind: input, shape index: {}]
  %s6 = inlined_call_operand.vmem [shape: f32[2,40,1], index: 6, kind: output, shape index: {}]
  %s7 = sld [smem:[#allocation0]]
  $region57: #{discriminator_forward.9} parent=0
    _
  %s9 = ssub.s32 1, %s7
  %s10 = scalar_select 0, %s9, %s7
  %v11 = vstv %s2
  %12 = vst [vmem:[#allocation3] sm:$0x1] %v11
  loop: start=0, step=1, limit=4
  $region2: #{discriminator_forward.9} parent=0 // loop_pre_header
    _
  $region3: #{discriminator_forward.9} parent=0 // loop_header
    %s14 = sphi 0, %s18
    %p15 = scmp.ge.s32.totalorder %s14, 4
    %s21 = sphi 0, %s33
    %s22 = sphi 0, %s29
    %s23 = sphi 0, %s21
    %s24 = sphi 0, %s22
    %s25 = sphi 0, %s23
    %s26 = sphi 0, %s24
    %s36 = sphi 0, %s38
    %s39 = sphi 0, %s36
    %s40 = sphi 0, %s39
    %s56 = sphi 0, %s40
    %s62 = sphi 0, %s64
    %s65 = sphi 0, %s62
    %s66 = sphi 0, %s65
    %s82 = sphi 0, %s66
    %s88 = sphi 0, %s90
    %s91 = sphi 0, %s88
    %s92 = sphi 0, %s91
    %s108 = sphi 0, %s92
    %s112 = sphi 0, %s112
    %s114 = sphi 0, %s112
    %s115 = sphi 0, %s114
    %s129 = sphi 0, %s115
    %s133 = sphi 0, %s133
    %s135 = sphi 0, %s133
    %s136 = sphi 0, %s135
    %s150 = sphi 0, %s136
    %s154 = sphi 0, %s154
    %s156 = sphi 0, %s154
    %s157 = sphi 0, %s156
    %s171 = sphi 0, %s157
    %s179 = sphi 0, %s181
    %s182 = sphi 0, %s179
    %s183 = sphi 0, %s182
    %s199 = sphi 0, %s183
  $region4: #{discriminator_forward.9} parent=0 // loop_header_branch
    %17 = sbr.rel (%p15) target = $region8
  $region5: #{discriminator_forward.9} parent=0 // loop_body
    %s19 = ssub.s32 %s14, 1
    %s20 = ssub.s32 %s14, 2
    %s27 = sadd.s32 1, %s22
    %p28 = scmp.ge.s32.totalorder %s27, 1
    %s29 = scalar_select %p28, 0, %s27
    %s30 = sadd.s32 1, %s21
    %s31 = scalar_select %p28, %s30, %s21
    %p32 = scmp.ge.s32.totalorder %s31, 2
    %s33 = scalar_select %p32, 0, %s31
    %s34 = ssub.s32 %s21, %s33
    %p35 = scmp.eq.s32.totalorder %s34, 0
    %s37 = sadd.s32 %s36, 1
    %s38 = scalar_select %p35, %s36, %s37
    %p41 = pneg %p35
    %p42 = scmp.eq.s32.totalorder %s14, 1
    %p43 = por %p41, %p42
    %p44 = scmp.ne.s32.totalorder %s36, %s39
    %p45 = scmp.eq.s32.totalorder %s14, 0
    %p46 = por %p44, %p45
    %p47 = scmp.ne.s32.totalorder %s36, %s39
    %p48 = scmp.eq.s32.totalorder %s19, 1
    %p49 = por %p47, %p48
    %p50 = scmp.ne.s32.totalorder %s39, %s40
    %p51 = scmp.eq.s32.totalorder %s19, 0
    %p52 = por %p50, %p51
    %p53 = scmp.ne.s32.totalorder %s39, %s40
    %p54 = scmp.eq.s32.totalorder %s20, 1
    %p55 = por %p53, %p54
    %p57 = scmp.ne.s32.totalorder %s40, %s56
    %p58 = scmp.eq.s32.totalorder %s20, 0
    %p59 = por %p57, %p58
    %s60 = ssub.s32 %s22, %s29
    %p61 = scmp.eq.s32.totalorder %s60, 0
    %s63 = sadd.s32 %s62, 1
    %s64 = scalar_select %p61, %s62, %s63
    %p67 = pneg %p61
    %p68 = scmp.eq.s32.totalorder %s14, 1
    %p69 = por %p67, %p68
    %p70 = scmp.ne.s32.totalorder %s62, %s65
    %p71 = scmp.eq.s32.totalorder %s14, 0
    %p72 = por %p70, %p71
    %p73 = scmp.ne.s32.totalorder %s62, %s65
    %p74 = scmp.eq.s32.totalorder %s19, 1
    %p75 = por %p73, %p74
    %p76 = scmp.ne.s32.totalorder %s65, %s66
    %p77 = scmp.eq.s32.totalorder %s19, 0
    %p78 = por %p76, %p77
    %p79 = scmp.ne.s32.totalorder %s65, %s66
    %p80 = scmp.eq.s32.totalorder %s20, 1
    %p81 = por %p79, %p80
    %p83 = scmp.ne.s32.totalorder %s66, %s82
    %p84 = scmp.eq.s32.totalorder %s20, 0
    %p85 = por %p83, %p84
    %s86 = ssub.s32 %s22, %s29
    %p87 = scmp.eq.s32.totalorder %s86, 0
    %s89 = sadd.s32 %s88, 1
    %s90 = scalar_select %p87, %s88, %s89
    %p93 = pneg %p87
    %p94 = scmp.eq.s32.totalorder %s14, 1
    %p95 = por %p93, %p94
    %p96 = scmp.ne.s32.totalorder %s88, %s91
    %p97 = scmp.eq.s32.totalorder %s14, 0
    %p98 = por %p96, %p97
    %p99 = scmp.ne.s32.totalorder %s88, %s91
    %p100 = scmp.eq.s32.totalorder %s19, 1
    %p101 = por %p99, %p100
    %p102 = scmp.ne.s32.totalorder %s91, %s92
    %p103 = scmp.eq.s32.totalorder %s19, 0
    %p104 = por %p102, %p103
    %p105 = scmp.ne.s32.totalorder %s91, %s92
    %p106 = scmp.eq.s32.totalorder %s20, 1
    %p107 = por %p105, %p106
    %p109 = scmp.ne.s32.totalorder %s92, %s108
    %p110 = scmp.eq.s32.totalorder %s20, 0
    %p111 = por %p109, %p110
    %s113 = sadd.s32 %s112, 1
    %p116 = scmp.eq.s32.totalorder %s14, 1
    %p117 = scmp.ne.s32.totalorder %s112, %s114
    %p118 = scmp.eq.s32.totalorder %s14, 0
    %p119 = por %p117, %p118
    %p120 = scmp.ne.s32.totalorder %s112, %s114
    %p121 = scmp.eq.s32.totalorder %s19, 1
    %p122 = por %p120, %p121
    %p123 = scmp.ne.s32.totalorder %s114, %s115
    %p124 = scmp.eq.s32.totalorder %s19, 0
    %p125 = por %p123, %p124
    %p126 = scmp.ne.s32.totalorder %s114, %s115
    %p127 = scmp.eq.s32.totalorder %s20, 1
    %p128 = por %p126, %p127
    %p130 = scmp.ne.s32.totalorder %s115, %s129
    %p131 = scmp.eq.s32.totalorder %s20, 0
    %p132 = por %p130, %p131
    %s134 = sadd.s32 %s133, 1
    %p137 = scmp.eq.s32.totalorder %s14, 1
    %p138 = scmp.ne.s32.totalorder %s133, %s135
    %p139 = scmp.eq.s32.totalorder %s14, 0
    %p140 = por %p138, %p139
    %p141 = scmp.ne.s32.totalorder %s133, %s135
    %p142 = scmp.eq.s32.totalorder %s19, 1
    %p143 = por %p141, %p142
    %p144 = scmp.ne.s32.totalorder %s135, %s136
    %p145 = scmp.eq.s32.totalorder %s19, 0
    %p146 = por %p144, %p145
    %p147 = scmp.ne.s32.totalorder %s135, %s136
    %p148 = scmp.eq.s32.totalorder %s20, 1
    %p149 = por %p147, %p148
    %p151 = scmp.ne.s32.totalorder %s136, %s150
    %p152 = scmp.eq.s32.totalorder %s20, 0
    %p153 = por %p151, %p152
    %s155 = sadd.s32 %s154, 1
    %p158 = scmp.eq.s32.totalorder %s14, 1
    %p159 = scmp.ne.s32.totalorder %s154, %s156
    %p160 = scmp.eq.s32.totalorder %s14, 0
    %p161 = por %p159, %p160
    %p162 = scmp.ne.s32.totalorder %s154, %s156
    %p163 = scmp.eq.s32.totalorder %s19, 1
    %p164 = por %p162, %p163
    %p165 = scmp.ne.s32.totalorder %s156, %s157
    %p166 = scmp.eq.s32.totalorder %s19, 0
    %p167 = por %p165, %p166
    %p168 = scmp.ne.s32.totalorder %s156, %s157
    %p169 = scmp.eq.s32.totalorder %s20, 1
    %p170 = por %p168, %p169
    %p172 = scmp.ne.s32.totalorder %s157, %s171
    %p173 = scmp.eq.s32.totalorder %s20, 0
    %p174 = por %p172, %p173
    %s175 = ssub.s32 %s21, %s33
    %s176 = ssub.s32 %s22, %s29
    %s177 = sor.u32 %s175, %s176
    %p178 = scmp.eq.s32.totalorder %s177, 0
    %s180 = sadd.s32 %s179, 1
    %s181 = scalar_select %p178, %s179, %s180
    %p184 = pneg %p178
    %p185 = scmp.eq.s32.totalorder %s14, 1
    %p186 = por %p184, %p185
    %p187 = scmp.ne.s32.totalorder %s179, %s182
    %p188 = scmp.eq.s32.totalorder %s14, 0
    %p189 = por %p187, %p188
    %p190 = scmp.ne.s32.totalorder %s179, %s182
    %p191 = scmp.eq.s32.totalorder %s19, 1
    %p192 = por %p190, %p191
    %p193 = scmp.ne.s32.totalorder %s182, %s183
    %p194 = scmp.eq.s32.totalorder %s19, 0
    %p195 = por %p193, %p194
    %p196 = scmp.ne.s32.totalorder %s182, %s183
    %p197 = scmp.eq.s32.totalorder %s20, 1
    %p198 = por %p196, %p197
    %p200 = scmp.ne.s32.totalorder %s183, %s199
    %p201 = scmp.eq.s32.totalorder %s20, 0
    %p202 = por %p200, %p201
    %p203 = scmp.le.s32.totalorder 1, %s14
    %p204 = scmp.lt.s32.totalorder %s14, 3
    %p205 = pnand %p203, %p204
    %p206 = pneg %p205
    // Predicated region
    $region9: #{discriminator_forward.9} parent=5 // pred_check
      _
    $region10: #{discriminator_forward.9} parent=5 // pred_check_branch
      %208 = sbr.rel (%p205) target = $region12
    $region11: #{discriminator_forward.9} parent=5 // pred_region
      %s209 = ssub.s32 %s14, 1
      // Predicated region
      $region13: #{discriminator_forward.9} parent=11 // pred_check
        %p210 = pneg %p78
      $region14: #{discriminator_forward.9} parent=11 // pred_check_branch
        %212 = sbr.rel (%p210) target = $region16
      $region15: #{discriminator_forward.9} parent=11 // pred_region
        %p213 = scmp.lt.s32.totalorder %s24, 0
        %s214 = scalar_select %p213, %s24, 0
        %s215 = smul.addr %s214, 4
        %s216 = scalar_lea.vmem %s1, %s215
      $region16: #{discriminator_forward.9} parent=11 // pred_fallthru
        _
      // Predicated region
      $region17: #{discriminator_forward.9} parent=11 // pred_check
        %p217 = pneg %p104
      $region18: #{discriminator_forward.9} parent=11 // pred_check_branch
        %219 = sbr.rel (%p217) target = $region20
      $region19: #{discriminator_forward.9} parent=11 // pred_region
        %p220 = scmp.lt.s32.totalorder %s24, 0
        %s221 = scalar_select %p220, %s24, 0
        %s222 = scalar_lea.vmem [#allocation3], %s221
      $region20: #{discriminator_forward.9} parent=11 // pred_fallthru
        _
      // Predicated region
      $region21: #{discriminator_forward.9} parent=11 // pred_check
        %p223 = pneg %p125
      $region22: #{discriminator_forward.9} parent=11 // pred_check_branch
        %225 = sbr.rel (%p223) target = $region24
      $region23: #{discriminator_forward.9} parent=11 // pred_region
        _
      $region24: #{discriminator_forward.9} parent=11 // pred_fallthru
        _
      // Predicated region
      $region25: #{discriminator_forward.9} parent=11 // pred_check
        %p226 = pneg %p146
      $region26: #{discriminator_forward.9} parent=11 // pred_check_branch
        %228 = sbr.rel (%p226) target = $region28
      $region27: #{discriminator_forward.9} parent=11 // pred_region
        _
      $region28: #{discriminator_forward.9} parent=11 // pred_fallthru
        _
      // Predicated region
      $region29: #{discriminator_forward.9} parent=11 // pred_check
        %p229 = pneg %p167
      $region30: #{discriminator_forward.9} parent=11 // pred_check_branch
        %231 = sbr.rel (%p229) target = $region32
      $region31: #{discriminator_forward.9} parent=11 // pred_region
        _
      $region32: #{discriminator_forward.9} parent=11 // pred_fallthru
        _
    $region12: #{discriminator_forward.9} parent=5 // pred_fallthru
      _
    %p232 = scmp.lt.s32.totalorder %s14, 2
    // Predicated region
    $region33: #{discriminator_forward.9} parent=5 // pred_check
      %p233 = pneg %p232
    $region34: #{discriminator_forward.9} parent=5 // pred_check_branch
      %235 = sbr.rel (%p233) target = $region36
    $region35: #{discriminator_forward.9} parent=5 // pred_region
      // Predicated region
      $region37: #{discriminator_forward.9} parent=35 // pred_check
        %p236 = pneg %p46
      $region38: #{discriminator_forward.9} parent=35 // pred_check_branch
        %238 = sbr.rel (%p236) target = $region40
      $region39: #{discriminator_forward.9} parent=35 // pred_region
        %p239 = scmp.lt.s32.totalorder %s21, 1
        %s240 = scalar_select %p239, %s21, 1
        %s241 = smul.addr %s240, 9
        %s242 = smul.addr %s241, 4
        %s243 = scalar_lea.vmem %s0, %s242
      $region40: #{discriminator_forward.9} parent=35 // pred_fallthru
        _
    $region36: #{discriminator_forward.9} parent=5 // pred_fallthru
      _
    %p244 = scmp.le.s32.totalorder 1, %s14
    %p245 = scmp.lt.s32.totalorder %s14, 3
    %p246 = pnand %p244, %p245
    %p247 = pneg %p246
    // Predicated region
    $region41: #{discriminator_forward.9} parent=5 // pred_check
      _
    $region42: #{discriminator_forward.9} parent=5 // pred_check_branch
      %249 = sbr.rel (%p246) target = $region44
    $region43: #{discriminator_forward.9} parent=5 // pred_region
      %s250 = ssub.s32 %s14, 1
      %p251 = scmp.lt.s32.totalorder %s23, 1
      %s252 = scalar_select %p251, %s23, 1
      %s253 = smul.addr %s252, 9
      %s254 = smul.addr %s253, 4
      %s255 = scalar_lea.vmem %s0, %s254
      %p256 = pneg %p52
      %p257 = pneg %p49
      %p258 = scmp.lt.s32.totalorder %s24, 0
      %s259 = scalar_select %p258, %s24, 0
      %s260 = smul.addr %s259, 4
      %s261 = scalar_lea.vmem %s1, %s260
      %p262 = pneg %p78
      %p263 = pneg %p75
      %p264 = scmp.lt.s32.totalorder %s24, 0
      %s265 = scalar_select %p264, %s24, 0
      %s266 = scalar_lea.vmem [#allocation3], %s265
      %p267 = pneg %p104
      %p268 = pneg %p101
      %p269 = pneg %p125
      %p270 = pneg %p122
      %p271 = pneg %p146
      %p272 = pneg %p143
      %p273 = pneg %p167
      %p274 = pneg %p164
      %p275 = pneg %p195
      %p276 = pneg %p192
      %p277 = scmp.lt.s32.totalorder %s23, 1
      %s278 = scalar_select %p277, %s23, 1
      %p279 = scmp.lt.s32.totalorder %s24, 0
      %s280 = scalar_select %p279, %s24, 0
      %s281 = smul.addr %s278, 5
      %s282 = sadd.s32 %s280, %s281
      %s283 = smul.addr %s282, 8
      %s284 = scalar_lea.vmem %s6, %s283
      %p285 = scmp.lt.s32.totalorder %s23, 1
      %s286 = scalar_select %p285, %s23, 1
      %s287 = smul.addr %s286, 9
      %s288 = smul.addr %s287, 4
      %s289 = scalar_lea.vmem %s0, %s288
      %p290 = scmp.lt.s32.totalorder %s24, 0
      %s291 = scalar_select %p290, %s24, 0
      %s292 = smul.addr %s291, 4
      %s293 = scalar_lea.vmem %s1, %s292
      %p294 = scmp.lt.s32.totalorder %s24, 0
      %s295 = scalar_select %p294, %s24, 0
      %s296 = scalar_lea.vmem [#allocation3], %s295
      %p297 = scmp.lt.s32.totalorder %s23, 1
      %s298 = scalar_select %p297, %s23, 1
      %p299 = scmp.lt.s32.totalorder %s24, 0
      %s300 = scalar_select %p299, %s24, 0
      %s301 = smul.addr %s298, 5
      %s302 = sadd.s32 %s300, %s301
      %s303 = smul.addr %s302, 8
      %s304 = scalar_lea.vmem %s6, %s303
      %v306 = vld [vmem:[%s289] sm:$0xf]
      %v307 = vld [vmem:[%s289 + $0x4] sm:$0xf]
      %v308 = vld [vmem:[%s289 + $0x8] sm:$0xf]
      %v309 = vld [vmem:[%s289 + $0xc] sm:$0xf]
      %v310 = vld [vmem:[%s289 + $0x10] sm:$0xf]
      %v311 = vld [vmem:[%s289 + $0x14] sm:$0xf]
      %v312 = vld [vmem:[%s289 + $0x18] sm:$0xf]
      %v313 = vld [vmem:[%s289 + $0x1c] sm:$0xf]
      %v314 = vld [vmem:[%s289 + $0x20] sm:$0xf]
      %v315 = vunpack.c.l.bf16 %v306
      %v316 = vunpack.c.l.bf16 %v307
      %v317 = vunpack.c.l.bf16 %v308
      %v318 = vunpack.c.l.bf16 %v309
      %v319 = vunpack.c.l.bf16 %v310
      %v320 = vunpack.c.l.bf16 %v311
      %v321 = vunpack.c.l.bf16 %v312
      %v322 = vunpack.c.l.bf16 %v313
      %v323 = vunpack.c.l.bf16 %v314
      %v324 = vld [vmem:[%s3] sm:$0x1]
      %v326 = vperm.slane %v324, 0
      %v328 = vmul.f32 %v315, %v326
      %v329 = vmul.f32 %v316, %v326
      %v330 = vmul.f32 %v317, %v326
      %v331 = vmul.f32 %v318, %v326
      %v332 = vmul.f32 %v319, %v326
      %v333 = vmul.f32 %v320, %v326
      %v334 = vmul.f32 %v321, %v326
      %v335 = vmul.f32 %v322, %v326
      %v336 = vmul.f32 %v323, %v326
      %v337 = vld [vmem:[%s4] sm:$0x1]
      %v339 = vperm.slane %v337, 0
      %v341 = vadd.f32 %v328, %v339
      %v342 = vadd.f32 %v329, %v339
      %v343 = vadd.f32 %v330, %v339
      %v344 = vadd.f32 %v331, %v339
      %v345 = vadd.f32 %v332, %v339
      %v346 = vadd.f32 %v333, %v339
      %v347 = vadd.f32 %v334, %v339
      %v348 = vadd.f32 %v335, %v339
      %v349 = vadd.f32 %v336, %v339
      %vm350 = vcmp.gt.f32.partialorder %v341, 0.0
      %vm351 = vcmp.gt.f32.partialorder %v342, 0.0
      %vm352 = vcmp.gt.f32.partialorder %v343, 0.0
      %vm353 = vcmp.gt.f32.partialorder %v344, 0.0
      %vm354 = vcmp.gt.f32.partialorder %v345, 0.0
      %vm355 = vcmp.gt.f32.partialorder %v346, 0.0
      %vm356 = vcmp.gt.f32.partialorder %v347, 0.0
      %vm357 = vcmp.gt.f32.partialorder %v348, 0.0
      %vm358 = vcmp.gt.f32.partialorder %v349, 0.0
      %v359 = vmul.f32 %v341, 0.2
      %v360 = vmul.f32 %v342, 0.2
      %v361 = vmul.f32 %v343, 0.2
      %v362 = vmul.f32 %v344, 0.2
      %v363 = vmul.f32 %v345, 0.2
      %v364 = vmul.f32 %v346, 0.2
      %v365 = vmul.f32 %v347, 0.2
      %v366 = vmul.f32 %v348, 0.2
      %v367 = vmul.f32 %v349, 0.2
      %v368 = vsel %vm350, %v341, %v359
      %v369 = vsel %vm351, %v342, %v360
      %v370 = vsel %vm352, %v343, %v361
      %v371 = vsel %vm353, %v344, %v362
      %v372 = vsel %vm354, %v345, %v363
      %v373 = vsel %vm355, %v346, %v364
      %v374 = vsel %vm356, %v347, %v365
      %v375 = vsel %vm357, %v348, %v366
      %v376 = vsel %vm358, %v349, %v367
      %v377 = vld [vmem:[%s5] sm:$0xff]
      %v378 = vld [vmem:[%s5 + $0x8] sm:$0xff]
      %v379 = vld [vmem:[%s5 + $0x10] sm:$0xff]
      %v380 = vld [vmem:[%s5 + $0x18] sm:$0xff]
      %v381 = vld [vmem:[%s5 + $0x20] sm:$0xff]
      %v382 = vld [vmem:[%s5 + $0x28] sm:$0xff]
      %v383 = vld [vmem:[%s5 + $0x30] sm:$0xff]
      %v384 = vld [vmem:[%s5 + $0x38] sm:$0xff]
      %v385 = vld [vmem:[%s5 + $0x40] sm:$0xff]
      %387 = vset.pattern.permute.xlu0 0
      %388 = vperm.xlu0 %387, %v377
      %v389 = vpop.permute.xlu0 %388
      %392 = vset.pattern.permute.xlu0 0
      %393 = vperm.xlu0 %392, %v378
      %v394 = vpop.permute.xlu0 %393
      %397 = vset.pattern.permute.xlu0 0
      %398 = vperm.xlu0 %397, %v379
      %v399 = vpop.permute.xlu0 %398
      %402 = vset.pattern.permute.xlu0 0
      %403 = vperm.xlu0 %402, %v380
      %v404 = vpop.permute.xlu0 %403
      %407 = vset.pattern.permute.xlu0 0
      %408 = vperm.xlu0 %407, %v381
      %v409 = vpop.permute.xlu0 %408
      %412 = vset.pattern.permute.xlu0 0
      %413 = vperm.xlu0 %412, %v382
      %v414 = vpop.permute.xlu0 %413
      %417 = vset.pattern.permute.xlu0 0
      %418 = vperm.xlu0 %417, %v383
      %v419 = vpop.permute.xlu0 %418
      %422 = vset.pattern.permute.xlu0 0
      %423 = vperm.xlu0 %422, %v384
      %v424 = vpop.permute.xlu0 %423
      %427 = vset.pattern.permute.xlu0 0
      %428 = vperm.xlu0 %427, %v385
      %v429 = vpop.permute.xlu0 %428
      %v431 = vmul.f32 %v368, %v389
      %v432 = vmul.f32 %v369, %v394
      %v433 = vmul.f32 %v370, %v399
      %v434 = vmul.f32 %v371, %v404
      %v435 = vmul.f32 %v372, %v409
      %v436 = vmul.f32 %v373, %v414
      %v437 = vmul.f32 %v374, %v419
      %v438 = vmul.f32 %v375, %v424
      %v439 = vmul.f32 %v376, %v429
      %v440 = vpack.c.bf16 %v431, %v431
      %v441 = vpack.c.bf16 %v432, %v432
      %v442 = vpack.c.bf16 %v433, %v433
      %v443 = vpack.c.bf16 %v434, %v434
      %v444 = vpack.c.bf16 %v435, %v435
      %v445 = vpack.c.bf16 %v436, %v436
      %v446 = vpack.c.bf16 %v437, %v437
      %v447 = vpack.c.bf16 %v438, %v438
      %v448 = vpack.c.bf16 %v439, %v439
      %vm449 = vcmask 519168
      %450 = vst.msk [vmem:[#allocation2] sm:$0xf] %vm449, %v440
      %451 = vst.msk [vmem:[#allocation2 + $0x4] sm:$0xf] %vm449, %v441
      %452 = vst.msk [vmem:[#allocation2 + $0x8] sm:$0xf] %vm449, %v442
      %453 = vst.msk [vmem:[#allocation2 + $0xc] sm:$0xf] %vm449, %v443
      %454 = vst.msk [vmem:[#allocation2 + $0x10] sm:$0xf] %vm449, %v444
      %455 = vst.msk [vmem:[#allocation2 + $0x14] sm:$0xf] %vm449, %v445
      %456 = vst.msk [vmem:[#allocation2 + $0x18] sm:$0xf] %vm449, %v446
      %457 = vst.msk [vmem:[#allocation2 + $0x1c] sm:$0xf] %vm449, %v447
      %458 = vst.msk [vmem:[#allocation2 + $0x20] sm:$0xf] %vm449, %v448
      %v459 = vld [vmem:[#allocation2] sm:$0xf]
      %v460 = vld [vmem:[#allocation2 + $0x4] sm:$0xf]
      %v461 = vld [vmem:[#allocation2 + $0x8] sm:$0xf]
      %v462 = vld [vmem:[#allocation2 + $0xc] sm:$0xf]
      %v463 = vld [vmem:[#allocation2 + $0x10] sm:$0xf]
      %v464 = vld [vmem:[%s293] sm:$0xf]
      %v465 = vld [vmem:[%s293 + $0x4] sm:$0xf]
      %v466 = vld [vmem:[%s293 + $0x8] sm:$0xf]
      %v467 = vld [vmem:[%s293 + $0xc] sm:$0xf]
      %v468 = vld [vmem:[%s293 + $0x10] sm:$0xf]
      %v469 = vld [vmem:[%s293 + $0x14] sm:$0xf]
      %v470 = vld [vmem:[%s293 + $0x18] sm:$0xf]
      %v471 = vld [vmem:[%s293 + $0x1c] sm:$0xf]
      %v472 = vld [vmem:[#allocation2 + $0x14] sm:$0x1]
      %s473 = scalar_lea.vmem %s293, 32
      %v474 = vld [vmem:[%s473] sm:$0xf]
      %v475 = vld [vmem:[%s473 + $0x4] sm:$0xf]
      %v476 = vld [vmem:[%s473 + $0x8] sm:$0xf]
      %v477 = vld [vmem:[%s473 + $0xc] sm:$0xf]
      %v478 = vld [vmem:[%s473 + $0x10] sm:$0xf]
      %v479 = vld [vmem:[%s473 + $0x14] sm:$0xf]
      %v480 = vld [vmem:[%s473 + $0x18] sm:$0xf]
      %v481 = vld [vmem:[%s473 + $0x1c] sm:$0xf]
      %v488 = vunpack.c.l.b16 %v459
      %v489 = vunpack.c.l.b16 %v460
      %v490 = vunpack.c.l.b16 %v461
      %v491 = vunpack.c.l.b16 %v462
      %v492 = vunpack.c.l.b16 %v463
      %v493 = vunpack.c.l.b16 %v472
      %v494 = vpack.c.b16 %v489, %v488
      %v495 = vpack.c.b16 %v491, %v490
      %v496 = vpack.c.b16 %v493, %v492
      %vm497 = vsmask.f32 7424
      %v499 = vshrl.u32 %v494, 16
      %v501 = vshll.u32 %v494, 16
      %v503 = vrot.slane %v501, 1
      %v504 = vor.u32 %v499, %v503
      %v506 = vshll.u32 %v495, 16
      %v508 = vrot.slane %v506, 1
      %v509 = vsel %vm497, %v504, %v508
      %v510 = vshrl.u32 %v495, 16
      %v512 = vor.u32 %v510, %v508
      %v514 = vshll.u32 %v496, 16
      %v516 = vrot.slane %v514, 1
      %v517 = vsel %vm497, %v512, %v516
      %v518 = vshrl.u32 %v496, 16
      %v520 = vor.u32 %v518, %v516
      %v529 = vunpack.c.l.b16 %v474
      %v530 = vunpack.c.l.b16 %v475
      %v531 = vunpack.c.l.b16 %v476
      %v532 = vunpack.c.l.b16 %v477
      %v533 = vunpack.c.l.b16 %v478
      %v534 = vunpack.c.l.b16 %v479
      %v535 = vunpack.c.l.b16 %v480
      %v536 = vunpack.c.l.b16 %v481
      %v537 = vpack.c.b16 %v530, %v529
      %v538 = vpack.c.b16 %v532, %v531
      %v539 = vpack.c.b16 %v534, %v533
      %v540 = vpack.c.b16 %v536, %v535
      %vm545 = vcmask 523264
      %v547 = vsel %vm545, %v509, 0
      %v550 = vsel %vm545, %v517, 0
      %v553 = vsel %vm545, %v520, 0
      %555 = vmatpush.bf16.msra.mxu0 0
      %556 = vmatpush.bf16.msra.mxu0 0
      %557 = vmatpush.bf16.msra.mxu0 0
      %558 = vmatpush.bf16.msra.mxu0 0
      %559 = vmatpush.bf16.msra.mxu0 %v540
      %560 = vmatpush.bf16.msra.mxu0 %v539
      %561 = vmatpush.bf16.msra.mxu0 %v538
      %562 = vmatpush.bf16.msra.mxu0 %v537
      %563 = vmatmul.bf16.gmra.mxu0 %v547
      %v564 = vpop.f32.mrf.mxu0
      %v565 = vadd.f32 0.0, %v564
      %v566 = vpop.f32.mrf.mxu0
      %v567 = vadd.f32 0.0, %v566
      %568 = vmatmul.bf16.gmra.mxu0 %v550
      %v569 = vpop.f32.mrf.mxu0
      %v570 = vadd.f32 0.0, %v569
      %v571 = vpop.f32.mrf.mxu0
      %v572 = vadd.f32 0.0, %v571
      %573 = vmatmul.bf16.gmra.mxu0 %v553
      %v574 = vpop.f32.mrf.mxu0
      %v575 = vadd.f32 0.0, %v574
      %v576 = vpop.f32.mrf.mxu0
      %577 = vdwg.mxu0
      %v578 = vpack.c.b16 %v492, %v492
      %v587 = vunpack.c.l.b16 %v464
      %v588 = vunpack.c.l.b16 %v465
      %v589 = vunpack.c.l.b16 %v466
      %v590 = vunpack.c.l.b16 %v467
      %v591 = vunpack.c.l.b16 %v468
      %v592 = vunpack.c.l.b16 %v469
      %v593 = vunpack.c.l.b16 %v470
      %v594 = vunpack.c.l.b16 %v471
      %v595 = vpack.c.b16 %v588, %v587
      %v596 = vpack.c.b16 %v590, %v589
      %v597 = vpack.c.b16 %v592, %v591
      %v598 = vpack.c.b16 %v594, %v593
      %v603 = vsel %vm545, %v494, 0
      %v605 = vsel %vm545, %v495, 0
      %v608 = vsel %vm545, %v578, 0
      %610 = vmatpush.bf16.msra.mxu0 0
      %611 = vmatpush.bf16.msra.mxu0 0
      %612 = vmatpush.bf16.msra.mxu0 0
      %613 = vmatpush.bf16.msra.mxu0 0
      %614 = vmatpush.bf16.msra.mxu0 %v598
      %615 = vmatpush.bf16.msra.mxu0 %v597
      %616 = vmatpush.bf16.msra.mxu0 %v596
      %617 = vmatpush.bf16.msra.mxu0 %v595
      %618 = vmatmul.bf16.gmra.mxu0 %v603
      %v619 = vpop.f32.mrf.mxu0
      %v620 = vadd.f32 %v565, %v619
      %v621 = vpop.f32.mrf.mxu0
      %v622 = vadd.f32 %v567, %v621
      %623 = vmatmul.bf16.gmra.mxu0 %v605
      %v624 = vpop.f32.mrf.mxu0
      %v625 = vadd.f32 %v570, %v624
      %v626 = vpop.f32.mrf.mxu0
      %v627 = vadd.f32 %v572, %v626
      %628 = vmatmul.bf16.gmra.mxu0 %v608
      %v629 = vpop.f32.mrf.mxu0
      %v630 = vadd.f32 %v575, %v629
      %v631 = vpop.f32.mrf.mxu0
      %632 = vdwg.mxu0
      %v633 = vld [vmem:[#allocation2] sm:$0xe]
      %s634 = scalar_lea.vmem %s293, 64
      %v635 = vld [vmem:[%s634] sm:$0xf]
      %v636 = vld [vmem:[%s634 + $0x4] sm:$0xf]
      %v637 = vld [vmem:[%s634 + $0x8] sm:$0xf]
      %v638 = vld [vmem:[%s634 + $0xc] sm:$0xf]
      %v639 = vld [vmem:[%s634 + $0x10] sm:$0xf]
      %v640 = vld [vmem:[%s634 + $0x14] sm:$0xf]
      %v641 = vld [vmem:[%s634 + $0x18] sm:$0xf]
      %v642 = vld [vmem:[%s634 + $0x1c] sm:$0xf]
      %v644 = vunpack.c.l.b16 %v633
      %v645 = vpack.c.b16 %v489, %v644
      %vm646 = vcmask 1046528
      %v647 = vrot.slane %v645, 1
      %v648 = vrot.slane %v495, 1
      %v649 = vsel %vm646, %v647, %v648
      %v650 = vrot.slane %v496, 1
      %v651 = vsel %vm646, %v648, %v650
      %v660 = vunpack.c.l.b16 %v635
      %v661 = vunpack.c.l.b16 %v636
      %v662 = vunpack.c.l.b16 %v637
      %v663 = vunpack.c.l.b16 %v638
      %v664 = vunpack.c.l.b16 %v639
      %v665 = vunpack.c.l.b16 %v640
      %v666 = vunpack.c.l.b16 %v641
      %v667 = vunpack.c.l.b16 %v642
      %v668 = vpack.c.b16 %v661, %v660
      %v669 = vpack.c.b16 %v663, %v662
      %v670 = vpack.c.b16 %v665, %v664
      %v671 = vpack.c.b16 %v667, %v666
      %v677 = vsel %vm545, %v649, 0
      %v680 = vsel %vm545, %v651, 0
      %v683 = vsel %vm545, %v650, 0
      %685 = vmatpush.bf16.msra.mxu0 0
      %686 = vmatpush.bf16.msra.mxu0 0
      %687 = vmatpush.bf16.msra.mxu0 0
      %688 = vmatpush.bf16.msra.mxu0 0
      %689 = vmatpush.bf16.msra.mxu0 %v671
      %690 = vmatpush.bf16.msra.mxu0 %v670
      %691 = vmatpush.bf16.msra.mxu0 %v669
      %692 = vmatpush.bf16.msra.mxu0 %v668
      %693 = vmatmul.bf16.gmra.mxu0 %v677
      %v694 = vpop.f32.mrf.mxu0
      %v695 = vadd.f32 0.0, %v694
      %v696 = vpop.f32.mrf.mxu0
      %v697 = vadd.f32 0.0, %v696
      %698 = vmatmul.bf16.gmra.mxu0 %v680
      %v699 = vpop.f32.mrf.mxu0
      %v700 = vadd.f32 0.0, %v699
      %v701 = vpop.f32.mrf.mxu0
      %v702 = vadd.f32 0.0, %v701
      %703 = vmatmul.bf16.gmra.mxu0 %v683
      %v704 = vpop.f32.mrf.mxu0
      %v705 = vadd.f32 0.0, %v704
      %v706 = vpop.f32.mrf.mxu0
      %707 = vdwg.mxu0
      %v708 = vadd.f32 %v620, %v695
      %v709 = vadd.f32 %v622, %v697
      %v710 = vadd.f32 %v625, %v700
      %v711 = vadd.f32 %v627, %v702
      %v712 = vadd.f32 %v630, %v705
      %v713 = vld [vmem:[#allocation2 + $0x14] sm:$0x3]
      %s714 = scalar_lea.vmem %s293, 96
      %v715 = vld [vmem:[%s714] sm:$0xf]
      %v716 = vld [vmem:[%s714 + $0x4] sm:$0xf]
      %v717 = vld [vmem:[%s714 + $0x8] sm:$0xf]
      %v718 = vld [vmem:[%s714 + $0xc] sm:$0xf]
      %v719 = vld [vmem:[%s714 + $0x10] sm:$0xf]
      %v720 = vld [vmem:[%s714 + $0x14] sm:$0xf]
      %v721 = vld [vmem:[%s714 + $0x18] sm:$0xf]
      %v722 = vld [vmem:[%s714 + $0x1c] sm:$0xf]
      %v724 = vunpack.c.l.b16 %v713
      %v725 = vpack.c.b16 %v724, %v492
      %vm726 = vsmask.f32 6400
      %v728 = vshrl.u32 %v645, 16
      %v730 = vrot.slane %v728, 1
      %v731 = vshll.u32 %v645, 16
      %v733 = vrot.slane %v731, 2
      %v734 = vor.u32 %v730, %v733
      %v735 = vrot.slane %v510, 1
      %v736 = vrot.slane %v506, 2
      %v737 = vor.u32 %v735, %v736
      %v738 = vsel %vm726, %v734, %v737
      %v740 = vshrl.u32 %v725, 16
      %v742 = vrot.slane %v740, 1
      %v743 = vshll.u32 %v725, 16
      %v745 = vrot.slane %v743, 2
      %v746 = vor.u32 %v742, %v745
      %v747 = vsel %vm726, %v737, %v746
      %v756 = vunpack.c.l.b16 %v715
      %v757 = vunpack.c.l.b16 %v716
      %v758 = vunpack.c.l.b16 %v717
      %v759 = vunpack.c.l.b16 %v718
      %v760 = vunpack.c.l.b16 %v719
      %v761 = vunpack.c.l.b16 %v720
      %v762 = vunpack.c.l.b16 %v721
      %v763 = vunpack.c.l.b16 %v722
      %v764 = vpack.c.b16 %v757, %v756
      %v765 = vpack.c.b16 %v759, %v758
      %v766 = vpack.c.b16 %v761, %v760
      %v767 = vpack.c.b16 %v763, %v762
      %v773 = vsel %vm545, %v738, 0
      %v776 = vsel %vm545, %v747, 0
      %v779 = vsel %vm545, %v746, 0
      %781 = vmatpush.bf16.msra.mxu0 0
      %782 = vmatpush.bf16.msra.mxu0 0
      %783 = vmatpush.bf16.msra.mxu0 0
      %784 = vmatpush.bf16.msra.mxu0 0
      %785 = vmatpush.bf16.msra.mxu0 %v767
      %786 = vmatpush.bf16.msra.mxu0 %v766
      %787 = vmatpush.bf16.msra.mxu0 %v765
      %788 = vmatpush.bf16.msra.mxu0 %v764
      %789 = vmatmul.bf16.gmra.mxu0 %v773
      %v790 = vpop.f32.mrf.mxu0
      %v791 = vadd.f32 0.0, %v790
      %v792 = vpop.f32.mrf.mxu0
      %v793 = vadd.f32 0.0, %v792
      %794 = vmatmul.bf16.gmra.mxu0 %v776
      %v795 = vpop.f32.mrf.mxu0
      %v796 = vadd.f32 0.0, %v795
      %v797 = vpop.f32.mrf.mxu0
      %v798 = vadd.f32 0.0, %v797
      %799 = vmatmul.bf16.gmra.mxu0 %v779
      %v800 = vpop.f32.mrf.mxu0
      %v801 = vadd.f32 0.0, %v800
      %v802 = vpop.f32.mrf.mxu0
      %803 = vdwg.mxu0
      %v804 = vadd.f32 %v708, %v791
      %v805 = vadd.f32 %v709, %v793
      %v806 = vadd.f32 %v710, %v796
      %v807 = vadd.f32 %v711, %v798
      %v808 = vadd.f32 %v712, %v801
      %v809 = vld [vmem:[#allocation2 + $0x14] sm:$0xf]
      %s810 = scalar_lea.vmem %s293, 128
      %v811 = vld [vmem:[%s810] sm:$0xf]
      %v812 = vld [vmem:[%s810 + $0x4] sm:$0xf]
      %v813 = vld [vmem:[%s810 + $0x8] sm:$0xf]
      %v814 = vld [vmem:[%s810 + $0xc] sm:$0xf]
      %v815 = vld [vmem:[%s810 + $0x10] sm:$0xf]
      %v816 = vld [vmem:[%s810 + $0x14] sm:$0xf]
      %v817 = vld [vmem:[%s810 + $0x18] sm:$0xf]
      %v818 = vld [vmem:[%s810 + $0x1c] sm:$0xf]
      %v820 = vunpack.c.l.b16 %v809
      %v821 = vpack.c.b16 %v490, %v489
      %v822 = vpack.c.b16 %v492, %v491
      %v823 = vpack.c.b16 %v820, %v820
      %v832 = vunpack.c.l.b16 %v811
      %v833 = vunpack.c.l.b16 %v812
      %v834 = vunpack.c.l.b16 %v813
      %v835 = vunpack.c.l.b16 %v814
      %v836 = vunpack.c.l.b16 %v815
      %v837 = vunpack.c.l.b16 %v816
      %v838 = vunpack.c.l.b16 %v817
      %v839 = vunpack.c.l.b16 %v818
      %v840 = vpack.c.b16 %v833, %v832
      %v841 = vpack.c.b16 %v835, %v834
      %v842 = vpack.c.b16 %v837, %v836
      %v843 = vpack.c.b16 %v839, %v838
      %v849 = vsel %vm545, %v821, 0
      %v852 = vsel %vm545, %v822, 0
      %v855 = vsel %vm545, %v823, 0
      %857 = vmatpush.bf16.msra.mxu0 0
      %858 = vmatpush.bf16.msra.mxu0 0
      %859 = vmatpush.bf16.msra.mxu0 0
      %860 = vmatpush.bf16.msra.mxu0 0
      %861 = vmatpush.bf16.msra.mxu0 %v843
      %862 = vmatpush.bf16.msra.mxu0 %v842
      %863 = vmatpush.bf16.msra.mxu0 %v841
      %864 = vmatpush.bf16.msra.mxu0 %v840
      %865 = vmatmul.bf16.gmra.mxu0 %v849
      %v866 = vpop.f32.mrf.mxu0
      %v867 = vadd.f32 0.0, %v866
      %v868 = vpop.f32.mrf.mxu0
      %v869 = vadd.f32 0.0, %v868
      %870 = vmatmul.bf16.gmra.mxu0 %v852
      %v871 = vpop.f32.mrf.mxu0
      %v872 = vadd.f32 0.0, %v871
      %v873 = vpop.f32.mrf.mxu0
      %v874 = vadd.f32 0.0, %v873
      %875 = vmatmul.bf16.gmra.mxu0 %v855
      %v876 = vpop.f32.mrf.mxu0
      %v877 = vadd.f32 0.0, %v876
      %v878 = vpop.f32.mrf.mxu0
      %879 = vdwg.mxu0
      %v880 = vadd.f32 %v804, %v867
      %v881 = vadd.f32 %v805, %v869
      %v882 = vadd.f32 %v806, %v872
      %v883 = vadd.f32 %v807, %v874
      %v884 = vadd.f32 %v808, %v877
      %v885 = vld [vmem:[#allocation2 + $0x4] sm:$0xf]
      %v886 = vld [vmem:[#allocation2 + $0x8] sm:$0xf]
      %v887 = vld [vmem:[#allocation2 + $0xc] sm:$0xf]
      %v888 = vld [vmem:[#allocation2 + $0x10] sm:$0xf]
      %v889 = vld [vmem:[#allocation2 + $0x14] sm:$0xf]
      %v890 = vld [vmem:[#allocation2 + $0x18] sm:$0x1]
      %s891 = scalar_lea.vmem %s293, 160
      %v892 = vld [vmem:[%s891] sm:$0xf]
      %v893 = vld [vmem:[%s891 + $0x4] sm:$0xf]
      %v894 = vld [vmem:[%s891 + $0x8] sm:$0xf]
      %v895 = vld [vmem:[%s891 + $0xc] sm:$0xf]
      %v896 = vld [vmem:[%s891 + $0x10] sm:$0xf]
      %v897 = vld [vmem:[%s891 + $0x14] sm:$0xf]
      %v898 = vld [vmem:[%s891 + $0x18] sm:$0xf]
      %v899 = vld [vmem:[%s891 + $0x1c] sm:$0xf]
      %v906 = vunpack.c.l.b16 %v885
      %v907 = vunpack.c.l.b16 %v886
      %v908 = vunpack.c.l.b16 %v887
      %v909 = vunpack.c.l.b16 %v888
      %v910 = vunpack.c.l.b16 %v889
      %v911 = vunpack.c.l.b16 %v890
      %v912 = vpack.c.b16 %v907, %v906
      %v913 = vpack.c.b16 %v909, %v908
      %v914 = vpack.c.b16 %v911, %v910
      %v916 = vshrl.u32 %v912, 16
      %v918 = vshll.u32 %v912, 16
      %v920 = vrot.slane %v918, 1
      %v921 = vor.u32 %v916, %v920
      %v923 = vshll.u32 %v913, 16
      %v925 = vrot.slane %v923, 1
      %v926 = vsel %vm497, %v921, %v925
      %v927 = vshrl.u32 %v913, 16
      %v929 = vor.u32 %v927, %v925
      %v931 = vshll.u32 %v914, 16
      %v933 = vrot.slane %v931, 1
      %v934 = vsel %vm497, %v929, %v933
      %v935 = vshrl.u32 %v914, 16
      %v937 = vor.u32 %v935, %v933
      %v946 = vunpack.c.l.b16 %v892
      %v947 = vunpack.c.l.b16 %v893
      %v948 = vunpack.c.l.b16 %v894
      %v949 = vunpack.c.l.b16 %v895
      %v950 = vunpack.c.l.b16 %v896
      %v951 = vunpack.c.l.b16 %v897
      %v952 = vunpack.c.l.b16 %v898
      %v953 = vunpack.c.l.b16 %v899
      %v954 = vpack.c.b16 %v947, %v946
      %v955 = vpack.c.b16 %v949, %v948
      %v956 = vpack.c.b16 %v951, %v950
      %v957 = vpack.c.b16 %v953, %v952
      %v963 = vsel %vm545, %v926, 0
      %v966 = vsel %vm545, %v934, 0
      %v969 = vsel %vm545, %v937, 0
      %971 = vmatpush.bf16.msra.mxu0 0
      %972 = vmatpush.bf16.msra.mxu0 0
      %973 = vmatpush.bf16.msra.mxu0 0
      %974 = vmatpush.bf16.msra.mxu0 0
      %975 = vmatpush.bf16.msra.mxu0 %v957
      %976 = vmatpush.bf16.msra.mxu0 %v956
      %977 = vmatpush.bf16.msra.mxu0 %v955
      %978 = vmatpush.bf16.msra.mxu0 %v954
      %979 = vmatmul.bf16.gmra.mxu0 %v963
      %v980 = vpop.f32.mrf.mxu0
      %v981 = vadd.f32 0.0, %v980
      %v982 = vpop.f32.mrf.mxu0
      %v983 = vadd.f32 0.0, %v982
      %984 = vmatmul.bf16.gmra.mxu0 %v966
      %v985 = vpop.f32.mrf.mxu0
      %v986 = vadd.f32 0.0, %v985
      %v987 = vpop.f32.mrf.mxu0
      %v988 = vadd.f32 0.0, %v987
      %989 = vmatmul.bf16.gmra.mxu0 %v969
      %v990 = vpop.f32.mrf.mxu0
      %v991 = vadd.f32 0.0, %v990
      %v992 = vpop.f32.mrf.mxu0
      %993 = vdwg.mxu0
      %v994 = vadd.f32 %v880, %v981
      %v995 = vadd.f32 %v881, %v983
      %v996 = vadd.f32 %v882, %v986
      %v997 = vadd.f32 %v883, %v988
      %v998 = vadd.f32 %v884, %v991
      %v999 = vld [vmem:[#allocation2 + $0x4] sm:$0xe]
      %s1000 = scalar_lea.vmem %s293, 192
      %v1001 = vld [vmem:[%s1000] sm:$0xf]
      %v1002 = vld [vmem:[%s1000 + $0x4] sm:$0xf]
      %v1003 = vld [vmem:[%s1000 + $0x8] sm:$0xf]
      %v1004 = vld [vmem:[%s1000 + $0xc] sm:$0xf]
      %v1005 = vld [vmem:[%s1000 + $0x10] sm:$0xf]
      %v1006 = vld [vmem:[%s1000 + $0x14] sm:$0xf]
      %v1007 = vld [vmem:[%s1000 + $0x18] sm:$0xf]
      %v1008 = vld [vmem:[%s1000 + $0x1c] sm:$0xf]
      %v1010 = vunpack.c.l.b16 %v999
      %v1011 = vpack.c.b16 %v907, %v1010
      %v1012 = vrot.slane %v1011, 1
      %v1013 = vrot.slane %v913, 1
      %v1014 = vsel %vm646, %v1012, %v1013
      %v1015 = vrot.slane %v914, 1
      %v1016 = vsel %vm646, %v1013, %v1015
      %v1025 = vunpack.c.l.b16 %v1001
      %v1026 = vunpack.c.l.b16 %v1002
      %v1027 = vunpack.c.l.b16 %v1003
      %v1028 = vunpack.c.l.b16 %v1004
      %v1029 = vunpack.c.l.b16 %v1005
      %v1030 = vunpack.c.l.b16 %v1006
      %v1031 = vunpack.c.l.b16 %v1007
      %v1032 = vunpack.c.l.b16 %v1008
      %v1033 = vpack.c.b16 %v1026, %v1025
      %v1034 = vpack.c.b16 %v1028, %v1027
      %v1035 = vpack.c.b16 %v1030, %v1029
      %v1036 = vpack.c.b16 %v1032, %v1031
      %v1042 = vsel %vm545, %v1014, 0
      %v1045 = vsel %vm545, %v1016, 0
      %v1048 = vsel %vm545, %v1015, 0
      %1050 = vmatpush.bf16.msra.mxu0 0
      %1051 = vmatpush.bf16.msra.mxu0 0
      %1052 = vmatpush.bf16.msra.mxu0 0
      %1053 = vmatpush.bf16.msra.mxu0 0
      %1054 = vmatpush.bf16.msra.mxu0 %v1036
      %1055 = vmatpush.bf16.msra.mxu0 %v1035
      %1056 = vmatpush.bf16.msra.mxu0 %v1034
      %1057 = vmatpush.bf16.msra.mxu0 %v1033
      %1058 = vmatmul.bf16.gmra.mxu0 %v1042
      %v1059 = vpop.f32.mrf.mxu0
      %v1060 = vadd.f32 0.0, %v1059
      %v1061 = vpop.f32.mrf.mxu0
      %v1062 = vadd.f32 0.0, %v1061
      %1063 = vmatmul.bf16.gmra.mxu0 %v1045
      %v1064 = vpop.f32.mrf.mxu0
      %v1065 = vadd.f32 0.0, %v1064
      %v1066 = vpop.f32.mrf.mxu0
      %v1067 = vadd.f32 0.0, %v1066
      %1068 = vmatmul.bf16.gmra.mxu0 %v1048
      %v1069 = vpop.f32.mrf.mxu0
      %v1070 = vadd.f32 0.0, %v1069
      %v1071 = vpop.f32.mrf.mxu0
      %1072 = vdwg.mxu0
      %v1073 = vadd.f32 %v994, %v1060
      %v1074 = vadd.f32 %v995, %v1062
      %v1075 = vadd.f32 %v996, %v1065
      %v1076 = vadd.f32 %v997, %v1067
      %v1077 = vadd.f32 %v998, %v1070
      %v1078 = vld [vmem:[#allocation2 + $0x18] sm:$0x3]
      %s1079 = scalar_lea.vmem %s293, 224
      %v1080 = vld [vmem:[%s1079] sm:$0xf]
      %v1081 = vld [vmem:[%s1079 + $0x4] sm:$0xf]
      %v1082 = vld [vmem:[%s1079 + $0x8] sm:$0xf]
      %v1083 = vld [vmem:[%s1079 + $0xc] sm:$0xf]
      %v1084 = vld [vmem:[%s1079 + $0x10] sm:$0xf]
      %v1085 = vld [vmem:[%s1079 + $0x14] sm:$0xf]
      %v1086 = vld [vmem:[%s1079 + $0x18] sm:$0xf]
      %v1087 = vld [vmem:[%s1079 + $0x1c] sm:$0xf]
      %v1089 = vunpack.c.l.b16 %v1078
      %v1090 = vpack.c.b16 %v1089, %v910
      %v1092 = vshrl.u32 %v1011, 16
      %v1094 = vrot.slane %v1092, 1
      %v1095 = vshll.u32 %v1011, 16
      %v1097 = vrot.slane %v1095, 2
      %v1098 = vor.u32 %v1094, %v1097
      %v1099 = vrot.slane %v927, 1
      %v1100 = vrot.slane %v923, 2
      %v1101 = vor.u32 %v1099, %v1100
      %v1102 = vsel %vm726, %v1098, %v1101
      %v1104 = vshrl.u32 %v1090, 16
      %v1106 = vrot.slane %v1104, 1
      %v1107 = vshll.u32 %v1090, 16
      %v1109 = vrot.slane %v1107, 2
      %v1110 = vor.u32 %v1106, %v1109
      %v1111 = vsel %vm726, %v1101, %v1110
      %v1120 = vunpack.c.l.b16 %v1080
      %v1121 = vunpack.c.l.b16 %v1081
      %v1122 = vunpack.c.l.b16 %v1082
      %v1123 = vunpack.c.l.b16 %v1083
      %v1124 = vunpack.c.l.b16 %v1084
      %v1125 = vunpack.c.l.b16 %v1085
      %v1126 = vunpack.c.l.b16 %v1086
      %v1127 = vunpack.c.l.b16 %v1087
      %v1128 = vpack.c.b16 %v1121, %v1120
      %v1129 = vpack.c.b16 %v1123, %v1122
      %v1130 = vpack.c.b16 %v1125, %v1124
      %v1131 = vpack.c.b16 %v1127, %v1126
      %v1137 = vsel %vm545, %v1102, 0
      %v1140 = vsel %vm545, %v1111, 0
      %v1143 = vsel %vm545, %v1110, 0
      %1145 = vmatpush.bf16.msra.mxu0 0
      %1146 = vmatpush.bf16.msra.mxu0 0
      %1147 = vmatpush.bf16.msra.mxu0 0
      %1148 = vmatpush.bf16.msra.mxu0 0
      %1149 = vmatpush.bf16.msra.mxu0 %v1131
      %1150 = vmatpush.bf16.msra.mxu0 %v1130
      %1151 = vmatpush.bf16.msra.mxu0 %v1129
      %1152 = vmatpush.bf16.msra.mxu0 %v1128
      %1153 = vmatmul.bf16.gmra.mxu0 %v1137
      %v1154 = vpop.f32.mrf.mxu0
      %v1155 = vadd.f32 0.0, %v1154
      %v1156 = vpop.f32.mrf.mxu0
      %v1157 = vadd.f32 0.0, %v1156
      %1158 = vmatmul.bf16.gmra.mxu0 %v1140
      %v1159 = vpop.f32.mrf.mxu0
      %v1160 = vadd.f32 0.0, %v1159
      %v1161 = vpop.f32.mrf.mxu0
      %v1162 = vadd.f32 0.0, %v1161
      %1163 = vmatmul.bf16.gmra.mxu0 %v1143
      %v1164 = vpop.f32.mrf.mxu0
      %v1165 = vadd.f32 0.0, %v1164
      %v1166 = vpop.f32.mrf.mxu0
      %1167 = vdwg.mxu0
      %v1168 = vadd.f32 %v1073, %v1155
      %v1169 = vadd.f32 %v1074, %v1157
      %v1170 = vadd.f32 %v1075, %v1160
      %v1171 = vadd.f32 %v1076, %v1162
      %v1172 = vadd.f32 %v1077, %v1165
      %v1173 = vld [vmem:[#allocation2 + $0x18] sm:$0xf]
      %s1174 = scalar_lea.vmem %s293, 256
      %v1175 = vld [vmem:[%s1174] sm:$0xf]
      %v1176 = vld [vmem:[%s1174 + $0x4] sm:$0xf]
      %v1177 = vld [vmem:[%s1174 + $0x8] sm:$0xf]
      %v1178 = vld [vmem:[%s1174 + $0xc] sm:$0xf]
      %v1179 = vld [vmem:[%s1174 + $0x10] sm:$0xf]
      %v1180 = vld [vmem:[%s1174 + $0x14] sm:$0xf]
      %v1181 = vld [vmem:[%s1174 + $0x18] sm:$0xf]
      %v1182 = vld [vmem:[%s1174 + $0x1c] sm:$0xf]
      %v1184 = vunpack.c.l.b16 %v1173
      %v1185 = vpack.c.b16 %v908, %v907
      %v1186 = vpack.c.b16 %v910, %v909
      %v1187 = vpack.c.b16 %v1184, %v1184
      %v1196 = vunpack.c.l.b16 %v1175
      %v1197 = vunpack.c.l.b16 %v1176
      %v1198 = vunpack.c.l.b16 %v1177
      %v1199 = vunpack.c.l.b16 %v1178
      %v1200 = vunpack.c.l.b16 %v1179
      %v1201 = vunpack.c.l.b16 %v1180
      %v1202 = vunpack.c.l.b16 %v1181
      %v1203 = vunpack.c.l.b16 %v1182
      %v1204 = vpack.c.b16 %v1197, %v1196
      %v1205 = vpack.c.b16 %v1199, %v1198
      %v1206 = vpack.c.b16 %v1201, %v1200
      %v1207 = vpack.c.b16 %v1203, %v1202
      %v1213 = vsel %vm545, %v1185, 0
      %v1216 = vsel %vm545, %v1186, 0
      %v1219 = vsel %vm545, %v1187, 0
      %1221 = vmatpush.bf16.msra.mxu0 0
      %1222 = vmatpush.bf16.msra.mxu0 0
      %1223 = vmatpush.bf16.msra.mxu0 0
      %1224 = vmatpush.bf16.msra.mxu0 0
      %1225 = vmatpush.bf16.msra.mxu0 %v1207
      %1226 = vmatpush.bf16.msra.mxu0 %v1206
      %1227 = vmatpush.bf16.msra.mxu0 %v1205
      %1228 = vmatpush.bf16.msra.mxu0 %v1204
      %1229 = vmatmul.bf16.gmra.mxu0 %v1213
      %v1230 = vpop.f32.mrf.mxu0
      %v1231 = vadd.f32 0.0, %v1230
      %v1232 = vpop.f32.mrf.mxu0
      %v1233 = vadd.f32 0.0, %v1232
      %1234 = vmatmul.bf16.gmra.mxu0 %v1216
      %v1235 = vpop.f32.mrf.mxu0
      %v1236 = vadd.f32 0.0, %v1235
      %v1237 = vpop.f32.mrf.mxu0
      %v1238 = vadd.f32 0.0, %v1237
      %1239 = vmatmul.bf16.gmra.mxu0 %v1219
      %v1240 = vpop.f32.mrf.mxu0
      %v1241 = vadd.f32 0.0, %v1240
      %v1242 = vpop.f32.mrf.mxu0
      %1243 = vdwg.mxu0
      %v1244 = vadd.f32 %v1168, %v1231
      %v1245 = vadd.f32 %v1169, %v1233
      %v1246 = vadd.f32 %v1170, %v1236
      %v1247 = vadd.f32 %v1171, %v1238
      %v1248 = vadd.f32 %v1172, %v1241
      %v1249 = vld [vmem:[#allocation2 + $0x8] sm:$0xf]
      %v1250 = vld [vmem:[#allocation2 + $0xc] sm:$0xf]
      %v1251 = vld [vmem:[#allocation2 + $0x10] sm:$0xf]
      %v1252 = vld [vmem:[#allocation2 + $0x14] sm:$0xf]
      %v1253 = vld [vmem:[#allocation2 + $0x18] sm:$0xf]
      %v1254 = vld [vmem:[#allocation2 + $0x1c] sm:$0x1]
      %s1255 = scalar_lea.vmem %s293, 288
      %v1256 = vld [vmem:[%s1255] sm:$0xf]
      %v1257 = vld [vmem:[%s1255 + $0x4] sm:$0xf]
      %v1258 = vld [vmem:[%s1255 + $0x8] sm:$0xf]
      %v1259 = vld [vmem:[%s1255 + $0xc] sm:$0xf]
      %v1260 = vld [vmem:[%s1255 + $0x10] sm:$0xf]
      %v1261 = vld [vmem:[%s1255 + $0x14] sm:$0xf]
      %v1262 = vld [vmem:[%s1255 + $0x18] sm:$0xf]
      %v1263 = vld [vmem:[%s1255 + $0x1c] sm:$0xf]
      %v1270 = vunpack.c.l.b16 %v1249
      %v1271 = vunpack.c.l.b16 %v1250
      %v1272 = vunpack.c.l.b16 %v1251
      %v1273 = vunpack.c.l.b16 %v1252
      %v1274 = vunpack.c.l.b16 %v1253
      %v1275 = vunpack.c.l.b16 %v1254
      %v1276 = vpack.c.b16 %v1271, %v1270
      %v1277 = vpack.c.b16 %v1273, %v1272
      %v1278 = vpack.c.b16 %v1275, %v1274
      %v1280 = vshrl.u32 %v1276, 16
      %v1282 = vshll.u32 %v1276, 16
      %v1284 = vrot.slane %v1282, 1
      %v1285 = vor.u32 %v1280, %v1284
      %v1287 = vshll.u32 %v1277, 16
      %v1289 = vrot.slane %v1287, 1
      %v1290 = vsel %vm497, %v1285, %v1289
      %v1291 = vshrl.u32 %v1277, 16
      %v1293 = vor.u32 %v1291, %v1289
      %v1295 = vshll.u32 %v1278, 16
      %v1297 = vrot.slane %v1295, 1
      %v1298 = vsel %vm497, %v1293, %v1297
      %v1299 = vshrl.u32 %v1278, 16
      %v1301 = vor.u32 %v1299, %v1297
      %v1310 = vunpack.c.l.b16 %v1256
      %v1311 = vunpack.c.l.b16 %v1257
      %v1312 = vunpack.c.l.b16 %v1258
      %v1313 = vunpack.c.l.b16 %v1259
      %v1314 = vunpack.c.l.b16 %v1260
      %v1315 = vunpack.c.l.b16 %v1261
      %v1316 = vunpack.c.l.b16 %v1262
      %v1317 = vunpack.c.l.b16 %v1263
      %v1318 = vpack.c.b16 %v1311, %v1310
      %v1319 = vpack.c.b16 %v1313, %v1312
      %v1320 = vpack.c.b16 %v1315, %v1314
      %v1321 = vpack.c.b16 %v1317, %v1316
      %v1327 = vsel %vm545, %v1290, 0
      %v1330 = vsel %vm545, %v1298, 0
      %v1333 = vsel %vm545, %v1301, 0
      %1335 = vmatpush.bf16.msra.mxu0 0
      %1336 = vmatpush.bf16.msra.mxu0 0
      %1337 = vmatpush.bf16.msra.mxu0 0
      %1338 = vmatpush.bf16.msra.mxu0 0
      %1339 = vmatpush.bf16.msra.mxu0 %v1321
      %1340 = vmatpush.bf16.msra.mxu0 %v1320
      %1341 = vmatpush.bf16.msra.mxu0 %v1319
      %1342 = vmatpush.bf16.msra.mxu0 %v1318
      %1343 = vmatmul.bf16.gmra.mxu0 %v1327
      %v1344 = vpop.f32.mrf.mxu0
      %v1345 = vadd.f32 0.0, %v1344
      %v1346 = vpop.f32.mrf.mxu0
      %v1347 = vadd.f32 0.0, %v1346
      %1348 = vmatmul.bf16.gmra.mxu0 %v1330
      %v1349 = vpop.f32.mrf.mxu0
      %v1350 = vadd.f32 0.0, %v1349
      %v1351 = vpop.f32.mrf.mxu0
      %v1352 = vadd.f32 0.0, %v1351
      %1353 = vmatmul.bf16.gmra.mxu0 %v1333
      %v1354 = vpop.f32.mrf.mxu0
      %v1355 = vadd.f32 0.0, %v1354
      %v1356 = vpop.f32.mrf.mxu0
      %1357 = vdwg.mxu0
      %v1358 = vadd.f32 %v1244, %v1345
      %v1359 = vadd.f32 %v1245, %v1347
      %v1360 = vadd.f32 %v1246, %v1350
      %v1361 = vadd.f32 %v1247, %v1352
      %v1362 = vadd.f32 %v1248, %v1355
      %v1363 = vld [vmem:[#allocation2 + $0x8] sm:$0xe]
      %s1364 = scalar_lea.vmem %s293, 320
      %v1365 = vld [vmem:[%s1364] sm:$0xf]
      %v1366 = vld [vmem:[%s1364 + $0x4] sm:$0xf]
      %v1367 = vld [vmem:[%s1364 + $0x8] sm:$0xf]
      %v1368 = vld [vmem:[%s1364 + $0xc] sm:$0xf]
      %v1369 = vld [vmem:[%s1364 + $0x10] sm:$0xf]
      %v1370 = vld [vmem:[%s1364 + $0x14] sm:$0xf]
      %v1371 = vld [vmem:[%s1364 + $0x18] sm:$0xf]
      %v1372 = vld [vmem:[%s1364 + $0x1c] sm:$0xf]
      %v1374 = vunpack.c.l.b16 %v1363
      %v1375 = vpack.c.b16 %v1271, %v1374
      %v1376 = vrot.slane %v1375, 1
      %v1377 = vrot.slane %v1277, 1
      %v1378 = vsel %vm646, %v1376, %v1377
      %v1379 = vrot.slane %v1278, 1
      %v1380 = vsel %vm646, %v1377, %v1379
      %v1389 = vunpack.c.l.b16 %v1365
      %v1390 = vunpack.c.l.b16 %v1366
      %v1391 = vunpack.c.l.b16 %v1367
      %v1392 = vunpack.c.l.b16 %v1368
      %v1393 = vunpack.c.l.b16 %v1369
      %v1394 = vunpack.c.l.b16 %v1370
      %v1395 = vunpack.c.l.b16 %v1371
      %v1396 = vunpack.c.l.b16 %v1372
      %v1397 = vpack.c.b16 %v1390, %v1389
      %v1398 = vpack.c.b16 %v1392, %v1391
      %v1399 = vpack.c.b16 %v1394, %v1393
      %v1400 = vpack.c.b16 %v1396, %v1395
      %v1406 = vsel %vm545, %v1378, 0
      %v1409 = vsel %vm545, %v1380, 0
      %v1412 = vsel %vm545, %v1379, 0
      %1414 = vmatpush.bf16.msra.mxu0 0
      %1415 = vmatpush.bf16.msra.mxu0 0
      %1416 = vmatpush.bf16.msra.mxu0 0
      %1417 = vmatpush.bf16.msra.mxu0 0
      %1418 = vmatpush.bf16.msra.mxu0 %v1400
      %1419 = vmatpush.bf16.msra.mxu0 %v1399
      %1420 = vmatpush.bf16.msra.mxu0 %v1398
      %1421 = vmatpush.bf16.msra.mxu0 %v1397
      %1422 = vmatmul.bf16.gmra.mxu0 %v1406
      %v1423 = vpop.f32.mrf.mxu0
      %v1424 = vadd.f32 0.0, %v1423
      %v1425 = vpop.f32.mrf.mxu0
      %v1426 = vadd.f32 0.0, %v1425
      %1427 = vmatmul.bf16.gmra.mxu0 %v1409
      %v1428 = vpop.f32.mrf.mxu0
      %v1429 = vadd.f32 0.0, %v1428
      %v1430 = vpop.f32.mrf.mxu0
      %v1431 = vadd.f32 0.0, %v1430
      %1432 = vmatmul.bf16.gmra.mxu0 %v1412
      %v1433 = vpop.f32.mrf.mxu0
      %v1434 = vadd.f32 0.0, %v1433
      %v1435 = vpop.f32.mrf.mxu0
      %1436 = vdwg.mxu0
      %v1437 = vadd.f32 %v1358, %v1424
      %v1438 = vadd.f32 %v1359, %v1426
      %v1439 = vadd.f32 %v1360, %v1429
      %v1440 = vadd.f32 %v1361, %v1431
      %v1441 = vadd.f32 %v1362, %v1434
      %v1442 = vld [vmem:[#allocation2 + $0x1c] sm:$0x3]
      %s1443 = scalar_lea.vmem %s293, 352
      %v1444 = vld [vmem:[%s1443] sm:$0xf]
      %v1445 = vld [vmem:[%s1443 + $0x4] sm:$0xf]
      %v1446 = vld [vmem:[%s1443 + $0x8] sm:$0xf]
      %v1447 = vld [vmem:[%s1443 + $0xc] sm:$0xf]
      %v1448 = vld [vmem:[%s1443 + $0x10] sm:$0xf]
      %v1449 = vld [vmem:[%s1443 + $0x14] sm:$0xf]
      %v1450 = vld [vmem:[%s1443 + $0x18] sm:$0xf]
      %v1451 = vld [vmem:[%s1443 + $0x1c] sm:$0xf]
      %v1453 = vunpack.c.l.b16 %v1442
      %v1454 = vpack.c.b16 %v1453, %v1274
      %v1456 = vshrl.u32 %v1375, 16
      %v1458 = vrot.slane %v1456, 1
      %v1459 = vshll.u32 %v1375, 16
      %v1461 = vrot.slane %v1459, 2
      %v1462 = vor.u32 %v1458, %v1461
      %v1463 = vrot.slane %v1291, 1
      %v1464 = vrot.slane %v1287, 2
      %v1465 = vor.u32 %v1463, %v1464
      %v1466 = vsel %vm726, %v1462, %v1465
      %v1468 = vshrl.u32 %v1454, 16
      %v1470 = vrot.slane %v1468, 1
      %v1471 = vshll.u32 %v1454, 16
      %v1473 = vrot.slane %v1471, 2
      %v1474 = vor.u32 %v1470, %v1473
      %v1475 = vsel %vm726, %v1465, %v1474
      %v1484 = vunpack.c.l.b16 %v1444
      %v1485 = vunpack.c.l.b16 %v1445
      %v1486 = vunpack.c.l.b16 %v1446
      %v1487 = vunpack.c.l.b16 %v1447
      %v1488 = vunpack.c.l.b16 %v1448
      %v1489 = vunpack.c.l.b16 %v1449
      %v1490 = vunpack.c.l.b16 %v1450
      %v1491 = vunpack.c.l.b16 %v1451
      %v1492 = vpack.c.b16 %v1485, %v1484
      %v1493 = vpack.c.b16 %v1487, %v1486
      %v1494 = vpack.c.b16 %v1489, %v1488
      %v1495 = vpack.c.b16 %v1491, %v1490
      %v1501 = vsel %vm545, %v1466, 0
      %v1504 = vsel %vm545, %v1475, 0
      %v1507 = vsel %vm545, %v1474, 0
      %1509 = vmatpush.bf16.msra.mxu0 0
      %1510 = vmatpush.bf16.msra.mxu0 0
      %1511 = vmatpush.bf16.msra.mxu0 0
      %1512 = vmatpush.bf16.msra.mxu0 0
      %1513 = vmatpush.bf16.msra.mxu0 %v1495
      %1514 = vmatpush.bf16.msra.mxu0 %v1494
      %1515 = vmatpush.bf16.msra.mxu0 %v1493
      %1516 = vmatpush.bf16.msra.mxu0 %v1492
      %1517 = vmatmul.bf16.gmra.mxu0 %v1501
      %v1518 = vpop.f32.mrf.mxu0
      %v1519 = vadd.f32 0.0, %v1518
      %v1520 = vpop.f32.mrf.mxu0
      %v1521 = vadd.f32 0.0, %v1520
      %1522 = vmatmul.bf16.gmra.mxu0 %v1504
      %v1523 = vpop.f32.mrf.mxu0
      %v1524 = vadd.f32 0.0, %v1523
      %v1525 = vpop.f32.mrf.mxu0
      %v1526 = vadd.f32 0.0, %v1525
      %1527 = vmatmul.bf16.gmra.mxu0 %v1507
      %v1528 = vpop.f32.mrf.mxu0
      %v1529 = vadd.f32 0.0, %v1528
      %v1530 = vpop.f32.mrf.mxu0
      %1531 = vdwg.mxu0
      %v1532 = vadd.f32 %v1437, %v1519
      %v1533 = vadd.f32 %v1438, %v1521
      %v1534 = vadd.f32 %v1439, %v1524
      %v1535 = vadd.f32 %v1440, %v1526
      %v1536 = vadd.f32 %v1441, %v1529
      %v1537 = vld [vmem:[#allocation2 + $0x1c] sm:$0xf]
      %s1538 = scalar_lea.vmem %s293, 384
      %v1539 = vld [vmem:[%s1538] sm:$0xf]
      %v1540 = vld [vmem:[%s1538 + $0x4] sm:$0xf]
      %v1541 = vld [vmem:[%s1538 + $0x8] sm:$0xf]
      %v1542 = vld [vmem:[%s1538 + $0xc] sm:$0xf]
      %v1543 = vld [vmem:[%s1538 + $0x10] sm:$0xf]
      %v1544 = vld [vmem:[%s1538 + $0x14] sm:$0xf]
      %v1545 = vld [vmem:[%s1538 + $0x18] sm:$0xf]
      %v1546 = vld [vmem:[%s1538 + $0x1c] sm:$0xf]
      %v1548 = vunpack.c.l.b16 %v1537
      %v1549 = vpack.c.b16 %v1272, %v1271
      %v1550 = vpack.c.b16 %v1274, %v1273
      %v1551 = vpack.c.b16 %v1548, %v1548
      %v1560 = vunpack.c.l.b16 %v1539
      %v1561 = vunpack.c.l.b16 %v1540
      %v1562 = vunpack.c.l.b16 %v1541
      %v1563 = vunpack.c.l.b16 %v1542
      %v1564 = vunpack.c.l.b16 %v1543
      %v1565 = vunpack.c.l.b16 %v1544
      %v1566 = vunpack.c.l.b16 %v1545
      %v1567 = vunpack.c.l.b16 %v1546
      %v1568 = vpack.c.b16 %v1561, %v1560
      %v1569 = vpack.c.b16 %v1563, %v1562
      %v1570 = vpack.c.b16 %v1565, %v1564
      %v1571 = vpack.c.b16 %v1567, %v1566
      %v1577 = vsel %vm545, %v1549, 0
      %v1580 = vsel %vm545, %v1550, 0
      %v1583 = vsel %vm545, %v1551, 0
      %1585 = vmatpush.bf16.msra.mxu0 0
      %1586 = vmatpush.bf16.msra.mxu0 0
      %1587 = vmatpush.bf16.msra.mxu0 0
      %1588 = vmatpush.bf16.msra.mxu0 0
      %1589 = vmatpush.bf16.msra.mxu0 %v1571
      %1590 = vmatpush.bf16.msra.mxu0 %v1570
      %1591 = vmatpush.bf16.msra.mxu0 %v1569
      %1592 = vmatpush.bf16.msra.mxu0 %v1568
      %1593 = vmatmul.bf16.gmra.mxu0 %v1577
      %v1594 = vpop.f32.mrf.mxu0
      %v1595 = vadd.f32 0.0, %v1594
      %v1596 = vpop.f32.mrf.mxu0
      %v1597 = vadd.f32 0.0, %v1596
      %1598 = vmatmul.bf16.gmra.mxu0 %v1580
      %v1599 = vpop.f32.mrf.mxu0
      %v1600 = vadd.f32 0.0, %v1599
      %v1601 = vpop.f32.mrf.mxu0
      %v1602 = vadd.f32 0.0, %v1601
      %1603 = vmatmul.bf16.gmra.mxu0 %v1583
      %v1604 = vpop.f32.mrf.mxu0
      %v1605 = vadd.f32 0.0, %v1604
      %v1606 = vpop.f32.mrf.mxu0
      %1607 = vdwg.mxu0
      %v1608 = vadd.f32 %v1532, %v1595
      %v1609 = vadd.f32 %v1533, %v1597
      %v1610 = vadd.f32 %v1534, %v1600
      %v1611 = vadd.f32 %v1535, %v1602
      %v1612 = vadd.f32 %v1536, %v1605
      %v1613 = vld [vmem:[#allocation2 + $0xc] sm:$0xf]
      %v1614 = vld [vmem:[#allocation2 + $0x10] sm:$0xf]
      %v1615 = vld [vmem:[#allocation2 + $0x14] sm:$0xf]
      %v1616 = vld [vmem:[#allocation2 + $0x18] sm:$0xf]
      %v1617 = vld [vmem:[#allocation2 + $0x1c] sm:$0xf]
      %v1618 = vld [vmem:[#allocation2 + $0x20] sm:$0x1]
      %s1619 = scalar_lea.vmem %s293, 416
      %v1620 = vld [vmem:[%s1619] sm:$0xf]
      %v1621 = vld [vmem:[%s1619 + $0x4] sm:$0xf]
      %v1622 = vld [vmem:[%s1619 + $0x8] sm:$0xf]
      %v1623 = vld [vmem:[%s1619 + $0xc] sm:$0xf]
      %v1624 = vld [vmem:[%s1619 + $0x10] sm:$0xf]
      %v1625 = vld [vmem:[%s1619 + $0x14] sm:$0xf]
      %v1626 = vld [vmem:[%s1619 + $0x18] sm:$0xf]
      %v1627 = vld [vmem:[%s1619 + $0x1c] sm:$0xf]
      %v1634 = vunpack.c.l.b16 %v1613
      %v1635 = vunpack.c.l.b16 %v1614
      %v1636 = vunpack.c.l.b16 %v1615
      %v1637 = vunpack.c.l.b16 %v1616
      %v1638 = vunpack.c.l.b16 %v1617
      %v1639 = vunpack.c.l.b16 %v1618
      %v1640 = vpack.c.b16 %v1635, %v1634
      %v1641 = vpack.c.b16 %v1637, %v1636
      %v1642 = vpack.c.b16 %v1639, %v1638
      %v1644 = vshrl.u32 %v1640, 16
      %v1646 = vshll.u32 %v1640, 16
      %v1648 = vrot.slane %v1646, 1
      %v1649 = vor.u32 %v1644, %v1648
      %v1651 = vshll.u32 %v1641, 16
      %v1653 = vrot.slane %v1651, 1
      %v1654 = vsel %vm497, %v1649, %v1653
      %v1655 = vshrl.u32 %v1641, 16
      %v1657 = vor.u32 %v1655, %v1653
      %v1659 = vshll.u32 %v1642, 16
      %v1661 = vrot.slane %v1659, 1
      %v1662 = vsel %vm497, %v1657, %v1661
      %v1663 = vshrl.u32 %v1642, 16
      %v1665 = vor.u32 %v1663, %v1661
      %v1674 = vunpack.c.l.b16 %v1620
      %v1675 = vunpack.c.l.b16 %v1621
      %v1676 = vunpack.c.l.b16 %v1622
      %v1677 = vunpack.c.l.b16 %v1623
      %v1678 = vunpack.c.l.b16 %v1624
      %v1679 = vunpack.c.l.b16 %v1625
      %v1680 = vunpack.c.l.b16 %v1626
      %v1681 = vunpack.c.l.b16 %v1627
      %v1682 = vpack.c.b16 %v1675, %v1674
      %v1683 = vpack.c.b16 %v1677, %v1676
      %v1684 = vpack.c.b16 %v1679, %v1678
      %v1685 = vpack.c.b16 %v1681, %v1680
      %v1691 = vsel %vm545, %v1654, 0
      %v1694 = vsel %vm545, %v1662, 0
      %v1697 = vsel %vm545, %v1665, 0
      %1699 = vmatpush.bf16.msra.mxu0 0
      %1700 = vmatpush.bf16.msra.mxu0 0
      %1701 = vmatpush.bf16.msra.mxu0 0
      %1702 = vmatpush.bf16.msra.mxu0 0
      %1703 = vmatpush.bf16.msra.mxu0 %v1685
      %1704 = vmatpush.bf16.msra.mxu0 %v1684
      %1705 = vmatpush.bf16.msra.mxu0 %v1683
      %1706 = vmatpush.bf16.msra.mxu0 %v1682
      %1707 = vmatmul.bf16.gmra.mxu0 %v1691
      %v1708 = vpop.f32.mrf.mxu0
      %v1709 = vadd.f32 0.0, %v1708
      %v1710 = vpop.f32.mrf.mxu0
      %v1711 = vadd.f32 0.0, %v1710
      %1712 = vmatmul.bf16.gmra.mxu0 %v1694
      %v1713 = vpop.f32.mrf.mxu0
      %v1714 = vadd.f32 0.0, %v1713
      %v1715 = vpop.f32.mrf.mxu0
      %v1716 = vadd.f32 0.0, %v1715
      %1717 = vmatmul.bf16.gmra.mxu0 %v1697
      %v1718 = vpop.f32.mrf.mxu0
      %v1719 = vadd.f32 0.0, %v1718
      %v1720 = vpop.f32.mrf.mxu0
      %1721 = vdwg.mxu0
      %v1722 = vadd.f32 %v1608, %v1709
      %v1723 = vadd.f32 %v1609, %v1711
      %v1724 = vadd.f32 %v1610, %v1714
      %v1725 = vadd.f32 %v1611, %v1716
      %v1726 = vadd.f32 %v1612, %v1719
      %v1727 = vld [vmem:[#allocation2 + $0xc] sm:$0xe]
      %s1728 = scalar_lea.vmem %s293, 448
      %v1729 = vld [vmem:[%s1728] sm:$0xf]
      %v1730 = vld [vmem:[%s1728 + $0x4] sm:$0xf]
      %v1731 = vld [vmem:[%s1728 + $0x8] sm:$0xf]
      %v1732 = vld [vmem:[%s1728 + $0xc] sm:$0xf]
      %v1733 = vld [vmem:[%s1728 + $0x10] sm:$0xf]
      %v1734 = vld [vmem:[%s1728 + $0x14] sm:$0xf]
      %v1735 = vld [vmem:[%s1728 + $0x18] sm:$0xf]
      %v1736 = vld [vmem:[%s1728 + $0x1c] sm:$0xf]
      %v1738 = vunpack.c.l.b16 %v1727
      %v1739 = vpack.c.b16 %v1635, %v1738
      %v1740 = vrot.slane %v1739, 1
      %v1741 = vrot.slane %v1641, 1
      %v1742 = vsel %vm646, %v1740, %v1741
      %v1743 = vrot.slane %v1642, 1
      %v1744 = vsel %vm646, %v1741, %v1743
      %v1753 = vunpack.c.l.b16 %v1729
      %v1754 = vunpack.c.l.b16 %v1730
      %v1755 = vunpack.c.l.b16 %v1731
      %v1756 = vunpack.c.l.b16 %v1732
      %v1757 = vunpack.c.l.b16 %v1733
      %v1758 = vunpack.c.l.b16 %v1734
      %v1759 = vunpack.c.l.b16 %v1735
      %v1760 = vunpack.c.l.b16 %v1736
      %v1761 = vpack.c.b16 %v1754, %v1753
      %v1762 = vpack.c.b16 %v1756, %v1755
      %v1763 = vpack.c.b16 %v1758, %v1757
      %v1764 = vpack.c.b16 %v1760, %v1759
      %v1770 = vsel %vm545, %v1742, 0
      %v1773 = vsel %vm545, %v1744, 0
      %v1776 = vsel %vm545, %v1743, 0
      %1778 = vmatpush.bf16.msra.mxu0 0
      %1779 = vmatpush.bf16.msra.mxu0 0
      %1780 = vmatpush.bf16.msra.mxu0 0
      %1781 = vmatpush.bf16.msra.mxu0 0
      %1782 = vmatpush.bf16.msra.mxu0 %v1764
      %1783 = vmatpush.bf16.msra.mxu0 %v1763
      %1784 = vmatpush.bf16.msra.mxu0 %v1762
      %1785 = vmatpush.bf16.msra.mxu0 %v1761
      %1786 = vmatmul.bf16.gmra.mxu0 %v1770
      %v1787 = vpop.f32.mrf.mxu0
      %v1788 = vadd.f32 0.0, %v1787
      %v1789 = vpop.f32.mrf.mxu0
      %v1790 = vadd.f32 0.0, %v1789
      %1791 = vmatmul.bf16.gmra.mxu0 %v1773
      %v1792 = vpop.f32.mrf.mxu0
      %v1793 = vadd.f32 0.0, %v1792
      %v1794 = vpop.f32.mrf.mxu0
      %v1795 = vadd.f32 0.0, %v1794
      %1796 = vmatmul.bf16.gmra.mxu0 %v1776
      %v1797 = vpop.f32.mrf.mxu0
      %v1798 = vadd.f32 0.0, %v1797
      %v1799 = vpop.f32.mrf.mxu0
      %1800 = vdwg.mxu0
      %v1801 = vadd.f32 %v1722, %v1788
      %v1802 = vadd.f32 %v1723, %v1790
      %v1803 = vadd.f32 %v1724, %v1793
      %v1804 = vadd.f32 %v1725, %v1795
      %v1805 = vadd.f32 %v1726, %v1798
      %v1806 = vld [vmem:[#allocation2 + $0x20] sm:$0x3]
      %s1807 = scalar_lea.vmem %s293, 480
      %v1808 = vld [vmem:[%s1807] sm:$0xf]
      %v1809 = vld [vmem:[%s1807 + $0x4] sm:$0xf]
      %v1810 = vld [vmem:[%s1807 + $0x8] sm:$0xf]
      %v1811 = vld [vmem:[%s1807 + $0xc] sm:$0xf]
      %v1812 = vld [vmem:[%s1807 + $0x10] sm:$0xf]
      %v1813 = vld [vmem:[%s1807 + $0x14] sm:$0xf]
      %v1814 = vld [vmem:[%s1807 + $0x18] sm:$0xf]
      %v1815 = vld [vmem:[%s1807 + $0x1c] sm:$0xf]
      %v1817 = vunpack.c.l.b16 %v1806
      %v1818 = vpack.c.b16 %v1817, %v1638
      %v1820 = vshrl.u32 %v1739, 16
      %v1822 = vrot.slane %v1820, 1
      %v1823 = vshll.u32 %v1739, 16
      %v1825 = vrot.slane %v1823, 2
      %v1826 = vor.u32 %v1822, %v1825
      %v1827 = vrot.slane %v1655, 1
      %v1828 = vrot.slane %v1651, 2
      %v1829 = vor.u32 %v1827, %v1828
      %v1830 = vsel %vm726, %v1826, %v1829
      %v1832 = vshrl.u32 %v1818, 16
      %v1834 = vrot.slane %v1832, 1
      %v1835 = vshll.u32 %v1818, 16
      %v1837 = vrot.slane %v1835, 2
      %v1838 = vor.u32 %v1834, %v1837
      %v1839 = vsel %vm726, %v1829, %v1838
      %v1848 = vunpack.c.l.b16 %v1808
      %v1849 = vunpack.c.l.b16 %v1809
      %v1850 = vunpack.c.l.b16 %v1810
      %v1851 = vunpack.c.l.b16 %v1811
      %v1852 = vunpack.c.l.b16 %v1812
      %v1853 = vunpack.c.l.b16 %v1813
      %v1854 = vunpack.c.l.b16 %v1814
      %v1855 = vunpack.c.l.b16 %v1815
      %v1856 = vpack.c.b16 %v1849, %v1848
      %v1857 = vpack.c.b16 %v1851, %v1850
      %v1858 = vpack.c.b16 %v1853, %v1852
      %v1859 = vpack.c.b16 %v1855, %v1854
      %v1865 = vsel %vm545, %v1830, 0
      %v1868 = vsel %vm545, %v1839, 0
      %v1871 = vsel %vm545, %v1838, 0
      %1873 = vmatpush.bf16.msra.mxu0 0
      %1874 = vmatpush.bf16.msra.mxu0 0
      %1875 = vmatpush.bf16.msra.mxu0 0
      %1876 = vmatpush.bf16.msra.mxu0 0
      %1877 = vmatpush.bf16.msra.mxu0 %v1859
      %1878 = vmatpush.bf16.msra.mxu0 %v1858
      %1879 = vmatpush.bf16.msra.mxu0 %v1857
      %1880 = vmatpush.bf16.msra.mxu0 %v1856
      %1881 = vmatmul.bf16.gmra.mxu0 %v1865
      %v1882 = vpop.f32.mrf.mxu0
      %v1883 = vadd.f32 0.0, %v1882
      %v1884 = vpop.f32.mrf.mxu0
      %v1885 = vadd.f32 0.0, %v1884
      %1886 = vmatmul.bf16.gmra.mxu0 %v1868
      %v1887 = vpop.f32.mrf.mxu0
      %v1888 = vadd.f32 0.0, %v1887
      %v1889 = vpop.f32.mrf.mxu0
      %v1890 = vadd.f32 0.0, %v1889
      %1891 = vmatmul.bf16.gmra.mxu0 %v1871
      %v1892 = vpop.f32.mrf.mxu0
      %v1893 = vadd.f32 0.0, %v1892
      %v1894 = vpop.f32.mrf.mxu0
      %1895 = vdwg.mxu0
      %v1896 = vadd.f32 %v1801, %v1883
      %v1897 = vadd.f32 %v1802, %v1885
      %v1898 = vadd.f32 %v1803, %v1888
      %v1899 = vadd.f32 %v1804, %v1890
      %v1900 = vadd.f32 %v1805, %v1893
      %v1901 = vld [vmem:[%s296] sm:$0x1]
      %v1903 = vperm.slane %v1901, 0
      %v1905 = vadd.f32 %v1896, %v1903
      %v1906 = vadd.f32 %v1897, %v1903
      %v1907 = vadd.f32 %v1898, %v1903
      %v1908 = vadd.f32 %v1899, %v1903
      %v1909 = vadd.f32 %v1900, %v1903
      %vm1910 = vcmask 7168
      %1911 = vst.msk [vmem:[%s304] sm:$0xff] %vm1910, %v1905
      %1912 = vst.msk [vmem:[%s304 + $0x8] sm:$0xff] %vm1910, %v1906
      %1913 = vst.msk [vmem:[%s304 + $0x10] sm:$0xff] %vm1910, %v1907
      %1914 = vst.msk [vmem:[%s304 + $0x18] sm:$0xff] %vm1910, %v1908
      %1915 = vst.msk [vmem:[%s304 + $0x20] sm:$0xff] %vm1910, %v1909
      %p1916 = scmp.lt.s32.totalorder %s23, 1
      %s1917 = scalar_select %p1916, %s23, 1
      %p1918 = scmp.lt.s32.totalorder %s24, 0
      %s1919 = scalar_select %p1918, %s24, 0
      %s1920 = smul.addr %s1917, 5
      %s1921 = sadd.s32 %s1919, %s1920
      %s1922 = smul.addr %s1921, 8
      %s1923 = scalar_lea.vmem %s6, %s1922
      // Predicated region
      $region45: #{discriminator_forward.9} parent=43 // pred_check
        %p1924 = pneg %p192
      $region46: #{discriminator_forward.9} parent=43 // pred_check_branch
        %1926 = sbr.rel (%p1924) target = $region48
      $region47: #{discriminator_forward.9} parent=43 // pred_region
        _
      $region48: #{discriminator_forward.9} parent=43 // pred_fallthru
        _
    $region44: #{discriminator_forward.9} parent=5 // pred_fallthru
      _
    %p1927 = scmp.le.s32.totalorder 2, %s14
    // Predicated region
    $region49: #{discriminator_forward.9} parent=5 // pred_check
      %p1928 = pneg %p1927
    $region50: #{discriminator_forward.9} parent=5 // pred_check_branch
      %1930 = sbr.rel (%p1928) target = $region52
    $region51: #{discriminator_forward.9} parent=5 // pred_region
      %s1931 = ssub.s32 %s14, 2
      // Predicated region
      $region53: #{discriminator_forward.9} parent=51 // pred_check
        %p1932 = pneg %p198
      $region54: #{discriminator_forward.9} parent=51 // pred_check_branch
        %1934 = sbr.rel (%p1932) target = $region56
      $region55: #{discriminator_forward.9} parent=51 // pred_region
        %p1935 = scmp.lt.s32.totalorder %s25, 1
        %s1936 = scalar_select %p1935, %s25, 1
        %p1937 = scmp.lt.s32.totalorder %s26, 0
        %s1938 = scalar_select %p1937, %s26, 0
        %s1939 = smul.addr %s1936, 5
        %s1940 = sadd.s32 %s1938, %s1939
        %s1941 = smul.addr %s1940, 8
        %s1942 = scalar_lea.vmem %s6, %s1941
      $region56: #{discriminator_forward.9} parent=51 // pred_fallthru
        _
    $region52: #{discriminator_forward.9} parent=5 // pred_fallthru
      _
  $region6: #{discriminator_forward.9} parent=0 // loop_footer
    %s18 = sadd.s32 1, %s14
  $region7: #{discriminator_forward.9} parent=0 // loop_footer_branch
    %13 = sbr.rel target = $region3
  $region8: #{discriminator_forward.9} parent=0 // loop_exit
    _

</llo_original>
